<compile_context>
chip_gen: v6e
topology: v6e:2x2x1
jax: 0.10.0
libtpu: 0.0.40
codegen_flags: <defaults>
</compile_context>

<pallas_src>
import functools

import jax
import jax.numpy as jnp
from jax.experimental import pallas as pl
from jax.experimental.pallas import tpu as pltpu


def _round_up(x, n):
    return ((x + n - 1) // n) * n


# ---------------------------------------------------------------------------
# Fused Refine_M kernel (one batch element per grid step)
# ---------------------------------------------------------------------------
def _refine_m_kernel(ux0_ref, x1_ref, mask_ref,
                     w12_ref, b12_ref, w3_ref, b3_ref,
                     w4_ref, b4_ref, w5_ref, b5_ref,
                     o_ref, buf_ref,
                     *, h, w, c0, cc0, m, base, compute_dtype):
    f32 = jnp.float32
    S = w + 2                    # padded-frame row stride
    F = (h + 2) * S              # flattened frame length (lane axis)

    # Zero the scratch every grid step: the zero margins implement SAME
    # padding, and unconditional zeroing stays correct however the "parallel"
    # batch axis is sharded across TensorCores.
    buf_ref[...] = jnp.zeros_like(buf_ref)

    mask = mask_ref[...].astype(f32)              # (1, F): 1 on interior pixels

    # Frame-embedded inputs (their 1-px borders are already zero).
    buf_ref[0:c0, base:base + F] = ux0_ref[0].astype(f32)
    buf_ref[c0:c0 + cc0, base:base + F] = x1_ref[0].astype(f32)

    def conv3x3(row_lo, cin, w_ref, b_ref):
        """3x3 SAME conv of buf rows [row_lo, row_lo+cin) in frame layout.

        w_ref is (9, cout, cin) (tap-major, pre-transposed), b_ref is
        (cout, 1).  Each tap is one static lane-shifted slice of the frame
        plus one small MXU matmul with N = F (lane-dense accumulator).
        Positions outside the h x w interior are garbage and must be masked
        by the caller (or discarded for the final output).
        """
        cout = w_ref.shape[1]
        # Bias folded into the accumulator init (hoisted out of the tap loop).
        acc = jnp.broadcast_to(b_ref[...].astype(f32), (cout, F))
        for k in range(9):
            ky, kx = divmod(k, 3)
            d = (ky - 1) * S + (kx - 1)
            q = buf_ref[row_lo:row_lo + cin,
                        base + d:base + d + F].astype(compute_dtype)
            wk = w_ref[k].astype(compute_dtype)           # (cout, cin)
            acc = acc + jnp.dot(wk, q, preferred_element_type=f32)
        return acc

    # ---- conv1 & conv2: shared input cat(ux0, x1), fused along cout --------
    r12 = conv3x3(0, c0 + cc0, w12_ref, b12_ref)          # (2m, F)
    c1 = jnp.maximum(r12[0:m], 0.0) * mask
    c2 = jnp.maximum(r12[m:2 * m], 0.0) * mask

    # ---- conv3(conv2) -------------------------------------------------------
    buf_ref[c0:c0 + m, base:base + F] = c2
    c3 = jnp.maximum(conv3x3(c0, m, w3_ref, b3_ref), 0.0) * mask

    # ---- conv4(cat(conv1, conv3)) -- concat = adjacent channel rows ---------
    buf_ref[c0 + m:c0 + 2 * m, base:base + F] = c3
    buf_ref[c0:c0 + m, base:base + F] = c1                # conv2 not needed any more
    c4 = conv3x3(c0, 2 * m, w4_ref, b4_ref) * mask        # (c0, F), no ReLU

    # ---- conv5(cat(ux0, conv4)) -- ux0 still resident in rows [0, c0) -------
    buf_ref[c0:2 * c0, base:base + F] = c4
    out = conv3x3(0, 2 * c0, w5_ref, b5_ref)              # (c0, F), no ReLU

    # Frame borders of `out` are garbage; the wrapper slices out the interior.
    o_ref[0] = out.astype(o_ref.dtype)


# ---------------------------------------------------------------------------
# Bilinear upsample (align_corners=False), NCHW.  Matches PyTorch
# F.interpolate(..., mode='bilinear', align_corners=False).  Gather-based, so
# it stays in XLA; everything downstream is one fused Pallas kernel.
# ---------------------------------------------------------------------------
def bilinear_upsample_nchw(x, out_h, out_w):
    N, C, H, W = x.shape
    if (H, W) == (out_h, out_w):
        return x

    def src_coords(out_size, in_size):
        i = jnp.arange(out_size, dtype=jnp.float32)
        src = (i + 0.5) * (in_size / out_size) - 0.5
        src = jnp.clip(src, 0.0, in_size - 1.0)
        lo = jnp.floor(src).astype(jnp.int32)
        hi = jnp.minimum(lo + 1, in_size - 1)
        frac = src - lo.astype(jnp.float32)
        return lo, hi, frac

    y0, y1, fy = src_coords(out_h, H)
    x0, x1, fx = src_coords(out_w, W)

    top = x[:, :, y0, :]
    bot = x[:, :, y1, :]
    rows = top * (1.0 - fy)[None, None, :, None] + bot * fy[None, None, :, None]
    left = rows[:, :, :, x0]
    right = rows[:, :, :, x1]
    return (left * (1.0 - fx)[None, None, None, :]
            + right * fx[None, None, None, :])


# ---------------------------------------------------------------------------
# Parameter initialization (HWIO weights, zero biases)
# ---------------------------------------------------------------------------
def init_refine_m_params(key, input_size0, input_size1, dtype=jnp.float32):
    c0 = input_size0
    cc0 = input_size1
    m = max(4, cc0)

    def kaiming_normal(key, cin, cout):
        std = (2.0 / (cin * 9)) ** 0.5              # fan_in, relu gain
        return std * jax.random.normal(key, (3, 3, cin, cout), dtype)

    def xavier_normal(key, cin, cout):
        fan_in, fan_out = cin * 9, cout * 9
        std = (2.0 / (fan_in + fan_out)) ** 0.5
        return std * jax.random.normal(key, (3, 3, cin, cout), dtype)

    k1, k2, k3, k4, k5 = jax.random.split(key, 5)
    return {
        "w1": kaiming_normal(k1, c0 + cc0, m), "b1": jnp.zeros((m,), dtype),
        "w2": kaiming_normal(k2, c0 + cc0, m), "b2": jnp.zeros((m,), dtype),
        "w3": kaiming_normal(k3, m, m),        "b3": jnp.zeros((m,), dtype),
        "w4": xavier_normal(k4, 2 * m, c0),    "b4": jnp.zeros((c0,), dtype),
        "w5": xavier_normal(k5, 2 * c0, c0),   "b5": jnp.zeros((c0,), dtype),
    }


# ---------------------------------------------------------------------------
# Refine_M forward (NCHW in / NCHW out, like the PyTorch module)
# ---------------------------------------------------------------------------
def refine_m_forward(params, x0_nchw, x1_nchw, *, compute_dtype=jnp.float32):
    N, c0, _, _ = x0_nchw.shape
    _, cc0, h, w = x1_nchw.shape
    m = params["b3"].shape[0]                       # max(4, cc0)

    S = w + 2                                       # padded-frame row stride
    F = (h + 2) * S                                 # flattened frame length
    base = max(128, _round_up(S + 1, 128))          # lane offset of the frame
    c_buf = c0 + max(cc0, 2 * m, c0)                # scratch channel rows
    l_buf = _round_up(base + F + S + 1, 128)        # scratch lane length

    ux0 = bilinear_upsample_nchw(x0_nchw, h, w)

    def frame(x):
        # (N, C, h, w) -> (N, C, F): 1-px zero border, flattened on the lane
        # axis so every DMA and in-kernel access is lane-dense.
        xp = jnp.pad(x, ((0, 0), (0, 0), (1, 1), (1, 1)))
        return xp.reshape(x.shape[0], x.shape[1], F)

    ux0_f = frame(ux0)
    x1_f = frame(x1_nchw)

    # Interior mask (1 on the h x w pixels, 0 on the frame border).
    idx = jnp.arange(F)
    rr, cc = idx // S, idx % S
    mask = (((rr >= 1) & (rr <= h) & (cc >= 1) & (cc <= w))
            .astype(jnp.float32).reshape(1, F))

    def wt(name):
        # HWIO (3,3,cin,cout) -> (9, cout, cin); tap index k = ky*3 + kx.
        wgt = params[name]
        cout = wgt.shape[-1]
        return jnp.transpose(wgt, (0, 1, 3, 2)).reshape(9, cout, wgt.shape[2])

    def bias(name):
        return params[name].reshape(-1, 1)          # (cout, 1)

    w12 = jnp.concatenate([wt("w1"), wt("w2")], axis=1)       # (9, 2m, c0+cc0)
    b12 = jnp.concatenate([bias("b1"), bias("b2")], axis=0)   # (2m, 1)

    ins = [ux0_f, x1_f, mask,
           w12, b12, wt("w3"), bias("b3"), wt("w4"), bias("b4"),
           wt("w5"), bias("b5")]

    in_specs = [pl.BlockSpec((1, c0, F), lambda n: (n, 0, 0)),
                pl.BlockSpec((1, cc0, F), lambda n: (n, 0, 0))]
    for a in ins[2:]:
        in_specs.append(pl.BlockSpec(a.shape, lambda n, _nd=a.ndim: (0,) * _nd))

    kernel = functools.partial(_refine_m_kernel, h=h, w=w, c0=c0, cc0=cc0,
                               m=m, base=base, compute_dtype=compute_dtype)

    # TODO(synk): for large feature maps, tile H into row blocks with a 1-row
    # halo (grid over row blocks) so per-conv (cout, F) accumulators keep
    # fitting in vregs/VMEM; at mobilevit refine sizes whole frames fit easily.
    out_f = pl.pallas_call(
        kernel,
        out_shape=jax.ShapeDtypeStruct((N, c0, F), x1_nchw.dtype),
        grid=(N,),
        in_specs=in_specs,
        out_specs=pl.BlockSpec((1, c0, F), lambda n: (n, 0, 0)),
        scratch_shapes=[pltpu.VMEM((c_buf, l_buf), jnp.float32)],
        compiler_params=pltpu.CompilerParams(
            # Batch elements are independent -> v7x splits them across its two
            # TensorCores (no-op on single-TC v5e/v6e).
            dimension_semantics=("parallel",)),
    )(*ins)

    # Drop the 1-px frame border -> (N, c0, h, w), already NCHW.
    return out_f.reshape(N, c0, h + 2, w + 2)[:, :, 1:h + 1, 1:w + 1]


# ---------------------------------------------------------------------------
# Pure-XLA reference (for the correctness check in __main__)
# ---------------------------------------------------------------------------
def _conv3x3_ref(x_nchw, w_hwio, b):
    y = jax.lax.conv_general_dilated(
        x_nchw, w_hwio, window_strides=(1, 1), padding="SAME",
        dimension_numbers=("NCHW", "HWIO", "NCHW"),
        precision=jax.lax.Precision.HIGHEST)
    return y + b[None, :, None, None]


def refine_m_reference(params, x0_nchw, x1_nchw):
    _, _, h, w = x1_nchw.shape
    ux0 = bilinear_upsample_nchw(x0_nchw, h, w)
    ci = jnp.concatenate([ux0, x1_nchw], axis=1)
    c1 = jax.nn.relu(_conv3x3_ref(ci, params["w1"], params["b1"]))
    c2 = jax.nn.relu(_conv3x3_ref(ci, params["w2"], params["b2"]))
    c3 = jax.nn.relu(_conv3x3_ref(c2, params["w3"], params["b3"]))
    c4 = _conv3x3_ref(jnp.concatenate([c1, c3], axis=1),
                      params["w4"], params["b4"])
    out = _conv3x3_ref(jnp.concatenate([ux0, c4], axis=1),
                       params["w5"], params["b5"])
    return out


# ---------------------------------------------------------------------------
if __name__ == "__main__":
    key = jax.random.PRNGKey(0)
    k_params, k_x0, k_x1 = jax.random.split(key, 3)

    input_size0 = 4   # c0  -> x0 channels (and output channels)
    input_size1 = 4   # cc0 -> x1 channels
    N = 2
    h0, w0 = 8, 8     # coarse feature map (upsampled 2x)
    h, w = 16, 16     # fine feature map (conv spatial size)

    params = init_refine_m_params(k_params, input_size0, input_size1)
    x0 = jax.random.normal(k_x0, (N, input_size0, h0, w0), jnp.float32)
    x1 = jax.random.normal(k_x1, (N, input_size1, h, w), jnp.float32)

    fwd = jax.jit(refine_m_forward)
    y = fwd(params, x0, x1)
    jax.block_until_ready(y)
    assert y.shape == (N, input_size0, h, w), y.shape

    # Correctness check against a pure-XLA reference (tolerance covers MXU
    # multi-pass precision differences for f32 operands).
    y_ref = jax.jit(refine_m_reference)(params, x0, x1)
    err = float(jnp.max(jnp.abs(y - y_ref)))
    assert err < 3e-2, f"max abs err vs XLA reference: {err}"

    print("KERNEL_OK")
</pallas_src>

<mosaic_0001>
module attributes {stable_mosaic.version = 11 : i64} {
  func.func @_refine_m_kernel(%arg0: i32, %arg1: memref<1x4x324xf32, #tpu.memory_space<vmem>>, %arg2: memref<1x4x324xf32, #tpu.memory_space<vmem>>, %arg3: memref<1x324xf32, #tpu.memory_space<vmem>>, %arg4: memref<9x8x8xf32, #tpu.memory_space<vmem>>, %arg5: memref<8x1xf32, #tpu.memory_space<vmem>>, %arg6: memref<9x4x4xf32, #tpu.memory_space<vmem>>, %arg7: memref<4x1xf32, #tpu.memory_space<vmem>>, %arg8: memref<9x4x8xf32, #tpu.memory_space<vmem>>, %arg9: memref<4x1xf32, #tpu.memory_space<vmem>>, %arg10: memref<9x4x8xf32, #tpu.memory_space<vmem>>, %arg11: memref<4x1xf32, #tpu.memory_space<vmem>>, %arg12: memref<1x4x324xf32, #tpu.memory_space<vmem>>, %arg13: memref<12x512xf32, #tpu.memory_space<vmem>>) attributes {dimension_semantics = [#tpu.dimension_semantics<parallel>], iteration_bounds = array<i64: 2>, scalar_prefetch = 0 : i64, scratch_operands = 1 : i64, tpu.core_type = #tpu.core_type<tc>, window_params = [{transform_indices = @transform_0, window_bounds = array<i64: 1, 4, 324>}, {transform_indices = @transform_1, window_bounds = array<i64: 1, 4, 324>}, {pipeline_mode = #tpu.pipeline_mode<synchronous>, transform_indices = @transform_2, window_bounds = array<i64: 1, 324>}, {pipeline_mode = #tpu.pipeline_mode<synchronous>, transform_indices = @transform_3, window_bounds = array<i64: 9, 8, 8>}, {pipeline_mode = #tpu.pipeline_mode<synchronous>, transform_indices = @transform_4, window_bounds = array<i64: 8, 1>}, {pipeline_mode = #tpu.pipeline_mode<synchronous>, transform_indices = @transform_5, window_bounds = array<i64: 9, 4, 4>}, {pipeline_mode = #tpu.pipeline_mode<synchronous>, transform_indices = @transform_6, window_bounds = array<i64: 4, 1>}, {pipeline_mode = #tpu.pipeline_mode<synchronous>, transform_indices = @transform_7, window_bounds = array<i64: 9, 4, 8>}, {pipeline_mode = #tpu.pipeline_mode<synchronous>, transform_indices = @transform_8, window_bounds = array<i64: 4, 1>}, {pipeline_mode = #tpu.pipeline_mode<synchronous>, transform_indices = @transform_9, window_bounds = array<i64: 9, 4, 8>}, {pipeline_mode = #tpu.pipeline_mode<synchronous>, transform_indices = @transform_10, window_bounds = array<i64: 4, 1>}, {transform_indices = @transform_11, window_bounds = array<i64: 1, 4, 324>}]} {
    %cst = arith.constant 0.000000e+00 : f32
    %0 = vector.broadcast %cst : f32 to vector<12x512xf32>
    %c0 = arith.constant 0 : index
    %c0_0 = arith.constant 0 : index
    %1 = vector.load %arg13[%c0, %c0_0] : memref<12x512xf32, #tpu.memory_space<vmem>>, vector<12x512xf32>
    tpu.vector_store %arg13[%c0, %c0_0], %0 {strides = array<i32>} : memref<12x512xf32, #tpu.memory_space<vmem>>, vector<12x512xf32>,
    %c0_1 = arith.constant 0 : index
    %c0_2 = arith.constant 0 : index
    %2 = vector.load %arg3[%c0_1, %c0_2] : memref<1x324xf32, #tpu.memory_space<vmem>>, vector<1x324xf32>
    %c0_3 = arith.constant 0 : index
    %c0_4 = arith.constant 0 : index
    %c0_5 = arith.constant 0 : index
    %3 = vector.load %arg1[%c0_3, %c0_4, %c0_5] : memref<1x4x324xf32, #tpu.memory_space<vmem>>, vector<1x4x324xf32>
    %4 = vector.shape_cast %3 : vector<1x4x324xf32> to vector<4x324xf32>
    %c0_6 = arith.constant 0 : index
    %c128 = arith.constant 128 : index
    %5 = vector.load %arg13[%c0_6, %c128] : memref<12x512xf32, #tpu.memory_space<vmem>>, vector<4x324xf32>
    tpu.vector_store %arg13[%c0_6, %c128], %4 {strides = array<i32>} : memref<12x512xf32, #tpu.memory_space<vmem>>, vector<4x324xf32>,
    %c0_7 = arith.constant 0 : index
    %c0_8 = arith.constant 0 : index
    %c0_9 = arith.constant 0 : index
    %6 = vector.load %arg2[%c0_7, %c0_8, %c0_9] : memref<1x4x324xf32, #tpu.memory_space<vmem>>, vector<1x4x324xf32>
    %7 = vector.shape_cast %6 : vector<1x4x324xf32> to vector<4x324xf32>
    %c4 = arith.constant 4 : index
    %c128_10 = arith.constant 128 : index
    %8 = vector.load %arg13[%c4, %c128_10] : memref<12x512xf32, #tpu.memory_space<vmem>>, vector<4x324xf32>
    tpu.vector_store %arg13[%c4, %c128_10], %7 {strides = array<i32>} : memref<12x512xf32, #tpu.memory_space<vmem>>, vector<4x324xf32>,
    %c0_11 = arith.constant 0 : index
    %c0_12 = arith.constant 0 : index
    %9 = vector.load %arg5[%c0_11, %c0_12] : memref<8x1xf32, #tpu.memory_space<vmem>>, vector<8x1xf32>
    %10 = vector.shape_cast %9 : vector<8x1xf32> to vector<8x1xf32>
    %11 = vector.broadcast %10 : vector<8x1xf32> to vector<8x324xf32>
    %c0_13 = arith.constant 0 : index
    %c109 = arith.constant 109 : index
    %12 = vector.load %arg13[%c0_13, %c109] : memref<12x512xf32, #tpu.memory_space<vmem>>, vector<8x324xf32>
    %c0_14 = arith.constant 0 : index
    %c0_15 = arith.constant 0 : index
    %c0_16 = arith.constant 0 : index
    %13 = vector.load %arg4[%c0_14, %c0_15, %c0_16] : memref<9x8x8xf32, #tpu.memory_space<vmem>>, vector<1x8x8xf32>
    %14 = vector.shape_cast %13 : vector<1x8x8xf32> to vector<8x8xf32>
    %cst_17 = arith.constant dense<0.000000e+00> : vector<8x324xf32>
    %15 = tpu.matmul %14, %12, %cst_17 {dimension_numbers = #tpu.dot_dimension_numbers<[1], [0], [0], [1], [0, 0, 1, 1], [], []>} : vector<8x8xf32>, vector<8x324xf32>, vector<8x324xf32> -> vector<8x324xf32>
    %16 = arith.addf %11, %15 : vector<8x324xf32>
    %c0_18 = arith.constant 0 : index
    %c110 = arith.constant 110 : index
    %17 = vector.load %arg13[%c0_18, %c110] : memref<12x512xf32, #tpu.memory_space<vmem>>, vector<8x324xf32>
    %c1 = arith.constant 1 : index
    %c0_19 = arith.constant 0 : index
    %c0_20 = arith.constant 0 : index
    %18 = vector.load %arg4[%c1, %c0_19, %c0_20] : memref<9x8x8xf32, #tpu.memory_space<vmem>>, vector<1x8x8xf32>
    %19 = vector.shape_cast %18 : vector<1x8x8xf32> to vector<8x8xf32>
    %cst_21 = arith.constant dense<0.000000e+00> : vector<8x324xf32>
    %20 = tpu.matmul %19, %17, %cst_21 {dimension_numbers = #tpu.dot_dimension_numbers<[1], [0], [0], [1], [0, 0, 1, 1], [], []>} : vector<8x8xf32>, vector<8x324xf32>, vector<8x324xf32> -> vector<8x324xf32>
    %21 = arith.addf %16, %20 : vector<8x324xf32>
    %c0_22 = arith.constant 0 : index
    %c111 = arith.constant 111 : index
    %22 = vector.load %arg13[%c0_22, %c111] : memref<12x512xf32, #tpu.memory_space<vmem>>, vector<8x324xf32>
    %c2 = arith.constant 2 : index
    %c0_23 = arith.constant 0 : index
    %c0_24 = arith.constant 0 : index
    %23 = vector.load %arg4[%c2, %c0_23, %c0_24] : memref<9x8x8xf32, #tpu.memory_space<vmem>>, vector<1x8x8xf32>
    %24 = vector.shape_cast %23 : vector<1x8x8xf32> to vector<8x8xf32>
    %cst_25 = arith.constant dense<0.000000e+00> : vector<8x324xf32>
    %25 = tpu.matmul %24, %22, %cst_25 {dimension_numbers = #tpu.dot_dimension_numbers<[1], [0], [0], [1], [0, 0, 1, 1], [], []>} : vector<8x8xf32>, vector<8x324xf32>, vector<8x324xf32> -> vector<8x324xf32>
    %26 = arith.addf %21, %25 : vector<8x324xf32>
    %c0_26 = arith.constant 0 : index
    %c127 = arith.constant 127 : index
    %27 = vector.load %arg13[%c0_26, %c127] : memref<12x512xf32, #tpu.memory_space<vmem>>, vector<8x324xf32>
    %c3 = arith.constant 3 : index
    %c0_27 = arith.constant 0 : index
    %c0_28 = arith.constant 0 : index
    %28 = vector.load %arg4[%c3, %c0_27, %c0_28] : memref<9x8x8xf32, #tpu.memory_space<vmem>>, vector<1x8x8xf32>
    %29 = vector.shape_cast %28 : vector<1x8x8xf32> to vector<8x8xf32>
    %cst_29 = arith.constant dense<0.000000e+00> : vector<8x324xf32>
    %30 = tpu.matmul %29, %27, %cst_29 {dimension_numbers = #tpu.dot_dimension_numbers<[1], [0], [0], [1], [0, 0, 1, 1], [], []>} : vector<8x8xf32>, vector<8x324xf32>, vector<8x324xf32> -> vector<8x324xf32>
    %31 = arith.addf %26, %30 : vector<8x324xf32>
    %c0_30 = arith.constant 0 : index
    %c128_31 = arith.constant 128 : index
    %32 = vector.load %arg13[%c0_30, %c128_31] : memref<12x512xf32, #tpu.memory_space<vmem>>, vector<8x324xf32>
    %c4_32 = arith.constant 4 : index
    %c0_33 = arith.constant 0 : index
    %c0_34 = arith.constant 0 : index
    %33 = vector.load %arg4[%c4_32, %c0_33, %c0_34] : memref<9x8x8xf32, #tpu.memory_space<vmem>>, vector<1x8x8xf32>
    %34 = vector.shape_cast %33 : vector<1x8x8xf32> to vector<8x8xf32>
    %cst_35 = arith.constant dense<0.000000e+00> : vector<8x324xf32>
    %35 = tpu.matmul %34, %32, %cst_35 {dimension_numbers = #tpu.dot_dimension_numbers<[1], [0], [0], [1], [0, 0, 1, 1], [], []>} : vector<8x8xf32>, vector<8x324xf32>, vector<8x324xf32> -> vector<8x324xf32>
    %36 = arith.addf %31, %35 : vector<8x324xf32>
    %c0_36 = arith.constant 0 : index
    %c129 = arith.constant 129 : index
    %37 = vector.load %arg13[%c0_36, %c129] : memref<12x512xf32, #tpu.memory_space<vmem>>, vector<8x324xf32>
    %c5 = arith.constant 5 : index
    %c0_37 = arith.constant 0 : index
    %c0_38 = arith.constant 0 : index
    %38 = vector.load %arg4[%c5, %c0_37, %c0_38] : memref<9x8x8xf32, #tpu.memory_space<vmem>>, vector<1x8x8xf32>
    %39 = vector.shape_cast %38 : vector<1x8x8xf32> to vector<8x8xf32>
    %cst_39 = arith.constant dense<0.000000e+00> : vector<8x324xf32>
    %40 = tpu.matmul %39, %37, %cst_39 {dimension_numbers = #tpu.dot_dimension_numbers<[1], [0], [0], [1], [0, 0, 1, 1], [], []>} : vector<8x8xf32>, vector<8x324xf32>, vector<8x324xf32> -> vector<8x324xf32>
    %41 = arith.addf %36, %40 : vector<8x324xf32>
    %c0_40 = arith.constant 0 : index
    %c145 = arith.constant 145 : index
    %42 = vector.load %arg13[%c0_40, %c145] : memref<12x512xf32, #tpu.memory_space<vmem>>, vector<8x324xf32>
    %c6 = arith.constant 6 : index
    %c0_41 = arith.constant 0 : index
    %c0_42 = arith.constant 0 : index
    %43 = vector.load %arg4[%c6, %c0_41, %c0_42] : memref<9x8x8xf32, #tpu.memory_space<vmem>>, vector<1x8x8xf32>
    %44 = vector.shape_cast %43 : vector<1x8x8xf32> to vector<8x8xf32>
    %cst_43 = arith.constant dense<0.000000e+00> : vector<8x324xf32>
    %45 = tpu.matmul %44, %42, %cst_43 {dimension_numbers = #tpu.dot_dimension_numbers<[1], [0], [0], [1], [0, 0, 1, 1], [], []>} : vector<8x8xf32>, vector<8x324xf32>, vector<8x324xf32> -> vector<8x324xf32>
    %46 = arith.addf %41, %45 : vector<8x324xf32>
    %c0_44 = arith.constant 0 : index
    %c146 = arith.constant 146 : index
    %47 = vector.load %arg13[%c0_44, %c146] : memref<12x512xf32, #tpu.memory_space<vmem>>, vector<8x324xf32>
    %c7 = arith.constant 7 : index
    %c0_45 = arith.constant 0 : index
    %c0_46 = arith.constant 0 : index
    %48 = vector.load %arg4[%c7, %c0_45, %c0_46] : memref<9x8x8xf32, #tpu.memory_space<vmem>>, vector<1x8x8xf32>
    %49 = vector.shape_cast %48 : vector<1x8x8xf32> to vector<8x8xf32>
    %cst_47 = arith.constant dense<0.000000e+00> : vector<8x324xf32>
    %50 = tpu.matmul %49, %47, %cst_47 {dimension_numbers = #tpu.dot_dimension_numbers<[1], [0], [0], [1], [0, 0, 1, 1], [], []>} : vector<8x8xf32>, vector<8x324xf32>, vector<8x324xf32> -> vector<8x324xf32>
    %51 = arith.addf %46, %50 : vector<8x324xf32>
    %c0_48 = arith.constant 0 : index
    %c147 = arith.constant 147 : index
    %52 = vector.load %arg13[%c0_48, %c147] : memref<12x512xf32, #tpu.memory_space<vmem>>, vector<8x324xf32>
    %c8 = arith.constant 8 : index
    %c0_49 = arith.constant 0 : index
    %c0_50 = arith.constant 0 : index
    %53 = vector.load %arg4[%c8, %c0_49, %c0_50] : memref<9x8x8xf32, #tpu.memory_space<vmem>>, vector<1x8x8xf32>
    %54 = vector.shape_cast %53 : vector<1x8x8xf32> to vector<8x8xf32>
    %cst_51 = arith.constant dense<0.000000e+00> : vector<8x324xf32>
    %55 = tpu.matmul %54, %52, %cst_51 {dimension_numbers = #tpu.dot_dimension_numbers<[1], [0], [0], [1], [0, 0, 1, 1], [], []>} : vector<8x8xf32>, vector<8x324xf32>, vector<8x324xf32> -> vector<8x324xf32>
    %56 = arith.addf %51, %55 : vector<8x324xf32>
    %57 = vector.extract_strided_slice %56 {offsets = [0, 0], sizes = [4, 324], strides = [1, 1]} : vector<8x324xf32> to vector<4x324xf32>
    %cst_52 = arith.constant 0.000000e+00 : f32
    %58 = vector.broadcast %cst_52 : f32 to vector<4x324xf32>
    %59 = arith.maximumf %57, %58 : vector<4x324xf32>
    %60 = vector.broadcast %2 : vector<1x324xf32> to vector<4x324xf32>
    %61 = arith.mulf %59, %60 : vector<4x324xf32>
    %62 = vector.extract_strided_slice %56 {offsets = [4, 0], sizes = [4, 324], strides = [1, 1]} : vector<8x324xf32> to vector<4x324xf32>
    %cst_53 = arith.constant 0.000000e+00 : f32
    %63 = vector.broadcast %cst_53 : f32 to vector<4x324xf32>
    %64 = arith.maximumf %62, %63 : vector<4x324xf32>
    %65 = vector.broadcast %2 : vector<1x324xf32> to vector<4x324xf32>
    %66 = arith.mulf %64, %65 : vector<4x324xf32>
    %c4_54 = arith.constant 4 : index
    %c128_55 = arith.constant 128 : index
    %67 = vector.load %arg13[%c4_54, %c128_55] : memref<12x512xf32, #tpu.memory_space<vmem>>, vector<4x324xf32>
    tpu.vector_store %arg13[%c4_54, %c128_55], %66 {strides = array<i32>} : memref<12x512xf32, #tpu.memory_space<vmem>>, vector<4x324xf32>,
    %c0_56 = arith.constant 0 : index
    %c0_57 = arith.constant 0 : index
    %68 = vector.load %arg7[%c0_56, %c0_57] : memref<4x1xf32, #tpu.memory_space<vmem>>, vector<4x1xf32>
    %69 = vector.shape_cast %68 : vector<4x1xf32> to vector<4x1xf32>
    %70 = vector.broadcast %69 : vector<4x1xf32> to vector<4x324xf32>
    %c4_58 = arith.constant 4 : index
    %c109_59 = arith.constant 109 : index
    %71 = vector.load %arg13[%c4_58, %c109_59] : memref<12x512xf32, #tpu.memory_space<vmem>>, vector<4x324xf32>
    %c0_60 = arith.constant 0 : index
    %c0_61 = arith.constant 0 : index
    %c0_62 = arith.constant 0 : index
    %72 = vector.load %arg6[%c0_60, %c0_61, %c0_62] : memref<9x4x4xf32, #tpu.memory_space<vmem>>, vector<1x4x4xf32>
    %73 = vector.shape_cast %72 : vector<1x4x4xf32> to vector<4x4xf32>
    %cst_63 = arith.constant dense<0.000000e+00> : vector<4x324xf32>
    %74 = tpu.matmul %73, %71, %cst_63 {dimension_numbers = #tpu.dot_dimension_numbers<[1], [0], [0], [1], [0, 0, 1, 1], [], []>} : vector<4x4xf32>, vector<4x324xf32>, vector<4x324xf32> -> vector<4x324xf32>
    %75 = arith.addf %70, %74 : vector<4x324xf32>
    %c4_64 = arith.constant 4 : index
    %c110_65 = arith.constant 110 : index
    %76 = vector.load %arg13[%c4_64, %c110_65] : memref<12x512xf32, #tpu.memory_space<vmem>>, vector<4x324xf32>
    %c1_66 = arith.constant 1 : index
    %c0_67 = arith.constant 0 : index
    %c0_68 = arith.constant 0 : index
    %77 = vector.load %arg6[%c1_66, %c0_67, %c0_68] : memref<9x4x4xf32, #tpu.memory_space<vmem>>, vector<1x4x4xf32>
    %78 = vector.shape_cast %77 : vector<1x4x4xf32> to vector<4x4xf32>
    %cst_69 = arith.constant dense<0.000000e+00> : vector<4x324xf32>
    %79 = tpu.matmul %78, %76, %cst_69 {dimension_numbers = #tpu.dot_dimension_numbers<[1], [0], [0], [1], [0, 0, 1, 1], [], []>} : vector<4x4xf32>, vector<4x324xf32>, vector<4x324xf32> -> vector<4x324xf32>
    %80 = arith.addf %75, %79 : vector<4x324xf32>
    %c4_70 = arith.constant 4 : index
    %c111_71 = arith.constant 111 : index
    %81 = vector.load %arg13[%c4_70, %c111_71] : memref<12x512xf32, #tpu.memory_space<vmem>>, vector<4x324xf32>
    %c2_72 = arith.constant 2 : index
    %c0_73 = arith.constant 0 : index
    %c0_74 = arith.constant 0 : index
    %82 = vector.load %arg6[%c2_72, %c0_73, %c0_74] : memref<9x4x4xf32, #tpu.memory_space<vmem>>, vector<1x4x4xf32>
    %83 = vector.shape_cast %82 : vector<1x4x4xf32> to vector<4x4xf32>
    %cst_75 = arith.constant dense<0.000000e+00> : vector<4x324xf32>
    %84 = tpu.matmul %83, %81, %cst_75 {dimension_numbers = #tpu.dot_dimension_numbers<[1], [0], [0], [1], [0, 0, 1, 1], [], []>} : vector<4x4xf32>, vector<4x324xf32>, vector<4x324xf32> -> vector<4x324xf32>
    %85 = arith.addf %80, %84 : vector<4x324xf32>
    %c4_76 = arith.constant 4 : index
    %c127_77 = arith.constant 127 : index
    %86 = vector.load %arg13[%c4_76, %c127_77] : memref<12x512xf32, #tpu.memory_space<vmem>>, vector<4x324xf32>
    %c3_78 = arith.constant 3 : index
    %c0_79 = arith.constant 0 : index
    %c0_80 = arith.constant 0 : index
    %87 = vector.load %arg6[%c3_78, %c0_79, %c0_80] : memref<9x4x4xf32, #tpu.memory_space<vmem>>, vector<1x4x4xf32>
    %88 = vector.shape_cast %87 : vector<1x4x4xf32> to vector<4x4xf32>
    %cst_81 = arith.constant dense<0.000000e+00> : vector<4x324xf32>
    %89 = tpu.matmul %88, %86, %cst_81 {dimension_numbers = #tpu.dot_dimension_numbers<[1], [0], [0], [1], [0, 0, 1, 1], [], []>} : vector<4x4xf32>, vector<4x324xf32>, vector<4x324xf32> -> vector<4x324xf32>
    %90 = arith.addf %85, %89 : vector<4x324xf32>
    %c4_82 = arith.constant 4 : index
    %c128_83 = arith.constant 128 : index
    %91 = vector.load %arg13[%c4_82, %c128_83] : memref<12x512xf32, #tpu.memory_space<vmem>>, vector<4x324xf32>
    %c4_84 = arith.constant 4 : index
    %c0_85 = arith.constant 0 : index
    %c0_86 = arith.constant 0 : index
    %92 = vector.load %arg6[%c4_84, %c0_85, %c0_86] : memref<9x4x4xf32, #tpu.memory_space<vmem>>, vector<1x4x4xf32>
    %93 = vector.shape_cast %92 : vector<1x4x4xf32> to vector<4x4xf32>
    %cst_87 = arith.constant dense<0.000000e+00> : vector<4x324xf32>
    %94 = tpu.matmul %93, %91, %cst_87 {dimension_numbers = #tpu.dot_dimension_numbers<[1], [0], [0], [1], [0, 0, 1, 1], [], []>} : vector<4x4xf32>, vector<4x324xf32>, vector<4x324xf32> -> vector<4x324xf32>
    %95 = arith.addf %90, %94 : vector<4x324xf32>
    %c4_88 = arith.constant 4 : index
    %c129_89 = arith.constant 129 : index
    %96 = vector.load %arg13[%c4_88, %c129_89] : memref<12x512xf32, #tpu.memory_space<vmem>>, vector<4x324xf32>
    %c5_90 = arith.constant 5 : index
    %c0_91 = arith.constant 0 : index
    %c0_92 = arith.constant 0 : index
    %97 = vector.load %arg6[%c5_90, %c0_91, %c0_92] : memref<9x4x4xf32, #tpu.memory_space<vmem>>, vector<1x4x4xf32>
    %98 = vector.shape_cast %97 : vector<1x4x4xf32> to vector<4x4xf32>
    %cst_93 = arith.constant dense<0.000000e+00> : vector<4x324xf32>
    %99 = tpu.matmul %98, %96, %cst_93 {dimension_numbers = #tpu.dot_dimension_numbers<[1], [0], [0], [1], [0, 0, 1, 1], [], []>} : vector<4x4xf32>, vector<4x324xf32>, vector<4x324xf32> -> vector<4x324xf32>
    %100 = arith.addf %95, %99 : vector<4x324xf32>
    %c4_94 = arith.constant 4 : index
    %c145_95 = arith.constant 145 : index
    %101 = vector.load %arg13[%c4_94, %c145_95] : memref<12x512xf32, #tpu.memory_space<vmem>>, vector<4x324xf32>
    %c6_96 = arith.constant 6 : index
    %c0_97 = arith.constant 0 : index
    %c0_98 = arith.constant 0 : index
    %102 = vector.load %arg6[%c6_96, %c0_97, %c0_98] : memref<9x4x4xf32, #tpu.memory_space<vmem>>, vector<1x4x4xf32>
    %103 = vector.shape_cast %102 : vector<1x4x4xf32> to vector<4x4xf32>
    %cst_99 = arith.constant dense<0.000000e+00> : vector<4x324xf32>
    %104 = tpu.matmul %103, %101, %cst_99 {dimension_numbers = #tpu.dot_dimension_numbers<[1], [0], [0], [1], [0, 0, 1, 1], [], []>} : vector<4x4xf32>, vector<4x324xf32>, vector<4x324xf32> -> vector<4x324xf32>
    %105 = arith.addf %100, %104 : vector<4x324xf32>
    %c4_100 = arith.constant 4 : index
    %c146_101 = arith.constant 146 : index
    %106 = vector.load %arg13[%c4_100, %c146_101] : memref<12x512xf32, #tpu.memory_space<vmem>>, vector<4x324xf32>
    %c7_102 = arith.constant 7 : index
    %c0_103 = arith.constant 0 : index
    %c0_104 = arith.constant 0 : index
    %107 = vector.load %arg6[%c7_102, %c0_103, %c0_104] : memref<9x4x4xf32, #tpu.memory_space<vmem>>, vector<1x4x4xf32>
    %108 = vector.shape_cast %107 : vector<1x4x4xf32> to vector<4x4xf32>
    %cst_105 = arith.constant dense<0.000000e+00> : vector<4x324xf32>
    %109 = tpu.matmul %108, %106, %cst_105 {dimension_numbers = #tpu.dot_dimension_numbers<[1], [0], [0], [1], [0, 0, 1, 1], [], []>} : vector<4x4xf32>, vector<4x324xf32>, vector<4x324xf32> -> vector<4x324xf32>
    %110 = arith.addf %105, %109 : vector<4x324xf32>
    %c4_106 = arith.constant 4 : index
    %c147_107 = arith.constant 147 : index
    %111 = vector.load %arg13[%c4_106, %c147_107] : memref<12x512xf32, #tpu.memory_space<vmem>>, vector<4x324xf32>
    %c8_108 = arith.constant 8 : index
    %c0_109 = arith.constant 0 : index
    %c0_110 = arith.constant 0 : index
    %112 = vector.load %arg6[%c8_108, %c0_109, %c0_110] : memref<9x4x4xf32, #tpu.memory_space<vmem>>, vector<1x4x4xf32>
    %113 = vector.shape_cast %112 : vector<1x4x4xf32> to vector<4x4xf32>
    %cst_111 = arith.constant dense<0.000000e+00> : vector<4x324xf32>
    %114 = tpu.matmul %113, %111, %cst_111 {dimension_numbers = #tpu.dot_dimension_numbers<[1], [0], [0], [1], [0, 0, 1, 1], [], []>} : vector<4x4xf32>, vector<4x324xf32>, vector<4x324xf32> -> vector<4x324xf32>
    %115 = arith.addf %110, %114 : vector<4x324xf32>
    %cst_112 = arith.constant 0.000000e+00 : f32
    %116 = vector.broadcast %cst_112 : f32 to vector<4x324xf32>
    %117 = arith.maximumf %115, %116 : vector<4x324xf32>
    %118 = vector.broadcast %2 : vector<1x324xf32> to vector<4x324xf32>
    %119 = arith.mulf %117, %118 : vector<4x324xf32>
    %c8_113 = arith.constant 8 : index
    %c128_114 = arith.constant 128 : index
    %120 = vector.load %arg13[%c8_113, %c128_114] : memref<12x512xf32, #tpu.memory_space<vmem>>, vector<4x324xf32>
    tpu.vector_store %arg13[%c8_113, %c128_114], %119 {strides = array<i32>} : memref<12x512xf32, #tpu.memory_space<vmem>>, vector<4x324xf32>,
    %c4_115 = arith.constant 4 : index
    %c128_116 = arith.constant 128 : index
    %121 = vector.load %arg13[%c4_115, %c128_116] : memref<12x512xf32, #tpu.memory_space<vmem>>, vector<4x324xf32>
    tpu.vector_store %arg13[%c4_115, %c128_116], %61 {strides = array<i32>} : memref<12x512xf32, #tpu.memory_space<vmem>>, vector<4x324xf32>,
    %c0_117 = arith.constant 0 : index
    %c0_118 = arith.constant 0 : index
    %122 = vector.load %arg9[%c0_117, %c0_118] : memref<4x1xf32, #tpu.memory_space<vmem>>, vector<4x1xf32>
    %123 = vector.shape_cast %122 : vector<4x1xf32> to vector<4x1xf32>
    %124 = vector.broadcast %123 : vector<4x1xf32> to vector<4x324xf32>
    %c4_119 = arith.constant 4 : index
    %c109_120 = arith.constant 109 : index
    %125 = vector.load %arg13[%c4_119, %c109_120] : memref<12x512xf32, #tpu.memory_space<vmem>>, vector<8x324xf32>
    %c0_121 = arith.constant 0 : index
    %c0_122 = arith.constant 0 : index
    %c0_123 = arith.constant 0 : index
    %126 = vector.load %arg8[%c0_121, %c0_122, %c0_123] : memref<9x4x8xf32, #tpu.memory_space<vmem>>, vector<1x4x8xf32>
    %127 = vector.shape_cast %126 : vector<1x4x8xf32> to vector<4x8xf32>
    %cst_124 = arith.constant dense<0.000000e+00> : vector<4x324xf32>
    %128 = tpu.matmul %127, %125, %cst_124 {dimension_numbers = #tpu.dot_dimension_numbers<[1], [0], [0], [1], [0, 0, 1, 1], [], []>} : vector<4x8xf32>, vector<8x324xf32>, vector<4x324xf32> -> vector<4x324xf32>
    %129 = arith.addf %124, %128 : vector<4x324xf32>
    %c4_125 = arith.constant 4 : index
    %c110_126 = arith.constant 110 : index
    %130 = vector.load %arg13[%c4_125, %c110_126] : memref<12x512xf32, #tpu.memory_space<vmem>>, vector<8x324xf32>
    %c1_127 = arith.constant 1 : index
    %c0_128 = arith.constant 0 : index
    %c0_129 = arith.constant 0 : index
    %131 = vector.load %arg8[%c1_127, %c0_128, %c0_129] : memref<9x4x8xf32, #tpu.memory_space<vmem>>, vector<1x4x8xf32>
    %132 = vector.shape_cast %131 : vector<1x4x8xf32> to vector<4x8xf32>
    %cst_130 = arith.constant dense<0.000000e+00> : vector<4x324xf32>
    %133 = tpu.matmul %132, %130, %cst_130 {dimension_numbers = #tpu.dot_dimension_numbers<[1], [0], [0], [1], [0, 0, 1, 1], [], []>} : vector<4x8xf32>, vector<8x324xf32>, vector<4x324xf32> -> vector<4x324xf32>
    %134 = arith.addf %129, %133 : vector<4x324xf32>
    %c4_131 = arith.constant 4 : index
    %c111_132 = arith.constant 111 : index
    %135 = vector.load %arg13[%c4_131, %c111_132] : memref<12x512xf32, #tpu.memory_space<vmem>>, vector<8x324xf32>
    %c2_133 = arith.constant 2 : index
    %c0_134 = arith.constant 0 : index
    %c0_135 = arith.constant 0 : index
    %136 = vector.load %arg8[%c2_133, %c0_134, %c0_135] : memref<9x4x8xf32, #tpu.memory_space<vmem>>, vector<1x4x8xf32>
    %137 = vector.shape_cast %136 : vector<1x4x8xf32> to vector<4x8xf32>
    %cst_136 = arith.constant dense<0.000000e+00> : vector<4x324xf32>
    %138 = tpu.matmul %137, %135, %cst_136 {dimension_numbers = #tpu.dot_dimension_numbers<[1], [0], [0], [1], [0, 0, 1, 1], [], []>} : vector<4x8xf32>, vector<8x324xf32>, vector<4x324xf32> -> vector<4x324xf32>
    %139 = arith.addf %134, %138 : vector<4x324xf32>
    %c4_137 = arith.constant 4 : index
    %c127_138 = arith.constant 127 : index
    %140 = vector.load %arg13[%c4_137, %c127_138] : memref<12x512xf32, #tpu.memory_space<vmem>>, vector<8x324xf32>
    %c3_139 = arith.constant 3 : index
    %c0_140 = arith.constant 0 : index
    %c0_141 = arith.constant 0 : index
    %141 = vector.load %arg8[%c3_139, %c0_140, %c0_141] : memref<9x4x8xf32, #tpu.memory_space<vmem>>, vector<1x4x8xf32>
    %142 = vector.shape_cast %141 : vector<1x4x8xf32> to vector<4x8xf32>
    %cst_142 = arith.constant dense<0.000000e+00> : vector<4x324xf32>
    %143 = tpu.matmul %142, %140, %cst_142 {dimension_numbers = #tpu.dot_dimension_numbers<[1], [0], [0], [1], [0, 0, 1, 1], [], []>} : vector<4x8xf32>, vector<8x324xf32>, vector<4x324xf32> -> vector<4x324xf32>
    %144 = arith.addf %139, %143 : vector<4x324xf32>
    %c4_143 = arith.constant 4 : index
    %c128_144 = arith.constant 128 : index
    %145 = vector.load %arg13[%c4_143, %c128_144] : memref<12x512xf32, #tpu.memory_space<vmem>>, vector<8x324xf32>
    %c4_145 = arith.constant 4 : index
    %c0_146 = arith.constant 0 : index
    %c0_147 = arith.constant 0 : index
    %146 = vector.load %arg8[%c4_145, %c0_146, %c0_147] : memref<9x4x8xf32, #tpu.memory_space<vmem>>, vector<1x4x8xf32>
    %147 = vector.shape_cast %146 : vector<1x4x8xf32> to vector<4x8xf32>
    %cst_148 = arith.constant dense<0.000000e+00> : vector<4x324xf32>
    %148 = tpu.matmul %147, %145, %cst_148 {dimension_numbers = #tpu.dot_dimension_numbers<[1], [0], [0], [1], [0, 0, 1, 1], [], []>} : vector<4x8xf32>, vector<8x324xf32>, vector<4x324xf32> -> vector<4x324xf32>
    %149 = arith.addf %144, %148 : vector<4x324xf32>
    %c4_149 = arith.constant 4 : index
    %c129_150 = arith.constant 129 : index
    %150 = vector.load %arg13[%c4_149, %c129_150] : memref<12x512xf32, #tpu.memory_space<vmem>>, vector<8x324xf32>
    %c5_151 = arith.constant 5 : index
    %c0_152 = arith.constant 0 : index
    %c0_153 = arith.constant 0 : index
    %151 = vector.load %arg8[%c5_151, %c0_152, %c0_153] : memref<9x4x8xf32, #tpu.memory_space<vmem>>, vector<1x4x8xf32>
    %152 = vector.shape_cast %151 : vector<1x4x8xf32> to vector<4x8xf32>
    %cst_154 = arith.constant dense<0.000000e+00> : vector<4x324xf32>
    %153 = tpu.matmul %152, %150, %cst_154 {dimension_numbers = #tpu.dot_dimension_numbers<[1], [0], [0], [1], [0, 0, 1, 1], [], []>} : vector<4x8xf32>, vector<8x324xf32>, vector<4x324xf32> -> vector<4x324xf32>
    %154 = arith.addf %149, %153 : vector<4x324xf32>
    %c4_155 = arith.constant 4 : index
    %c145_156 = arith.constant 145 : index
    %155 = vector.load %arg13[%c4_155, %c145_156] : memref<12x512xf32, #tpu.memory_space<vmem>>, vector<8x324xf32>
    %c6_157 = arith.constant 6 : index
    %c0_158 = arith.constant 0 : index
    %c0_159 = arith.constant 0 : index
    %156 = vector.load %arg8[%c6_157, %c0_158, %c0_159] : memref<9x4x8xf32, #tpu.memory_space<vmem>>, vector<1x4x8xf32>
    %157 = vector.shape_cast %156 : vector<1x4x8xf32> to vector<4x8xf32>
    %cst_160 = arith.constant dense<0.000000e+00> : vector<4x324xf32>
    %158 = tpu.matmul %157, %155, %cst_160 {dimension_numbers = #tpu.dot_dimension_numbers<[1], [0], [0], [1], [0, 0, 1, 1], [], []>} : vector<4x8xf32>, vector<8x324xf32>, vector<4x324xf32> -> vector<4x324xf32>
    %159 = arith.addf %154, %158 : vector<4x324xf32>
    %c4_161 = arith.constant 4 : index
    %c146_162 = arith.constant 146 : index
    %160 = vector.load %arg13[%c4_161, %c146_162] : memref<12x512xf32, #tpu.memory_space<vmem>>, vector<8x324xf32>
    %c7_163 = arith.constant 7 : index
    %c0_164 = arith.constant 0 : index
    %c0_165 = arith.constant 0 : index
    %161 = vector.load %arg8[%c7_163, %c0_164, %c0_165] : memref<9x4x8xf32, #tpu.memory_space<vmem>>, vector<1x4x8xf32>
    %162 = vector.shape_cast %161 : vector<1x4x8xf32> to vector<4x8xf32>
    %cst_166 = arith.constant dense<0.000000e+00> : vector<4x324xf32>
    %163 = tpu.matmul %162, %160, %cst_166 {dimension_numbers = #tpu.dot_dimension_numbers<[1], [0], [0], [1], [0, 0, 1, 1], [], []>} : vector<4x8xf32>, vector<8x324xf32>, vector<4x324xf32> -> vector<4x324xf32>
    %164 = arith.addf %159, %163 : vector<4x324xf32>
    %c4_167 = arith.constant 4 : index
    %c147_168 = arith.constant 147 : index
    %165 = vector.load %arg13[%c4_167, %c147_168] : memref<12x512xf32, #tpu.memory_space<vmem>>, vector<8x324xf32>
    %c8_169 = arith.constant 8 : index
    %c0_170 = arith.constant 0 : index
    %c0_171 = arith.constant 0 : index
    %166 = vector.load %arg8[%c8_169, %c0_170, %c0_171] : memref<9x4x8xf32, #tpu.memory_space<vmem>>, vector<1x4x8xf32>
    %167 = vector.shape_cast %166 : vector<1x4x8xf32> to vector<4x8xf32>
    %cst_172 = arith.constant dense<0.000000e+00> : vector<4x324xf32>
    %168 = tpu.matmul %167, %165, %cst_172 {dimension_numbers = #tpu.dot_dimension_numbers<[1], [0], [0], [1], [0, 0, 1, 1], [], []>} : vector<4x8xf32>, vector<8x324xf32>, vector<4x324xf32> -> vector<4x324xf32>
    %169 = arith.addf %164, %168 : vector<4x324xf32>
    %170 = vector.broadcast %2 : vector<1x324xf32> to vector<4x324xf32>
    %171 = arith.mulf %169, %170 : vector<4x324xf32>
    %c4_173 = arith.constant 4 : index
    %c128_174 = arith.constant 128 : index
    %172 = vector.load %arg13[%c4_173, %c128_174] : memref<12x512xf32, #tpu.memory_space<vmem>>, vector<4x324xf32>
    tpu.vector_store %arg13[%c4_173, %c128_174], %171 {strides = array<i32>} : memref<12x512xf32, #tpu.memory_space<vmem>>, vector<4x324xf32>,
    %c0_175 = arith.constant 0 : index
    %c0_176 = arith.constant 0 : index
    %173 = vector.load %arg11[%c0_175, %c0_176] : memref<4x1xf32, #tpu.memory_space<vmem>>, vector<4x1xf32>
    %174 = vector.shape_cast %173 : vector<4x1xf32> to vector<4x1xf32>
    %175 = vector.broadcast %174 : vector<4x1xf32> to vector<4x324xf32>
    %c0_177 = arith.constant 0 : index
    %c109_178 = arith.constant 109 : index
    %176 = vector.load %arg13[%c0_177, %c109_178] : memref<12x512xf32, #tpu.memory_space<vmem>>, vector<8x324xf32>
    %c0_179 = arith.constant 0 : index
    %c0_180 = arith.constant 0 : index
    %c0_181 = arith.constant 0 : index
    %177 = vector.load %arg10[%c0_179, %c0_180, %c0_181] : memref<9x4x8xf32, #tpu.memory_space<vmem>>, vector<1x4x8xf32>
    %178 = vector.shape_cast %177 : vector<1x4x8xf32> to vector<4x8xf32>
    %cst_182 = arith.constant dense<0.000000e+00> : vector<4x324xf32>
    %179 = tpu.matmul %178, %176, %cst_182 {dimension_numbers = #tpu.dot_dimension_numbers<[1], [0], [0], [1], [0, 0, 1, 1], [], []>} : vector<4x8xf32>, vector<8x324xf32>, vector<4x324xf32> -> vector<4x324xf32>
    %180 = arith.addf %175, %179 : vector<4x324xf32>
    %c0_183 = arith.constant 0 : index
    %c110_184 = arith.constant 110 : index
    %181 = vector.load %arg13[%c0_183, %c110_184] : memref<12x512xf32, #tpu.memory_space<vmem>>, vector<8x324xf32>
    %c1_185 = arith.constant 1 : index
    %c0_186 = arith.constant 0 : index
    %c0_187 = arith.constant 0 : index
    %182 = vector.load %arg10[%c1_185, %c0_186, %c0_187] : memref<9x4x8xf32, #tpu.memory_space<vmem>>, vector<1x4x8xf32>
    %183 = vector.shape_cast %182 : vector<1x4x8xf32> to vector<4x8xf32>
    %cst_188 = arith.constant dense<0.000000e+00> : vector<4x324xf32>
    %184 = tpu.matmul %183, %181, %cst_188 {dimension_numbers = #tpu.dot_dimension_numbers<[1], [0], [0], [1], [0, 0, 1, 1], [], []>} : vector<4x8xf32>, vector<8x324xf32>, vector<4x324xf32> -> vector<4x324xf32>
    %185 = arith.addf %180, %184 : vector<4x324xf32>
    %c0_189 = arith.constant 0 : index
    %c111_190 = arith.constant 111 : index
    %186 = vector.load %arg13[%c0_189, %c111_190] : memref<12x512xf32, #tpu.memory_space<vmem>>, vector<8x324xf32>
    %c2_191 = arith.constant 2 : index
    %c0_192 = arith.constant 0 : index
    %c0_193 = arith.constant 0 : index
    %187 = vector.load %arg10[%c2_191, %c0_192, %c0_193] : memref<9x4x8xf32, #tpu.memory_space<vmem>>, vector<1x4x8xf32>
    %188 = vector.shape_cast %187 : vector<1x4x8xf32> to vector<4x8xf32>
    %cst_194 = arith.constant dense<0.000000e+00> : vector<4x324xf32>
    %189 = tpu.matmul %188, %186, %cst_194 {dimension_numbers = #tpu.dot_dimension_numbers<[1], [0], [0], [1], [0, 0, 1, 1], [], []>} : vector<4x8xf32>, vector<8x324xf32>, vector<4x324xf32> -> vector<4x324xf32>
    %190 = arith.addf %185, %189 : vector<4x324xf32>
    %c0_195 = arith.constant 0 : index
    %c127_196 = arith.constant 127 : index
    %191 = vector.load %arg13[%c0_195, %c127_196] : memref<12x512xf32, #tpu.memory_space<vmem>>, vector<8x324xf32>
    %c3_197 = arith.constant 3 : index
    %c0_198 = arith.constant 0 : index
    %c0_199 = arith.constant 0 : index
    %192 = vector.load %arg10[%c3_197, %c0_198, %c0_199] : memref<9x4x8xf32, #tpu.memory_space<vmem>>, vector<1x4x8xf32>
    %193 = vector.shape_cast %192 : vector<1x4x8xf32> to vector<4x8xf32>
    %cst_200 = arith.constant dense<0.000000e+00> : vector<4x324xf32>
    %194 = tpu.matmul %193, %191, %cst_200 {dimension_numbers = #tpu.dot_dimension_numbers<[1], [0], [0], [1], [0, 0, 1, 1], [], []>} : vector<4x8xf32>, vector<8x324xf32>, vector<4x324xf32> -> vector<4x324xf32>
    %195 = arith.addf %190, %194 : vector<4x324xf32>
    %c0_201 = arith.constant 0 : index
    %c128_202 = arith.constant 128 : index
    %196 = vector.load %arg13[%c0_201, %c128_202] : memref<12x512xf32, #tpu.memory_space<vmem>>, vector<8x324xf32>
    %c4_203 = arith.constant 4 : index
    %c0_204 = arith.constant 0 : index
    %c0_205 = arith.constant 0 : index
    %197 = vector.load %arg10[%c4_203, %c0_204, %c0_205] : memref<9x4x8xf32, #tpu.memory_space<vmem>>, vector<1x4x8xf32>
    %198 = vector.shape_cast %197 : vector<1x4x8xf32> to vector<4x8xf32>
    %cst_206 = arith.constant dense<0.000000e+00> : vector<4x324xf32>
    %199 = tpu.matmul %198, %196, %cst_206 {dimension_numbers = #tpu.dot_dimension_numbers<[1], [0], [0], [1], [0, 0, 1, 1], [], []>} : vector<4x8xf32>, vector<8x324xf32>, vector<4x324xf32> -> vector<4x324xf32>
    %200 = arith.addf %195, %199 : vector<4x324xf32>
    %c0_207 = arith.constant 0 : index
    %c129_208 = arith.constant 129 : index
    %201 = vector.load %arg13[%c0_207, %c129_208] : memref<12x512xf32, #tpu.memory_space<vmem>>, vector<8x324xf32>
    %c5_209 = arith.constant 5 : index
    %c0_210 = arith.constant 0 : index
    %c0_211 = arith.constant 0 : index
    %202 = vector.load %arg10[%c5_209, %c0_210, %c0_211] : memref<9x4x8xf32, #tpu.memory_space<vmem>>, vector<1x4x8xf32>
    %203 = vector.shape_cast %202 : vector<1x4x8xf32> to vector<4x8xf32>
    %cst_212 = arith.constant dense<0.000000e+00> : vector<4x324xf32>
    %204 = tpu.matmul %203, %201, %cst_212 {dimension_numbers = #tpu.dot_dimension_numbers<[1], [0], [0], [1], [0, 0, 1, 1], [], []>} : vector<4x8xf32>, vector<8x324xf32>, vector<4x324xf32> -> vector<4x324xf32>
    %205 = arith.addf %200, %204 : vector<4x324xf32>
    %c0_213 = arith.constant 0 : index
    %c145_214 = arith.constant 145 : index
    %206 = vector.load %arg13[%c0_213, %c145_214] : memref<12x512xf32, #tpu.memory_space<vmem>>, vector<8x324xf32>
    %c6_215 = arith.constant 6 : index
    %c0_216 = arith.constant 0 : index
    %c0_217 = arith.constant 0 : index
    %207 = vector.load %arg10[%c6_215, %c0_216, %c0_217] : memref<9x4x8xf32, #tpu.memory_space<vmem>>, vector<1x4x8xf32>
    %208 = vector.shape_cast %207 : vector<1x4x8xf32> to vector<4x8xf32>
    %cst_218 = arith.constant dense<0.000000e+00> : vector<4x324xf32>
    %209 = tpu.matmul %208, %206, %cst_218 {dimension_numbers = #tpu.dot_dimension_numbers<[1], [0], [0], [1], [0, 0, 1, 1], [], []>} : vector<4x8xf32>, vector<8x324xf32>, vector<4x324xf32> -> vector<4x324xf32>
    %210 = arith.addf %205, %209 : vector<4x324xf32>
    %c0_219 = arith.constant 0 : index
    %c146_220 = arith.constant 146 : index
    %211 = vector.load %arg13[%c0_219, %c146_220] : memref<12x512xf32, #tpu.memory_space<vmem>>, vector<8x324xf32>
    %c7_221 = arith.constant 7 : index
    %c0_222 = arith.constant 0 : index
    %c0_223 = arith.constant 0 : index
    %212 = vector.load %arg10[%c7_221, %c0_222, %c0_223] : memref<9x4x8xf32, #tpu.memory_space<vmem>>, vector<1x4x8xf32>
    %213 = vector.shape_cast %212 : vector<1x4x8xf32> to vector<4x8xf32>
    %cst_224 = arith.constant dense<0.000000e+00> : vector<4x324xf32>
    %214 = tpu.matmul %213, %211, %cst_224 {dimension_numbers = #tpu.dot_dimension_numbers<[1], [0], [0], [1], [0, 0, 1, 1], [], []>} : vector<4x8xf32>, vector<8x324xf32>, vector<4x324xf32> -> vector<4x324xf32>
    %215 = arith.addf %210, %214 : vector<4x324xf32>
    %c0_225 = arith.constant 0 : index
    %c147_226 = arith.constant 147 : index
    %216 = vector.load %arg13[%c0_225, %c147_226] : memref<12x512xf32, #tpu.memory_space<vmem>>, vector<8x324xf32>
    %c8_227 = arith.constant 8 : index
    %c0_228 = arith.constant 0 : index
    %c0_229 = arith.constant 0 : index
    %217 = vector.load %arg10[%c8_227, %c0_228, %c0_229] : memref<9x4x8xf32, #tpu.memory_space<vmem>>, vector<1x4x8xf32>
    %218 = vector.shape_cast %217 : vector<1x4x8xf32> to vector<4x8xf32>
    %cst_230 = arith.constant dense<0.000000e+00> : vector<4x324xf32>
    %219 = tpu.matmul %218, %216, %cst_230 {dimension_numbers = #tpu.dot_dimension_numbers<[1], [0], [0], [1], [0, 0, 1, 1], [], []>} : vector<4x8xf32>, vector<8x324xf32>, vector<4x324xf32> -> vector<4x324xf32>
    %220 = arith.addf %215, %219 : vector<4x324xf32>
    %c0_231 = arith.constant 0 : index
    %c0_232 = arith.constant 0 : index
    %c0_233 = arith.constant 0 : index
    %221 = vector.load %arg12[%c0_231, %c0_232, %c0_233] : memref<1x4x324xf32, #tpu.memory_space<vmem>>, vector<1x4x324xf32>
    %222 = vector.shape_cast %221 : vector<1x4x324xf32> to vector<4x324xf32>
    %223 = vector.shape_cast %220 : vector<4x324xf32> to vector<1x4x324xf32>
    tpu.vector_store %arg12[%c0_231, %c0_232, %c0_233], %223 {strides = array<i32>} : memref<1x4x324xf32, #tpu.memory_space<vmem>>, vector<1x4x324xf32>,
    return
  }
  func.func @transform_0(%arg0: i32) -> (i32, i32, i32) {
    %c0_i32 = arith.constant 0 : i32
    %c0_i32_0 = arith.constant 0 : i32
    %c0_i32_1 = arith.constant 0 : i32
    return %arg0, %c0_i32, %c0_i32_0 : i32, i32, i32
  }
  func.func @transform_1(%arg0: i32) -> (i32, i32, i32) {
    %c0_i32 = arith.constant 0 : i32
    %c0_i32_0 = arith.constant 0 : i32
    %c0_i32_1 = arith.constant 0 : i32
    return %arg0, %c0_i32, %c0_i32_0 : i32, i32, i32
  }
  func.func @transform_2(%arg0: i32) -> (i32, i32) {
    %c0_i32 = arith.constant 0 : i32
    %c0_i32_0 = arith.constant 0 : i32
    %c0_i32_1 = arith.constant 0 : i32
    return %c0_i32, %c0_i32_0 : i32, i32
  }
  func.func @transform_3(%arg0: i32) -> (i32, i32, i32) {
    %c0_i32 = arith.constant 0 : i32
    %c0_i32_0 = arith.constant 0 : i32
    %c0_i32_1 = arith.constant 0 : i32
    %c0_i32_2 = arith.constant 0 : i32
    return %c0_i32, %c0_i32_0, %c0_i32_1 : i32, i32, i32
  }
  func.func @transform_4(%arg0: i32) -> (i32, i32) {
    %c0_i32 = arith.constant 0 : i32
    %c0_i32_0 = arith.constant 0 : i32
    %c0_i32_1 = arith.constant 0 : i32
    return %c0_i32, %c0_i32_0 : i32, i32
  }
  func.func @transform_5(%arg0: i32) -> (i32, i32, i32) {
    %c0_i32 = arith.constant 0 : i32
    %c0_i32_0 = arith.constant 0 : i32
    %c0_i32_1 = arith.constant 0 : i32
    %c0_i32_2 = arith.constant 0 : i32
    return %c0_i32, %c0_i32_0, %c0_i32_1 : i32, i32, i32
  }
  func.func @transform_6(%arg0: i32) -> (i32, i32) {
    %c0_i32 = arith.constant 0 : i32
    %c0_i32_0 = arith.constant 0 : i32
    %c0_i32_1 = arith.constant 0 : i32
    return %c0_i32, %c0_i32_0 : i32, i32
  }
  func.func @transform_7(%arg0: i32) -> (i32, i32, i32) {
    %c0_i32 = arith.constant 0 : i32
    %c0_i32_0 = arith.constant 0 : i32
    %c0_i32_1 = arith.constant 0 : i32
    %c0_i32_2 = arith.constant 0 : i32
    return %c0_i32, %c0_i32_0, %c0_i32_1 : i32, i32, i32
  }
  func.func @transform_8(%arg0: i32) -> (i32, i32) {
    %c0_i32 = arith.constant 0 : i32
    %c0_i32_0 = arith.constant 0 : i32
    %c0_i32_1 = arith.constant 0 : i32
    return %c0_i32, %c0_i32_0 : i32, i32
  }
  func.func @transform_9(%arg0: i32) -> (i32, i32, i32) {
    %c0_i32 = arith.constant 0 : i32
    %c0_i32_0 = arith.constant 0 : i32
    %c0_i32_1 = arith.constant 0 : i32
    %c0_i32_2 = arith.constant 0 : i32
    return %c0_i32, %c0_i32_0, %c0_i32_1 : i32, i32, i32
  }
  func.func @transform_10(%arg0: i32) -> (i32, i32) {
    %c0_i32 = arith.constant 0 : i32
    %c0_i32_0 = arith.constant 0 : i32
    %c0_i32_1 = arith.constant 0 : i32
    return %c0_i32, %c0_i32_0 : i32, i32
  }
  func.func @transform_11(%arg0: i32) -> (i32, i32, i32) {
    %c0_i32 = arith.constant 0 : i32
    %c0_i32_0 = arith.constant 0 : i32
    %c0_i32_1 = arith.constant 0 : i32
    return %arg0, %c0_i32, %c0_i32_0 : i32, i32, i32
  }
}

</mosaic_0001>

<llo_original>
// kernel: refine_m_forward.1
$region0: #{refine_m_forward.1}
  #allocation0 [shape = 'u32[]', space=smem, size = 0x4, offset = 0x4, fixed_abs, tag = 'smem constant byte address 0x4 - core index']
  #allocation1 [shape = 'u32[144,128]{1,0:T(1,128)}', space=vmem, size = 0x12000, scoped, tag = 'internal scratch']
  #allocation2 [shape = 'f32[12,512]{1,0:T(8,128)}', space=vmem, size = 0x8000, scoped, tag = 'scratch operand']
  %s0 = inlined_call_operand.vmem [shape: f32[2,4,324], index: 0, kind: input, shape index: {}]
  %s1 = inlined_call_operand.vmem [shape: f32[2,4,324], index: 1, kind: input, shape index: {}]
  %s2 = inlined_call_operand.vmem [shape: f32[1,324], index: 2, kind: input, shape index: {}]
  %s3 = inlined_call_operand.vmem [shape: f32[9,8,8], index: 3, kind: input, shape index: {}]
  %s4 = inlined_call_operand.vmem [shape: f32[8,1], index: 4, kind: input, shape index: {}]
  %s5 = inlined_call_operand.vmem [shape: f32[9,4,4], index: 5, kind: input, shape index: {}]
  %s6 = inlined_call_operand.vmem [shape: f32[4,1], index: 6, kind: input, shape index: {}]
  %s7 = inlined_call_operand.vmem [shape: f32[9,4,8], index: 7, kind: input, shape index: {}]
  %s8 = inlined_call_operand.vmem [shape: f32[4,1], index: 8, kind: input, shape index: {}]
  %s9 = inlined_call_operand.vmem [shape: f32[9,4,8], index: 9, kind: input, shape index: {}]
  %s10 = inlined_call_operand.vmem [shape: f32[4,1], index: 10, kind: input, shape index: {}]
  %s11 = inlined_call_operand.vmem [shape: f32[2,4,324], index: 11, kind: output, shape index: {}]
  %s12 = sld [smem:[#allocation0]]
  $region77: #{refine_m_forward.1} parent=0
    _
  %s14 = ssub.s32 1, %s12
  %s15 = scalar_select 0, %s14, %s12
  loop: start=0, step=1, limit=4
  $region2: #{refine_m_forward.1} parent=0 // loop_pre_header
    _
  $region3: #{refine_m_forward.1} parent=0 // loop_header
    %s17 = sphi 0, %s21
    %p18 = scmp.ge.s32.totalorder %s17, 4
    %s27 = sphi 0, %s29
    %s30 = sphi 0, %s27
    %s31 = sphi 0, %s30
    %s47 = sphi 0, %s31
    %s53 = sphi 0, %s55
    %s56 = sphi 0, %s53
    %s57 = sphi 0, %s56
    %s73 = sphi 0, %s57
    %s77 = sphi 0, %s77
    %s79 = sphi 0, %s77
    %s80 = sphi 0, %s79
    %s94 = sphi 0, %s80
    %s98 = sphi 0, %s98
    %s100 = sphi 0, %s98
    %s101 = sphi 0, %s100
    %s115 = sphi 0, %s101
    %s119 = sphi 0, %s119
    %s121 = sphi 0, %s119
    %s122 = sphi 0, %s121
    %s136 = sphi 0, %s122
    %s140 = sphi 0, %s140
    %s142 = sphi 0, %s140
    %s143 = sphi 0, %s142
    %s157 = sphi 0, %s143
    %s161 = sphi 0, %s161
    %s163 = sphi 0, %s161
    %s164 = sphi 0, %s163
    %s178 = sphi 0, %s164
    %s182 = sphi 0, %s182
    %s184 = sphi 0, %s182
    %s185 = sphi 0, %s184
    %s199 = sphi 0, %s185
    %s203 = sphi 0, %s203
    %s205 = sphi 0, %s203
    %s206 = sphi 0, %s205
    %s220 = sphi 0, %s206
    %s224 = sphi 0, %s224
    %s226 = sphi 0, %s224
    %s227 = sphi 0, %s226
    %s241 = sphi 0, %s227
    %s245 = sphi 0, %s245
    %s247 = sphi 0, %s245
    %s248 = sphi 0, %s247
    %s262 = sphi 0, %s248
    %s268 = sphi 0, %s270
    %s271 = sphi 0, %s268
    %s272 = sphi 0, %s271
    %s288 = sphi 0, %s272
  $region4: #{refine_m_forward.1} parent=0 // loop_header_branch
    %20 = sbr.rel (%p18) target = $region8
  $region5: #{refine_m_forward.1} parent=0 // loop_body
    %s22 = ssub.s32 %s17, 1
    %s23 = ssub.s32 %s17, 2
    %s24 = sadd.s32 %s17, 1
    %s25 = ssub.s32 %s17, %s24
    %p26 = scmp.eq.s32.totalorder %s25, 0
    %s28 = sadd.s32 %s27, 1
    %s29 = scalar_select %p26, %s27, %s28
    %p32 = pneg %p26
    %p33 = scmp.eq.s32.totalorder %s17, 1
    %p34 = por %p32, %p33
    %p35 = scmp.ne.s32.totalorder %s27, %s30
    %p36 = scmp.eq.s32.totalorder %s17, 0
    %p37 = por %p35, %p36
    %p38 = scmp.ne.s32.totalorder %s27, %s30
    %p39 = scmp.eq.s32.totalorder %s22, 1
    %p40 = por %p38, %p39
    %p41 = scmp.ne.s32.totalorder %s30, %s31
    %p42 = scmp.eq.s32.totalorder %s22, 0
    %p43 = por %p41, %p42
    %p44 = scmp.ne.s32.totalorder %s30, %s31
    %p45 = scmp.eq.s32.totalorder %s23, 1
    %p46 = por %p44, %p45
    %p48 = scmp.ne.s32.totalorder %s31, %s47
    %p49 = scmp.eq.s32.totalorder %s23, 0
    %p50 = por %p48, %p49
    %s51 = ssub.s32 %s17, %s24
    %p52 = scmp.eq.s32.totalorder %s51, 0
    %s54 = sadd.s32 %s53, 1
    %s55 = scalar_select %p52, %s53, %s54
    %p58 = pneg %p52
    %p59 = scmp.eq.s32.totalorder %s17, 1
    %p60 = por %p58, %p59
    %p61 = scmp.ne.s32.totalorder %s53, %s56
    %p62 = scmp.eq.s32.totalorder %s17, 0
    %p63 = por %p61, %p62
    %p64 = scmp.ne.s32.totalorder %s53, %s56
    %p65 = scmp.eq.s32.totalorder %s22, 1
    %p66 = por %p64, %p65
    %p67 = scmp.ne.s32.totalorder %s56, %s57
    %p68 = scmp.eq.s32.totalorder %s22, 0
    %p69 = por %p67, %p68
    %p70 = scmp.ne.s32.totalorder %s56, %s57
    %p71 = scmp.eq.s32.totalorder %s23, 1
    %p72 = por %p70, %p71
    %p74 = scmp.ne.s32.totalorder %s57, %s73
    %p75 = scmp.eq.s32.totalorder %s23, 0
    %p76 = por %p74, %p75
    %s78 = sadd.s32 %s77, 1
    %p81 = scmp.eq.s32.totalorder %s17, 1
    %p82 = scmp.ne.s32.totalorder %s77, %s79
    %p83 = scmp.eq.s32.totalorder %s17, 0
    %p84 = por %p82, %p83
    %p85 = scmp.ne.s32.totalorder %s77, %s79
    %p86 = scmp.eq.s32.totalorder %s22, 1
    %p87 = por %p85, %p86
    %p88 = scmp.ne.s32.totalorder %s79, %s80
    %p89 = scmp.eq.s32.totalorder %s22, 0
    %p90 = por %p88, %p89
    %p91 = scmp.ne.s32.totalorder %s79, %s80
    %p92 = scmp.eq.s32.totalorder %s23, 1
    %p93 = por %p91, %p92
    %p95 = scmp.ne.s32.totalorder %s80, %s94
    %p96 = scmp.eq.s32.totalorder %s23, 0
    %p97 = por %p95, %p96
    %s99 = sadd.s32 %s98, 1
    %p102 = scmp.eq.s32.totalorder %s17, 1
    %p103 = scmp.ne.s32.totalorder %s98, %s100
    %p104 = scmp.eq.s32.totalorder %s17, 0
    %p105 = por %p103, %p104
    %p106 = scmp.ne.s32.totalorder %s98, %s100
    %p107 = scmp.eq.s32.totalorder %s22, 1
    %p108 = por %p106, %p107
    %p109 = scmp.ne.s32.totalorder %s100, %s101
    %p110 = scmp.eq.s32.totalorder %s22, 0
    %p111 = por %p109, %p110
    %p112 = scmp.ne.s32.totalorder %s100, %s101
    %p113 = scmp.eq.s32.totalorder %s23, 1
    %p114 = por %p112, %p113
    %p116 = scmp.ne.s32.totalorder %s101, %s115
    %p117 = scmp.eq.s32.totalorder %s23, 0
    %p118 = por %p116, %p117
    %s120 = sadd.s32 %s119, 1
    %p123 = scmp.eq.s32.totalorder %s17, 1
    %p124 = scmp.ne.s32.totalorder %s119, %s121
    %p125 = scmp.eq.s32.totalorder %s17, 0
    %p126 = por %p124, %p125
    %p127 = scmp.ne.s32.totalorder %s119, %s121
    %p128 = scmp.eq.s32.totalorder %s22, 1
    %p129 = por %p127, %p128
    %p130 = scmp.ne.s32.totalorder %s121, %s122
    %p131 = scmp.eq.s32.totalorder %s22, 0
    %p132 = por %p130, %p131
    %p133 = scmp.ne.s32.totalorder %s121, %s122
    %p134 = scmp.eq.s32.totalorder %s23, 1
    %p135 = por %p133, %p134
    %p137 = scmp.ne.s32.totalorder %s122, %s136
    %p138 = scmp.eq.s32.totalorder %s23, 0
    %p139 = por %p137, %p138
    %s141 = sadd.s32 %s140, 1
    %p144 = scmp.eq.s32.totalorder %s17, 1
    %p145 = scmp.ne.s32.totalorder %s140, %s142
    %p146 = scmp.eq.s32.totalorder %s17, 0
    %p147 = por %p145, %p146
    %p148 = scmp.ne.s32.totalorder %s140, %s142
    %p149 = scmp.eq.s32.totalorder %s22, 1
    %p150 = por %p148, %p149
    %p151 = scmp.ne.s32.totalorder %s142, %s143
    %p152 = scmp.eq.s32.totalorder %s22, 0
    %p153 = por %p151, %p152
    %p154 = scmp.ne.s32.totalorder %s142, %s143
    %p155 = scmp.eq.s32.totalorder %s23, 1
    %p156 = por %p154, %p155
    %p158 = scmp.ne.s32.totalorder %s143, %s157
    %p159 = scmp.eq.s32.totalorder %s23, 0
    %p160 = por %p158, %p159
    %s162 = sadd.s32 %s161, 1
    %p165 = scmp.eq.s32.totalorder %s17, 1
    %p166 = scmp.ne.s32.totalorder %s161, %s163
    %p167 = scmp.eq.s32.totalorder %s17, 0
    %p168 = por %p166, %p167
    %p169 = scmp.ne.s32.totalorder %s161, %s163
    %p170 = scmp.eq.s32.totalorder %s22, 1
    %p171 = por %p169, %p170
    %p172 = scmp.ne.s32.totalorder %s163, %s164
    %p173 = scmp.eq.s32.totalorder %s22, 0
    %p174 = por %p172, %p173
    %p175 = scmp.ne.s32.totalorder %s163, %s164
    %p176 = scmp.eq.s32.totalorder %s23, 1
    %p177 = por %p175, %p176
    %p179 = scmp.ne.s32.totalorder %s164, %s178
    %p180 = scmp.eq.s32.totalorder %s23, 0
    %p181 = por %p179, %p180
    %s183 = sadd.s32 %s182, 1
    %p186 = scmp.eq.s32.totalorder %s17, 1
    %p187 = scmp.ne.s32.totalorder %s182, %s184
    %p188 = scmp.eq.s32.totalorder %s17, 0
    %p189 = por %p187, %p188
    %p190 = scmp.ne.s32.totalorder %s182, %s184
    %p191 = scmp.eq.s32.totalorder %s22, 1
    %p192 = por %p190, %p191
    %p193 = scmp.ne.s32.totalorder %s184, %s185
    %p194 = scmp.eq.s32.totalorder %s22, 0
    %p195 = por %p193, %p194
    %p196 = scmp.ne.s32.totalorder %s184, %s185
    %p197 = scmp.eq.s32.totalorder %s23, 1
    %p198 = por %p196, %p197
    %p200 = scmp.ne.s32.totalorder %s185, %s199
    %p201 = scmp.eq.s32.totalorder %s23, 0
    %p202 = por %p200, %p201
    %s204 = sadd.s32 %s203, 1
    %p207 = scmp.eq.s32.totalorder %s17, 1
    %p208 = scmp.ne.s32.totalorder %s203, %s205
    %p209 = scmp.eq.s32.totalorder %s17, 0
    %p210 = por %p208, %p209
    %p211 = scmp.ne.s32.totalorder %s203, %s205
    %p212 = scmp.eq.s32.totalorder %s22, 1
    %p213 = por %p211, %p212
    %p214 = scmp.ne.s32.totalorder %s205, %s206
    %p215 = scmp.eq.s32.totalorder %s22, 0
    %p216 = por %p214, %p215
    %p217 = scmp.ne.s32.totalorder %s205, %s206
    %p218 = scmp.eq.s32.totalorder %s23, 1
    %p219 = por %p217, %p218
    %p221 = scmp.ne.s32.totalorder %s206, %s220
    %p222 = scmp.eq.s32.totalorder %s23, 0
    %p223 = por %p221, %p222
    %s225 = sadd.s32 %s224, 1
    %p228 = scmp.eq.s32.totalorder %s17, 1
    %p229 = scmp.ne.s32.totalorder %s224, %s226
    %p230 = scmp.eq.s32.totalorder %s17, 0
    %p231 = por %p229, %p230
    %p232 = scmp.ne.s32.totalorder %s224, %s226
    %p233 = scmp.eq.s32.totalorder %s22, 1
    %p234 = por %p232, %p233
    %p235 = scmp.ne.s32.totalorder %s226, %s227
    %p236 = scmp.eq.s32.totalorder %s22, 0
    %p237 = por %p235, %p236
    %p238 = scmp.ne.s32.totalorder %s226, %s227
    %p239 = scmp.eq.s32.totalorder %s23, 1
    %p240 = por %p238, %p239
    %p242 = scmp.ne.s32.totalorder %s227, %s241
    %p243 = scmp.eq.s32.totalorder %s23, 0
    %p244 = por %p242, %p243
    %s246 = sadd.s32 %s245, 1
    %p249 = scmp.eq.s32.totalorder %s17, 1
    %p250 = scmp.ne.s32.totalorder %s245, %s247
    %p251 = scmp.eq.s32.totalorder %s17, 0
    %p252 = por %p250, %p251
    %p253 = scmp.ne.s32.totalorder %s245, %s247
    %p254 = scmp.eq.s32.totalorder %s22, 1
    %p255 = por %p253, %p254
    %p256 = scmp.ne.s32.totalorder %s247, %s248
    %p257 = scmp.eq.s32.totalorder %s22, 0
    %p258 = por %p256, %p257
    %p259 = scmp.ne.s32.totalorder %s247, %s248
    %p260 = scmp.eq.s32.totalorder %s23, 1
    %p261 = por %p259, %p260
    %p263 = scmp.ne.s32.totalorder %s248, %s262
    %p264 = scmp.eq.s32.totalorder %s23, 0
    %p265 = por %p263, %p264
    %s266 = ssub.s32 %s17, %s24
    %p267 = scmp.eq.s32.totalorder %s266, 0
    %s269 = sadd.s32 %s268, 1
    %s270 = scalar_select %p267, %s268, %s269
    %p273 = pneg %p267
    %p274 = scmp.eq.s32.totalorder %s17, 1
    %p275 = por %p273, %p274
    %p276 = scmp.ne.s32.totalorder %s268, %s271
    %p277 = scmp.eq.s32.totalorder %s17, 0
    %p278 = por %p276, %p277
    %p279 = scmp.ne.s32.totalorder %s268, %s271
    %p280 = scmp.eq.s32.totalorder %s22, 1
    %p281 = por %p279, %p280
    %p282 = scmp.ne.s32.totalorder %s271, %s272
    %p283 = scmp.eq.s32.totalorder %s22, 0
    %p284 = por %p282, %p283
    %p285 = scmp.ne.s32.totalorder %s271, %s272
    %p286 = scmp.eq.s32.totalorder %s23, 1
    %p287 = por %p285, %p286
    %p289 = scmp.ne.s32.totalorder %s272, %s288
    %p290 = scmp.eq.s32.totalorder %s23, 0
    %p291 = por %p289, %p290
    %p292 = scmp.le.s32.totalorder 1, %s17
    %p293 = scmp.lt.s32.totalorder %s17, 3
    %p294 = pnand %p292, %p293
    %p295 = pneg %p294
    // Predicated region
    $region9: #{refine_m_forward.1} parent=5 // pred_check
      _
    $region10: #{refine_m_forward.1} parent=5 // pred_check_branch
      %297 = sbr.rel (%p294) target = $region12
    $region11: #{refine_m_forward.1} parent=5 // pred_region
      %s298 = ssub.s32 %s17, 1
      // Predicated region
      $region13: #{refine_m_forward.1} parent=11 // pred_check
        %p299 = pneg %p90
      $region14: #{refine_m_forward.1} parent=11 // pred_check_branch
        %301 = sbr.rel (%p299) target = $region16
      $region15: #{refine_m_forward.1} parent=11 // pred_region
        _
      $region16: #{refine_m_forward.1} parent=11 // pred_fallthru
        _
      // Predicated region
      $region17: #{refine_m_forward.1} parent=11 // pred_check
        %p302 = pneg %p111
      $region18: #{refine_m_forward.1} parent=11 // pred_check_branch
        %304 = sbr.rel (%p302) target = $region20
      $region19: #{refine_m_forward.1} parent=11 // pred_region
        _
      $region20: #{refine_m_forward.1} parent=11 // pred_fallthru
        _
      // Predicated region
      $region21: #{refine_m_forward.1} parent=11 // pred_check
        %p305 = pneg %p132
      $region22: #{refine_m_forward.1} parent=11 // pred_check_branch
        %307 = sbr.rel (%p305) target = $region24
      $region23: #{refine_m_forward.1} parent=11 // pred_region
        _
      $region24: #{refine_m_forward.1} parent=11 // pred_fallthru
        _
      // Predicated region
      $region25: #{refine_m_forward.1} parent=11 // pred_check
        %p308 = pneg %p153
      $region26: #{refine_m_forward.1} parent=11 // pred_check_branch
        %310 = sbr.rel (%p308) target = $region28
      $region27: #{refine_m_forward.1} parent=11 // pred_region
        _
      $region28: #{refine_m_forward.1} parent=11 // pred_fallthru
        _
      // Predicated region
      $region29: #{refine_m_forward.1} parent=11 // pred_check
        %p311 = pneg %p174
      $region30: #{refine_m_forward.1} parent=11 // pred_check_branch
        %313 = sbr.rel (%p311) target = $region32
      $region31: #{refine_m_forward.1} parent=11 // pred_region
        _
      $region32: #{refine_m_forward.1} parent=11 // pred_fallthru
        _
      // Predicated region
      $region33: #{refine_m_forward.1} parent=11 // pred_check
        %p314 = pneg %p195
      $region34: #{refine_m_forward.1} parent=11 // pred_check_branch
        %316 = sbr.rel (%p314) target = $region36
      $region35: #{refine_m_forward.1} parent=11 // pred_region
        _
      $region36: #{refine_m_forward.1} parent=11 // pred_fallthru
        _
      // Predicated region
      $region37: #{refine_m_forward.1} parent=11 // pred_check
        %p317 = pneg %p216
      $region38: #{refine_m_forward.1} parent=11 // pred_check_branch
        %319 = sbr.rel (%p317) target = $region40
      $region39: #{refine_m_forward.1} parent=11 // pred_region
        _
      $region40: #{refine_m_forward.1} parent=11 // pred_fallthru
        _
      // Predicated region
      $region41: #{refine_m_forward.1} parent=11 // pred_check
        %p320 = pneg %p237
      $region42: #{refine_m_forward.1} parent=11 // pred_check_branch
        %322 = sbr.rel (%p320) target = $region44
      $region43: #{refine_m_forward.1} parent=11 // pred_region
        _
      $region44: #{refine_m_forward.1} parent=11 // pred_fallthru
        _
      // Predicated region
      $region45: #{refine_m_forward.1} parent=11 // pred_check
        %p323 = pneg %p258
      $region46: #{refine_m_forward.1} parent=11 // pred_check_branch
        %325 = sbr.rel (%p323) target = $region48
      $region47: #{refine_m_forward.1} parent=11 // pred_region
        _
      $region48: #{refine_m_forward.1} parent=11 // pred_fallthru
        _
    $region12: #{refine_m_forward.1} parent=5 // pred_fallthru
      _
    %p326 = scmp.lt.s32.totalorder %s17, 2
    // Predicated region
    $region49: #{refine_m_forward.1} parent=5 // pred_check
      %p327 = pneg %p326
    $region50: #{refine_m_forward.1} parent=5 // pred_check_branch
      %329 = sbr.rel (%p327) target = $region52
    $region51: #{refine_m_forward.1} parent=5 // pred_region
      // Predicated region
      $region53: #{refine_m_forward.1} parent=51 // pred_check
        %p330 = pneg %p37
      $region54: #{refine_m_forward.1} parent=51 // pred_check_branch
        %332 = sbr.rel (%p330) target = $region56
      $region55: #{refine_m_forward.1} parent=51 // pred_region
        %p333 = scmp.lt.s32.totalorder %s17, 1
        %s334 = scalar_select %p333, %s17, 1
        %s335 = smul.addr %s334, 3
        %s336 = smul.addr %s335, 4
        %s337 = scalar_lea.vmem %s0, %s336
      $region56: #{refine_m_forward.1} parent=51 // pred_fallthru
        _
      // Predicated region
      $region57: #{refine_m_forward.1} parent=51 // pred_check
        %p338 = pneg %p63
      $region58: #{refine_m_forward.1} parent=51 // pred_check_branch
        %340 = sbr.rel (%p338) target = $region60
      $region59: #{refine_m_forward.1} parent=51 // pred_region
        %p341 = scmp.lt.s32.totalorder %s17, 1
        %s342 = scalar_select %p341, %s17, 1
        %s343 = smul.addr %s342, 3
        %s344 = smul.addr %s343, 4
        %s345 = scalar_lea.vmem %s1, %s344
      $region60: #{refine_m_forward.1} parent=51 // pred_fallthru
        _
    $region52: #{refine_m_forward.1} parent=5 // pred_fallthru
      _
    %p346 = scmp.le.s32.totalorder 1, %s17
    %p347 = scmp.lt.s32.totalorder %s17, 3
    %p348 = pnand %p346, %p347
    %p349 = pneg %p348
    // Predicated region
    $region61: #{refine_m_forward.1} parent=5 // pred_check
      _
    $region62: #{refine_m_forward.1} parent=5 // pred_check_branch
      %351 = sbr.rel (%p348) target = $region64
    $region63: #{refine_m_forward.1} parent=5 // pred_region
      %s352 = ssub.s32 %s17, 1
      %p353 = scmp.lt.s32.totalorder %s22, 1
      %s354 = scalar_select %p353, %s22, 1
      %s355 = smul.addr %s354, 3
      %s356 = smul.addr %s355, 4
      %s357 = scalar_lea.vmem %s0, %s356
      %p358 = pneg %p43
      %p359 = pneg %p40
      %p360 = scmp.lt.s32.totalorder %s22, 1
      %s361 = scalar_select %p360, %s22, 1
      %s362 = smul.addr %s361, 3
      %s363 = smul.addr %s362, 4
      %s364 = scalar_lea.vmem %s1, %s363
      %p365 = pneg %p69
      %p366 = pneg %p66
      %p367 = pneg %p90
      %p368 = pneg %p87
      %p369 = pneg %p111
      %p370 = pneg %p108
      %p371 = pneg %p132
      %p372 = pneg %p129
      %p373 = pneg %p153
      %p374 = pneg %p150
      %p375 = pneg %p174
      %p376 = pneg %p171
      %p377 = pneg %p195
      %p378 = pneg %p192
      %p379 = pneg %p216
      %p380 = pneg %p213
      %p381 = pneg %p237
      %p382 = pneg %p234
      %p383 = pneg %p258
      %p384 = pneg %p255
      %p385 = pneg %p284
      %p386 = pneg %p281
      %p387 = scmp.lt.s32.totalorder %s22, 1
      %s388 = scalar_select %p387, %s22, 1
      %s389 = smul.addr %s388, 3
      %s390 = smul.addr %s389, 4
      %s391 = scalar_lea.vmem %s11, %s390
      %p392 = scmp.lt.s32.totalorder %s22, 1
      %s393 = scalar_select %p392, %s22, 1
      %s394 = smul.addr %s393, 3
      %s395 = smul.addr %s394, 4
      %s396 = scalar_lea.vmem %s0, %s395
      %p397 = scmp.lt.s32.totalorder %s22, 1
      %s398 = scalar_select %p397, %s22, 1
      %s399 = smul.addr %s398, 3
      %s400 = smul.addr %s399, 4
      %s401 = scalar_lea.vmem %s1, %s400
      %p402 = scmp.lt.s32.totalorder %s22, 1
      %s403 = scalar_select %p402, %s22, 1
      %s404 = smul.addr %s403, 3
      %s405 = smul.addr %s404, 4
      %s406 = scalar_lea.vmem %s11, %s405
      %407 = vst [vmem:[#allocation2] sm:$0xff] 0.0
      %408 = vst [vmem:[#allocation2 + $0x8] sm:$0xff] 0.0
      %409 = vst [vmem:[#allocation2 + $0x10] sm:$0xff] 0.0
      %410 = vst [vmem:[#allocation2 + $0x18] sm:$0xff] 0.0
      %411 = vst [vmem:[#allocation2 + $0x20] sm:$0xf] 0.0
      %412 = vst [vmem:[#allocation2 + $0x28] sm:$0xf] 0.0
      %413 = vst [vmem:[#allocation2 + $0x30] sm:$0xf] 0.0
      %414 = vst [vmem:[#allocation2 + $0x38] sm:$0xf] 0.0
      %v415 = vld [vmem:[%s2] sm:$0x7]
      %v416 = vld [vmem:[%s396] sm:$0xff]
      %v417 = vld [vmem:[%s396 + $0x8] sm:$0xf]
      %v419 = vcombine.high %v416, %v416
      %421 = vst [vmem:[#allocation2 + $0x8] sm:$0xf] %v416
      %422 = vst [vmem:[#allocation2 + $0x10] sm:$0xf] %v419
      %vm423 = vcmask 551936
      %424 = vst.msk [vmem:[#allocation2 + $0x18] sm:$0xf] %vm423, %v417
      %v425 = vld [vmem:[%s401] sm:$0xff]
      %v426 = vld [vmem:[%s401 + $0x8] sm:$0xf]
      %v429 = vcombine.low %v425, %v425
      %v430 = vcombine.low %v426, %v426
      %433 = vst [vmem:[#allocation2 + $0x8] sm:$0xf0] %v429
      %434 = vst [vmem:[#allocation2 + $0x10] sm:$0xf0] %v425
      %vm435 = vcmask 556036
      %436 = vst.msk [vmem:[#allocation2 + $0x18] sm:$0xf0] %vm435, %v430
      %v437 = vld [vmem:[%s4] sm:$0xff]
      %439 = vset.pattern.permute.xlu0 0
      %440 = vperm.xlu0 %439, %v437
      %v441 = vpop.permute.xlu0 %440
      %v443 = vld [vmem:[#allocation2] sm:$0xff]
      %v444 = vld [vmem:[#allocation2 + $0x8] sm:$0xff]
      %v445 = vld [vmem:[#allocation2 + $0x10] sm:$0xff]
      %v446 = vld [vmem:[#allocation2 + $0x18] sm:$0xff]
      %v447 = vld [vmem:[%s3] sm:$0xff]
      %452 = vrot.lane.b32.xlu0 %v443, 19
      %v453 = vpop.permute.xlu0 %452
      %454 = vrot.lane.b32.xlu0 %v444, 19
      %v455 = vpop.permute.xlu0 %454
      %456 = vrot.lane.b32.xlu0 %v445, 19
      %v457 = vpop.permute.xlu0 %456
      %458 = vrot.lane.b32.xlu0 %v446, 19
      %v459 = vpop.permute.xlu0 %458
      %vm460 = vcmask 154624
      %v461 = vsel %vm460, %v453, %v455
      %v462 = vsel %vm460, %v455, %v457
      %v463 = vsel %vm460, %v457, %v459
      %vm467 = vcmask 64512
      %v469 = vsel %vm467, %v447, 0
      %471 = vmatprep.subr.mxu0 0.0
      %472 = vmatpush1.msra.mxu0 0.0
      %473 = vmatprep.subr.mxu0 0.0
      %474 = vmatpush1.msra.mxu0 0.0
      %475 = vmatprep.subr.mxu0 0.0
      %476 = vmatpush1.msra.mxu0 0.0
      %477 = vmatprep.subr.mxu0 0.0
      %478 = vmatpush1.msra.mxu0 0.0
      %479 = vmatprep.subr.mxu0 0.0
      %480 = vmatpush1.msra.mxu0 0.0
      %481 = vmatprep.subr.mxu0 0.0
      %482 = vmatpush1.msra.mxu0 0.0
      %483 = vmatprep.subr.mxu0 0.0
      %484 = vmatpush1.msra.mxu0 0.0
      %485 = vmatprep.subr.mxu0 0.0
      %486 = vmatpush1.msra.mxu0 0.0
      %487 = vmatprep.subr.mxu0 0.0
      %488 = vmatpush1.msra.mxu0 0.0
      %489 = vmatprep.subr.mxu0 0.0
      %490 = vmatpush1.msra.mxu0 0.0
      %491 = vmatprep.subr.mxu0 0.0
      %492 = vmatpush1.msra.mxu0 0.0
      %493 = vmatprep.subr.mxu0 0.0
      %494 = vmatpush1.msra.mxu0 0.0
      %495 = vmatprep.subr.mxu0 0.0
      %496 = vmatpush1.msra.mxu0 0.0
      %497 = vmatprep.subr.mxu0 0.0
      %498 = vmatpush1.msra.mxu0 0.0
      %499 = vmatprep.subr.mxu0 0.0
      %500 = vmatpush1.msra.mxu0 0.0
      %501 = vmatprep.subr.mxu0 %v462
      %502 = vmatpush1.msra.mxu0 %v461
      %503 = vmatprep.subr.mxu0 0.0
      %504 = vmatpush2.msra.mxu0 0.0
      %505 = vmatprep.subr.mxu0 0.0
      %506 = vmatpush2.msra.mxu0 0.0
      %507 = vmatprep.subr.mxu0 0.0
      %508 = vmatpush2.msra.mxu0 0.0
      %509 = vmatprep.subr.mxu0 0.0
      %510 = vmatpush2.msra.mxu0 0.0
      %511 = vmatprep.subr.mxu0 0.0
      %512 = vmatpush2.msra.mxu0 0.0
      %513 = vmatprep.subr.mxu0 0.0
      %514 = vmatpush2.msra.mxu0 0.0
      %515 = vmatprep.subr.mxu0 0.0
      %516 = vmatpush2.msra.mxu0 0.0
      %517 = vmatprep.subr.mxu0 0.0
      %518 = vmatpush2.msra.mxu0 0.0
      %519 = vmatprep.subr.mxu0 0.0
      %520 = vmatpush2.msra.mxu0 0.0
      %521 = vmatprep.subr.mxu0 0.0
      %522 = vmatpush2.msra.mxu0 0.0
      %523 = vmatprep.subr.mxu0 0.0
      %524 = vmatpush2.msra.mxu0 0.0
      %525 = vmatprep.subr.mxu0 0.0
      %526 = vmatpush2.msra.mxu0 0.0
      %527 = vmatprep.subr.mxu0 0.0
      %528 = vmatpush2.msra.mxu0 0.0
      %529 = vmatprep.subr.mxu0 0.0
      %530 = vmatpush2.msra.mxu0 0.0
      %531 = vmatprep.subr.mxu0 0.0
      %532 = vmatpush2.msra.mxu0 0.0
      %533 = vmatprep.subr.mxu0 0.0
      %534 = vmatpush2.msra.mxu0 0.0
      %535 = vmatprep.mubr.f32.mxu0 0.0
      %536 = vmatmul.mubr.f32.gmra.mxu0 %v469
      %v537 = vpop.f32.mrf.mxu0
      %v538 = vadd.f32 0.0, %v537
      %v539 = vpop.f32.mrf.mxu0
      %v540 = vadd.f32 0.0, %v539
      %541 = vdwg.mxu0
      %542 = vmatprep.subr.mxu0 0.0
      %543 = vmatpush1.msra.mxu0 0.0
      %544 = vmatprep.subr.mxu0 0.0
      %545 = vmatpush1.msra.mxu0 0.0
      %546 = vmatprep.subr.mxu0 0.0
      %547 = vmatpush1.msra.mxu0 0.0
      %548 = vmatprep.subr.mxu0 0.0
      %549 = vmatpush1.msra.mxu0 0.0
      %550 = vmatprep.subr.mxu0 0.0
      %551 = vmatpush1.msra.mxu0 0.0
      %552 = vmatprep.subr.mxu0 0.0
      %553 = vmatpush1.msra.mxu0 0.0
      %554 = vmatprep.subr.mxu0 0.0
      %555 = vmatpush1.msra.mxu0 0.0
      %556 = vmatprep.subr.mxu0 0.0
      %557 = vmatpush1.msra.mxu0 0.0
      %558 = vmatprep.subr.mxu0 0.0
      %559 = vmatpush1.msra.mxu0 0.0
      %560 = vmatprep.subr.mxu0 0.0
      %561 = vmatpush1.msra.mxu0 0.0
      %562 = vmatprep.subr.mxu0 0.0
      %563 = vmatpush1.msra.mxu0 0.0
      %564 = vmatprep.subr.mxu0 0.0
      %565 = vmatpush1.msra.mxu0 0.0
      %566 = vmatprep.subr.mxu0 0.0
      %567 = vmatpush1.msra.mxu0 0.0
      %568 = vmatprep.subr.mxu0 0.0
      %569 = vmatpush1.msra.mxu0 0.0
      %570 = vmatprep.subr.mxu0 0.0
      %571 = vmatpush1.msra.mxu0 0.0
      %572 = vmatprep.subr.mxu0 0.0
      %573 = vmatpush1.msra.mxu0 %v463
      %574 = vmatprep.subr.mxu0 0.0
      %575 = vmatpush2.msra.mxu0 0.0
      %576 = vmatprep.subr.mxu0 0.0
      %577 = vmatpush2.msra.mxu0 0.0
      %578 = vmatprep.subr.mxu0 0.0
      %579 = vmatpush2.msra.mxu0 0.0
      %580 = vmatprep.subr.mxu0 0.0
      %581 = vmatpush2.msra.mxu0 0.0
      %582 = vmatprep.subr.mxu0 0.0
      %583 = vmatpush2.msra.mxu0 0.0
      %584 = vmatprep.subr.mxu0 0.0
      %585 = vmatpush2.msra.mxu0 0.0
      %586 = vmatprep.subr.mxu0 0.0
      %587 = vmatpush2.msra.mxu0 0.0
      %588 = vmatprep.subr.mxu0 0.0
      %589 = vmatpush2.msra.mxu0 0.0
      %590 = vmatprep.subr.mxu0 0.0
      %591 = vmatpush2.msra.mxu0 0.0
      %592 = vmatprep.subr.mxu0 0.0
      %593 = vmatpush2.msra.mxu0 0.0
      %594 = vmatprep.subr.mxu0 0.0
      %595 = vmatpush2.msra.mxu0 0.0
      %596 = vmatprep.subr.mxu0 0.0
      %597 = vmatpush2.msra.mxu0 0.0
      %598 = vmatprep.subr.mxu0 0.0
      %599 = vmatpush2.msra.mxu0 0.0
      %600 = vmatprep.subr.mxu0 0.0
      %601 = vmatpush2.msra.mxu0 0.0
      %602 = vmatprep.subr.mxu0 0.0
      %603 = vmatpush2.msra.mxu0 0.0
      %604 = vmatprep.subr.mxu0 0.0
      %605 = vmatpush2.msra.mxu0 0.0
      %606 = vmatprep.mubr.f32.mxu0 0.0
      %607 = vmatmul.mubr.f32.gmra.mxu0 %v469
      %v608 = vpop.f32.mrf.mxu0
      %v609 = vadd.f32 0.0, %v608
      %v610 = vpop.f32.mrf.mxu0
      %611 = vdwg.mxu0
      %v612 = vadd.f32 %v441, %v538
      %v613 = vadd.f32 %v441, %v540
      %v614 = vadd.f32 %v441, %v609
      %s615 = scalar_lea.vmem %s3, 8
      %v616 = vld [vmem:[%s615] sm:$0xff]
      %617 = vrot.lane.b32.xlu0 %v443, 18
      %v618 = vpop.permute.xlu0 %617
      %619 = vrot.lane.b32.xlu0 %v444, 18
      %v620 = vpop.permute.xlu0 %619
      %621 = vrot.lane.b32.xlu0 %v445, 18
      %v622 = vpop.permute.xlu0 %621
      %623 = vrot.lane.b32.xlu0 %v446, 18
      %v624 = vpop.permute.xlu0 %623
      %vm625 = vcmask 146432
      %v626 = vsel %vm625, %v618, %v620
      %v627 = vsel %vm625, %v620, %v622
      %v628 = vsel %vm625, %v622, %v624
      %v633 = vsel %vm467, %v616, 0
      %635 = vmatprep.subr.mxu0 0.0
      %636 = vmatpush1.msra.mxu0 0.0
      %637 = vmatprep.subr.mxu0 0.0
      %638 = vmatpush1.msra.mxu0 0.0
      %639 = vmatprep.subr.mxu0 0.0
      %640 = vmatpush1.msra.mxu0 0.0
      %641 = vmatprep.subr.mxu0 0.0
      %642 = vmatpush1.msra.mxu0 0.0
      %643 = vmatprep.subr.mxu0 0.0
      %644 = vmatpush1.msra.mxu0 0.0
      %645 = vmatprep.subr.mxu0 0.0
      %646 = vmatpush1.msra.mxu0 0.0
      %647 = vmatprep.subr.mxu0 0.0
      %648 = vmatpush1.msra.mxu0 0.0
      %649 = vmatprep.subr.mxu0 0.0
      %650 = vmatpush1.msra.mxu0 0.0
      %651 = vmatprep.subr.mxu0 0.0
      %652 = vmatpush1.msra.mxu0 0.0
      %653 = vmatprep.subr.mxu0 0.0
      %654 = vmatpush1.msra.mxu0 0.0
      %655 = vmatprep.subr.mxu0 0.0
      %656 = vmatpush1.msra.mxu0 0.0
      %657 = vmatprep.subr.mxu0 0.0
      %658 = vmatpush1.msra.mxu0 0.0
      %659 = vmatprep.subr.mxu0 0.0
      %660 = vmatpush1.msra.mxu0 0.0
      %661 = vmatprep.subr.mxu0 0.0
      %662 = vmatpush1.msra.mxu0 0.0
      %663 = vmatprep.subr.mxu0 0.0
      %664 = vmatpush1.msra.mxu0 0.0
      %665 = vmatprep.subr.mxu0 %v627
      %666 = vmatpush1.msra.mxu0 %v626
      %667 = vmatprep.subr.mxu0 0.0
      %668 = vmatpush2.msra.mxu0 0.0
      %669 = vmatprep.subr.mxu0 0.0
      %670 = vmatpush2.msra.mxu0 0.0
      %671 = vmatprep.subr.mxu0 0.0
      %672 = vmatpush2.msra.mxu0 0.0
      %673 = vmatprep.subr.mxu0 0.0
      %674 = vmatpush2.msra.mxu0 0.0
      %675 = vmatprep.subr.mxu0 0.0
      %676 = vmatpush2.msra.mxu0 0.0
      %677 = vmatprep.subr.mxu0 0.0
      %678 = vmatpush2.msra.mxu0 0.0
      %679 = vmatprep.subr.mxu0 0.0
      %680 = vmatpush2.msra.mxu0 0.0
      %681 = vmatprep.subr.mxu0 0.0
      %682 = vmatpush2.msra.mxu0 0.0
      %683 = vmatprep.subr.mxu0 0.0
      %684 = vmatpush2.msra.mxu0 0.0
      %685 = vmatprep.subr.mxu0 0.0
      %686 = vmatpush2.msra.mxu0 0.0
      %687 = vmatprep.subr.mxu0 0.0
      %688 = vmatpush2.msra.mxu0 0.0
      %689 = vmatprep.subr.mxu0 0.0
      %690 = vmatpush2.msra.mxu0 0.0
      %691 = vmatprep.subr.mxu0 0.0
      %692 = vmatpush2.msra.mxu0 0.0
      %693 = vmatprep.subr.mxu0 0.0
      %694 = vmatpush2.msra.mxu0 0.0
      %695 = vmatprep.subr.mxu0 0.0
      %696 = vmatpush2.msra.mxu0 0.0
      %697 = vmatprep.subr.mxu0 0.0
      %698 = vmatpush2.msra.mxu0 0.0
      %699 = vmatprep.mubr.f32.mxu0 0.0
      %700 = vmatmul.mubr.f32.gmra.mxu0 %v633
      %v701 = vpop.f32.mrf.mxu0
      %v702 = vadd.f32 0.0, %v701
      %v703 = vpop.f32.mrf.mxu0
      %v704 = vadd.f32 0.0, %v703
      %705 = vdwg.mxu0
      %706 = vmatprep.subr.mxu0 0.0
      %707 = vmatpush1.msra.mxu0 0.0
      %708 = vmatprep.subr.mxu0 0.0
      %709 = vmatpush1.msra.mxu0 0.0
      %710 = vmatprep.subr.mxu0 0.0
      %711 = vmatpush1.msra.mxu0 0.0
      %712 = vmatprep.subr.mxu0 0.0
      %713 = vmatpush1.msra.mxu0 0.0
      %714 = vmatprep.subr.mxu0 0.0
      %715 = vmatpush1.msra.mxu0 0.0
      %716 = vmatprep.subr.mxu0 0.0
      %717 = vmatpush1.msra.mxu0 0.0
      %718 = vmatprep.subr.mxu0 0.0
      %719 = vmatpush1.msra.mxu0 0.0
      %720 = vmatprep.subr.mxu0 0.0
      %721 = vmatpush1.msra.mxu0 0.0
      %722 = vmatprep.subr.mxu0 0.0
      %723 = vmatpush1.msra.mxu0 0.0
      %724 = vmatprep.subr.mxu0 0.0
      %725 = vmatpush1.msra.mxu0 0.0
      %726 = vmatprep.subr.mxu0 0.0
      %727 = vmatpush1.msra.mxu0 0.0
      %728 = vmatprep.subr.mxu0 0.0
      %729 = vmatpush1.msra.mxu0 0.0
      %730 = vmatprep.subr.mxu0 0.0
      %731 = vmatpush1.msra.mxu0 0.0
      %732 = vmatprep.subr.mxu0 0.0
      %733 = vmatpush1.msra.mxu0 0.0
      %734 = vmatprep.subr.mxu0 0.0
      %735 = vmatpush1.msra.mxu0 0.0
      %736 = vmatprep.subr.mxu0 0.0
      %737 = vmatpush1.msra.mxu0 %v628
      %738 = vmatprep.subr.mxu0 0.0
      %739 = vmatpush2.msra.mxu0 0.0
      %740 = vmatprep.subr.mxu0 0.0
      %741 = vmatpush2.msra.mxu0 0.0
      %742 = vmatprep.subr.mxu0 0.0
      %743 = vmatpush2.msra.mxu0 0.0
      %744 = vmatprep.subr.mxu0 0.0
      %745 = vmatpush2.msra.mxu0 0.0
      %746 = vmatprep.subr.mxu0 0.0
      %747 = vmatpush2.msra.mxu0 0.0
      %748 = vmatprep.subr.mxu0 0.0
      %749 = vmatpush2.msra.mxu0 0.0
      %750 = vmatprep.subr.mxu0 0.0
      %751 = vmatpush2.msra.mxu0 0.0
      %752 = vmatprep.subr.mxu0 0.0
      %753 = vmatpush2.msra.mxu0 0.0
      %754 = vmatprep.subr.mxu0 0.0
      %755 = vmatpush2.msra.mxu0 0.0
      %756 = vmatprep.subr.mxu0 0.0
      %757 = vmatpush2.msra.mxu0 0.0
      %758 = vmatprep.subr.mxu0 0.0
      %759 = vmatpush2.msra.mxu0 0.0
      %760 = vmatprep.subr.mxu0 0.0
      %761 = vmatpush2.msra.mxu0 0.0
      %762 = vmatprep.subr.mxu0 0.0
      %763 = vmatpush2.msra.mxu0 0.0
      %764 = vmatprep.subr.mxu0 0.0
      %765 = vmatpush2.msra.mxu0 0.0
      %766 = vmatprep.subr.mxu0 0.0
      %767 = vmatpush2.msra.mxu0 0.0
      %768 = vmatprep.subr.mxu0 0.0
      %769 = vmatpush2.msra.mxu0 0.0
      %770 = vmatprep.mubr.f32.mxu0 0.0
      %771 = vmatmul.mubr.f32.gmra.mxu0 %v633
      %v772 = vpop.f32.mrf.mxu0
      %v773 = vadd.f32 0.0, %v772
      %v774 = vpop.f32.mrf.mxu0
      %775 = vdwg.mxu0
      %v776 = vadd.f32 %v612, %v702
      %v777 = vadd.f32 %v613, %v704
      %v778 = vadd.f32 %v614, %v773
      %s779 = scalar_lea.vmem %s3, 16
      %v780 = vld [vmem:[%s779] sm:$0xff]
      %781 = vrot.lane.b32.xlu0 %v443, 17
      %v782 = vpop.permute.xlu0 %781
      %783 = vrot.lane.b32.xlu0 %v444, 17
      %v784 = vpop.permute.xlu0 %783
      %785 = vrot.lane.b32.xlu0 %v445, 17
      %v786 = vpop.permute.xlu0 %785
      %787 = vrot.lane.b32.xlu0 %v446, 17
      %v788 = vpop.permute.xlu0 %787
      %vm789 = vcmask 138240
      %v790 = vsel %vm789, %v782, %v784
      %v791 = vsel %vm789, %v784, %v786
      %v792 = vsel %vm789, %v786, %v788
      %v797 = vsel %vm467, %v780, 0
      %799 = vmatprep.subr.mxu0 0.0
      %800 = vmatpush1.msra.mxu0 0.0
      %801 = vmatprep.subr.mxu0 0.0
      %802 = vmatpush1.msra.mxu0 0.0
      %803 = vmatprep.subr.mxu0 0.0
      %804 = vmatpush1.msra.mxu0 0.0
      %805 = vmatprep.subr.mxu0 0.0
      %806 = vmatpush1.msra.mxu0 0.0
      %807 = vmatprep.subr.mxu0 0.0
      %808 = vmatpush1.msra.mxu0 0.0
      %809 = vmatprep.subr.mxu0 0.0
      %810 = vmatpush1.msra.mxu0 0.0
      %811 = vmatprep.subr.mxu0 0.0
      %812 = vmatpush1.msra.mxu0 0.0
      %813 = vmatprep.subr.mxu0 0.0
      %814 = vmatpush1.msra.mxu0 0.0
      %815 = vmatprep.subr.mxu0 0.0
      %816 = vmatpush1.msra.mxu0 0.0
      %817 = vmatprep.subr.mxu0 0.0
      %818 = vmatpush1.msra.mxu0 0.0
      %819 = vmatprep.subr.mxu0 0.0
      %820 = vmatpush1.msra.mxu0 0.0
      %821 = vmatprep.subr.mxu0 0.0
      %822 = vmatpush1.msra.mxu0 0.0
      %823 = vmatprep.subr.mxu0 0.0
      %824 = vmatpush1.msra.mxu0 0.0
      %825 = vmatprep.subr.mxu0 0.0
      %826 = vmatpush1.msra.mxu0 0.0
      %827 = vmatprep.subr.mxu0 0.0
      %828 = vmatpush1.msra.mxu0 0.0
      %829 = vmatprep.subr.mxu0 %v791
      %830 = vmatpush1.msra.mxu0 %v790
      %831 = vmatprep.subr.mxu0 0.0
      %832 = vmatpush2.msra.mxu0 0.0
      %833 = vmatprep.subr.mxu0 0.0
      %834 = vmatpush2.msra.mxu0 0.0
      %835 = vmatprep.subr.mxu0 0.0
      %836 = vmatpush2.msra.mxu0 0.0
      %837 = vmatprep.subr.mxu0 0.0
      %838 = vmatpush2.msra.mxu0 0.0
      %839 = vmatprep.subr.mxu0 0.0
      %840 = vmatpush2.msra.mxu0 0.0
      %841 = vmatprep.subr.mxu0 0.0
      %842 = vmatpush2.msra.mxu0 0.0
      %843 = vmatprep.subr.mxu0 0.0
      %844 = vmatpush2.msra.mxu0 0.0
      %845 = vmatprep.subr.mxu0 0.0
      %846 = vmatpush2.msra.mxu0 0.0
      %847 = vmatprep.subr.mxu0 0.0
      %848 = vmatpush2.msra.mxu0 0.0
      %849 = vmatprep.subr.mxu0 0.0
      %850 = vmatpush2.msra.mxu0 0.0
      %851 = vmatprep.subr.mxu0 0.0
      %852 = vmatpush2.msra.mxu0 0.0
      %853 = vmatprep.subr.mxu0 0.0
      %854 = vmatpush2.msra.mxu0 0.0
      %855 = vmatprep.subr.mxu0 0.0
      %856 = vmatpush2.msra.mxu0 0.0
      %857 = vmatprep.subr.mxu0 0.0
      %858 = vmatpush2.msra.mxu0 0.0
      %859 = vmatprep.subr.mxu0 0.0
      %860 = vmatpush2.msra.mxu0 0.0
      %861 = vmatprep.subr.mxu0 0.0
      %862 = vmatpush2.msra.mxu0 0.0
      %863 = vmatprep.mubr.f32.mxu0 0.0
      %864 = vmatmul.mubr.f32.gmra.mxu0 %v797
      %v865 = vpop.f32.mrf.mxu0
      %v866 = vadd.f32 0.0, %v865
      %v867 = vpop.f32.mrf.mxu0
      %v868 = vadd.f32 0.0, %v867
      %869 = vdwg.mxu0
      %870 = vmatprep.subr.mxu0 0.0
      %871 = vmatpush1.msra.mxu0 0.0
      %872 = vmatprep.subr.mxu0 0.0
      %873 = vmatpush1.msra.mxu0 0.0
      %874 = vmatprep.subr.mxu0 0.0
      %875 = vmatpush1.msra.mxu0 0.0
      %876 = vmatprep.subr.mxu0 0.0
      %877 = vmatpush1.msra.mxu0 0.0
      %878 = vmatprep.subr.mxu0 0.0
      %879 = vmatpush1.msra.mxu0 0.0
      %880 = vmatprep.subr.mxu0 0.0
      %881 = vmatpush1.msra.mxu0 0.0
      %882 = vmatprep.subr.mxu0 0.0
      %883 = vmatpush1.msra.mxu0 0.0
      %884 = vmatprep.subr.mxu0 0.0
      %885 = vmatpush1.msra.mxu0 0.0
      %886 = vmatprep.subr.mxu0 0.0
      %887 = vmatpush1.msra.mxu0 0.0
      %888 = vmatprep.subr.mxu0 0.0
      %889 = vmatpush1.msra.mxu0 0.0
      %890 = vmatprep.subr.mxu0 0.0
      %891 = vmatpush1.msra.mxu0 0.0
      %892 = vmatprep.subr.mxu0 0.0
      %893 = vmatpush1.msra.mxu0 0.0
      %894 = vmatprep.subr.mxu0 0.0
      %895 = vmatpush1.msra.mxu0 0.0
      %896 = vmatprep.subr.mxu0 0.0
      %897 = vmatpush1.msra.mxu0 0.0
      %898 = vmatprep.subr.mxu0 0.0
      %899 = vmatpush1.msra.mxu0 0.0
      %900 = vmatprep.subr.mxu0 0.0
      %901 = vmatpush1.msra.mxu0 %v792
      %902 = vmatprep.subr.mxu0 0.0
      %903 = vmatpush2.msra.mxu0 0.0
      %904 = vmatprep.subr.mxu0 0.0
      %905 = vmatpush2.msra.mxu0 0.0
      %906 = vmatprep.subr.mxu0 0.0
      %907 = vmatpush2.msra.mxu0 0.0
      %908 = vmatprep.subr.mxu0 0.0
      %909 = vmatpush2.msra.mxu0 0.0
      %910 = vmatprep.subr.mxu0 0.0
      %911 = vmatpush2.msra.mxu0 0.0
      %912 = vmatprep.subr.mxu0 0.0
      %913 = vmatpush2.msra.mxu0 0.0
      %914 = vmatprep.subr.mxu0 0.0
      %915 = vmatpush2.msra.mxu0 0.0
      %916 = vmatprep.subr.mxu0 0.0
      %917 = vmatpush2.msra.mxu0 0.0
      %918 = vmatprep.subr.mxu0 0.0
      %919 = vmatpush2.msra.mxu0 0.0
      %920 = vmatprep.subr.mxu0 0.0
      %921 = vmatpush2.msra.mxu0 0.0
      %922 = vmatprep.subr.mxu0 0.0
      %923 = vmatpush2.msra.mxu0 0.0
      %924 = vmatprep.subr.mxu0 0.0
      %925 = vmatpush2.msra.mxu0 0.0
      %926 = vmatprep.subr.mxu0 0.0
      %927 = vmatpush2.msra.mxu0 0.0
      %928 = vmatprep.subr.mxu0 0.0
      %929 = vmatpush2.msra.mxu0 0.0
      %930 = vmatprep.subr.mxu0 0.0
      %931 = vmatpush2.msra.mxu0 0.0
      %932 = vmatprep.subr.mxu0 0.0
      %933 = vmatpush2.msra.mxu0 0.0
      %934 = vmatprep.mubr.f32.mxu0 0.0
      %935 = vmatmul.mubr.f32.gmra.mxu0 %v797
      %v936 = vpop.f32.mrf.mxu0
      %v937 = vadd.f32 0.0, %v936
      %v938 = vpop.f32.mrf.mxu0
      %939 = vdwg.mxu0
      %v940 = vadd.f32 %v776, %v866
      %v941 = vadd.f32 %v777, %v868
      %v942 = vadd.f32 %v778, %v937
      %s943 = scalar_lea.vmem %s3, 24
      %v944 = vld [vmem:[%s943] sm:$0xff]
      %945 = vrot.lane.b32.xlu0 %v443, 1
      %v946 = vpop.permute.xlu0 %945
      %947 = vrot.lane.b32.xlu0 %v444, 1
      %v948 = vpop.permute.xlu0 %947
      %949 = vrot.lane.b32.xlu0 %v445, 1
      %v950 = vpop.permute.xlu0 %949
      %951 = vrot.lane.b32.xlu0 %v446, 1
      %v952 = vpop.permute.xlu0 %951
      %vm953 = vcmask 7168
      %v954 = vsel %vm953, %v946, %v948
      %v955 = vsel %vm953, %v948, %v950
      %v956 = vsel %vm953, %v950, %v952
      %v961 = vsel %vm467, %v944, 0
      %963 = vmatprep.subr.mxu0 0.0
      %964 = vmatpush1.msra.mxu0 0.0
      %965 = vmatprep.subr.mxu0 0.0
      %966 = vmatpush1.msra.mxu0 0.0
      %967 = vmatprep.subr.mxu0 0.0
      %968 = vmatpush1.msra.mxu0 0.0
      %969 = vmatprep.subr.mxu0 0.0
      %970 = vmatpush1.msra.mxu0 0.0
      %971 = vmatprep.subr.mxu0 0.0
      %972 = vmatpush1.msra.mxu0 0.0
      %973 = vmatprep.subr.mxu0 0.0
      %974 = vmatpush1.msra.mxu0 0.0
      %975 = vmatprep.subr.mxu0 0.0
      %976 = vmatpush1.msra.mxu0 0.0
      %977 = vmatprep.subr.mxu0 0.0
      %978 = vmatpush1.msra.mxu0 0.0
      %979 = vmatprep.subr.mxu0 0.0
      %980 = vmatpush1.msra.mxu0 0.0
      %981 = vmatprep.subr.mxu0 0.0
      %982 = vmatpush1.msra.mxu0 0.0
      %983 = vmatprep.subr.mxu0 0.0
      %984 = vmatpush1.msra.mxu0 0.0
      %985 = vmatprep.subr.mxu0 0.0
      %986 = vmatpush1.msra.mxu0 0.0
      %987 = vmatprep.subr.mxu0 0.0
      %988 = vmatpush1.msra.mxu0 0.0
      %989 = vmatprep.subr.mxu0 0.0
      %990 = vmatpush1.msra.mxu0 0.0
      %991 = vmatprep.subr.mxu0 0.0
      %992 = vmatpush1.msra.mxu0 0.0
      %993 = vmatprep.subr.mxu0 %v955
      %994 = vmatpush1.msra.mxu0 %v954
      %995 = vmatprep.subr.mxu0 0.0
      %996 = vmatpush2.msra.mxu0 0.0
      %997 = vmatprep.subr.mxu0 0.0
      %998 = vmatpush2.msra.mxu0 0.0
      %999 = vmatprep.subr.mxu0 0.0
      %1000 = vmatpush2.msra.mxu0 0.0
      %1001 = vmatprep.subr.mxu0 0.0
      %1002 = vmatpush2.msra.mxu0 0.0
      %1003 = vmatprep.subr.mxu0 0.0
      %1004 = vmatpush2.msra.mxu0 0.0
      %1005 = vmatprep.subr.mxu0 0.0
      %1006 = vmatpush2.msra.mxu0 0.0
      %1007 = vmatprep.subr.mxu0 0.0
      %1008 = vmatpush2.msra.mxu0 0.0
      %1009 = vmatprep.subr.mxu0 0.0
      %1010 = vmatpush2.msra.mxu0 0.0
      %1011 = vmatprep.subr.mxu0 0.0
      %1012 = vmatpush2.msra.mxu0 0.0
      %1013 = vmatprep.subr.mxu0 0.0
      %1014 = vmatpush2.msra.mxu0 0.0
      %1015 = vmatprep.subr.mxu0 0.0
      %1016 = vmatpush2.msra.mxu0 0.0
      %1017 = vmatprep.subr.mxu0 0.0
      %1018 = vmatpush2.msra.mxu0 0.0
      %1019 = vmatprep.subr.mxu0 0.0
      %1020 = vmatpush2.msra.mxu0 0.0
      %1021 = vmatprep.subr.mxu0 0.0
      %1022 = vmatpush2.msra.mxu0 0.0
      %1023 = vmatprep.subr.mxu0 0.0
      %1024 = vmatpush2.msra.mxu0 0.0
      %1025 = vmatprep.subr.mxu0 0.0
      %1026 = vmatpush2.msra.mxu0 0.0
      %1027 = vmatprep.mubr.f32.mxu0 0.0
      %1028 = vmatmul.mubr.f32.gmra.mxu0 %v961
      %v1029 = vpop.f32.mrf.mxu0
      %v1030 = vadd.f32 0.0, %v1029
      %v1031 = vpop.f32.mrf.mxu0
      %v1032 = vadd.f32 0.0, %v1031
      %1033 = vdwg.mxu0
      %1034 = vmatprep.subr.mxu0 0.0
      %1035 = vmatpush1.msra.mxu0 0.0
      %1036 = vmatprep.subr.mxu0 0.0
      %1037 = vmatpush1.msra.mxu0 0.0
      %1038 = vmatprep.subr.mxu0 0.0
      %1039 = vmatpush1.msra.mxu0 0.0
      %1040 = vmatprep.subr.mxu0 0.0
      %1041 = vmatpush1.msra.mxu0 0.0
      %1042 = vmatprep.subr.mxu0 0.0
      %1043 = vmatpush1.msra.mxu0 0.0
      %1044 = vmatprep.subr.mxu0 0.0
      %1045 = vmatpush1.msra.mxu0 0.0
      %1046 = vmatprep.subr.mxu0 0.0
      %1047 = vmatpush1.msra.mxu0 0.0
      %1048 = vmatprep.subr.mxu0 0.0
      %1049 = vmatpush1.msra.mxu0 0.0
      %1050 = vmatprep.subr.mxu0 0.0
      %1051 = vmatpush1.msra.mxu0 0.0
      %1052 = vmatprep.subr.mxu0 0.0
      %1053 = vmatpush1.msra.mxu0 0.0
      %1054 = vmatprep.subr.mxu0 0.0
      %1055 = vmatpush1.msra.mxu0 0.0
      %1056 = vmatprep.subr.mxu0 0.0
      %1057 = vmatpush1.msra.mxu0 0.0
      %1058 = vmatprep.subr.mxu0 0.0
      %1059 = vmatpush1.msra.mxu0 0.0
      %1060 = vmatprep.subr.mxu0 0.0
      %1061 = vmatpush1.msra.mxu0 0.0
      %1062 = vmatprep.subr.mxu0 0.0
      %1063 = vmatpush1.msra.mxu0 0.0
      %1064 = vmatprep.subr.mxu0 0.0
      %1065 = vmatpush1.msra.mxu0 %v956
      %1066 = vmatprep.subr.mxu0 0.0
      %1067 = vmatpush2.msra.mxu0 0.0
      %1068 = vmatprep.subr.mxu0 0.0
      %1069 = vmatpush2.msra.mxu0 0.0
      %1070 = vmatprep.subr.mxu0 0.0
      %1071 = vmatpush2.msra.mxu0 0.0
      %1072 = vmatprep.subr.mxu0 0.0
      %1073 = vmatpush2.msra.mxu0 0.0
      %1074 = vmatprep.subr.mxu0 0.0
      %1075 = vmatpush2.msra.mxu0 0.0
      %1076 = vmatprep.subr.mxu0 0.0
      %1077 = vmatpush2.msra.mxu0 0.0
      %1078 = vmatprep.subr.mxu0 0.0
      %1079 = vmatpush2.msra.mxu0 0.0
      %1080 = vmatprep.subr.mxu0 0.0
      %1081 = vmatpush2.msra.mxu0 0.0
      %1082 = vmatprep.subr.mxu0 0.0
      %1083 = vmatpush2.msra.mxu0 0.0
      %1084 = vmatprep.subr.mxu0 0.0
      %1085 = vmatpush2.msra.mxu0 0.0
      %1086 = vmatprep.subr.mxu0 0.0
      %1087 = vmatpush2.msra.mxu0 0.0
      %1088 = vmatprep.subr.mxu0 0.0
      %1089 = vmatpush2.msra.mxu0 0.0
      %1090 = vmatprep.subr.mxu0 0.0
      %1091 = vmatpush2.msra.mxu0 0.0
      %1092 = vmatprep.subr.mxu0 0.0
      %1093 = vmatpush2.msra.mxu0 0.0
      %1094 = vmatprep.subr.mxu0 0.0
      %1095 = vmatpush2.msra.mxu0 0.0
      %1096 = vmatprep.subr.mxu0 0.0
      %1097 = vmatpush2.msra.mxu0 0.0
      %1098 = vmatprep.mubr.f32.mxu0 0.0
      %1099 = vmatmul.mubr.f32.gmra.mxu0 %v961
      %v1100 = vpop.f32.mrf.mxu0
      %v1101 = vadd.f32 0.0, %v1100
      %v1102 = vpop.f32.mrf.mxu0
      %1103 = vdwg.mxu0
      %v1104 = vadd.f32 %v940, %v1030
      %v1105 = vadd.f32 %v941, %v1032
      %v1106 = vadd.f32 %v942, %v1101
      %s1107 = scalar_lea.vmem %s3, 32
      %v1108 = vld [vmem:[%s1107] sm:$0xff]
      %v1110 = vsel %vm467, %v1108, 0
      %1112 = vmatprep.subr.mxu0 0.0
      %1113 = vmatpush1.msra.mxu0 0.0
      %1114 = vmatprep.subr.mxu0 0.0
      %1115 = vmatpush1.msra.mxu0 0.0
      %1116 = vmatprep.subr.mxu0 0.0
      %1117 = vmatpush1.msra.mxu0 0.0
      %1118 = vmatprep.subr.mxu0 0.0
      %1119 = vmatpush1.msra.mxu0 0.0
      %1120 = vmatprep.subr.mxu0 0.0
      %1121 = vmatpush1.msra.mxu0 0.0
      %1122 = vmatprep.subr.mxu0 0.0
      %1123 = vmatpush1.msra.mxu0 0.0
      %1124 = vmatprep.subr.mxu0 0.0
      %1125 = vmatpush1.msra.mxu0 0.0
      %1126 = vmatprep.subr.mxu0 0.0
      %1127 = vmatpush1.msra.mxu0 0.0
      %1128 = vmatprep.subr.mxu0 0.0
      %1129 = vmatpush1.msra.mxu0 0.0
      %1130 = vmatprep.subr.mxu0 0.0
      %1131 = vmatpush1.msra.mxu0 0.0
      %1132 = vmatprep.subr.mxu0 0.0
      %1133 = vmatpush1.msra.mxu0 0.0
      %1134 = vmatprep.subr.mxu0 0.0
      %1135 = vmatpush1.msra.mxu0 0.0
      %1136 = vmatprep.subr.mxu0 0.0
      %1137 = vmatpush1.msra.mxu0 0.0
      %1138 = vmatprep.subr.mxu0 0.0
      %1139 = vmatpush1.msra.mxu0 0.0
      %1140 = vmatprep.subr.mxu0 0.0
      %1141 = vmatpush1.msra.mxu0 0.0
      %1142 = vmatprep.subr.mxu0 %v445
      %1143 = vmatpush1.msra.mxu0 %v444
      %1144 = vmatprep.subr.mxu0 0.0
      %1145 = vmatpush2.msra.mxu0 0.0
      %1146 = vmatprep.subr.mxu0 0.0
      %1147 = vmatpush2.msra.mxu0 0.0
      %1148 = vmatprep.subr.mxu0 0.0
      %1149 = vmatpush2.msra.mxu0 0.0
      %1150 = vmatprep.subr.mxu0 0.0
      %1151 = vmatpush2.msra.mxu0 0.0
      %1152 = vmatprep.subr.mxu0 0.0
      %1153 = vmatpush2.msra.mxu0 0.0
      %1154 = vmatprep.subr.mxu0 0.0
      %1155 = vmatpush2.msra.mxu0 0.0
      %1156 = vmatprep.subr.mxu0 0.0
      %1157 = vmatpush2.msra.mxu0 0.0
      %1158 = vmatprep.subr.mxu0 0.0
      %1159 = vmatpush2.msra.mxu0 0.0
      %1160 = vmatprep.subr.mxu0 0.0
      %1161 = vmatpush2.msra.mxu0 0.0
      %1162 = vmatprep.subr.mxu0 0.0
      %1163 = vmatpush2.msra.mxu0 0.0
      %1164 = vmatprep.subr.mxu0 0.0
      %1165 = vmatpush2.msra.mxu0 0.0
      %1166 = vmatprep.subr.mxu0 0.0
      %1167 = vmatpush2.msra.mxu0 0.0
      %1168 = vmatprep.subr.mxu0 0.0
      %1169 = vmatpush2.msra.mxu0 0.0
      %1170 = vmatprep.subr.mxu0 0.0
      %1171 = vmatpush2.msra.mxu0 0.0
      %1172 = vmatprep.subr.mxu0 0.0
      %1173 = vmatpush2.msra.mxu0 0.0
      %1174 = vmatprep.subr.mxu0 0.0
      %1175 = vmatpush2.msra.mxu0 0.0
      %1176 = vmatprep.mubr.f32.mxu0 0.0
      %1177 = vmatmul.mubr.f32.gmra.mxu0 %v1110
      %v1178 = vpop.f32.mrf.mxu0
      %v1179 = vadd.f32 0.0, %v1178
      %v1180 = vpop.f32.mrf.mxu0
      %v1181 = vadd.f32 0.0, %v1180
      %1182 = vdwg.mxu0
      %1183 = vmatprep.subr.mxu0 0.0
      %1184 = vmatpush1.msra.mxu0 0.0
      %1185 = vmatprep.subr.mxu0 0.0
      %1186 = vmatpush1.msra.mxu0 0.0
      %1187 = vmatprep.subr.mxu0 0.0
      %1188 = vmatpush1.msra.mxu0 0.0
      %1189 = vmatprep.subr.mxu0 0.0
      %1190 = vmatpush1.msra.mxu0 0.0
      %1191 = vmatprep.subr.mxu0 0.0
      %1192 = vmatpush1.msra.mxu0 0.0
      %1193 = vmatprep.subr.mxu0 0.0
      %1194 = vmatpush1.msra.mxu0 0.0
      %1195 = vmatprep.subr.mxu0 0.0
      %1196 = vmatpush1.msra.mxu0 0.0
      %1197 = vmatprep.subr.mxu0 0.0
      %1198 = vmatpush1.msra.mxu0 0.0
      %1199 = vmatprep.subr.mxu0 0.0
      %1200 = vmatpush1.msra.mxu0 0.0
      %1201 = vmatprep.subr.mxu0 0.0
      %1202 = vmatpush1.msra.mxu0 0.0
      %1203 = vmatprep.subr.mxu0 0.0
      %1204 = vmatpush1.msra.mxu0 0.0
      %1205 = vmatprep.subr.mxu0 0.0
      %1206 = vmatpush1.msra.mxu0 0.0
      %1207 = vmatprep.subr.mxu0 0.0
      %1208 = vmatpush1.msra.mxu0 0.0
      %1209 = vmatprep.subr.mxu0 0.0
      %1210 = vmatpush1.msra.mxu0 0.0
      %1211 = vmatprep.subr.mxu0 0.0
      %1212 = vmatpush1.msra.mxu0 0.0
      %1213 = vmatprep.subr.mxu0 0.0
      %1214 = vmatpush1.msra.mxu0 %v446
      %1215 = vmatprep.subr.mxu0 0.0
      %1216 = vmatpush2.msra.mxu0 0.0
      %1217 = vmatprep.subr.mxu0 0.0
      %1218 = vmatpush2.msra.mxu0 0.0
      %1219 = vmatprep.subr.mxu0 0.0
      %1220 = vmatpush2.msra.mxu0 0.0
      %1221 = vmatprep.subr.mxu0 0.0
      %1222 = vmatpush2.msra.mxu0 0.0
      %1223 = vmatprep.subr.mxu0 0.0
      %1224 = vmatpush2.msra.mxu0 0.0
      %1225 = vmatprep.subr.mxu0 0.0
      %1226 = vmatpush2.msra.mxu0 0.0
      %1227 = vmatprep.subr.mxu0 0.0
      %1228 = vmatpush2.msra.mxu0 0.0
      %1229 = vmatprep.subr.mxu0 0.0
      %1230 = vmatpush2.msra.mxu0 0.0
      %1231 = vmatprep.subr.mxu0 0.0
      %1232 = vmatpush2.msra.mxu0 0.0
      %1233 = vmatprep.subr.mxu0 0.0
      %1234 = vmatpush2.msra.mxu0 0.0
      %1235 = vmatprep.subr.mxu0 0.0
      %1236 = vmatpush2.msra.mxu0 0.0
      %1237 = vmatprep.subr.mxu0 0.0
      %1238 = vmatpush2.msra.mxu0 0.0
      %1239 = vmatprep.subr.mxu0 0.0
      %1240 = vmatpush2.msra.mxu0 0.0
      %1241 = vmatprep.subr.mxu0 0.0
      %1242 = vmatpush2.msra.mxu0 0.0
      %1243 = vmatprep.subr.mxu0 0.0
      %1244 = vmatpush2.msra.mxu0 0.0
      %1245 = vmatprep.subr.mxu0 0.0
      %1246 = vmatpush2.msra.mxu0 0.0
      %1247 = vmatprep.mubr.f32.mxu0 0.0
      %1248 = vmatmul.mubr.f32.gmra.mxu0 %v1110
      %v1249 = vpop.f32.mrf.mxu0
      %v1250 = vadd.f32 0.0, %v1249
      %v1251 = vpop.f32.mrf.mxu0
      %1252 = vdwg.mxu0
      %v1253 = vadd.f32 %v1104, %v1179
      %v1254 = vadd.f32 %v1105, %v1181
      %v1255 = vadd.f32 %v1106, %v1250
      %s1256 = scalar_lea.vmem %s3, 40
      %v1257 = vld [vmem:[%s1256] sm:$0xff]
      %1258 = vrot.lane.b32.xlu0 %v444, 127
      %v1259 = vpop.permute.xlu0 %1258
      %1260 = vrot.lane.b32.xlu0 %v445, 127
      %v1261 = vpop.permute.xlu0 %1260
      %1262 = vrot.lane.b32.xlu0 %v446, 127
      %v1263 = vpop.permute.xlu0 %1262
      %vm1264 = vcmask 1039360
      %v1265 = vsel %vm1264, %v1259, %v1261
      %v1266 = vsel %vm1264, %v1261, %v1263
      %v1271 = vsel %vm467, %v1257, 0
      %1273 = vmatprep.subr.mxu0 0.0
      %1274 = vmatpush1.msra.mxu0 0.0
      %1275 = vmatprep.subr.mxu0 0.0
      %1276 = vmatpush1.msra.mxu0 0.0
      %1277 = vmatprep.subr.mxu0 0.0
      %1278 = vmatpush1.msra.mxu0 0.0
      %1279 = vmatprep.subr.mxu0 0.0
      %1280 = vmatpush1.msra.mxu0 0.0
      %1281 = vmatprep.subr.mxu0 0.0
      %1282 = vmatpush1.msra.mxu0 0.0
      %1283 = vmatprep.subr.mxu0 0.0
      %1284 = vmatpush1.msra.mxu0 0.0
      %1285 = vmatprep.subr.mxu0 0.0
      %1286 = vmatpush1.msra.mxu0 0.0
      %1287 = vmatprep.subr.mxu0 0.0
      %1288 = vmatpush1.msra.mxu0 0.0
      %1289 = vmatprep.subr.mxu0 0.0
      %1290 = vmatpush1.msra.mxu0 0.0
      %1291 = vmatprep.subr.mxu0 0.0
      %1292 = vmatpush1.msra.mxu0 0.0
      %1293 = vmatprep.subr.mxu0 0.0
      %1294 = vmatpush1.msra.mxu0 0.0
      %1295 = vmatprep.subr.mxu0 0.0
      %1296 = vmatpush1.msra.mxu0 0.0
      %1297 = vmatprep.subr.mxu0 0.0
      %1298 = vmatpush1.msra.mxu0 0.0
      %1299 = vmatprep.subr.mxu0 0.0
      %1300 = vmatpush1.msra.mxu0 0.0
      %1301 = vmatprep.subr.mxu0 0.0
      %1302 = vmatpush1.msra.mxu0 0.0
      %1303 = vmatprep.subr.mxu0 %v1266
      %1304 = vmatpush1.msra.mxu0 %v1265
      %1305 = vmatprep.subr.mxu0 0.0
      %1306 = vmatpush2.msra.mxu0 0.0
      %1307 = vmatprep.subr.mxu0 0.0
      %1308 = vmatpush2.msra.mxu0 0.0
      %1309 = vmatprep.subr.mxu0 0.0
      %1310 = vmatpush2.msra.mxu0 0.0
      %1311 = vmatprep.subr.mxu0 0.0
      %1312 = vmatpush2.msra.mxu0 0.0
      %1313 = vmatprep.subr.mxu0 0.0
      %1314 = vmatpush2.msra.mxu0 0.0
      %1315 = vmatprep.subr.mxu0 0.0
      %1316 = vmatpush2.msra.mxu0 0.0
      %1317 = vmatprep.subr.mxu0 0.0
      %1318 = vmatpush2.msra.mxu0 0.0
      %1319 = vmatprep.subr.mxu0 0.0
      %1320 = vmatpush2.msra.mxu0 0.0
      %1321 = vmatprep.subr.mxu0 0.0
      %1322 = vmatpush2.msra.mxu0 0.0
      %1323 = vmatprep.subr.mxu0 0.0
      %1324 = vmatpush2.msra.mxu0 0.0
      %1325 = vmatprep.subr.mxu0 0.0
      %1326 = vmatpush2.msra.mxu0 0.0
      %1327 = vmatprep.subr.mxu0 0.0
      %1328 = vmatpush2.msra.mxu0 0.0
      %1329 = vmatprep.subr.mxu0 0.0
      %1330 = vmatpush2.msra.mxu0 0.0
      %1331 = vmatprep.subr.mxu0 0.0
      %1332 = vmatpush2.msra.mxu0 0.0
      %1333 = vmatprep.subr.mxu0 0.0
      %1334 = vmatpush2.msra.mxu0 0.0
      %1335 = vmatprep.subr.mxu0 0.0
      %1336 = vmatpush2.msra.mxu0 0.0
      %1337 = vmatprep.mubr.f32.mxu0 0.0
      %1338 = vmatmul.mubr.f32.gmra.mxu0 %v1271
      %v1339 = vpop.f32.mrf.mxu0
      %v1340 = vadd.f32 0.0, %v1339
      %v1341 = vpop.f32.mrf.mxu0
      %v1342 = vadd.f32 0.0, %v1341
      %1343 = vdwg.mxu0
      %1344 = vmatprep.subr.mxu0 0.0
      %1345 = vmatpush1.msra.mxu0 0.0
      %1346 = vmatprep.subr.mxu0 0.0
      %1347 = vmatpush1.msra.mxu0 0.0
      %1348 = vmatprep.subr.mxu0 0.0
      %1349 = vmatpush1.msra.mxu0 0.0
      %1350 = vmatprep.subr.mxu0 0.0
      %1351 = vmatpush1.msra.mxu0 0.0
      %1352 = vmatprep.subr.mxu0 0.0
      %1353 = vmatpush1.msra.mxu0 0.0
      %1354 = vmatprep.subr.mxu0 0.0
      %1355 = vmatpush1.msra.mxu0 0.0
      %1356 = vmatprep.subr.mxu0 0.0
      %1357 = vmatpush1.msra.mxu0 0.0
      %1358 = vmatprep.subr.mxu0 0.0
      %1359 = vmatpush1.msra.mxu0 0.0
      %1360 = vmatprep.subr.mxu0 0.0
      %1361 = vmatpush1.msra.mxu0 0.0
      %1362 = vmatprep.subr.mxu0 0.0
      %1363 = vmatpush1.msra.mxu0 0.0
      %1364 = vmatprep.subr.mxu0 0.0
      %1365 = vmatpush1.msra.mxu0 0.0
      %1366 = vmatprep.subr.mxu0 0.0
      %1367 = vmatpush1.msra.mxu0 0.0
      %1368 = vmatprep.subr.mxu0 0.0
      %1369 = vmatpush1.msra.mxu0 0.0
      %1370 = vmatprep.subr.mxu0 0.0
      %1371 = vmatpush1.msra.mxu0 0.0
      %1372 = vmatprep.subr.mxu0 0.0
      %1373 = vmatpush1.msra.mxu0 0.0
      %1374 = vmatprep.subr.mxu0 0.0
      %1375 = vmatpush1.msra.mxu0 %v1263
      %1376 = vmatprep.subr.mxu0 0.0
      %1377 = vmatpush2.msra.mxu0 0.0
      %1378 = vmatprep.subr.mxu0 0.0
      %1379 = vmatpush2.msra.mxu0 0.0
      %1380 = vmatprep.subr.mxu0 0.0
      %1381 = vmatpush2.msra.mxu0 0.0
      %1382 = vmatprep.subr.mxu0 0.0
      %1383 = vmatpush2.msra.mxu0 0.0
      %1384 = vmatprep.subr.mxu0 0.0
      %1385 = vmatpush2.msra.mxu0 0.0
      %1386 = vmatprep.subr.mxu0 0.0
      %1387 = vmatpush2.msra.mxu0 0.0
      %1388 = vmatprep.subr.mxu0 0.0
      %1389 = vmatpush2.msra.mxu0 0.0
      %1390 = vmatprep.subr.mxu0 0.0
      %1391 = vmatpush2.msra.mxu0 0.0
      %1392 = vmatprep.subr.mxu0 0.0
      %1393 = vmatpush2.msra.mxu0 0.0
      %1394 = vmatprep.subr.mxu0 0.0
      %1395 = vmatpush2.msra.mxu0 0.0
      %1396 = vmatprep.subr.mxu0 0.0
      %1397 = vmatpush2.msra.mxu0 0.0
      %1398 = vmatprep.subr.mxu0 0.0
      %1399 = vmatpush2.msra.mxu0 0.0
      %1400 = vmatprep.subr.mxu0 0.0
      %1401 = vmatpush2.msra.mxu0 0.0
      %1402 = vmatprep.subr.mxu0 0.0
      %1403 = vmatpush2.msra.mxu0 0.0
      %1404 = vmatprep.subr.mxu0 0.0
      %1405 = vmatpush2.msra.mxu0 0.0
      %1406 = vmatprep.subr.mxu0 0.0
      %1407 = vmatpush2.msra.mxu0 0.0
      %1408 = vmatprep.mubr.f32.mxu0 0.0
      %1409 = vmatmul.mubr.f32.gmra.mxu0 %v1271
      %v1410 = vpop.f32.mrf.mxu0
      %v1411 = vadd.f32 0.0, %v1410
      %v1412 = vpop.f32.mrf.mxu0
      %1413 = vdwg.mxu0
      %v1414 = vadd.f32 %v1253, %v1340
      %v1415 = vadd.f32 %v1254, %v1342
      %v1416 = vadd.f32 %v1255, %v1411
      %s1417 = scalar_lea.vmem %s3, 48
      %v1418 = vld [vmem:[%s1417] sm:$0xff]
      %1419 = vrot.lane.b32.xlu0 %v444, 111
      %v1420 = vpop.permute.xlu0 %1419
      %1421 = vrot.lane.b32.xlu0 %v445, 111
      %v1422 = vpop.permute.xlu0 %1421
      %1423 = vrot.lane.b32.xlu0 %v446, 111
      %v1424 = vpop.permute.xlu0 %1423
      %vm1425 = vcmask 908288
      %v1426 = vsel %vm1425, %v1420, %v1422
      %v1427 = vsel %vm1425, %v1422, %v1424
      %v1432 = vsel %vm467, %v1418, 0
      %1434 = vmatprep.subr.mxu0 0.0
      %1435 = vmatpush1.msra.mxu0 0.0
      %1436 = vmatprep.subr.mxu0 0.0
      %1437 = vmatpush1.msra.mxu0 0.0
      %1438 = vmatprep.subr.mxu0 0.0
      %1439 = vmatpush1.msra.mxu0 0.0
      %1440 = vmatprep.subr.mxu0 0.0
      %1441 = vmatpush1.msra.mxu0 0.0
      %1442 = vmatprep.subr.mxu0 0.0
      %1443 = vmatpush1.msra.mxu0 0.0
      %1444 = vmatprep.subr.mxu0 0.0
      %1445 = vmatpush1.msra.mxu0 0.0
      %1446 = vmatprep.subr.mxu0 0.0
      %1447 = vmatpush1.msra.mxu0 0.0
      %1448 = vmatprep.subr.mxu0 0.0
      %1449 = vmatpush1.msra.mxu0 0.0
      %1450 = vmatprep.subr.mxu0 0.0
      %1451 = vmatpush1.msra.mxu0 0.0
      %1452 = vmatprep.subr.mxu0 0.0
      %1453 = vmatpush1.msra.mxu0 0.0
      %1454 = vmatprep.subr.mxu0 0.0
      %1455 = vmatpush1.msra.mxu0 0.0
      %1456 = vmatprep.subr.mxu0 0.0
      %1457 = vmatpush1.msra.mxu0 0.0
      %1458 = vmatprep.subr.mxu0 0.0
      %1459 = vmatpush1.msra.mxu0 0.0
      %1460 = vmatprep.subr.mxu0 0.0
      %1461 = vmatpush1.msra.mxu0 0.0
      %1462 = vmatprep.subr.mxu0 0.0
      %1463 = vmatpush1.msra.mxu0 0.0
      %1464 = vmatprep.subr.mxu0 %v1427
      %1465 = vmatpush1.msra.mxu0 %v1426
      %1466 = vmatprep.subr.mxu0 0.0
      %1467 = vmatpush2.msra.mxu0 0.0
      %1468 = vmatprep.subr.mxu0 0.0
      %1469 = vmatpush2.msra.mxu0 0.0
      %1470 = vmatprep.subr.mxu0 0.0
      %1471 = vmatpush2.msra.mxu0 0.0
      %1472 = vmatprep.subr.mxu0 0.0
      %1473 = vmatpush2.msra.mxu0 0.0
      %1474 = vmatprep.subr.mxu0 0.0
      %1475 = vmatpush2.msra.mxu0 0.0
      %1476 = vmatprep.subr.mxu0 0.0
      %1477 = vmatpush2.msra.mxu0 0.0
      %1478 = vmatprep.subr.mxu0 0.0
      %1479 = vmatpush2.msra.mxu0 0.0
      %1480 = vmatprep.subr.mxu0 0.0
      %1481 = vmatpush2.msra.mxu0 0.0
      %1482 = vmatprep.subr.mxu0 0.0
      %1483 = vmatpush2.msra.mxu0 0.0
      %1484 = vmatprep.subr.mxu0 0.0
      %1485 = vmatpush2.msra.mxu0 0.0
      %1486 = vmatprep.subr.mxu0 0.0
      %1487 = vmatpush2.msra.mxu0 0.0
      %1488 = vmatprep.subr.mxu0 0.0
      %1489 = vmatpush2.msra.mxu0 0.0
      %1490 = vmatprep.subr.mxu0 0.0
      %1491 = vmatpush2.msra.mxu0 0.0
      %1492 = vmatprep.subr.mxu0 0.0
      %1493 = vmatpush2.msra.mxu0 0.0
      %1494 = vmatprep.subr.mxu0 0.0
      %1495 = vmatpush2.msra.mxu0 0.0
      %1496 = vmatprep.subr.mxu0 0.0
      %1497 = vmatpush2.msra.mxu0 0.0
      %1498 = vmatprep.mubr.f32.mxu0 0.0
      %1499 = vmatmul.mubr.f32.gmra.mxu0 %v1432
      %v1500 = vpop.f32.mrf.mxu0
      %v1501 = vadd.f32 0.0, %v1500
      %v1502 = vpop.f32.mrf.mxu0
      %v1503 = vadd.f32 0.0, %v1502
      %1504 = vdwg.mxu0
      %1505 = vmatprep.subr.mxu0 0.0
      %1506 = vmatpush1.msra.mxu0 0.0
      %1507 = vmatprep.subr.mxu0 0.0
      %1508 = vmatpush1.msra.mxu0 0.0
      %1509 = vmatprep.subr.mxu0 0.0
      %1510 = vmatpush1.msra.mxu0 0.0
      %1511 = vmatprep.subr.mxu0 0.0
      %1512 = vmatpush1.msra.mxu0 0.0
      %1513 = vmatprep.subr.mxu0 0.0
      %1514 = vmatpush1.msra.mxu0 0.0
      %1515 = vmatprep.subr.mxu0 0.0
      %1516 = vmatpush1.msra.mxu0 0.0
      %1517 = vmatprep.subr.mxu0 0.0
      %1518 = vmatpush1.msra.mxu0 0.0
      %1519 = vmatprep.subr.mxu0 0.0
      %1520 = vmatpush1.msra.mxu0 0.0
      %1521 = vmatprep.subr.mxu0 0.0
      %1522 = vmatpush1.msra.mxu0 0.0
      %1523 = vmatprep.subr.mxu0 0.0
      %1524 = vmatpush1.msra.mxu0 0.0
      %1525 = vmatprep.subr.mxu0 0.0
      %1526 = vmatpush1.msra.mxu0 0.0
      %1527 = vmatprep.subr.mxu0 0.0
      %1528 = vmatpush1.msra.mxu0 0.0
      %1529 = vmatprep.subr.mxu0 0.0
      %1530 = vmatpush1.msra.mxu0 0.0
      %1531 = vmatprep.subr.mxu0 0.0
      %1532 = vmatpush1.msra.mxu0 0.0
      %1533 = vmatprep.subr.mxu0 0.0
      %1534 = vmatpush1.msra.mxu0 0.0
      %1535 = vmatprep.subr.mxu0 0.0
      %1536 = vmatpush1.msra.mxu0 %v1424
      %1537 = vmatprep.subr.mxu0 0.0
      %1538 = vmatpush2.msra.mxu0 0.0
      %1539 = vmatprep.subr.mxu0 0.0
      %1540 = vmatpush2.msra.mxu0 0.0
      %1541 = vmatprep.subr.mxu0 0.0
      %1542 = vmatpush2.msra.mxu0 0.0
      %1543 = vmatprep.subr.mxu0 0.0
      %1544 = vmatpush2.msra.mxu0 0.0
      %1545 = vmatprep.subr.mxu0 0.0
      %1546 = vmatpush2.msra.mxu0 0.0
      %1547 = vmatprep.subr.mxu0 0.0
      %1548 = vmatpush2.msra.mxu0 0.0
      %1549 = vmatprep.subr.mxu0 0.0
      %1550 = vmatpush2.msra.mxu0 0.0
      %1551 = vmatprep.subr.mxu0 0.0
      %1552 = vmatpush2.msra.mxu0 0.0
      %1553 = vmatprep.subr.mxu0 0.0
      %1554 = vmatpush2.msra.mxu0 0.0
      %1555 = vmatprep.subr.mxu0 0.0
      %1556 = vmatpush2.msra.mxu0 0.0
      %1557 = vmatprep.subr.mxu0 0.0
      %1558 = vmatpush2.msra.mxu0 0.0
      %1559 = vmatprep.subr.mxu0 0.0
      %1560 = vmatpush2.msra.mxu0 0.0
      %1561 = vmatprep.subr.mxu0 0.0
      %1562 = vmatpush2.msra.mxu0 0.0
      %1563 = vmatprep.subr.mxu0 0.0
      %1564 = vmatpush2.msra.mxu0 0.0
      %1565 = vmatprep.subr.mxu0 0.0
      %1566 = vmatpush2.msra.mxu0 0.0
      %1567 = vmatprep.subr.mxu0 0.0
      %1568 = vmatpush2.msra.mxu0 0.0
      %1569 = vmatprep.mubr.f32.mxu0 0.0
      %1570 = vmatmul.mubr.f32.gmra.mxu0 %v1432
      %v1571 = vpop.f32.mrf.mxu0
      %v1572 = vadd.f32 0.0, %v1571
      %v1573 = vpop.f32.mrf.mxu0
      %1574 = vdwg.mxu0
      %v1575 = vadd.f32 %v1414, %v1501
      %v1576 = vadd.f32 %v1415, %v1503
      %v1577 = vadd.f32 %v1416, %v1572
      %s1578 = scalar_lea.vmem %s3, 56
      %v1579 = vld [vmem:[%s1578] sm:$0xff]
      %1580 = vrot.lane.b32.xlu0 %v444, 110
      %v1581 = vpop.permute.xlu0 %1580
      %1582 = vrot.lane.b32.xlu0 %v445, 110
      %v1583 = vpop.permute.xlu0 %1582
      %1584 = vrot.lane.b32.xlu0 %v446, 110
      %v1585 = vpop.permute.xlu0 %1584
      %vm1586 = vcmask 900096
      %v1587 = vsel %vm1586, %v1581, %v1583
      %v1588 = vsel %vm1586, %v1583, %v1585
      %v1593 = vsel %vm467, %v1579, 0
      %1595 = vmatprep.subr.mxu0 0.0
      %1596 = vmatpush1.msra.mxu0 0.0
      %1597 = vmatprep.subr.mxu0 0.0
      %1598 = vmatpush1.msra.mxu0 0.0
      %1599 = vmatprep.subr.mxu0 0.0
      %1600 = vmatpush1.msra.mxu0 0.0
      %1601 = vmatprep.subr.mxu0 0.0
      %1602 = vmatpush1.msra.mxu0 0.0
      %1603 = vmatprep.subr.mxu0 0.0
      %1604 = vmatpush1.msra.mxu0 0.0
      %1605 = vmatprep.subr.mxu0 0.0
      %1606 = vmatpush1.msra.mxu0 0.0
      %1607 = vmatprep.subr.mxu0 0.0
      %1608 = vmatpush1.msra.mxu0 0.0
      %1609 = vmatprep.subr.mxu0 0.0
      %1610 = vmatpush1.msra.mxu0 0.0
      %1611 = vmatprep.subr.mxu0 0.0
      %1612 = vmatpush1.msra.mxu0 0.0
      %1613 = vmatprep.subr.mxu0 0.0
      %1614 = vmatpush1.msra.mxu0 0.0
      %1615 = vmatprep.subr.mxu0 0.0
      %1616 = vmatpush1.msra.mxu0 0.0
      %1617 = vmatprep.subr.mxu0 0.0
      %1618 = vmatpush1.msra.mxu0 0.0
      %1619 = vmatprep.subr.mxu0 0.0
      %1620 = vmatpush1.msra.mxu0 0.0
      %1621 = vmatprep.subr.mxu0 0.0
      %1622 = vmatpush1.msra.mxu0 0.0
      %1623 = vmatprep.subr.mxu0 0.0
      %1624 = vmatpush1.msra.mxu0 0.0
      %1625 = vmatprep.subr.mxu0 %v1588
      %1626 = vmatpush1.msra.mxu0 %v1587
      %1627 = vmatprep.subr.mxu0 0.0
      %1628 = vmatpush2.msra.mxu0 0.0
      %1629 = vmatprep.subr.mxu0 0.0
      %1630 = vmatpush2.msra.mxu0 0.0
      %1631 = vmatprep.subr.mxu0 0.0
      %1632 = vmatpush2.msra.mxu0 0.0
      %1633 = vmatprep.subr.mxu0 0.0
      %1634 = vmatpush2.msra.mxu0 0.0
      %1635 = vmatprep.subr.mxu0 0.0
      %1636 = vmatpush2.msra.mxu0 0.0
      %1637 = vmatprep.subr.mxu0 0.0
      %1638 = vmatpush2.msra.mxu0 0.0
      %1639 = vmatprep.subr.mxu0 0.0
      %1640 = vmatpush2.msra.mxu0 0.0
      %1641 = vmatprep.subr.mxu0 0.0
      %1642 = vmatpush2.msra.mxu0 0.0
      %1643 = vmatprep.subr.mxu0 0.0
      %1644 = vmatpush2.msra.mxu0 0.0
      %1645 = vmatprep.subr.mxu0 0.0
      %1646 = vmatpush2.msra.mxu0 0.0
      %1647 = vmatprep.subr.mxu0 0.0
      %1648 = vmatpush2.msra.mxu0 0.0
      %1649 = vmatprep.subr.mxu0 0.0
      %1650 = vmatpush2.msra.mxu0 0.0
      %1651 = vmatprep.subr.mxu0 0.0
      %1652 = vmatpush2.msra.mxu0 0.0
      %1653 = vmatprep.subr.mxu0 0.0
      %1654 = vmatpush2.msra.mxu0 0.0
      %1655 = vmatprep.subr.mxu0 0.0
      %1656 = vmatpush2.msra.mxu0 0.0
      %1657 = vmatprep.subr.mxu0 0.0
      %1658 = vmatpush2.msra.mxu0 0.0
      %1659 = vmatprep.mubr.f32.mxu0 0.0
      %1660 = vmatmul.mubr.f32.gmra.mxu0 %v1593
      %v1661 = vpop.f32.mrf.mxu0
      %v1662 = vadd.f32 0.0, %v1661
      %v1663 = vpop.f32.mrf.mxu0
      %v1664 = vadd.f32 0.0, %v1663
      %1665 = vdwg.mxu0
      %1666 = vmatprep.subr.mxu0 0.0
      %1667 = vmatpush1.msra.mxu0 0.0
      %1668 = vmatprep.subr.mxu0 0.0
      %1669 = vmatpush1.msra.mxu0 0.0
      %1670 = vmatprep.subr.mxu0 0.0
      %1671 = vmatpush1.msra.mxu0 0.0
      %1672 = vmatprep.subr.mxu0 0.0
      %1673 = vmatpush1.msra.mxu0 0.0
      %1674 = vmatprep.subr.mxu0 0.0
      %1675 = vmatpush1.msra.mxu0 0.0
      %1676 = vmatprep.subr.mxu0 0.0
      %1677 = vmatpush1.msra.mxu0 0.0
      %1678 = vmatprep.subr.mxu0 0.0
      %1679 = vmatpush1.msra.mxu0 0.0
      %1680 = vmatprep.subr.mxu0 0.0
      %1681 = vmatpush1.msra.mxu0 0.0
      %1682 = vmatprep.subr.mxu0 0.0
      %1683 = vmatpush1.msra.mxu0 0.0
      %1684 = vmatprep.subr.mxu0 0.0
      %1685 = vmatpush1.msra.mxu0 0.0
      %1686 = vmatprep.subr.mxu0 0.0
      %1687 = vmatpush1.msra.mxu0 0.0
      %1688 = vmatprep.subr.mxu0 0.0
      %1689 = vmatpush1.msra.mxu0 0.0
      %1690 = vmatprep.subr.mxu0 0.0
      %1691 = vmatpush1.msra.mxu0 0.0
      %1692 = vmatprep.subr.mxu0 0.0
      %1693 = vmatpush1.msra.mxu0 0.0
      %1694 = vmatprep.subr.mxu0 0.0
      %1695 = vmatpush1.msra.mxu0 0.0
      %1696 = vmatprep.subr.mxu0 0.0
      %1697 = vmatpush1.msra.mxu0 %v1585
      %1698 = vmatprep.subr.mxu0 0.0
      %1699 = vmatpush2.msra.mxu0 0.0
      %1700 = vmatprep.subr.mxu0 0.0
      %1701 = vmatpush2.msra.mxu0 0.0
      %1702 = vmatprep.subr.mxu0 0.0
      %1703 = vmatpush2.msra.mxu0 0.0
      %1704 = vmatprep.subr.mxu0 0.0
      %1705 = vmatpush2.msra.mxu0 0.0
      %1706 = vmatprep.subr.mxu0 0.0
      %1707 = vmatpush2.msra.mxu0 0.0
      %1708 = vmatprep.subr.mxu0 0.0
      %1709 = vmatpush2.msra.mxu0 0.0
      %1710 = vmatprep.subr.mxu0 0.0
      %1711 = vmatpush2.msra.mxu0 0.0
      %1712 = vmatprep.subr.mxu0 0.0
      %1713 = vmatpush2.msra.mxu0 0.0
      %1714 = vmatprep.subr.mxu0 0.0
      %1715 = vmatpush2.msra.mxu0 0.0
      %1716 = vmatprep.subr.mxu0 0.0
      %1717 = vmatpush2.msra.mxu0 0.0
      %1718 = vmatprep.subr.mxu0 0.0
      %1719 = vmatpush2.msra.mxu0 0.0
      %1720 = vmatprep.subr.mxu0 0.0
      %1721 = vmatpush2.msra.mxu0 0.0
      %1722 = vmatprep.subr.mxu0 0.0
      %1723 = vmatpush2.msra.mxu0 0.0
      %1724 = vmatprep.subr.mxu0 0.0
      %1725 = vmatpush2.msra.mxu0 0.0
      %1726 = vmatprep.subr.mxu0 0.0
      %1727 = vmatpush2.msra.mxu0 0.0
      %1728 = vmatprep.subr.mxu0 0.0
      %1729 = vmatpush2.msra.mxu0 0.0
      %1730 = vmatprep.mubr.f32.mxu0 0.0
      %1731 = vmatmul.mubr.f32.gmra.mxu0 %v1593
      %v1732 = vpop.f32.mrf.mxu0
      %v1733 = vadd.f32 0.0, %v1732
      %v1734 = vpop.f32.mrf.mxu0
      %1735 = vdwg.mxu0
      %v1736 = vadd.f32 %v1575, %v1662
      %v1737 = vadd.f32 %v1576, %v1664
      %v1738 = vadd.f32 %v1577, %v1733
      %s1739 = scalar_lea.vmem %s3, 64
      %v1740 = vld [vmem:[%s1739] sm:$0xff]
      %1741 = vrot.lane.b32.xlu0 %v444, 109
      %v1742 = vpop.permute.xlu0 %1741
      %1743 = vrot.lane.b32.xlu0 %v445, 109
      %v1744 = vpop.permute.xlu0 %1743
      %1745 = vrot.lane.b32.xlu0 %v446, 109
      %v1746 = vpop.permute.xlu0 %1745
      %vm1747 = vcmask 891904
      %v1748 = vsel %vm1747, %v1742, %v1744
      %v1749 = vsel %vm1747, %v1744, %v1746
      %v1754 = vsel %vm467, %v1740, 0
      %1756 = vmatprep.subr.mxu0 0.0
      %1757 = vmatpush1.msra.mxu0 0.0
      %1758 = vmatprep.subr.mxu0 0.0
      %1759 = vmatpush1.msra.mxu0 0.0
      %1760 = vmatprep.subr.mxu0 0.0
      %1761 = vmatpush1.msra.mxu0 0.0
      %1762 = vmatprep.subr.mxu0 0.0
      %1763 = vmatpush1.msra.mxu0 0.0
      %1764 = vmatprep.subr.mxu0 0.0
      %1765 = vmatpush1.msra.mxu0 0.0
      %1766 = vmatprep.subr.mxu0 0.0
      %1767 = vmatpush1.msra.mxu0 0.0
      %1768 = vmatprep.subr.mxu0 0.0
      %1769 = vmatpush1.msra.mxu0 0.0
      %1770 = vmatprep.subr.mxu0 0.0
      %1771 = vmatpush1.msra.mxu0 0.0
      %1772 = vmatprep.subr.mxu0 0.0
      %1773 = vmatpush1.msra.mxu0 0.0
      %1774 = vmatprep.subr.mxu0 0.0
      %1775 = vmatpush1.msra.mxu0 0.0
      %1776 = vmatprep.subr.mxu0 0.0
      %1777 = vmatpush1.msra.mxu0 0.0
      %1778 = vmatprep.subr.mxu0 0.0
      %1779 = vmatpush1.msra.mxu0 0.0
      %1780 = vmatprep.subr.mxu0 0.0
      %1781 = vmatpush1.msra.mxu0 0.0
      %1782 = vmatprep.subr.mxu0 0.0
      %1783 = vmatpush1.msra.mxu0 0.0
      %1784 = vmatprep.subr.mxu0 0.0
      %1785 = vmatpush1.msra.mxu0 0.0
      %1786 = vmatprep.subr.mxu0 %v1749
      %1787 = vmatpush1.msra.mxu0 %v1748
      %1788 = vmatprep.subr.mxu0 0.0
      %1789 = vmatpush2.msra.mxu0 0.0
      %1790 = vmatprep.subr.mxu0 0.0
      %1791 = vmatpush2.msra.mxu0 0.0
      %1792 = vmatprep.subr.mxu0 0.0
      %1793 = vmatpush2.msra.mxu0 0.0
      %1794 = vmatprep.subr.mxu0 0.0
      %1795 = vmatpush2.msra.mxu0 0.0
      %1796 = vmatprep.subr.mxu0 0.0
      %1797 = vmatpush2.msra.mxu0 0.0
      %1798 = vmatprep.subr.mxu0 0.0
      %1799 = vmatpush2.msra.mxu0 0.0
      %1800 = vmatprep.subr.mxu0 0.0
      %1801 = vmatpush2.msra.mxu0 0.0
      %1802 = vmatprep.subr.mxu0 0.0
      %1803 = vmatpush2.msra.mxu0 0.0
      %1804 = vmatprep.subr.mxu0 0.0
      %1805 = vmatpush2.msra.mxu0 0.0
      %1806 = vmatprep.subr.mxu0 0.0
      %1807 = vmatpush2.msra.mxu0 0.0
      %1808 = vmatprep.subr.mxu0 0.0
      %1809 = vmatpush2.msra.mxu0 0.0
      %1810 = vmatprep.subr.mxu0 0.0
      %1811 = vmatpush2.msra.mxu0 0.0
      %1812 = vmatprep.subr.mxu0 0.0
      %1813 = vmatpush2.msra.mxu0 0.0
      %1814 = vmatprep.subr.mxu0 0.0
      %1815 = vmatpush2.msra.mxu0 0.0
      %1816 = vmatprep.subr.mxu0 0.0
      %1817 = vmatpush2.msra.mxu0 0.0
      %1818 = vmatprep.subr.mxu0 0.0
      %1819 = vmatpush2.msra.mxu0 0.0
      %1820 = vmatprep.mubr.f32.mxu0 0.0
      %1821 = vmatmul.mubr.f32.gmra.mxu0 %v1754
      %v1822 = vpop.f32.mrf.mxu0
      %v1823 = vadd.f32 0.0, %v1822
      %v1824 = vpop.f32.mrf.mxu0
      %v1825 = vadd.f32 0.0, %v1824
      %1826 = vdwg.mxu0
      %1827 = vmatprep.subr.mxu0 0.0
      %1828 = vmatpush1.msra.mxu0 0.0
      %1829 = vmatprep.subr.mxu0 0.0
      %1830 = vmatpush1.msra.mxu0 0.0
      %1831 = vmatprep.subr.mxu0 0.0
      %1832 = vmatpush1.msra.mxu0 0.0
      %1833 = vmatprep.subr.mxu0 0.0
      %1834 = vmatpush1.msra.mxu0 0.0
      %1835 = vmatprep.subr.mxu0 0.0
      %1836 = vmatpush1.msra.mxu0 0.0
      %1837 = vmatprep.subr.mxu0 0.0
      %1838 = vmatpush1.msra.mxu0 0.0
      %1839 = vmatprep.subr.mxu0 0.0
      %1840 = vmatpush1.msra.mxu0 0.0
      %1841 = vmatprep.subr.mxu0 0.0
      %1842 = vmatpush1.msra.mxu0 0.0
      %1843 = vmatprep.subr.mxu0 0.0
      %1844 = vmatpush1.msra.mxu0 0.0
      %1845 = vmatprep.subr.mxu0 0.0
      %1846 = vmatpush1.msra.mxu0 0.0
      %1847 = vmatprep.subr.mxu0 0.0
      %1848 = vmatpush1.msra.mxu0 0.0
      %1849 = vmatprep.subr.mxu0 0.0
      %1850 = vmatpush1.msra.mxu0 0.0
      %1851 = vmatprep.subr.mxu0 0.0
      %1852 = vmatpush1.msra.mxu0 0.0
      %1853 = vmatprep.subr.mxu0 0.0
      %1854 = vmatpush1.msra.mxu0 0.0
      %1855 = vmatprep.subr.mxu0 0.0
      %1856 = vmatpush1.msra.mxu0 0.0
      %1857 = vmatprep.subr.mxu0 0.0
      %1858 = vmatpush1.msra.mxu0 %v1746
      %1859 = vmatprep.subr.mxu0 0.0
      %1860 = vmatpush2.msra.mxu0 0.0
      %1861 = vmatprep.subr.mxu0 0.0
      %1862 = vmatpush2.msra.mxu0 0.0
      %1863 = vmatprep.subr.mxu0 0.0
      %1864 = vmatpush2.msra.mxu0 0.0
      %1865 = vmatprep.subr.mxu0 0.0
      %1866 = vmatpush2.msra.mxu0 0.0
      %1867 = vmatprep.subr.mxu0 0.0
      %1868 = vmatpush2.msra.mxu0 0.0
      %1869 = vmatprep.subr.mxu0 0.0
      %1870 = vmatpush2.msra.mxu0 0.0
      %1871 = vmatprep.subr.mxu0 0.0
      %1872 = vmatpush2.msra.mxu0 0.0
      %1873 = vmatprep.subr.mxu0 0.0
      %1874 = vmatpush2.msra.mxu0 0.0
      %1875 = vmatprep.subr.mxu0 0.0
      %1876 = vmatpush2.msra.mxu0 0.0
      %1877 = vmatprep.subr.mxu0 0.0
      %1878 = vmatpush2.msra.mxu0 0.0
      %1879 = vmatprep.subr.mxu0 0.0
      %1880 = vmatpush2.msra.mxu0 0.0
      %1881 = vmatprep.subr.mxu0 0.0
      %1882 = vmatpush2.msra.mxu0 0.0
      %1883 = vmatprep.subr.mxu0 0.0
      %1884 = vmatpush2.msra.mxu0 0.0
      %1885 = vmatprep.subr.mxu0 0.0
      %1886 = vmatpush2.msra.mxu0 0.0
      %1887 = vmatprep.subr.mxu0 0.0
      %1888 = vmatpush2.msra.mxu0 0.0
      %1889 = vmatprep.subr.mxu0 0.0
      %1890 = vmatpush2.msra.mxu0 0.0
      %1891 = vmatprep.mubr.f32.mxu0 0.0
      %1892 = vmatmul.mubr.f32.gmra.mxu0 %v1754
      %v1893 = vpop.f32.mrf.mxu0
      %v1894 = vadd.f32 0.0, %v1893
      %v1895 = vpop.f32.mrf.mxu0
      %1896 = vdwg.mxu0
      %v1897 = vadd.f32 %v1736, %v1823
      %v1898 = vadd.f32 %v1737, %v1825
      %v1899 = vadd.f32 %v1738, %v1894
      %v1900 = vmax.f32 %v1897, 0.0
      %v1901 = vmax.f32 %v1898, 0.0
      %v1902 = vmax.f32 %v1899, 0.0
      %v1904 = vlaneseq
      %v1905 = vshrl.u32 %v1904, 7
      %v1906 = vsub.s32 0, %v1905
      %v1907 = vrot.slane %v415, %v1906
      %v1908 = vlaneseq
      %v1909 = vshrl.u32 %v1908, 7
      %v1910 = vsub.s32 1, %v1909
      %v1911 = vrot.slane %v415, %v1910
      %v1912 = vlaneseq
      %v1913 = vshrl.u32 %v1912, 7
      %v1914 = vsub.s32 2, %v1913
      %v1915 = vrot.slane %v415, %v1914
      %v1919 = vmul.f32 %v1900, %v1907
      %v1920 = vmul.f32 %v1901, %v1911
      %v1921 = vmul.f32 %v1902, %v1915
      %1922 = vst [vmem:[#allocation2 + $0x8] sm:$0xf0] %v1919
      %1923 = vst [vmem:[#allocation2 + $0x10] sm:$0xf0] %v1920
      %1924 = vst.msk [vmem:[#allocation2 + $0x18] sm:$0xf0] %vm435, %v1921
      %v1925 = vld [vmem:[%s6] sm:$0xf]
      %1927 = vset.pattern.permute.xlu0 0
      %1928 = vperm.xlu0 %1927, %v1925
      %v1929 = vpop.permute.xlu0 %1928
      %v1931 = vld [vmem:[#allocation2] sm:$0xf0]
      %v1932 = vld [vmem:[#allocation2 + $0x8] sm:$0xf0]
      %v1933 = vld [vmem:[#allocation2 + $0x10] sm:$0xf0]
      %v1934 = vld [vmem:[#allocation2 + $0x18] sm:$0xf0]
      %v1935 = vld [vmem:[%s5] sm:$0xf]
      %v1940 = vrot.slane %v1931, 4
      %v1941 = vrot.slane %v1932, 4
      %v1942 = vrot.slane %v1933, 4
      %v1943 = vrot.slane %v1934, 4
      %1944 = vrot.lane.b32.xlu0 %v1940, 19
      %v1945 = vpop.permute.xlu0 %1944
      %1946 = vrot.lane.b32.xlu0 %v1941, 19
      %v1947 = vpop.permute.xlu0 %1946
      %1948 = vrot.lane.b32.xlu0 %v1942, 19
      %v1949 = vpop.permute.xlu0 %1948
      %1950 = vrot.lane.b32.xlu0 %v1943, 19
      %v1951 = vpop.permute.xlu0 %1950
      %v1952 = vsel %vm460, %v1945, %v1947
      %v1953 = vsel %vm460, %v1947, %v1949
      %v1954 = vsel %vm460, %v1949, %v1951
      %vm1955 = vcmask 31744
      %v1957 = vsel %vm1955, %v1935, 0
      %vm1959 = vcmask 1043456
      %v1960 = vsel %vm1959, %v1952, 0
      %v1962 = vsel %vm1959, %v1953, 0
      %v1964 = vsel %vm1959, %v1954, 0
      %1966 = vmatprep.subr.mxu0 0.0
      %1967 = vmatpush1.msra.mxu0 0.0
      %1968 = vmatprep.subr.mxu0 0.0
      %1969 = vmatpush1.msra.mxu0 0.0
      %1970 = vmatprep.subr.mxu0 0.0
      %1971 = vmatpush1.msra.mxu0 0.0
      %1972 = vmatprep.subr.mxu0 0.0
      %1973 = vmatpush1.msra.mxu0 0.0
      %1974 = vmatprep.subr.mxu0 0.0
      %1975 = vmatpush1.msra.mxu0 0.0
      %1976 = vmatprep.subr.mxu0 0.0
      %1977 = vmatpush1.msra.mxu0 0.0
      %1978 = vmatprep.subr.mxu0 0.0
      %1979 = vmatpush1.msra.mxu0 0.0
      %1980 = vmatprep.subr.mxu0 0.0
      %1981 = vmatpush1.msra.mxu0 0.0
      %1982 = vmatprep.subr.mxu0 0.0
      %1983 = vmatpush1.msra.mxu0 0.0
      %1984 = vmatprep.subr.mxu0 0.0
      %1985 = vmatpush1.msra.mxu0 0.0
      %1986 = vmatprep.subr.mxu0 0.0
      %1987 = vmatpush1.msra.mxu0 0.0
      %1988 = vmatprep.subr.mxu0 0.0
      %1989 = vmatpush1.msra.mxu0 0.0
      %1990 = vmatprep.subr.mxu0 0.0
      %1991 = vmatpush1.msra.mxu0 0.0
      %1992 = vmatprep.subr.mxu0 0.0
      %1993 = vmatpush1.msra.mxu0 0.0
      %1994 = vmatprep.subr.mxu0 0.0
      %1995 = vmatpush1.msra.mxu0 0.0
      %1996 = vmatprep.subr.mxu0 %v1962
      %1997 = vmatpush1.msra.mxu0 %v1960
      %1998 = vmatprep.subr.mxu0 0.0
      %1999 = vmatpush2.msra.mxu0 0.0
      %2000 = vmatprep.subr.mxu0 0.0
      %2001 = vmatpush2.msra.mxu0 0.0
      %2002 = vmatprep.subr.mxu0 0.0
      %2003 = vmatpush2.msra.mxu0 0.0
      %2004 = vmatprep.subr.mxu0 0.0
      %2005 = vmatpush2.msra.mxu0 0.0
      %2006 = vmatprep.subr.mxu0 0.0
      %2007 = vmatpush2.msra.mxu0 0.0
      %2008 = vmatprep.subr.mxu0 0.0
      %2009 = vmatpush2.msra.mxu0 0.0
      %2010 = vmatprep.subr.mxu0 0.0
      %2011 = vmatpush2.msra.mxu0 0.0
      %2012 = vmatprep.subr.mxu0 0.0
      %2013 = vmatpush2.msra.mxu0 0.0
      %2014 = vmatprep.subr.mxu0 0.0
      %2015 = vmatpush2.msra.mxu0 0.0
      %2016 = vmatprep.subr.mxu0 0.0
      %2017 = vmatpush2.msra.mxu0 0.0
      %2018 = vmatprep.subr.mxu0 0.0
      %2019 = vmatpush2.msra.mxu0 0.0
      %2020 = vmatprep.subr.mxu0 0.0
      %2021 = vmatpush2.msra.mxu0 0.0
      %2022 = vmatprep.subr.mxu0 0.0
      %2023 = vmatpush2.msra.mxu0 0.0
      %2024 = vmatprep.subr.mxu0 0.0
      %2025 = vmatpush2.msra.mxu0 0.0
      %2026 = vmatprep.subr.mxu0 0.0
      %2027 = vmatpush2.msra.mxu0 0.0
      %2028 = vmatprep.subr.mxu0 0.0
      %2029 = vmatpush2.msra.mxu0 0.0
      %2030 = vmatprep.mubr.f32.mxu0 0.0
      %2031 = vmatmul.mubr.f32.gmra.mxu0 %v1957
      %v2032 = vpop.f32.mrf.mxu0
      %v2033 = vadd.f32 0.0, %v2032
      %v2034 = vpop.f32.mrf.mxu0
      %v2035 = vadd.f32 0.0, %v2034
      %2036 = vdwg.mxu0
      %2037 = vmatprep.subr.mxu0 0.0
      %2038 = vmatpush1.msra.mxu0 0.0
      %2039 = vmatprep.subr.mxu0 0.0
      %2040 = vmatpush1.msra.mxu0 0.0
      %2041 = vmatprep.subr.mxu0 0.0
      %2042 = vmatpush1.msra.mxu0 0.0
      %2043 = vmatprep.subr.mxu0 0.0
      %2044 = vmatpush1.msra.mxu0 0.0
      %2045 = vmatprep.subr.mxu0 0.0
      %2046 = vmatpush1.msra.mxu0 0.0
      %2047 = vmatprep.subr.mxu0 0.0
      %2048 = vmatpush1.msra.mxu0 0.0
      %2049 = vmatprep.subr.mxu0 0.0
      %2050 = vmatpush1.msra.mxu0 0.0
      %2051 = vmatprep.subr.mxu0 0.0
      %2052 = vmatpush1.msra.mxu0 0.0
      %2053 = vmatprep.subr.mxu0 0.0
      %2054 = vmatpush1.msra.mxu0 0.0
      %2055 = vmatprep.subr.mxu0 0.0
      %2056 = vmatpush1.msra.mxu0 0.0
      %2057 = vmatprep.subr.mxu0 0.0
      %2058 = vmatpush1.msra.mxu0 0.0
      %2059 = vmatprep.subr.mxu0 0.0
      %2060 = vmatpush1.msra.mxu0 0.0
      %2061 = vmatprep.subr.mxu0 0.0
      %2062 = vmatpush1.msra.mxu0 0.0
      %2063 = vmatprep.subr.mxu0 0.0
      %2064 = vmatpush1.msra.mxu0 0.0
      %2065 = vmatprep.subr.mxu0 0.0
      %2066 = vmatpush1.msra.mxu0 0.0
      %2067 = vmatprep.subr.mxu0 0.0
      %2068 = vmatpush1.msra.mxu0 %v1964
      %2069 = vmatprep.subr.mxu0 0.0
      %2070 = vmatpush2.msra.mxu0 0.0
      %2071 = vmatprep.subr.mxu0 0.0
      %2072 = vmatpush2.msra.mxu0 0.0
      %2073 = vmatprep.subr.mxu0 0.0
      %2074 = vmatpush2.msra.mxu0 0.0
      %2075 = vmatprep.subr.mxu0 0.0
      %2076 = vmatpush2.msra.mxu0 0.0
      %2077 = vmatprep.subr.mxu0 0.0
      %2078 = vmatpush2.msra.mxu0 0.0
      %2079 = vmatprep.subr.mxu0 0.0
      %2080 = vmatpush2.msra.mxu0 0.0
      %2081 = vmatprep.subr.mxu0 0.0
      %2082 = vmatpush2.msra.mxu0 0.0
      %2083 = vmatprep.subr.mxu0 0.0
      %2084 = vmatpush2.msra.mxu0 0.0
      %2085 = vmatprep.subr.mxu0 0.0
      %2086 = vmatpush2.msra.mxu0 0.0
      %2087 = vmatprep.subr.mxu0 0.0
      %2088 = vmatpush2.msra.mxu0 0.0
      %2089 = vmatprep.subr.mxu0 0.0
      %2090 = vmatpush2.msra.mxu0 0.0
      %2091 = vmatprep.subr.mxu0 0.0
      %2092 = vmatpush2.msra.mxu0 0.0
      %2093 = vmatprep.subr.mxu0 0.0
      %2094 = vmatpush2.msra.mxu0 0.0
      %2095 = vmatprep.subr.mxu0 0.0
      %2096 = vmatpush2.msra.mxu0 0.0
      %2097 = vmatprep.subr.mxu0 0.0
      %2098 = vmatpush2.msra.mxu0 0.0
      %2099 = vmatprep.subr.mxu0 0.0
      %2100 = vmatpush2.msra.mxu0 0.0
      %2101 = vmatprep.mubr.f32.mxu0 0.0
      %2102 = vmatmul.mubr.f32.gmra.mxu0 %v1957
      %v2103 = vpop.f32.mrf.mxu0
      %v2104 = vadd.f32 0.0, %v2103
      %v2105 = vpop.f32.mrf.mxu0
      %2106 = vdwg.mxu0
      %v2107 = vadd.f32 %v1929, %v2033
      %v2108 = vadd.f32 %v1929, %v2035
      %v2109 = vadd.f32 %v1929, %v2104
      %s2110 = scalar_lea.vmem %s5, 4
      %v2111 = vld [vmem:[%s2110] sm:$0xf]
      %2112 = vrot.lane.b32.xlu0 %v1940, 18
      %v2113 = vpop.permute.xlu0 %2112
      %2114 = vrot.lane.b32.xlu0 %v1941, 18
      %v2115 = vpop.permute.xlu0 %2114
      %2116 = vrot.lane.b32.xlu0 %v1942, 18
      %v2117 = vpop.permute.xlu0 %2116
      %2118 = vrot.lane.b32.xlu0 %v1943, 18
      %v2119 = vpop.permute.xlu0 %2118
      %v2120 = vsel %vm625, %v2113, %v2115
      %v2121 = vsel %vm625, %v2115, %v2117
      %v2122 = vsel %vm625, %v2117, %v2119
      %v2124 = vsel %vm1955, %v2111, 0
      %v2126 = vsel %vm1959, %v2120, 0
      %v2128 = vsel %vm1959, %v2121, 0
      %v2130 = vsel %vm1959, %v2122, 0
      %2132 = vmatprep.subr.mxu0 0.0
      %2133 = vmatpush1.msra.mxu0 0.0
      %2134 = vmatprep.subr.mxu0 0.0
      %2135 = vmatpush1.msra.mxu0 0.0
      %2136 = vmatprep.subr.mxu0 0.0
      %2137 = vmatpush1.msra.mxu0 0.0
      %2138 = vmatprep.subr.mxu0 0.0
      %2139 = vmatpush1.msra.mxu0 0.0
      %2140 = vmatprep.subr.mxu0 0.0
      %2141 = vmatpush1.msra.mxu0 0.0
      %2142 = vmatprep.subr.mxu0 0.0
      %2143 = vmatpush1.msra.mxu0 0.0
      %2144 = vmatprep.subr.mxu0 0.0
      %2145 = vmatpush1.msra.mxu0 0.0
      %2146 = vmatprep.subr.mxu0 0.0
      %2147 = vmatpush1.msra.mxu0 0.0
      %2148 = vmatprep.subr.mxu0 0.0
      %2149 = vmatpush1.msra.mxu0 0.0
      %2150 = vmatprep.subr.mxu0 0.0
      %2151 = vmatpush1.msra.mxu0 0.0
      %2152 = vmatprep.subr.mxu0 0.0
      %2153 = vmatpush1.msra.mxu0 0.0
      %2154 = vmatprep.subr.mxu0 0.0
      %2155 = vmatpush1.msra.mxu0 0.0
      %2156 = vmatprep.subr.mxu0 0.0
      %2157 = vmatpush1.msra.mxu0 0.0
      %2158 = vmatprep.subr.mxu0 0.0
      %2159 = vmatpush1.msra.mxu0 0.0
      %2160 = vmatprep.subr.mxu0 0.0
      %2161 = vmatpush1.msra.mxu0 0.0
      %2162 = vmatprep.subr.mxu0 %v2128
      %2163 = vmatpush1.msra.mxu0 %v2126
      %2164 = vmatprep.subr.mxu0 0.0
      %2165 = vmatpush2.msra.mxu0 0.0
      %2166 = vmatprep.subr.mxu0 0.0
      %2167 = vmatpush2.msra.mxu0 0.0
      %2168 = vmatprep.subr.mxu0 0.0
      %2169 = vmatpush2.msra.mxu0 0.0
      %2170 = vmatprep.subr.mxu0 0.0
      %2171 = vmatpush2.msra.mxu0 0.0
      %2172 = vmatprep.subr.mxu0 0.0
      %2173 = vmatpush2.msra.mxu0 0.0
      %2174 = vmatprep.subr.mxu0 0.0
      %2175 = vmatpush2.msra.mxu0 0.0
      %2176 = vmatprep.subr.mxu0 0.0
      %2177 = vmatpush2.msra.mxu0 0.0
      %2178 = vmatprep.subr.mxu0 0.0
      %2179 = vmatpush2.msra.mxu0 0.0
      %2180 = vmatprep.subr.mxu0 0.0
      %2181 = vmatpush2.msra.mxu0 0.0
      %2182 = vmatprep.subr.mxu0 0.0
      %2183 = vmatpush2.msra.mxu0 0.0
      %2184 = vmatprep.subr.mxu0 0.0
      %2185 = vmatpush2.msra.mxu0 0.0
      %2186 = vmatprep.subr.mxu0 0.0
      %2187 = vmatpush2.msra.mxu0 0.0
      %2188 = vmatprep.subr.mxu0 0.0
      %2189 = vmatpush2.msra.mxu0 0.0
      %2190 = vmatprep.subr.mxu0 0.0
      %2191 = vmatpush2.msra.mxu0 0.0
      %2192 = vmatprep.subr.mxu0 0.0
      %2193 = vmatpush2.msra.mxu0 0.0
      %2194 = vmatprep.subr.mxu0 0.0
      %2195 = vmatpush2.msra.mxu0 0.0
      %2196 = vmatprep.mubr.f32.mxu0 0.0
      %2197 = vmatmul.mubr.f32.gmra.mxu0 %v2124
      %v2198 = vpop.f32.mrf.mxu0
      %v2199 = vadd.f32 0.0, %v2198
      %v2200 = vpop.f32.mrf.mxu0
      %v2201 = vadd.f32 0.0, %v2200
      %2202 = vdwg.mxu0
      %2203 = vmatprep.subr.mxu0 0.0
      %2204 = vmatpush1.msra.mxu0 0.0
      %2205 = vmatprep.subr.mxu0 0.0
      %2206 = vmatpush1.msra.mxu0 0.0
      %2207 = vmatprep.subr.mxu0 0.0
      %2208 = vmatpush1.msra.mxu0 0.0
      %2209 = vmatprep.subr.mxu0 0.0
      %2210 = vmatpush1.msra.mxu0 0.0
      %2211 = vmatprep.subr.mxu0 0.0
      %2212 = vmatpush1.msra.mxu0 0.0
      %2213 = vmatprep.subr.mxu0 0.0
      %2214 = vmatpush1.msra.mxu0 0.0
      %2215 = vmatprep.subr.mxu0 0.0
      %2216 = vmatpush1.msra.mxu0 0.0
      %2217 = vmatprep.subr.mxu0 0.0
      %2218 = vmatpush1.msra.mxu0 0.0
      %2219 = vmatprep.subr.mxu0 0.0
      %2220 = vmatpush1.msra.mxu0 0.0
      %2221 = vmatprep.subr.mxu0 0.0
      %2222 = vmatpush1.msra.mxu0 0.0
      %2223 = vmatprep.subr.mxu0 0.0
      %2224 = vmatpush1.msra.mxu0 0.0
      %2225 = vmatprep.subr.mxu0 0.0
      %2226 = vmatpush1.msra.mxu0 0.0
      %2227 = vmatprep.subr.mxu0 0.0
      %2228 = vmatpush1.msra.mxu0 0.0
      %2229 = vmatprep.subr.mxu0 0.0
      %2230 = vmatpush1.msra.mxu0 0.0
      %2231 = vmatprep.subr.mxu0 0.0
      %2232 = vmatpush1.msra.mxu0 0.0
      %2233 = vmatprep.subr.mxu0 0.0
      %2234 = vmatpush1.msra.mxu0 %v2130
      %2235 = vmatprep.subr.mxu0 0.0
      %2236 = vmatpush2.msra.mxu0 0.0
      %2237 = vmatprep.subr.mxu0 0.0
      %2238 = vmatpush2.msra.mxu0 0.0
      %2239 = vmatprep.subr.mxu0 0.0
      %2240 = vmatpush2.msra.mxu0 0.0
      %2241 = vmatprep.subr.mxu0 0.0
      %2242 = vmatpush2.msra.mxu0 0.0
      %2243 = vmatprep.subr.mxu0 0.0
      %2244 = vmatpush2.msra.mxu0 0.0
      %2245 = vmatprep.subr.mxu0 0.0
      %2246 = vmatpush2.msra.mxu0 0.0
      %2247 = vmatprep.subr.mxu0 0.0
      %2248 = vmatpush2.msra.mxu0 0.0
      %2249 = vmatprep.subr.mxu0 0.0
      %2250 = vmatpush2.msra.mxu0 0.0
      %2251 = vmatprep.subr.mxu0 0.0
      %2252 = vmatpush2.msra.mxu0 0.0
      %2253 = vmatprep.subr.mxu0 0.0
      %2254 = vmatpush2.msra.mxu0 0.0
      %2255 = vmatprep.subr.mxu0 0.0
      %2256 = vmatpush2.msra.mxu0 0.0
      %2257 = vmatprep.subr.mxu0 0.0
      %2258 = vmatpush2.msra.mxu0 0.0
      %2259 = vmatprep.subr.mxu0 0.0
      %2260 = vmatpush2.msra.mxu0 0.0
      %2261 = vmatprep.subr.mxu0 0.0
      %2262 = vmatpush2.msra.mxu0 0.0
      %2263 = vmatprep.subr.mxu0 0.0
      %2264 = vmatpush2.msra.mxu0 0.0
      %2265 = vmatprep.subr.mxu0 0.0
      %2266 = vmatpush2.msra.mxu0 0.0
      %2267 = vmatprep.mubr.f32.mxu0 0.0
      %2268 = vmatmul.mubr.f32.gmra.mxu0 %v2124
      %v2269 = vpop.f32.mrf.mxu0
      %v2270 = vadd.f32 0.0, %v2269
      %v2271 = vpop.f32.mrf.mxu0
      %2272 = vdwg.mxu0
      %v2273 = vadd.f32 %v2107, %v2199
      %v2274 = vadd.f32 %v2108, %v2201
      %v2275 = vadd.f32 %v2109, %v2270
      %s2276 = scalar_lea.vmem %s5, 8
      %v2277 = vld [vmem:[%s2276] sm:$0xf]
      %2278 = vrot.lane.b32.xlu0 %v1940, 17
      %v2279 = vpop.permute.xlu0 %2278
      %2280 = vrot.lane.b32.xlu0 %v1941, 17
      %v2281 = vpop.permute.xlu0 %2280
      %2282 = vrot.lane.b32.xlu0 %v1942, 17
      %v2283 = vpop.permute.xlu0 %2282
      %2284 = vrot.lane.b32.xlu0 %v1943, 17
      %v2285 = vpop.permute.xlu0 %2284
      %v2286 = vsel %vm789, %v2279, %v2281
      %v2287 = vsel %vm789, %v2281, %v2283
      %v2288 = vsel %vm789, %v2283, %v2285
      %v2290 = vsel %vm1955, %v2277, 0
      %v2292 = vsel %vm1959, %v2286, 0
      %v2294 = vsel %vm1959, %v2287, 0
      %v2296 = vsel %vm1959, %v2288, 0
      %2298 = vmatprep.subr.mxu0 0.0
      %2299 = vmatpush1.msra.mxu0 0.0
      %2300 = vmatprep.subr.mxu0 0.0
      %2301 = vmatpush1.msra.mxu0 0.0
      %2302 = vmatprep.subr.mxu0 0.0
      %2303 = vmatpush1.msra.mxu0 0.0
      %2304 = vmatprep.subr.mxu0 0.0
      %2305 = vmatpush1.msra.mxu0 0.0
      %2306 = vmatprep.subr.mxu0 0.0
      %2307 = vmatpush1.msra.mxu0 0.0
      %2308 = vmatprep.subr.mxu0 0.0
      %2309 = vmatpush1.msra.mxu0 0.0
      %2310 = vmatprep.subr.mxu0 0.0
      %2311 = vmatpush1.msra.mxu0 0.0
      %2312 = vmatprep.subr.mxu0 0.0
      %2313 = vmatpush1.msra.mxu0 0.0
      %2314 = vmatprep.subr.mxu0 0.0
      %2315 = vmatpush1.msra.mxu0 0.0
      %2316 = vmatprep.subr.mxu0 0.0
      %2317 = vmatpush1.msra.mxu0 0.0
      %2318 = vmatprep.subr.mxu0 0.0
      %2319 = vmatpush1.msra.mxu0 0.0
      %2320 = vmatprep.subr.mxu0 0.0
      %2321 = vmatpush1.msra.mxu0 0.0
      %2322 = vmatprep.subr.mxu0 0.0
      %2323 = vmatpush1.msra.mxu0 0.0
      %2324 = vmatprep.subr.mxu0 0.0
      %2325 = vmatpush1.msra.mxu0 0.0
      %2326 = vmatprep.subr.mxu0 0.0
      %2327 = vmatpush1.msra.mxu0 0.0
      %2328 = vmatprep.subr.mxu0 %v2294
      %2329 = vmatpush1.msra.mxu0 %v2292
      %2330 = vmatprep.subr.mxu0 0.0
      %2331 = vmatpush2.msra.mxu0 0.0
      %2332 = vmatprep.subr.mxu0 0.0
      %2333 = vmatpush2.msra.mxu0 0.0
      %2334 = vmatprep.subr.mxu0 0.0
      %2335 = vmatpush2.msra.mxu0 0.0
      %2336 = vmatprep.subr.mxu0 0.0
      %2337 = vmatpush2.msra.mxu0 0.0
      %2338 = vmatprep.subr.mxu0 0.0
      %2339 = vmatpush2.msra.mxu0 0.0
      %2340 = vmatprep.subr.mxu0 0.0
      %2341 = vmatpush2.msra.mxu0 0.0
      %2342 = vmatprep.subr.mxu0 0.0
      %2343 = vmatpush2.msra.mxu0 0.0
      %2344 = vmatprep.subr.mxu0 0.0
      %2345 = vmatpush2.msra.mxu0 0.0
      %2346 = vmatprep.subr.mxu0 0.0
      %2347 = vmatpush2.msra.mxu0 0.0
      %2348 = vmatprep.subr.mxu0 0.0
      %2349 = vmatpush2.msra.mxu0 0.0
      %2350 = vmatprep.subr.mxu0 0.0
      %2351 = vmatpush2.msra.mxu0 0.0
      %2352 = vmatprep.subr.mxu0 0.0
      %2353 = vmatpush2.msra.mxu0 0.0
      %2354 = vmatprep.subr.mxu0 0.0
      %2355 = vmatpush2.msra.mxu0 0.0
      %2356 = vmatprep.subr.mxu0 0.0
      %2357 = vmatpush2.msra.mxu0 0.0
      %2358 = vmatprep.subr.mxu0 0.0
      %2359 = vmatpush2.msra.mxu0 0.0
      %2360 = vmatprep.subr.mxu0 0.0
      %2361 = vmatpush2.msra.mxu0 0.0
      %2362 = vmatprep.mubr.f32.mxu0 0.0
      %2363 = vmatmul.mubr.f32.gmra.mxu0 %v2290
      %v2364 = vpop.f32.mrf.mxu0
      %v2365 = vadd.f32 0.0, %v2364
      %v2366 = vpop.f32.mrf.mxu0
      %v2367 = vadd.f32 0.0, %v2366
      %2368 = vdwg.mxu0
      %2369 = vmatprep.subr.mxu0 0.0
      %2370 = vmatpush1.msra.mxu0 0.0
      %2371 = vmatprep.subr.mxu0 0.0
      %2372 = vmatpush1.msra.mxu0 0.0
      %2373 = vmatprep.subr.mxu0 0.0
      %2374 = vmatpush1.msra.mxu0 0.0
      %2375 = vmatprep.subr.mxu0 0.0
      %2376 = vmatpush1.msra.mxu0 0.0
      %2377 = vmatprep.subr.mxu0 0.0
      %2378 = vmatpush1.msra.mxu0 0.0
      %2379 = vmatprep.subr.mxu0 0.0
      %2380 = vmatpush1.msra.mxu0 0.0
      %2381 = vmatprep.subr.mxu0 0.0
      %2382 = vmatpush1.msra.mxu0 0.0
      %2383 = vmatprep.subr.mxu0 0.0
      %2384 = vmatpush1.msra.mxu0 0.0
      %2385 = vmatprep.subr.mxu0 0.0
      %2386 = vmatpush1.msra.mxu0 0.0
      %2387 = vmatprep.subr.mxu0 0.0
      %2388 = vmatpush1.msra.mxu0 0.0
      %2389 = vmatprep.subr.mxu0 0.0
      %2390 = vmatpush1.msra.mxu0 0.0
      %2391 = vmatprep.subr.mxu0 0.0
      %2392 = vmatpush1.msra.mxu0 0.0
      %2393 = vmatprep.subr.mxu0 0.0
      %2394 = vmatpush1.msra.mxu0 0.0
      %2395 = vmatprep.subr.mxu0 0.0
      %2396 = vmatpush1.msra.mxu0 0.0
      %2397 = vmatprep.subr.mxu0 0.0
      %2398 = vmatpush1.msra.mxu0 0.0
      %2399 = vmatprep.subr.mxu0 0.0
      %2400 = vmatpush1.msra.mxu0 %v2296
      %2401 = vmatprep.subr.mxu0 0.0
      %2402 = vmatpush2.msra.mxu0 0.0
      %2403 = vmatprep.subr.mxu0 0.0
      %2404 = vmatpush2.msra.mxu0 0.0
      %2405 = vmatprep.subr.mxu0 0.0
      %2406 = vmatpush2.msra.mxu0 0.0
      %2407 = vmatprep.subr.mxu0 0.0
      %2408 = vmatpush2.msra.mxu0 0.0
      %2409 = vmatprep.subr.mxu0 0.0
      %2410 = vmatpush2.msra.mxu0 0.0
      %2411 = vmatprep.subr.mxu0 0.0
      %2412 = vmatpush2.msra.mxu0 0.0
      %2413 = vmatprep.subr.mxu0 0.0
      %2414 = vmatpush2.msra.mxu0 0.0
      %2415 = vmatprep.subr.mxu0 0.0
      %2416 = vmatpush2.msra.mxu0 0.0
      %2417 = vmatprep.subr.mxu0 0.0
      %2418 = vmatpush2.msra.mxu0 0.0
      %2419 = vmatprep.subr.mxu0 0.0
      %2420 = vmatpush2.msra.mxu0 0.0
      %2421 = vmatprep.subr.mxu0 0.0
      %2422 = vmatpush2.msra.mxu0 0.0
      %2423 = vmatprep.subr.mxu0 0.0
      %2424 = vmatpush2.msra.mxu0 0.0
      %2425 = vmatprep.subr.mxu0 0.0
      %2426 = vmatpush2.msra.mxu0 0.0
      %2427 = vmatprep.subr.mxu0 0.0
      %2428 = vmatpush2.msra.mxu0 0.0
      %2429 = vmatprep.subr.mxu0 0.0
      %2430 = vmatpush2.msra.mxu0 0.0
      %2431 = vmatprep.subr.mxu0 0.0
      %2432 = vmatpush2.msra.mxu0 0.0
      %2433 = vmatprep.mubr.f32.mxu0 0.0
      %2434 = vmatmul.mubr.f32.gmra.mxu0 %v2290
      %v2435 = vpop.f32.mrf.mxu0
      %v2436 = vadd.f32 0.0, %v2435
      %v2437 = vpop.f32.mrf.mxu0
      %2438 = vdwg.mxu0
      %v2439 = vadd.f32 %v2273, %v2365
      %v2440 = vadd.f32 %v2274, %v2367
      %v2441 = vadd.f32 %v2275, %v2436
      %s2442 = scalar_lea.vmem %s5, 12
      %v2443 = vld [vmem:[%s2442] sm:$0xf]
      %2444 = vrot.lane.b32.xlu0 %v1940, 1
      %v2445 = vpop.permute.xlu0 %2444
      %2446 = vrot.lane.b32.xlu0 %v1941, 1
      %v2447 = vpop.permute.xlu0 %2446
      %2448 = vrot.lane.b32.xlu0 %v1942, 1
      %v2449 = vpop.permute.xlu0 %2448
      %2450 = vrot.lane.b32.xlu0 %v1943, 1
      %v2451 = vpop.permute.xlu0 %2450
      %v2452 = vsel %vm953, %v2445, %v2447
      %v2453 = vsel %vm953, %v2447, %v2449
      %v2454 = vsel %vm953, %v2449, %v2451
      %v2456 = vsel %vm1955, %v2443, 0
      %v2458 = vsel %vm1959, %v2452, 0
      %v2460 = vsel %vm1959, %v2453, 0
      %v2462 = vsel %vm1959, %v2454, 0
      %2464 = vmatprep.subr.mxu0 0.0
      %2465 = vmatpush1.msra.mxu0 0.0
      %2466 = vmatprep.subr.mxu0 0.0
      %2467 = vmatpush1.msra.mxu0 0.0
      %2468 = vmatprep.subr.mxu0 0.0
      %2469 = vmatpush1.msra.mxu0 0.0
      %2470 = vmatprep.subr.mxu0 0.0
      %2471 = vmatpush1.msra.mxu0 0.0
      %2472 = vmatprep.subr.mxu0 0.0
      %2473 = vmatpush1.msra.mxu0 0.0
      %2474 = vmatprep.subr.mxu0 0.0
      %2475 = vmatpush1.msra.mxu0 0.0
      %2476 = vmatprep.subr.mxu0 0.0
      %2477 = vmatpush1.msra.mxu0 0.0
      %2478 = vmatprep.subr.mxu0 0.0
      %2479 = vmatpush1.msra.mxu0 0.0
      %2480 = vmatprep.subr.mxu0 0.0
      %2481 = vmatpush1.msra.mxu0 0.0
      %2482 = vmatprep.subr.mxu0 0.0
      %2483 = vmatpush1.msra.mxu0 0.0
      %2484 = vmatprep.subr.mxu0 0.0
      %2485 = vmatpush1.msra.mxu0 0.0
      %2486 = vmatprep.subr.mxu0 0.0
      %2487 = vmatpush1.msra.mxu0 0.0
      %2488 = vmatprep.subr.mxu0 0.0
      %2489 = vmatpush1.msra.mxu0 0.0
      %2490 = vmatprep.subr.mxu0 0.0
      %2491 = vmatpush1.msra.mxu0 0.0
      %2492 = vmatprep.subr.mxu0 0.0
      %2493 = vmatpush1.msra.mxu0 0.0
      %2494 = vmatprep.subr.mxu0 %v2460
      %2495 = vmatpush1.msra.mxu0 %v2458
      %2496 = vmatprep.subr.mxu0 0.0
      %2497 = vmatpush2.msra.mxu0 0.0
      %2498 = vmatprep.subr.mxu0 0.0
      %2499 = vmatpush2.msra.mxu0 0.0
      %2500 = vmatprep.subr.mxu0 0.0
      %2501 = vmatpush2.msra.mxu0 0.0
      %2502 = vmatprep.subr.mxu0 0.0
      %2503 = vmatpush2.msra.mxu0 0.0
      %2504 = vmatprep.subr.mxu0 0.0
      %2505 = vmatpush2.msra.mxu0 0.0
      %2506 = vmatprep.subr.mxu0 0.0
      %2507 = vmatpush2.msra.mxu0 0.0
      %2508 = vmatprep.subr.mxu0 0.0
      %2509 = vmatpush2.msra.mxu0 0.0
      %2510 = vmatprep.subr.mxu0 0.0
      %2511 = vmatpush2.msra.mxu0 0.0
      %2512 = vmatprep.subr.mxu0 0.0
      %2513 = vmatpush2.msra.mxu0 0.0
      %2514 = vmatprep.subr.mxu0 0.0
      %2515 = vmatpush2.msra.mxu0 0.0
      %2516 = vmatprep.subr.mxu0 0.0
      %2517 = vmatpush2.msra.mxu0 0.0
      %2518 = vmatprep.subr.mxu0 0.0
      %2519 = vmatpush2.msra.mxu0 0.0
      %2520 = vmatprep.subr.mxu0 0.0
      %2521 = vmatpush2.msra.mxu0 0.0
      %2522 = vmatprep.subr.mxu0 0.0
      %2523 = vmatpush2.msra.mxu0 0.0
      %2524 = vmatprep.subr.mxu0 0.0
      %2525 = vmatpush2.msra.mxu0 0.0
      %2526 = vmatprep.subr.mxu0 0.0
      %2527 = vmatpush2.msra.mxu0 0.0
      %2528 = vmatprep.mubr.f32.mxu0 0.0
      %2529 = vmatmul.mubr.f32.gmra.mxu0 %v2456
      %v2530 = vpop.f32.mrf.mxu0
      %v2531 = vadd.f32 0.0, %v2530
      %v2532 = vpop.f32.mrf.mxu0
      %v2533 = vadd.f32 0.0, %v2532
      %2534 = vdwg.mxu0
      %2535 = vmatprep.subr.mxu0 0.0
      %2536 = vmatpush1.msra.mxu0 0.0
      %2537 = vmatprep.subr.mxu0 0.0
      %2538 = vmatpush1.msra.mxu0 0.0
      %2539 = vmatprep.subr.mxu0 0.0
      %2540 = vmatpush1.msra.mxu0 0.0
      %2541 = vmatprep.subr.mxu0 0.0
      %2542 = vmatpush1.msra.mxu0 0.0
      %2543 = vmatprep.subr.mxu0 0.0
      %2544 = vmatpush1.msra.mxu0 0.0
      %2545 = vmatprep.subr.mxu0 0.0
      %2546 = vmatpush1.msra.mxu0 0.0
      %2547 = vmatprep.subr.mxu0 0.0
      %2548 = vmatpush1.msra.mxu0 0.0
      %2549 = vmatprep.subr.mxu0 0.0
      %2550 = vmatpush1.msra.mxu0 0.0
      %2551 = vmatprep.subr.mxu0 0.0
      %2552 = vmatpush1.msra.mxu0 0.0
      %2553 = vmatprep.subr.mxu0 0.0
      %2554 = vmatpush1.msra.mxu0 0.0
      %2555 = vmatprep.subr.mxu0 0.0
      %2556 = vmatpush1.msra.mxu0 0.0
      %2557 = vmatprep.subr.mxu0 0.0
      %2558 = vmatpush1.msra.mxu0 0.0
      %2559 = vmatprep.subr.mxu0 0.0
      %2560 = vmatpush1.msra.mxu0 0.0
      %2561 = vmatprep.subr.mxu0 0.0
      %2562 = vmatpush1.msra.mxu0 0.0
      %2563 = vmatprep.subr.mxu0 0.0
      %2564 = vmatpush1.msra.mxu0 0.0
      %2565 = vmatprep.subr.mxu0 0.0
      %2566 = vmatpush1.msra.mxu0 %v2462
      %2567 = vmatprep.subr.mxu0 0.0
      %2568 = vmatpush2.msra.mxu0 0.0
      %2569 = vmatprep.subr.mxu0 0.0
      %2570 = vmatpush2.msra.mxu0 0.0
      %2571 = vmatprep.subr.mxu0 0.0
      %2572 = vmatpush2.msra.mxu0 0.0
      %2573 = vmatprep.subr.mxu0 0.0
      %2574 = vmatpush2.msra.mxu0 0.0
      %2575 = vmatprep.subr.mxu0 0.0
      %2576 = vmatpush2.msra.mxu0 0.0
      %2577 = vmatprep.subr.mxu0 0.0
      %2578 = vmatpush2.msra.mxu0 0.0
      %2579 = vmatprep.subr.mxu0 0.0
      %2580 = vmatpush2.msra.mxu0 0.0
      %2581 = vmatprep.subr.mxu0 0.0
      %2582 = vmatpush2.msra.mxu0 0.0
      %2583 = vmatprep.subr.mxu0 0.0
      %2584 = vmatpush2.msra.mxu0 0.0
      %2585 = vmatprep.subr.mxu0 0.0
      %2586 = vmatpush2.msra.mxu0 0.0
      %2587 = vmatprep.subr.mxu0 0.0
      %2588 = vmatpush2.msra.mxu0 0.0
      %2589 = vmatprep.subr.mxu0 0.0
      %2590 = vmatpush2.msra.mxu0 0.0
      %2591 = vmatprep.subr.mxu0 0.0
      %2592 = vmatpush2.msra.mxu0 0.0
      %2593 = vmatprep.subr.mxu0 0.0
      %2594 = vmatpush2.msra.mxu0 0.0
      %2595 = vmatprep.subr.mxu0 0.0
      %2596 = vmatpush2.msra.mxu0 0.0
      %2597 = vmatprep.subr.mxu0 0.0
      %2598 = vmatpush2.msra.mxu0 0.0
      %2599 = vmatprep.mubr.f32.mxu0 0.0
      %2600 = vmatmul.mubr.f32.gmra.mxu0 %v2456
      %v2601 = vpop.f32.mrf.mxu0
      %v2602 = vadd.f32 0.0, %v2601
      %v2603 = vpop.f32.mrf.mxu0
      %2604 = vdwg.mxu0
      %v2605 = vadd.f32 %v2439, %v2531
      %v2606 = vadd.f32 %v2440, %v2533
      %v2607 = vadd.f32 %v2441, %v2602
      %s2608 = scalar_lea.vmem %s5, 16
      %v2609 = vld [vmem:[%s2608] sm:$0xf]
      %v2611 = vsel %vm1955, %v2609, 0
      %v2613 = vsel %vm1959, %v1941, 0
      %v2615 = vsel %vm1959, %v1942, 0
      %v2617 = vsel %vm1959, %v1943, 0
      %2619 = vmatprep.subr.mxu0 0.0
      %2620 = vmatpush1.msra.mxu0 0.0
      %2621 = vmatprep.subr.mxu0 0.0
      %2622 = vmatpush1.msra.mxu0 0.0
      %2623 = vmatprep.subr.mxu0 0.0
      %2624 = vmatpush1.msra.mxu0 0.0
      %2625 = vmatprep.subr.mxu0 0.0
      %2626 = vmatpush1.msra.mxu0 0.0
      %2627 = vmatprep.subr.mxu0 0.0
      %2628 = vmatpush1.msra.mxu0 0.0
      %2629 = vmatprep.subr.mxu0 0.0
      %2630 = vmatpush1.msra.mxu0 0.0
      %2631 = vmatprep.subr.mxu0 0.0
      %2632 = vmatpush1.msra.mxu0 0.0
      %2633 = vmatprep.subr.mxu0 0.0
      %2634 = vmatpush1.msra.mxu0 0.0
      %2635 = vmatprep.subr.mxu0 0.0
      %2636 = vmatpush1.msra.mxu0 0.0
      %2637 = vmatprep.subr.mxu0 0.0
      %2638 = vmatpush1.msra.mxu0 0.0
      %2639 = vmatprep.subr.mxu0 0.0
      %2640 = vmatpush1.msra.mxu0 0.0
      %2641 = vmatprep.subr.mxu0 0.0
      %2642 = vmatpush1.msra.mxu0 0.0
      %2643 = vmatprep.subr.mxu0 0.0
      %2644 = vmatpush1.msra.mxu0 0.0
      %2645 = vmatprep.subr.mxu0 0.0
      %2646 = vmatpush1.msra.mxu0 0.0
      %2647 = vmatprep.subr.mxu0 0.0
      %2648 = vmatpush1.msra.mxu0 0.0
      %2649 = vmatprep.subr.mxu0 %v2615
      %2650 = vmatpush1.msra.mxu0 %v2613
      %2651 = vmatprep.subr.mxu0 0.0
      %2652 = vmatpush2.msra.mxu0 0.0
      %2653 = vmatprep.subr.mxu0 0.0
      %2654 = vmatpush2.msra.mxu0 0.0
      %2655 = vmatprep.subr.mxu0 0.0
      %2656 = vmatpush2.msra.mxu0 0.0
      %2657 = vmatprep.subr.mxu0 0.0
      %2658 = vmatpush2.msra.mxu0 0.0
      %2659 = vmatprep.subr.mxu0 0.0
      %2660 = vmatpush2.msra.mxu0 0.0
      %2661 = vmatprep.subr.mxu0 0.0
      %2662 = vmatpush2.msra.mxu0 0.0
      %2663 = vmatprep.subr.mxu0 0.0
      %2664 = vmatpush2.msra.mxu0 0.0
      %2665 = vmatprep.subr.mxu0 0.0
      %2666 = vmatpush2.msra.mxu0 0.0
      %2667 = vmatprep.subr.mxu0 0.0
      %2668 = vmatpush2.msra.mxu0 0.0
      %2669 = vmatprep.subr.mxu0 0.0
      %2670 = vmatpush2.msra.mxu0 0.0
      %2671 = vmatprep.subr.mxu0 0.0
      %2672 = vmatpush2.msra.mxu0 0.0
      %2673 = vmatprep.subr.mxu0 0.0
      %2674 = vmatpush2.msra.mxu0 0.0
      %2675 = vmatprep.subr.mxu0 0.0
      %2676 = vmatpush2.msra.mxu0 0.0
      %2677 = vmatprep.subr.mxu0 0.0
      %2678 = vmatpush2.msra.mxu0 0.0
      %2679 = vmatprep.subr.mxu0 0.0
      %2680 = vmatpush2.msra.mxu0 0.0
      %2681 = vmatprep.subr.mxu0 0.0
      %2682 = vmatpush2.msra.mxu0 0.0
      %2683 = vmatprep.mubr.f32.mxu0 0.0
      %2684 = vmatmul.mubr.f32.gmra.mxu0 %v2611
      %v2685 = vpop.f32.mrf.mxu0
      %v2686 = vadd.f32 0.0, %v2685
      %v2687 = vpop.f32.mrf.mxu0
      %v2688 = vadd.f32 0.0, %v2687
      %2689 = vdwg.mxu0
      %2690 = vmatprep.subr.mxu0 0.0
      %2691 = vmatpush1.msra.mxu0 0.0
      %2692 = vmatprep.subr.mxu0 0.0
      %2693 = vmatpush1.msra.mxu0 0.0
      %2694 = vmatprep.subr.mxu0 0.0
      %2695 = vmatpush1.msra.mxu0 0.0
      %2696 = vmatprep.subr.mxu0 0.0
      %2697 = vmatpush1.msra.mxu0 0.0
      %2698 = vmatprep.subr.mxu0 0.0
      %2699 = vmatpush1.msra.mxu0 0.0
      %2700 = vmatprep.subr.mxu0 0.0
      %2701 = vmatpush1.msra.mxu0 0.0
      %2702 = vmatprep.subr.mxu0 0.0
      %2703 = vmatpush1.msra.mxu0 0.0
      %2704 = vmatprep.subr.mxu0 0.0
      %2705 = vmatpush1.msra.mxu0 0.0
      %2706 = vmatprep.subr.mxu0 0.0
      %2707 = vmatpush1.msra.mxu0 0.0
      %2708 = vmatprep.subr.mxu0 0.0
      %2709 = vmatpush1.msra.mxu0 0.0
      %2710 = vmatprep.subr.mxu0 0.0
      %2711 = vmatpush1.msra.mxu0 0.0
      %2712 = vmatprep.subr.mxu0 0.0
      %2713 = vmatpush1.msra.mxu0 0.0
      %2714 = vmatprep.subr.mxu0 0.0
      %2715 = vmatpush1.msra.mxu0 0.0
      %2716 = vmatprep.subr.mxu0 0.0
      %2717 = vmatpush1.msra.mxu0 0.0
      %2718 = vmatprep.subr.mxu0 0.0
      %2719 = vmatpush1.msra.mxu0 0.0
      %2720 = vmatprep.subr.mxu0 0.0
      %2721 = vmatpush1.msra.mxu0 %v2617
      %2722 = vmatprep.subr.mxu0 0.0
      %2723 = vmatpush2.msra.mxu0 0.0
      %2724 = vmatprep.subr.mxu0 0.0
      %2725 = vmatpush2.msra.mxu0 0.0
      %2726 = vmatprep.subr.mxu0 0.0
      %2727 = vmatpush2.msra.mxu0 0.0
      %2728 = vmatprep.subr.mxu0 0.0
      %2729 = vmatpush2.msra.mxu0 0.0
      %2730 = vmatprep.subr.mxu0 0.0
      %2731 = vmatpush2.msra.mxu0 0.0
      %2732 = vmatprep.subr.mxu0 0.0
      %2733 = vmatpush2.msra.mxu0 0.0
      %2734 = vmatprep.subr.mxu0 0.0
      %2735 = vmatpush2.msra.mxu0 0.0
      %2736 = vmatprep.subr.mxu0 0.0
      %2737 = vmatpush2.msra.mxu0 0.0
      %2738 = vmatprep.subr.mxu0 0.0
      %2739 = vmatpush2.msra.mxu0 0.0
      %2740 = vmatprep.subr.mxu0 0.0
      %2741 = vmatpush2.msra.mxu0 0.0
      %2742 = vmatprep.subr.mxu0 0.0
      %2743 = vmatpush2.msra.mxu0 0.0
      %2744 = vmatprep.subr.mxu0 0.0
      %2745 = vmatpush2.msra.mxu0 0.0
      %2746 = vmatprep.subr.mxu0 0.0
      %2747 = vmatpush2.msra.mxu0 0.0
      %2748 = vmatprep.subr.mxu0 0.0
      %2749 = vmatpush2.msra.mxu0 0.0
      %2750 = vmatprep.subr.mxu0 0.0
      %2751 = vmatpush2.msra.mxu0 0.0
      %2752 = vmatprep.subr.mxu0 0.0
      %2753 = vmatpush2.msra.mxu0 0.0
      %2754 = vmatprep.mubr.f32.mxu0 0.0
      %2755 = vmatmul.mubr.f32.gmra.mxu0 %v2611
      %v2756 = vpop.f32.mrf.mxu0
      %v2757 = vadd.f32 0.0, %v2756
      %v2758 = vpop.f32.mrf.mxu0
      %2759 = vdwg.mxu0
      %v2760 = vadd.f32 %v2605, %v2686
      %v2761 = vadd.f32 %v2606, %v2688
      %v2762 = vadd.f32 %v2607, %v2757
      %s2763 = scalar_lea.vmem %s5, 20
      %v2764 = vld [vmem:[%s2763] sm:$0xf]
      %2765 = vrot.lane.b32.xlu0 %v1941, 127
      %v2766 = vpop.permute.xlu0 %2765
      %2767 = vrot.lane.b32.xlu0 %v1942, 127
      %v2768 = vpop.permute.xlu0 %2767
      %2769 = vrot.lane.b32.xlu0 %v1943, 127
      %v2770 = vpop.permute.xlu0 %2769
      %v2771 = vsel %vm1264, %v2766, %v2768
      %v2772 = vsel %vm1264, %v2768, %v2770
      %v2774 = vsel %vm1955, %v2764, 0
      %v2776 = vsel %vm1959, %v2771, 0
      %v2778 = vsel %vm1959, %v2772, 0
      %v2780 = vsel %vm1959, %v2770, 0
      %2782 = vmatprep.subr.mxu0 0.0
      %2783 = vmatpush1.msra.mxu0 0.0
      %2784 = vmatprep.subr.mxu0 0.0
      %2785 = vmatpush1.msra.mxu0 0.0
      %2786 = vmatprep.subr.mxu0 0.0
      %2787 = vmatpush1.msra.mxu0 0.0
      %2788 = vmatprep.subr.mxu0 0.0
      %2789 = vmatpush1.msra.mxu0 0.0
      %2790 = vmatprep.subr.mxu0 0.0
      %2791 = vmatpush1.msra.mxu0 0.0
      %2792 = vmatprep.subr.mxu0 0.0
      %2793 = vmatpush1.msra.mxu0 0.0
      %2794 = vmatprep.subr.mxu0 0.0
      %2795 = vmatpush1.msra.mxu0 0.0
      %2796 = vmatprep.subr.mxu0 0.0
      %2797 = vmatpush1.msra.mxu0 0.0
      %2798 = vmatprep.subr.mxu0 0.0
      %2799 = vmatpush1.msra.mxu0 0.0
      %2800 = vmatprep.subr.mxu0 0.0
      %2801 = vmatpush1.msra.mxu0 0.0
      %2802 = vmatprep.subr.mxu0 0.0
      %2803 = vmatpush1.msra.mxu0 0.0
      %2804 = vmatprep.subr.mxu0 0.0
      %2805 = vmatpush1.msra.mxu0 0.0
      %2806 = vmatprep.subr.mxu0 0.0
      %2807 = vmatpush1.msra.mxu0 0.0
      %2808 = vmatprep.subr.mxu0 0.0
      %2809 = vmatpush1.msra.mxu0 0.0
      %2810 = vmatprep.subr.mxu0 0.0
      %2811 = vmatpush1.msra.mxu0 0.0
      %2812 = vmatprep.subr.mxu0 %v2778
      %2813 = vmatpush1.msra.mxu0 %v2776
      %2814 = vmatprep.subr.mxu0 0.0
      %2815 = vmatpush2.msra.mxu0 0.0
      %2816 = vmatprep.subr.mxu0 0.0
      %2817 = vmatpush2.msra.mxu0 0.0
      %2818 = vmatprep.subr.mxu0 0.0
      %2819 = vmatpush2.msra.mxu0 0.0
      %2820 = vmatprep.subr.mxu0 0.0
      %2821 = vmatpush2.msra.mxu0 0.0
      %2822 = vmatprep.subr.mxu0 0.0
      %2823 = vmatpush2.msra.mxu0 0.0
      %2824 = vmatprep.subr.mxu0 0.0
      %2825 = vmatpush2.msra.mxu0 0.0
      %2826 = vmatprep.subr.mxu0 0.0
      %2827 = vmatpush2.msra.mxu0 0.0
      %2828 = vmatprep.subr.mxu0 0.0
      %2829 = vmatpush2.msra.mxu0 0.0
      %2830 = vmatprep.subr.mxu0 0.0
      %2831 = vmatpush2.msra.mxu0 0.0
      %2832 = vmatprep.subr.mxu0 0.0
      %2833 = vmatpush2.msra.mxu0 0.0
      %2834 = vmatprep.subr.mxu0 0.0
      %2835 = vmatpush2.msra.mxu0 0.0
      %2836 = vmatprep.subr.mxu0 0.0
      %2837 = vmatpush2.msra.mxu0 0.0
      %2838 = vmatprep.subr.mxu0 0.0
      %2839 = vmatpush2.msra.mxu0 0.0
      %2840 = vmatprep.subr.mxu0 0.0
      %2841 = vmatpush2.msra.mxu0 0.0
      %2842 = vmatprep.subr.mxu0 0.0
      %2843 = vmatpush2.msra.mxu0 0.0
      %2844 = vmatprep.subr.mxu0 0.0
      %2845 = vmatpush2.msra.mxu0 0.0
      %2846 = vmatprep.mubr.f32.mxu0 0.0
      %2847 = vmatmul.mubr.f32.gmra.mxu0 %v2774
      %v2848 = vpop.f32.mrf.mxu0
      %v2849 = vadd.f32 0.0, %v2848
      %v2850 = vpop.f32.mrf.mxu0
      %v2851 = vadd.f32 0.0, %v2850
      %2852 = vdwg.mxu0
      %2853 = vmatprep.subr.mxu0 0.0
      %2854 = vmatpush1.msra.mxu0 0.0
      %2855 = vmatprep.subr.mxu0 0.0
      %2856 = vmatpush1.msra.mxu0 0.0
      %2857 = vmatprep.subr.mxu0 0.0
      %2858 = vmatpush1.msra.mxu0 0.0
      %2859 = vmatprep.subr.mxu0 0.0
      %2860 = vmatpush1.msra.mxu0 0.0
      %2861 = vmatprep.subr.mxu0 0.0
      %2862 = vmatpush1.msra.mxu0 0.0
      %2863 = vmatprep.subr.mxu0 0.0
      %2864 = vmatpush1.msra.mxu0 0.0
      %2865 = vmatprep.subr.mxu0 0.0
      %2866 = vmatpush1.msra.mxu0 0.0
      %2867 = vmatprep.subr.mxu0 0.0
      %2868 = vmatpush1.msra.mxu0 0.0
      %2869 = vmatprep.subr.mxu0 0.0
      %2870 = vmatpush1.msra.mxu0 0.0
      %2871 = vmatprep.subr.mxu0 0.0
      %2872 = vmatpush1.msra.mxu0 0.0
      %2873 = vmatprep.subr.mxu0 0.0
      %2874 = vmatpush1.msra.mxu0 0.0
      %2875 = vmatprep.subr.mxu0 0.0
      %2876 = vmatpush1.msra.mxu0 0.0
      %2877 = vmatprep.subr.mxu0 0.0
      %2878 = vmatpush1.msra.mxu0 0.0
      %2879 = vmatprep.subr.mxu0 0.0
      %2880 = vmatpush1.msra.mxu0 0.0
      %2881 = vmatprep.subr.mxu0 0.0
      %2882 = vmatpush1.msra.mxu0 0.0
      %2883 = vmatprep.subr.mxu0 0.0
      %2884 = vmatpush1.msra.mxu0 %v2780
      %2885 = vmatprep.subr.mxu0 0.0
      %2886 = vmatpush2.msra.mxu0 0.0
      %2887 = vmatprep.subr.mxu0 0.0
      %2888 = vmatpush2.msra.mxu0 0.0
      %2889 = vmatprep.subr.mxu0 0.0
      %2890 = vmatpush2.msra.mxu0 0.0
      %2891 = vmatprep.subr.mxu0 0.0
      %2892 = vmatpush2.msra.mxu0 0.0
      %2893 = vmatprep.subr.mxu0 0.0
      %2894 = vmatpush2.msra.mxu0 0.0
      %2895 = vmatprep.subr.mxu0 0.0
      %2896 = vmatpush2.msra.mxu0 0.0
      %2897 = vmatprep.subr.mxu0 0.0
      %2898 = vmatpush2.msra.mxu0 0.0
      %2899 = vmatprep.subr.mxu0 0.0
      %2900 = vmatpush2.msra.mxu0 0.0
      %2901 = vmatprep.subr.mxu0 0.0
      %2902 = vmatpush2.msra.mxu0 0.0
      %2903 = vmatprep.subr.mxu0 0.0
      %2904 = vmatpush2.msra.mxu0 0.0
      %2905 = vmatprep.subr.mxu0 0.0
      %2906 = vmatpush2.msra.mxu0 0.0
      %2907 = vmatprep.subr.mxu0 0.0
      %2908 = vmatpush2.msra.mxu0 0.0
      %2909 = vmatprep.subr.mxu0 0.0
      %2910 = vmatpush2.msra.mxu0 0.0
      %2911 = vmatprep.subr.mxu0 0.0
      %2912 = vmatpush2.msra.mxu0 0.0
      %2913 = vmatprep.subr.mxu0 0.0
      %2914 = vmatpush2.msra.mxu0 0.0
      %2915 = vmatprep.subr.mxu0 0.0
      %2916 = vmatpush2.msra.mxu0 0.0
      %2917 = vmatprep.mubr.f32.mxu0 0.0
      %2918 = vmatmul.mubr.f32.gmra.mxu0 %v2774
      %v2919 = vpop.f32.mrf.mxu0
      %v2920 = vadd.f32 0.0, %v2919
      %v2921 = vpop.f32.mrf.mxu0
      %2922 = vdwg.mxu0
      %v2923 = vadd.f32 %v2760, %v2849
      %v2924 = vadd.f32 %v2761, %v2851
      %v2925 = vadd.f32 %v2762, %v2920
      %s2926 = scalar_lea.vmem %s5, 24
      %v2927 = vld [vmem:[%s2926] sm:$0xf]
      %2928 = vrot.lane.b32.xlu0 %v1941, 111
      %v2929 = vpop.permute.xlu0 %2928
      %2930 = vrot.lane.b32.xlu0 %v1942, 111
      %v2931 = vpop.permute.xlu0 %2930
      %2932 = vrot.lane.b32.xlu0 %v1943, 111
      %v2933 = vpop.permute.xlu0 %2932
      %v2934 = vsel %vm1425, %v2929, %v2931
      %v2935 = vsel %vm1425, %v2931, %v2933
      %v2937 = vsel %vm1955, %v2927, 0
      %v2939 = vsel %vm1959, %v2934, 0
      %v2941 = vsel %vm1959, %v2935, 0
      %v2943 = vsel %vm1959, %v2933, 0
      %2945 = vmatprep.subr.mxu0 0.0
      %2946 = vmatpush1.msra.mxu0 0.0
      %2947 = vmatprep.subr.mxu0 0.0
      %2948 = vmatpush1.msra.mxu0 0.0
      %2949 = vmatprep.subr.mxu0 0.0
      %2950 = vmatpush1.msra.mxu0 0.0
      %2951 = vmatprep.subr.mxu0 0.0
      %2952 = vmatpush1.msra.mxu0 0.0
      %2953 = vmatprep.subr.mxu0 0.0
      %2954 = vmatpush1.msra.mxu0 0.0
      %2955 = vmatprep.subr.mxu0 0.0
      %2956 = vmatpush1.msra.mxu0 0.0
      %2957 = vmatprep.subr.mxu0 0.0
      %2958 = vmatpush1.msra.mxu0 0.0
      %2959 = vmatprep.subr.mxu0 0.0
      %2960 = vmatpush1.msra.mxu0 0.0
      %2961 = vmatprep.subr.mxu0 0.0
      %2962 = vmatpush1.msra.mxu0 0.0
      %2963 = vmatprep.subr.mxu0 0.0
      %2964 = vmatpush1.msra.mxu0 0.0
      %2965 = vmatprep.subr.mxu0 0.0
      %2966 = vmatpush1.msra.mxu0 0.0
      %2967 = vmatprep.subr.mxu0 0.0
      %2968 = vmatpush1.msra.mxu0 0.0
      %2969 = vmatprep.subr.mxu0 0.0
      %2970 = vmatpush1.msra.mxu0 0.0
      %2971 = vmatprep.subr.mxu0 0.0
      %2972 = vmatpush1.msra.mxu0 0.0
      %2973 = vmatprep.subr.mxu0 0.0
      %2974 = vmatpush1.msra.mxu0 0.0
      %2975 = vmatprep.subr.mxu0 %v2941
      %2976 = vmatpush1.msra.mxu0 %v2939
      %2977 = vmatprep.subr.mxu0 0.0
      %2978 = vmatpush2.msra.mxu0 0.0
      %2979 = vmatprep.subr.mxu0 0.0
      %2980 = vmatpush2.msra.mxu0 0.0
      %2981 = vmatprep.subr.mxu0 0.0
      %2982 = vmatpush2.msra.mxu0 0.0
      %2983 = vmatprep.subr.mxu0 0.0
      %2984 = vmatpush2.msra.mxu0 0.0
      %2985 = vmatprep.subr.mxu0 0.0
      %2986 = vmatpush2.msra.mxu0 0.0
      %2987 = vmatprep.subr.mxu0 0.0
      %2988 = vmatpush2.msra.mxu0 0.0
      %2989 = vmatprep.subr.mxu0 0.0
      %2990 = vmatpush2.msra.mxu0 0.0
      %2991 = vmatprep.subr.mxu0 0.0
      %2992 = vmatpush2.msra.mxu0 0.0
      %2993 = vmatprep.subr.mxu0 0.0
      %2994 = vmatpush2.msra.mxu0 0.0
      %2995 = vmatprep.subr.mxu0 0.0
      %2996 = vmatpush2.msra.mxu0 0.0
      %2997 = vmatprep.subr.mxu0 0.0
      %2998 = vmatpush2.msra.mxu0 0.0
      %2999 = vmatprep.subr.mxu0 0.0
      %3000 = vmatpush2.msra.mxu0 0.0
      %3001 = vmatprep.subr.mxu0 0.0
      %3002 = vmatpush2.msra.mxu0 0.0
      %3003 = vmatprep.subr.mxu0 0.0
      %3004 = vmatpush2.msra.mxu0 0.0
      %3005 = vmatprep.subr.mxu0 0.0
      %3006 = vmatpush2.msra.mxu0 0.0
      %3007 = vmatprep.subr.mxu0 0.0
      %3008 = vmatpush2.msra.mxu0 0.0
      %3009 = vmatprep.mubr.f32.mxu0 0.0
      %3010 = vmatmul.mubr.f32.gmra.mxu0 %v2937
      %v3011 = vpop.f32.mrf.mxu0
      %v3012 = vadd.f32 0.0, %v3011
      %v3013 = vpop.f32.mrf.mxu0
      %v3014 = vadd.f32 0.0, %v3013
      %3015 = vdwg.mxu0
      %3016 = vmatprep.subr.mxu0 0.0
      %3017 = vmatpush1.msra.mxu0 0.0
      %3018 = vmatprep.subr.mxu0 0.0
      %3019 = vmatpush1.msra.mxu0 0.0
      %3020 = vmatprep.subr.mxu0 0.0
      %3021 = vmatpush1.msra.mxu0 0.0
      %3022 = vmatprep.subr.mxu0 0.0
      %3023 = vmatpush1.msra.mxu0 0.0
      %3024 = vmatprep.subr.mxu0 0.0
      %3025 = vmatpush1.msra.mxu0 0.0
      %3026 = vmatprep.subr.mxu0 0.0
      %3027 = vmatpush1.msra.mxu0 0.0
      %3028 = vmatprep.subr.mxu0 0.0
      %3029 = vmatpush1.msra.mxu0 0.0
      %3030 = vmatprep.subr.mxu0 0.0
      %3031 = vmatpush1.msra.mxu0 0.0
      %3032 = vmatprep.subr.mxu0 0.0
      %3033 = vmatpush1.msra.mxu0 0.0
      %3034 = vmatprep.subr.mxu0 0.0
      %3035 = vmatpush1.msra.mxu0 0.0
      %3036 = vmatprep.subr.mxu0 0.0
      %3037 = vmatpush1.msra.mxu0 0.0
      %3038 = vmatprep.subr.mxu0 0.0
      %3039 = vmatpush1.msra.mxu0 0.0
      %3040 = vmatprep.subr.mxu0 0.0
      %3041 = vmatpush1.msra.mxu0 0.0
      %3042 = vmatprep.subr.mxu0 0.0
      %3043 = vmatpush1.msra.mxu0 0.0
      %3044 = vmatprep.subr.mxu0 0.0
      %3045 = vmatpush1.msra.mxu0 0.0
      %3046 = vmatprep.subr.mxu0 0.0
      %3047 = vmatpush1.msra.mxu0 %v2943
      %3048 = vmatprep.subr.mxu0 0.0
      %3049 = vmatpush2.msra.mxu0 0.0
      %3050 = vmatprep.subr.mxu0 0.0
      %3051 = vmatpush2.msra.mxu0 0.0
      %3052 = vmatprep.subr.mxu0 0.0
      %3053 = vmatpush2.msra.mxu0 0.0
      %3054 = vmatprep.subr.mxu0 0.0
      %3055 = vmatpush2.msra.mxu0 0.0
      %3056 = vmatprep.subr.mxu0 0.0
      %3057 = vmatpush2.msra.mxu0 0.0
      %3058 = vmatprep.subr.mxu0 0.0
      %3059 = vmatpush2.msra.mxu0 0.0
      %3060 = vmatprep.subr.mxu0 0.0
      %3061 = vmatpush2.msra.mxu0 0.0
      %3062 = vmatprep.subr.mxu0 0.0
      %3063 = vmatpush2.msra.mxu0 0.0
      %3064 = vmatprep.subr.mxu0 0.0
      %3065 = vmatpush2.msra.mxu0 0.0
      %3066 = vmatprep.subr.mxu0 0.0
      %3067 = vmatpush2.msra.mxu0 0.0
      %3068 = vmatprep.subr.mxu0 0.0
      %3069 = vmatpush2.msra.mxu0 0.0
      %3070 = vmatprep.subr.mxu0 0.0
      %3071 = vmatpush2.msra.mxu0 0.0
      %3072 = vmatprep.subr.mxu0 0.0
      %3073 = vmatpush2.msra.mxu0 0.0
      %3074 = vmatprep.subr.mxu0 0.0
      %3075 = vmatpush2.msra.mxu0 0.0
      %3076 = vmatprep.subr.mxu0 0.0
      %3077 = vmatpush2.msra.mxu0 0.0
      %3078 = vmatprep.subr.mxu0 0.0
      %3079 = vmatpush2.msra.mxu0 0.0
      %3080 = vmatprep.mubr.f32.mxu0 0.0
      %3081 = vmatmul.mubr.f32.gmra.mxu0 %v2937
      %v3082 = vpop.f32.mrf.mxu0
      %v3083 = vadd.f32 0.0, %v3082
      %v3084 = vpop.f32.mrf.mxu0
      %3085 = vdwg.mxu0
      %v3086 = vadd.f32 %v2923, %v3012
      %v3087 = vadd.f32 %v2924, %v3014
      %v3088 = vadd.f32 %v2925, %v3083
      %s3089 = scalar_lea.vmem %s5, 28
      %v3090 = vld [vmem:[%s3089] sm:$0xf]
      %3091 = vrot.lane.b32.xlu0 %v1941, 110
      %v3092 = vpop.permute.xlu0 %3091
      %3093 = vrot.lane.b32.xlu0 %v1942, 110
      %v3094 = vpop.permute.xlu0 %3093
      %3095 = vrot.lane.b32.xlu0 %v1943, 110
      %v3096 = vpop.permute.xlu0 %3095
      %v3097 = vsel %vm1586, %v3092, %v3094
      %v3098 = vsel %vm1586, %v3094, %v3096
      %v3100 = vsel %vm1955, %v3090, 0
      %v3102 = vsel %vm1959, %v3097, 0
      %v3104 = vsel %vm1959, %v3098, 0
      %v3106 = vsel %vm1959, %v3096, 0
      %3108 = vmatprep.subr.mxu0 0.0
      %3109 = vmatpush1.msra.mxu0 0.0
      %3110 = vmatprep.subr.mxu0 0.0
      %3111 = vmatpush1.msra.mxu0 0.0
      %3112 = vmatprep.subr.mxu0 0.0
      %3113 = vmatpush1.msra.mxu0 0.0
      %3114 = vmatprep.subr.mxu0 0.0
      %3115 = vmatpush1.msra.mxu0 0.0
      %3116 = vmatprep.subr.mxu0 0.0
      %3117 = vmatpush1.msra.mxu0 0.0
      %3118 = vmatprep.subr.mxu0 0.0
      %3119 = vmatpush1.msra.mxu0 0.0
      %3120 = vmatprep.subr.mxu0 0.0
      %3121 = vmatpush1.msra.mxu0 0.0
      %3122 = vmatprep.subr.mxu0 0.0
      %3123 = vmatpush1.msra.mxu0 0.0
      %3124 = vmatprep.subr.mxu0 0.0
      %3125 = vmatpush1.msra.mxu0 0.0
      %3126 = vmatprep.subr.mxu0 0.0
      %3127 = vmatpush1.msra.mxu0 0.0
      %3128 = vmatprep.subr.mxu0 0.0
      %3129 = vmatpush1.msra.mxu0 0.0
      %3130 = vmatprep.subr.mxu0 0.0
      %3131 = vmatpush1.msra.mxu0 0.0
      %3132 = vmatprep.subr.mxu0 0.0
      %3133 = vmatpush1.msra.mxu0 0.0
      %3134 = vmatprep.subr.mxu0 0.0
      %3135 = vmatpush1.msra.mxu0 0.0
      %3136 = vmatprep.subr.mxu0 0.0
      %3137 = vmatpush1.msra.mxu0 0.0
      %3138 = vmatprep.subr.mxu0 %v3104
      %3139 = vmatpush1.msra.mxu0 %v3102
      %3140 = vmatprep.subr.mxu0 0.0
      %3141 = vmatpush2.msra.mxu0 0.0
      %3142 = vmatprep.subr.mxu0 0.0
      %3143 = vmatpush2.msra.mxu0 0.0
      %3144 = vmatprep.subr.mxu0 0.0
      %3145 = vmatpush2.msra.mxu0 0.0
      %3146 = vmatprep.subr.mxu0 0.0
      %3147 = vmatpush2.msra.mxu0 0.0
      %3148 = vmatprep.subr.mxu0 0.0
      %3149 = vmatpush2.msra.mxu0 0.0
      %3150 = vmatprep.subr.mxu0 0.0
      %3151 = vmatpush2.msra.mxu0 0.0
      %3152 = vmatprep.subr.mxu0 0.0
      %3153 = vmatpush2.msra.mxu0 0.0
      %3154 = vmatprep.subr.mxu0 0.0
      %3155 = vmatpush2.msra.mxu0 0.0
      %3156 = vmatprep.subr.mxu0 0.0
      %3157 = vmatpush2.msra.mxu0 0.0
      %3158 = vmatprep.subr.mxu0 0.0
      %3159 = vmatpush2.msra.mxu0 0.0
      %3160 = vmatprep.subr.mxu0 0.0
      %3161 = vmatpush2.msra.mxu0 0.0
      %3162 = vmatprep.subr.mxu0 0.0
      %3163 = vmatpush2.msra.mxu0 0.0
      %3164 = vmatprep.subr.mxu0 0.0
      %3165 = vmatpush2.msra.mxu0 0.0
      %3166 = vmatprep.subr.mxu0 0.0
      %3167 = vmatpush2.msra.mxu0 0.0
      %3168 = vmatprep.subr.mxu0 0.0
      %3169 = vmatpush2.msra.mxu0 0.0
      %3170 = vmatprep.subr.mxu0 0.0
      %3171 = vmatpush2.msra.mxu0 0.0
      %3172 = vmatprep.mubr.f32.mxu0 0.0
      %3173 = vmatmul.mubr.f32.gmra.mxu0 %v3100
      %v3174 = vpop.f32.mrf.mxu0
      %v3175 = vadd.f32 0.0, %v3174
      %v3176 = vpop.f32.mrf.mxu0
      %v3177 = vadd.f32 0.0, %v3176
      %3178 = vdwg.mxu0
      %3179 = vmatprep.subr.mxu0 0.0
      %3180 = vmatpush1.msra.mxu0 0.0
      %3181 = vmatprep.subr.mxu0 0.0
      %3182 = vmatpush1.msra.mxu0 0.0
      %3183 = vmatprep.subr.mxu0 0.0
      %3184 = vmatpush1.msra.mxu0 0.0
      %3185 = vmatprep.subr.mxu0 0.0
      %3186 = vmatpush1.msra.mxu0 0.0
      %3187 = vmatprep.subr.mxu0 0.0
      %3188 = vmatpush1.msra.mxu0 0.0
      %3189 = vmatprep.subr.mxu0 0.0
      %3190 = vmatpush1.msra.mxu0 0.0
      %3191 = vmatprep.subr.mxu0 0.0
      %3192 = vmatpush1.msra.mxu0 0.0
      %3193 = vmatprep.subr.mxu0 0.0
      %3194 = vmatpush1.msra.mxu0 0.0
      %3195 = vmatprep.subr.mxu0 0.0
      %3196 = vmatpush1.msra.mxu0 0.0
      %3197 = vmatprep.subr.mxu0 0.0
      %3198 = vmatpush1.msra.mxu0 0.0
      %3199 = vmatprep.subr.mxu0 0.0
      %3200 = vmatpush1.msra.mxu0 0.0
      %3201 = vmatprep.subr.mxu0 0.0
      %3202 = vmatpush1.msra.mxu0 0.0
      %3203 = vmatprep.subr.mxu0 0.0
      %3204 = vmatpush1.msra.mxu0 0.0
      %3205 = vmatprep.subr.mxu0 0.0
      %3206 = vmatpush1.msra.mxu0 0.0
      %3207 = vmatprep.subr.mxu0 0.0
      %3208 = vmatpush1.msra.mxu0 0.0
      %3209 = vmatprep.subr.mxu0 0.0
      %3210 = vmatpush1.msra.mxu0 %v3106
      %3211 = vmatprep.subr.mxu0 0.0
      %3212 = vmatpush2.msra.mxu0 0.0
      %3213 = vmatprep.subr.mxu0 0.0
      %3214 = vmatpush2.msra.mxu0 0.0
      %3215 = vmatprep.subr.mxu0 0.0
      %3216 = vmatpush2.msra.mxu0 0.0
      %3217 = vmatprep.subr.mxu0 0.0
      %3218 = vmatpush2.msra.mxu0 0.0
      %3219 = vmatprep.subr.mxu0 0.0
      %3220 = vmatpush2.msra.mxu0 0.0
      %3221 = vmatprep.subr.mxu0 0.0
      %3222 = vmatpush2.msra.mxu0 0.0
      %3223 = vmatprep.subr.mxu0 0.0
      %3224 = vmatpush2.msra.mxu0 0.0
      %3225 = vmatprep.subr.mxu0 0.0
      %3226 = vmatpush2.msra.mxu0 0.0
      %3227 = vmatprep.subr.mxu0 0.0
      %3228 = vmatpush2.msra.mxu0 0.0
      %3229 = vmatprep.subr.mxu0 0.0
      %3230 = vmatpush2.msra.mxu0 0.0
      %3231 = vmatprep.subr.mxu0 0.0
      %3232 = vmatpush2.msra.mxu0 0.0
      %3233 = vmatprep.subr.mxu0 0.0
      %3234 = vmatpush2.msra.mxu0 0.0
      %3235 = vmatprep.subr.mxu0 0.0
      %3236 = vmatpush2.msra.mxu0 0.0
      %3237 = vmatprep.subr.mxu0 0.0
      %3238 = vmatpush2.msra.mxu0 0.0
      %3239 = vmatprep.subr.mxu0 0.0
      %3240 = vmatpush2.msra.mxu0 0.0
      %3241 = vmatprep.subr.mxu0 0.0
      %3242 = vmatpush2.msra.mxu0 0.0
      %3243 = vmatprep.mubr.f32.mxu0 0.0
      %3244 = vmatmul.mubr.f32.gmra.mxu0 %v3100
      %v3245 = vpop.f32.mrf.mxu0
      %v3246 = vadd.f32 0.0, %v3245
      %v3247 = vpop.f32.mrf.mxu0
      %3248 = vdwg.mxu0
      %v3249 = vadd.f32 %v3086, %v3175
      %v3250 = vadd.f32 %v3087, %v3177
      %v3251 = vadd.f32 %v3088, %v3246
      %s3252 = scalar_lea.vmem %s5, 32
      %v3253 = vld [vmem:[%s3252] sm:$0xf]
      %3254 = vrot.lane.b32.xlu0 %v1941, 109
      %v3255 = vpop.permute.xlu0 %3254
      %3256 = vrot.lane.b32.xlu0 %v1942, 109
      %v3257 = vpop.permute.xlu0 %3256
      %3258 = vrot.lane.b32.xlu0 %v1943, 109
      %v3259 = vpop.permute.xlu0 %3258
      %v3260 = vsel %vm1747, %v3255, %v3257
      %v3261 = vsel %vm1747, %v3257, %v3259
      %v3263 = vsel %vm1955, %v3253, 0
      %v3265 = vsel %vm1959, %v3260, 0
      %v3267 = vsel %vm1959, %v3261, 0
      %v3269 = vsel %vm1959, %v3259, 0
      %3271 = vmatprep.subr.mxu0 0.0
      %3272 = vmatpush1.msra.mxu0 0.0
      %3273 = vmatprep.subr.mxu0 0.0
      %3274 = vmatpush1.msra.mxu0 0.0
      %3275 = vmatprep.subr.mxu0 0.0
      %3276 = vmatpush1.msra.mxu0 0.0
      %3277 = vmatprep.subr.mxu0 0.0
      %3278 = vmatpush1.msra.mxu0 0.0
      %3279 = vmatprep.subr.mxu0 0.0
      %3280 = vmatpush1.msra.mxu0 0.0
      %3281 = vmatprep.subr.mxu0 0.0
      %3282 = vmatpush1.msra.mxu0 0.0
      %3283 = vmatprep.subr.mxu0 0.0
      %3284 = vmatpush1.msra.mxu0 0.0
      %3285 = vmatprep.subr.mxu0 0.0
      %3286 = vmatpush1.msra.mxu0 0.0
      %3287 = vmatprep.subr.mxu0 0.0
      %3288 = vmatpush1.msra.mxu0 0.0
      %3289 = vmatprep.subr.mxu0 0.0
      %3290 = vmatpush1.msra.mxu0 0.0
      %3291 = vmatprep.subr.mxu0 0.0
      %3292 = vmatpush1.msra.mxu0 0.0
      %3293 = vmatprep.subr.mxu0 0.0
      %3294 = vmatpush1.msra.mxu0 0.0
      %3295 = vmatprep.subr.mxu0 0.0
      %3296 = vmatpush1.msra.mxu0 0.0
      %3297 = vmatprep.subr.mxu0 0.0
      %3298 = vmatpush1.msra.mxu0 0.0
      %3299 = vmatprep.subr.mxu0 0.0
      %3300 = vmatpush1.msra.mxu0 0.0
      %3301 = vmatprep.subr.mxu0 %v3267
      %3302 = vmatpush1.msra.mxu0 %v3265
      %3303 = vmatprep.subr.mxu0 0.0
      %3304 = vmatpush2.msra.mxu0 0.0
      %3305 = vmatprep.subr.mxu0 0.0
      %3306 = vmatpush2.msra.mxu0 0.0
      %3307 = vmatprep.subr.mxu0 0.0
      %3308 = vmatpush2.msra.mxu0 0.0
      %3309 = vmatprep.subr.mxu0 0.0
      %3310 = vmatpush2.msra.mxu0 0.0
      %3311 = vmatprep.subr.mxu0 0.0
      %3312 = vmatpush2.msra.mxu0 0.0
      %3313 = vmatprep.subr.mxu0 0.0
      %3314 = vmatpush2.msra.mxu0 0.0
      %3315 = vmatprep.subr.mxu0 0.0
      %3316 = vmatpush2.msra.mxu0 0.0
      %3317 = vmatprep.subr.mxu0 0.0
      %3318 = vmatpush2.msra.mxu0 0.0
      %3319 = vmatprep.subr.mxu0 0.0
      %3320 = vmatpush2.msra.mxu0 0.0
      %3321 = vmatprep.subr.mxu0 0.0
      %3322 = vmatpush2.msra.mxu0 0.0
      %3323 = vmatprep.subr.mxu0 0.0
      %3324 = vmatpush2.msra.mxu0 0.0
      %3325 = vmatprep.subr.mxu0 0.0
      %3326 = vmatpush2.msra.mxu0 0.0
      %3327 = vmatprep.subr.mxu0 0.0
      %3328 = vmatpush2.msra.mxu0 0.0
      %3329 = vmatprep.subr.mxu0 0.0
      %3330 = vmatpush2.msra.mxu0 0.0
      %3331 = vmatprep.subr.mxu0 0.0
      %3332 = vmatpush2.msra.mxu0 0.0
      %3333 = vmatprep.subr.mxu0 0.0
      %3334 = vmatpush2.msra.mxu0 0.0
      %3335 = vmatprep.mubr.f32.mxu0 0.0
      %3336 = vmatmul.mubr.f32.gmra.mxu0 %v3263
      %v3337 = vpop.f32.mrf.mxu0
      %v3338 = vadd.f32 0.0, %v3337
      %v3339 = vpop.f32.mrf.mxu0
      %v3340 = vadd.f32 0.0, %v3339
      %3341 = vdwg.mxu0
      %3342 = vmatprep.subr.mxu0 0.0
      %3343 = vmatpush1.msra.mxu0 0.0
      %3344 = vmatprep.subr.mxu0 0.0
      %3345 = vmatpush1.msra.mxu0 0.0
      %3346 = vmatprep.subr.mxu0 0.0
      %3347 = vmatpush1.msra.mxu0 0.0
      %3348 = vmatprep.subr.mxu0 0.0
      %3349 = vmatpush1.msra.mxu0 0.0
      %3350 = vmatprep.subr.mxu0 0.0
      %3351 = vmatpush1.msra.mxu0 0.0
      %3352 = vmatprep.subr.mxu0 0.0
      %3353 = vmatpush1.msra.mxu0 0.0
      %3354 = vmatprep.subr.mxu0 0.0
      %3355 = vmatpush1.msra.mxu0 0.0
      %3356 = vmatprep.subr.mxu0 0.0
      %3357 = vmatpush1.msra.mxu0 0.0
      %3358 = vmatprep.subr.mxu0 0.0
      %3359 = vmatpush1.msra.mxu0 0.0
      %3360 = vmatprep.subr.mxu0 0.0
      %3361 = vmatpush1.msra.mxu0 0.0
      %3362 = vmatprep.subr.mxu0 0.0
      %3363 = vmatpush1.msra.mxu0 0.0
      %3364 = vmatprep.subr.mxu0 0.0
      %3365 = vmatpush1.msra.mxu0 0.0
      %3366 = vmatprep.subr.mxu0 0.0
      %3367 = vmatpush1.msra.mxu0 0.0
      %3368 = vmatprep.subr.mxu0 0.0
      %3369 = vmatpush1.msra.mxu0 0.0
      %3370 = vmatprep.subr.mxu0 0.0
      %3371 = vmatpush1.msra.mxu0 0.0
      %3372 = vmatprep.subr.mxu0 0.0
      %3373 = vmatpush1.msra.mxu0 %v3269
      %3374 = vmatprep.subr.mxu0 0.0
      %3375 = vmatpush2.msra.mxu0 0.0
      %3376 = vmatprep.subr.mxu0 0.0
      %3377 = vmatpush2.msra.mxu0 0.0
      %3378 = vmatprep.subr.mxu0 0.0
      %3379 = vmatpush2.msra.mxu0 0.0
      %3380 = vmatprep.subr.mxu0 0.0
      %3381 = vmatpush2.msra.mxu0 0.0
      %3382 = vmatprep.subr.mxu0 0.0
      %3383 = vmatpush2.msra.mxu0 0.0
      %3384 = vmatprep.subr.mxu0 0.0
      %3385 = vmatpush2.msra.mxu0 0.0
      %3386 = vmatprep.subr.mxu0 0.0
      %3387 = vmatpush2.msra.mxu0 0.0
      %3388 = vmatprep.subr.mxu0 0.0
      %3389 = vmatpush2.msra.mxu0 0.0
      %3390 = vmatprep.subr.mxu0 0.0
      %3391 = vmatpush2.msra.mxu0 0.0
      %3392 = vmatprep.subr.mxu0 0.0
      %3393 = vmatpush2.msra.mxu0 0.0
      %3394 = vmatprep.subr.mxu0 0.0
      %3395 = vmatpush2.msra.mxu0 0.0
      %3396 = vmatprep.subr.mxu0 0.0
      %3397 = vmatpush2.msra.mxu0 0.0
      %3398 = vmatprep.subr.mxu0 0.0
      %3399 = vmatpush2.msra.mxu0 0.0
      %3400 = vmatprep.subr.mxu0 0.0
      %3401 = vmatpush2.msra.mxu0 0.0
      %3402 = vmatprep.subr.mxu0 0.0
      %3403 = vmatpush2.msra.mxu0 0.0
      %3404 = vmatprep.subr.mxu0 0.0
      %3405 = vmatpush2.msra.mxu0 0.0
      %3406 = vmatprep.mubr.f32.mxu0 0.0
      %3407 = vmatmul.mubr.f32.gmra.mxu0 %v3263
      %v3408 = vpop.f32.mrf.mxu0
      %v3409 = vadd.f32 0.0, %v3408
      %v3410 = vpop.f32.mrf.mxu0
      %3411 = vdwg.mxu0
      %v3412 = vadd.f32 %v3249, %v3338
      %v3413 = vadd.f32 %v3250, %v3340
      %v3414 = vadd.f32 %v3251, %v3409
      %v3415 = vmax.f32 %v3412, 0.0
      %v3416 = vmax.f32 %v3413, 0.0
      %v3417 = vmax.f32 %v3414, 0.0
      %v3418 = vmul.f32 %v3415, %v1907
      %v3419 = vmul.f32 %v3416, %v1911
      %v3420 = vmul.f32 %v3417, %v1915
      %3421 = vst [vmem:[#allocation2 + $0x28] sm:$0xf] %v3418
      %3422 = vst [vmem:[#allocation2 + $0x30] sm:$0xf] %v3419
      %3423 = vst.msk [vmem:[#allocation2 + $0x38] sm:$0xf] %vm423, %v3420
      %v3427 = vrot.slane %v1919, 4
      %v3428 = vrot.slane %v1920, 4
      %v3429 = vrot.slane %v1921, 4
      %3433 = vst [vmem:[#allocation2 + $0x8] sm:$0xf0] %v3427
      %3434 = vst [vmem:[#allocation2 + $0x10] sm:$0xf0] %v3428
      %3435 = vst.msk [vmem:[#allocation2 + $0x18] sm:$0xf0] %vm435, %v3429
      %v3436 = vld [vmem:[%s8] sm:$0xf]
      %3438 = vset.pattern.permute.xlu0 0
      %3439 = vperm.xlu0 %3438, %v3436
      %v3440 = vpop.permute.xlu0 %3439
      %v3442 = vld [vmem:[#allocation2] sm:$0xf0]
      %v3443 = vld [vmem:[#allocation2 + $0x8] sm:$0xf0]
      %v3444 = vld [vmem:[#allocation2 + $0x10] sm:$0xf0]
      %v3445 = vld [vmem:[#allocation2 + $0x18] sm:$0xf0]
      %v3446 = vld [vmem:[#allocation2 + $0x20] sm:$0xf]
      %v3447 = vld [vmem:[#allocation2 + $0x28] sm:$0xf]
      %v3448 = vld [vmem:[#allocation2 + $0x30] sm:$0xf]
      %v3449 = vld [vmem:[#allocation2 + $0x38] sm:$0xf]
      %v3450 = vld [vmem:[%s7] sm:$0xf]
      %v3459 = vrot.slane %v3442, 4
      %v3460 = vrot.slane %v3446, 4
      %v3461 = vsel %vm1959, %v3459, %v3460
      %v3462 = vrot.slane %v3443, 4
      %v3463 = vrot.slane %v3447, 4
      %v3464 = vsel %vm1959, %v3462, %v3463
      %v3465 = vrot.slane %v3444, 4
      %v3466 = vrot.slane %v3448, 4
      %v3467 = vsel %vm1959, %v3465, %v3466
      %v3468 = vrot.slane %v3445, 4
      %v3469 = vrot.slane %v3449, 4
      %v3470 = vsel %vm1959, %v3468, %v3469
      %3471 = vrot.lane.b32.xlu0 %v3461, 19
      %v3472 = vpop.permute.xlu0 %3471
      %3473 = vrot.lane.b32.xlu0 %v3464, 19
      %v3474 = vpop.permute.xlu0 %3473
      %3475 = vrot.lane.b32.xlu0 %v3467, 19
      %v3476 = vpop.permute.xlu0 %3475
      %3477 = vrot.lane.b32.xlu0 %v3470, 19
      %v3478 = vpop.permute.xlu0 %3477
      %v3479 = vsel %vm460, %v3472, %v3474
      %v3480 = vsel %vm460, %v3474, %v3476
      %v3481 = vsel %vm460, %v3476, %v3478
      %v3486 = vsel %vm467, %v3450, 0
      %3488 = vmatprep.subr.mxu0 0.0
      %3489 = vmatpush1.msra.mxu0 0.0
      %3490 = vmatprep.subr.mxu0 0.0
      %3491 = vmatpush1.msra.mxu0 0.0
      %3492 = vmatprep.subr.mxu0 0.0
      %3493 = vmatpush1.msra.mxu0 0.0
      %3494 = vmatprep.subr.mxu0 0.0
      %3495 = vmatpush1.msra.mxu0 0.0
      %3496 = vmatprep.subr.mxu0 0.0
      %3497 = vmatpush1.msra.mxu0 0.0
      %3498 = vmatprep.subr.mxu0 0.0
      %3499 = vmatpush1.msra.mxu0 0.0
      %3500 = vmatprep.subr.mxu0 0.0
      %3501 = vmatpush1.msra.mxu0 0.0
      %3502 = vmatprep.subr.mxu0 0.0
      %3503 = vmatpush1.msra.mxu0 0.0
      %3504 = vmatprep.subr.mxu0 0.0
      %3505 = vmatpush1.msra.mxu0 0.0
      %3506 = vmatprep.subr.mxu0 0.0
      %3507 = vmatpush1.msra.mxu0 0.0
      %3508 = vmatprep.subr.mxu0 0.0
      %3509 = vmatpush1.msra.mxu0 0.0
      %3510 = vmatprep.subr.mxu0 0.0
      %3511 = vmatpush1.msra.mxu0 0.0
      %3512 = vmatprep.subr.mxu0 0.0
      %3513 = vmatpush1.msra.mxu0 0.0
      %3514 = vmatprep.subr.mxu0 0.0
      %3515 = vmatpush1.msra.mxu0 0.0
      %3516 = vmatprep.subr.mxu0 0.0
      %3517 = vmatpush1.msra.mxu0 0.0
      %3518 = vmatprep.subr.mxu0 %v3480
      %3519 = vmatpush1.msra.mxu0 %v3479
      %3520 = vmatprep.subr.mxu0 0.0
      %3521 = vmatpush2.msra.mxu0 0.0
      %3522 = vmatprep.subr.mxu0 0.0
      %3523 = vmatpush2.msra.mxu0 0.0
      %3524 = vmatprep.subr.mxu0 0.0
      %3525 = vmatpush2.msra.mxu0 0.0
      %3526 = vmatprep.subr.mxu0 0.0
      %3527 = vmatpush2.msra.mxu0 0.0
      %3528 = vmatprep.subr.mxu0 0.0
      %3529 = vmatpush2.msra.mxu0 0.0
      %3530 = vmatprep.subr.mxu0 0.0
      %3531 = vmatpush2.msra.mxu0 0.0
      %3532 = vmatprep.subr.mxu0 0.0
      %3533 = vmatpush2.msra.mxu0 0.0
      %3534 = vmatprep.subr.mxu0 0.0
      %3535 = vmatpush2.msra.mxu0 0.0
      %3536 = vmatprep.subr.mxu0 0.0
      %3537 = vmatpush2.msra.mxu0 0.0
      %3538 = vmatprep.subr.mxu0 0.0
      %3539 = vmatpush2.msra.mxu0 0.0
      %3540 = vmatprep.subr.mxu0 0.0
      %3541 = vmatpush2.msra.mxu0 0.0
      %3542 = vmatprep.subr.mxu0 0.0
      %3543 = vmatpush2.msra.mxu0 0.0
      %3544 = vmatprep.subr.mxu0 0.0
      %3545 = vmatpush2.msra.mxu0 0.0
      %3546 = vmatprep.subr.mxu0 0.0
      %3547 = vmatpush2.msra.mxu0 0.0
      %3548 = vmatprep.subr.mxu0 0.0
      %3549 = vmatpush2.msra.mxu0 0.0
      %3550 = vmatprep.subr.mxu0 0.0
      %3551 = vmatpush2.msra.mxu0 0.0
      %3552 = vmatprep.mubr.f32.mxu0 0.0
      %3553 = vmatmul.mubr.f32.gmra.mxu0 %v3486
      %v3554 = vpop.f32.mrf.mxu0
      %v3555 = vadd.f32 0.0, %v3554
      %v3556 = vpop.f32.mrf.mxu0
      %v3557 = vadd.f32 0.0, %v3556
      %3558 = vdwg.mxu0
      %3559 = vmatprep.subr.mxu0 0.0
      %3560 = vmatpush1.msra.mxu0 0.0
      %3561 = vmatprep.subr.mxu0 0.0
      %3562 = vmatpush1.msra.mxu0 0.0
      %3563 = vmatprep.subr.mxu0 0.0
      %3564 = vmatpush1.msra.mxu0 0.0
      %3565 = vmatprep.subr.mxu0 0.0
      %3566 = vmatpush1.msra.mxu0 0.0
      %3567 = vmatprep.subr.mxu0 0.0
      %3568 = vmatpush1.msra.mxu0 0.0
      %3569 = vmatprep.subr.mxu0 0.0
      %3570 = vmatpush1.msra.mxu0 0.0
      %3571 = vmatprep.subr.mxu0 0.0
      %3572 = vmatpush1.msra.mxu0 0.0
      %3573 = vmatprep.subr.mxu0 0.0
      %3574 = vmatpush1.msra.mxu0 0.0
      %3575 = vmatprep.subr.mxu0 0.0
      %3576 = vmatpush1.msra.mxu0 0.0
      %3577 = vmatprep.subr.mxu0 0.0
      %3578 = vmatpush1.msra.mxu0 0.0
      %3579 = vmatprep.subr.mxu0 0.0
      %3580 = vmatpush1.msra.mxu0 0.0
      %3581 = vmatprep.subr.mxu0 0.0
      %3582 = vmatpush1.msra.mxu0 0.0
      %3583 = vmatprep.subr.mxu0 0.0
      %3584 = vmatpush1.msra.mxu0 0.0
      %3585 = vmatprep.subr.mxu0 0.0
      %3586 = vmatpush1.msra.mxu0 0.0
      %3587 = vmatprep.subr.mxu0 0.0
      %3588 = vmatpush1.msra.mxu0 0.0
      %3589 = vmatprep.subr.mxu0 0.0
      %3590 = vmatpush1.msra.mxu0 %v3481
      %3591 = vmatprep.subr.mxu0 0.0
      %3592 = vmatpush2.msra.mxu0 0.0
      %3593 = vmatprep.subr.mxu0 0.0
      %3594 = vmatpush2.msra.mxu0 0.0
      %3595 = vmatprep.subr.mxu0 0.0
      %3596 = vmatpush2.msra.mxu0 0.0
      %3597 = vmatprep.subr.mxu0 0.0
      %3598 = vmatpush2.msra.mxu0 0.0
      %3599 = vmatprep.subr.mxu0 0.0
      %3600 = vmatpush2.msra.mxu0 0.0
      %3601 = vmatprep.subr.mxu0 0.0
      %3602 = vmatpush2.msra.mxu0 0.0
      %3603 = vmatprep.subr.mxu0 0.0
      %3604 = vmatpush2.msra.mxu0 0.0
      %3605 = vmatprep.subr.mxu0 0.0
      %3606 = vmatpush2.msra.mxu0 0.0
      %3607 = vmatprep.subr.mxu0 0.0
      %3608 = vmatpush2.msra.mxu0 0.0
      %3609 = vmatprep.subr.mxu0 0.0
      %3610 = vmatpush2.msra.mxu0 0.0
      %3611 = vmatprep.subr.mxu0 0.0
      %3612 = vmatpush2.msra.mxu0 0.0
      %3613 = vmatprep.subr.mxu0 0.0
      %3614 = vmatpush2.msra.mxu0 0.0
      %3615 = vmatprep.subr.mxu0 0.0
      %3616 = vmatpush2.msra.mxu0 0.0
      %3617 = vmatprep.subr.mxu0 0.0
      %3618 = vmatpush2.msra.mxu0 0.0
      %3619 = vmatprep.subr.mxu0 0.0
      %3620 = vmatpush2.msra.mxu0 0.0
      %3621 = vmatprep.subr.mxu0 0.0
      %3622 = vmatpush2.msra.mxu0 0.0
      %3623 = vmatprep.mubr.f32.mxu0 0.0
      %3624 = vmatmul.mubr.f32.gmra.mxu0 %v3486
      %v3625 = vpop.f32.mrf.mxu0
      %v3626 = vadd.f32 0.0, %v3625
      %v3627 = vpop.f32.mrf.mxu0
      %3628 = vdwg.mxu0
      %v3629 = vadd.f32 %v3440, %v3555
      %v3630 = vadd.f32 %v3440, %v3557
      %v3631 = vadd.f32 %v3440, %v3626
      %s3632 = scalar_lea.vmem %s7, 4
      %v3633 = vld [vmem:[%s3632] sm:$0xf]
      %3634 = vrot.lane.b32.xlu0 %v3461, 18
      %v3635 = vpop.permute.xlu0 %3634
      %3636 = vrot.lane.b32.xlu0 %v3464, 18
      %v3637 = vpop.permute.xlu0 %3636
      %3638 = vrot.lane.b32.xlu0 %v3467, 18
      %v3639 = vpop.permute.xlu0 %3638
      %3640 = vrot.lane.b32.xlu0 %v3470, 18
      %v3641 = vpop.permute.xlu0 %3640
      %v3642 = vsel %vm625, %v3635, %v3637
      %v3643 = vsel %vm625, %v3637, %v3639
      %v3644 = vsel %vm625, %v3639, %v3641
      %v3649 = vsel %vm467, %v3633, 0
      %3651 = vmatprep.subr.mxu0 0.0
      %3652 = vmatpush1.msra.mxu0 0.0
      %3653 = vmatprep.subr.mxu0 0.0
      %3654 = vmatpush1.msra.mxu0 0.0
      %3655 = vmatprep.subr.mxu0 0.0
      %3656 = vmatpush1.msra.mxu0 0.0
      %3657 = vmatprep.subr.mxu0 0.0
      %3658 = vmatpush1.msra.mxu0 0.0
      %3659 = vmatprep.subr.mxu0 0.0
      %3660 = vmatpush1.msra.mxu0 0.0
      %3661 = vmatprep.subr.mxu0 0.0
      %3662 = vmatpush1.msra.mxu0 0.0
      %3663 = vmatprep.subr.mxu0 0.0
      %3664 = vmatpush1.msra.mxu0 0.0
      %3665 = vmatprep.subr.mxu0 0.0
      %3666 = vmatpush1.msra.mxu0 0.0
      %3667 = vmatprep.subr.mxu0 0.0
      %3668 = vmatpush1.msra.mxu0 0.0
      %3669 = vmatprep.subr.mxu0 0.0
      %3670 = vmatpush1.msra.mxu0 0.0
      %3671 = vmatprep.subr.mxu0 0.0
      %3672 = vmatpush1.msra.mxu0 0.0
      %3673 = vmatprep.subr.mxu0 0.0
      %3674 = vmatpush1.msra.mxu0 0.0
      %3675 = vmatprep.subr.mxu0 0.0
      %3676 = vmatpush1.msra.mxu0 0.0
      %3677 = vmatprep.subr.mxu0 0.0
      %3678 = vmatpush1.msra.mxu0 0.0
      %3679 = vmatprep.subr.mxu0 0.0
      %3680 = vmatpush1.msra.mxu0 0.0
      %3681 = vmatprep.subr.mxu0 %v3643
      %3682 = vmatpush1.msra.mxu0 %v3642
      %3683 = vmatprep.subr.mxu0 0.0
      %3684 = vmatpush2.msra.mxu0 0.0
      %3685 = vmatprep.subr.mxu0 0.0
      %3686 = vmatpush2.msra.mxu0 0.0
      %3687 = vmatprep.subr.mxu0 0.0
      %3688 = vmatpush2.msra.mxu0 0.0
      %3689 = vmatprep.subr.mxu0 0.0
      %3690 = vmatpush2.msra.mxu0 0.0
      %3691 = vmatprep.subr.mxu0 0.0
      %3692 = vmatpush2.msra.mxu0 0.0
      %3693 = vmatprep.subr.mxu0 0.0
      %3694 = vmatpush2.msra.mxu0 0.0
      %3695 = vmatprep.subr.mxu0 0.0
      %3696 = vmatpush2.msra.mxu0 0.0
      %3697 = vmatprep.subr.mxu0 0.0
      %3698 = vmatpush2.msra.mxu0 0.0
      %3699 = vmatprep.subr.mxu0 0.0
      %3700 = vmatpush2.msra.mxu0 0.0
      %3701 = vmatprep.subr.mxu0 0.0
      %3702 = vmatpush2.msra.mxu0 0.0
      %3703 = vmatprep.subr.mxu0 0.0
      %3704 = vmatpush2.msra.mxu0 0.0
      %3705 = vmatprep.subr.mxu0 0.0
      %3706 = vmatpush2.msra.mxu0 0.0
      %3707 = vmatprep.subr.mxu0 0.0
      %3708 = vmatpush2.msra.mxu0 0.0
      %3709 = vmatprep.subr.mxu0 0.0
      %3710 = vmatpush2.msra.mxu0 0.0
      %3711 = vmatprep.subr.mxu0 0.0
      %3712 = vmatpush2.msra.mxu0 0.0
      %3713 = vmatprep.subr.mxu0 0.0
      %3714 = vmatpush2.msra.mxu0 0.0
      %3715 = vmatprep.mubr.f32.mxu0 0.0
      %3716 = vmatmul.mubr.f32.gmra.mxu0 %v3649
      %v3717 = vpop.f32.mrf.mxu0
      %v3718 = vadd.f32 0.0, %v3717
      %v3719 = vpop.f32.mrf.mxu0
      %v3720 = vadd.f32 0.0, %v3719
      %3721 = vdwg.mxu0
      %3722 = vmatprep.subr.mxu0 0.0
      %3723 = vmatpush1.msra.mxu0 0.0
      %3724 = vmatprep.subr.mxu0 0.0
      %3725 = vmatpush1.msra.mxu0 0.0
      %3726 = vmatprep.subr.mxu0 0.0
      %3727 = vmatpush1.msra.mxu0 0.0
      %3728 = vmatprep.subr.mxu0 0.0
      %3729 = vmatpush1.msra.mxu0 0.0
      %3730 = vmatprep.subr.mxu0 0.0
      %3731 = vmatpush1.msra.mxu0 0.0
      %3732 = vmatprep.subr.mxu0 0.0
      %3733 = vmatpush1.msra.mxu0 0.0
      %3734 = vmatprep.subr.mxu0 0.0
      %3735 = vmatpush1.msra.mxu0 0.0
      %3736 = vmatprep.subr.mxu0 0.0
      %3737 = vmatpush1.msra.mxu0 0.0
      %3738 = vmatprep.subr.mxu0 0.0
      %3739 = vmatpush1.msra.mxu0 0.0
      %3740 = vmatprep.subr.mxu0 0.0
      %3741 = vmatpush1.msra.mxu0 0.0
      %3742 = vmatprep.subr.mxu0 0.0
      %3743 = vmatpush1.msra.mxu0 0.0
      %3744 = vmatprep.subr.mxu0 0.0
      %3745 = vmatpush1.msra.mxu0 0.0
      %3746 = vmatprep.subr.mxu0 0.0
      %3747 = vmatpush1.msra.mxu0 0.0
      %3748 = vmatprep.subr.mxu0 0.0
      %3749 = vmatpush1.msra.mxu0 0.0
      %3750 = vmatprep.subr.mxu0 0.0
      %3751 = vmatpush1.msra.mxu0 0.0
      %3752 = vmatprep.subr.mxu0 0.0
      %3753 = vmatpush1.msra.mxu0 %v3644
      %3754 = vmatprep.subr.mxu0 0.0
      %3755 = vmatpush2.msra.mxu0 0.0
      %3756 = vmatprep.subr.mxu0 0.0
      %3757 = vmatpush2.msra.mxu0 0.0
      %3758 = vmatprep.subr.mxu0 0.0
      %3759 = vmatpush2.msra.mxu0 0.0
      %3760 = vmatprep.subr.mxu0 0.0
      %3761 = vmatpush2.msra.mxu0 0.0
      %3762 = vmatprep.subr.mxu0 0.0
      %3763 = vmatpush2.msra.mxu0 0.0
      %3764 = vmatprep.subr.mxu0 0.0
      %3765 = vmatpush2.msra.mxu0 0.0
      %3766 = vmatprep.subr.mxu0 0.0
      %3767 = vmatpush2.msra.mxu0 0.0
      %3768 = vmatprep.subr.mxu0 0.0
      %3769 = vmatpush2.msra.mxu0 0.0
      %3770 = vmatprep.subr.mxu0 0.0
      %3771 = vmatpush2.msra.mxu0 0.0
      %3772 = vmatprep.subr.mxu0 0.0
      %3773 = vmatpush2.msra.mxu0 0.0
      %3774 = vmatprep.subr.mxu0 0.0
      %3775 = vmatpush2.msra.mxu0 0.0
      %3776 = vmatprep.subr.mxu0 0.0
      %3777 = vmatpush2.msra.mxu0 0.0
      %3778 = vmatprep.subr.mxu0 0.0
      %3779 = vmatpush2.msra.mxu0 0.0
      %3780 = vmatprep.subr.mxu0 0.0
      %3781 = vmatpush2.msra.mxu0 0.0
      %3782 = vmatprep.subr.mxu0 0.0
      %3783 = vmatpush2.msra.mxu0 0.0
      %3784 = vmatprep.subr.mxu0 0.0
      %3785 = vmatpush2.msra.mxu0 0.0
      %3786 = vmatprep.mubr.f32.mxu0 0.0
      %3787 = vmatmul.mubr.f32.gmra.mxu0 %v3649
      %v3788 = vpop.f32.mrf.mxu0
      %v3789 = vadd.f32 0.0, %v3788
      %v3790 = vpop.f32.mrf.mxu0
      %3791 = vdwg.mxu0
      %v3792 = vadd.f32 %v3629, %v3718
      %v3793 = vadd.f32 %v3630, %v3720
      %v3794 = vadd.f32 %v3631, %v3789
      %s3795 = scalar_lea.vmem %s7, 8
      %v3796 = vld [vmem:[%s3795] sm:$0xf]
      %3797 = vrot.lane.b32.xlu0 %v3461, 17
      %v3798 = vpop.permute.xlu0 %3797
      %3799 = vrot.lane.b32.xlu0 %v3464, 17
      %v3800 = vpop.permute.xlu0 %3799
      %3801 = vrot.lane.b32.xlu0 %v3467, 17
      %v3802 = vpop.permute.xlu0 %3801
      %3803 = vrot.lane.b32.xlu0 %v3470, 17
      %v3804 = vpop.permute.xlu0 %3803
      %v3805 = vsel %vm789, %v3798, %v3800
      %v3806 = vsel %vm789, %v3800, %v3802
      %v3807 = vsel %vm789, %v3802, %v3804
      %v3812 = vsel %vm467, %v3796, 0
      %3814 = vmatprep.subr.mxu0 0.0
      %3815 = vmatpush1.msra.mxu0 0.0
      %3816 = vmatprep.subr.mxu0 0.0
      %3817 = vmatpush1.msra.mxu0 0.0
      %3818 = vmatprep.subr.mxu0 0.0
      %3819 = vmatpush1.msra.mxu0 0.0
      %3820 = vmatprep.subr.mxu0 0.0
      %3821 = vmatpush1.msra.mxu0 0.0
      %3822 = vmatprep.subr.mxu0 0.0
      %3823 = vmatpush1.msra.mxu0 0.0
      %3824 = vmatprep.subr.mxu0 0.0
      %3825 = vmatpush1.msra.mxu0 0.0
      %3826 = vmatprep.subr.mxu0 0.0
      %3827 = vmatpush1.msra.mxu0 0.0
      %3828 = vmatprep.subr.mxu0 0.0
      %3829 = vmatpush1.msra.mxu0 0.0
      %3830 = vmatprep.subr.mxu0 0.0
      %3831 = vmatpush1.msra.mxu0 0.0
      %3832 = vmatprep.subr.mxu0 0.0
      %3833 = vmatpush1.msra.mxu0 0.0
      %3834 = vmatprep.subr.mxu0 0.0
      %3835 = vmatpush1.msra.mxu0 0.0
      %3836 = vmatprep.subr.mxu0 0.0
      %3837 = vmatpush1.msra.mxu0 0.0
      %3838 = vmatprep.subr.mxu0 0.0
      %3839 = vmatpush1.msra.mxu0 0.0
      %3840 = vmatprep.subr.mxu0 0.0
      %3841 = vmatpush1.msra.mxu0 0.0
      %3842 = vmatprep.subr.mxu0 0.0
      %3843 = vmatpush1.msra.mxu0 0.0
      %3844 = vmatprep.subr.mxu0 %v3806
      %3845 = vmatpush1.msra.mxu0 %v3805
      %3846 = vmatprep.subr.mxu0 0.0
      %3847 = vmatpush2.msra.mxu0 0.0
      %3848 = vmatprep.subr.mxu0 0.0
      %3849 = vmatpush2.msra.mxu0 0.0
      %3850 = vmatprep.subr.mxu0 0.0
      %3851 = vmatpush2.msra.mxu0 0.0
      %3852 = vmatprep.subr.mxu0 0.0
      %3853 = vmatpush2.msra.mxu0 0.0
      %3854 = vmatprep.subr.mxu0 0.0
      %3855 = vmatpush2.msra.mxu0 0.0
      %3856 = vmatprep.subr.mxu0 0.0
      %3857 = vmatpush2.msra.mxu0 0.0
      %3858 = vmatprep.subr.mxu0 0.0
      %3859 = vmatpush2.msra.mxu0 0.0
      %3860 = vmatprep.subr.mxu0 0.0
      %3861 = vmatpush2.msra.mxu0 0.0
      %3862 = vmatprep.subr.mxu0 0.0
      %3863 = vmatpush2.msra.mxu0 0.0
      %3864 = vmatprep.subr.mxu0 0.0
      %3865 = vmatpush2.msra.mxu0 0.0
      %3866 = vmatprep.subr.mxu0 0.0
      %3867 = vmatpush2.msra.mxu0 0.0
      %3868 = vmatprep.subr.mxu0 0.0
      %3869 = vmatpush2.msra.mxu0 0.0
      %3870 = vmatprep.subr.mxu0 0.0
      %3871 = vmatpush2.msra.mxu0 0.0
      %3872 = vmatprep.subr.mxu0 0.0
      %3873 = vmatpush2.msra.mxu0 0.0
      %3874 = vmatprep.subr.mxu0 0.0
      %3875 = vmatpush2.msra.mxu0 0.0
      %3876 = vmatprep.subr.mxu0 0.0
      %3877 = vmatpush2.msra.mxu0 0.0
      %3878 = vmatprep.mubr.f32.mxu0 0.0
      %3879 = vmatmul.mubr.f32.gmra.mxu0 %v3812
      %v3880 = vpop.f32.mrf.mxu0
      %v3881 = vadd.f32 0.0, %v3880
      %v3882 = vpop.f32.mrf.mxu0
      %v3883 = vadd.f32 0.0, %v3882
      %3884 = vdwg.mxu0
      %3885 = vmatprep.subr.mxu0 0.0
      %3886 = vmatpush1.msra.mxu0 0.0
      %3887 = vmatprep.subr.mxu0 0.0
      %3888 = vmatpush1.msra.mxu0 0.0
      %3889 = vmatprep.subr.mxu0 0.0
      %3890 = vmatpush1.msra.mxu0 0.0
      %3891 = vmatprep.subr.mxu0 0.0
      %3892 = vmatpush1.msra.mxu0 0.0
      %3893 = vmatprep.subr.mxu0 0.0
      %3894 = vmatpush1.msra.mxu0 0.0
      %3895 = vmatprep.subr.mxu0 0.0
      %3896 = vmatpush1.msra.mxu0 0.0
      %3897 = vmatprep.subr.mxu0 0.0
      %3898 = vmatpush1.msra.mxu0 0.0
      %3899 = vmatprep.subr.mxu0 0.0
      %3900 = vmatpush1.msra.mxu0 0.0
      %3901 = vmatprep.subr.mxu0 0.0
      %3902 = vmatpush1.msra.mxu0 0.0
      %3903 = vmatprep.subr.mxu0 0.0
      %3904 = vmatpush1.msra.mxu0 0.0
      %3905 = vmatprep.subr.mxu0 0.0
      %3906 = vmatpush1.msra.mxu0 0.0
      %3907 = vmatprep.subr.mxu0 0.0
      %3908 = vmatpush1.msra.mxu0 0.0
      %3909 = vmatprep.subr.mxu0 0.0
      %3910 = vmatpush1.msra.mxu0 0.0
      %3911 = vmatprep.subr.mxu0 0.0
      %3912 = vmatpush1.msra.mxu0 0.0
      %3913 = vmatprep.subr.mxu0 0.0
      %3914 = vmatpush1.msra.mxu0 0.0
      %3915 = vmatprep.subr.mxu0 0.0
      %3916 = vmatpush1.msra.mxu0 %v3807
      %3917 = vmatprep.subr.mxu0 0.0
      %3918 = vmatpush2.msra.mxu0 0.0
      %3919 = vmatprep.subr.mxu0 0.0
      %3920 = vmatpush2.msra.mxu0 0.0
      %3921 = vmatprep.subr.mxu0 0.0
      %3922 = vmatpush2.msra.mxu0 0.0
      %3923 = vmatprep.subr.mxu0 0.0
      %3924 = vmatpush2.msra.mxu0 0.0
      %3925 = vmatprep.subr.mxu0 0.0
      %3926 = vmatpush2.msra.mxu0 0.0
      %3927 = vmatprep.subr.mxu0 0.0
      %3928 = vmatpush2.msra.mxu0 0.0
      %3929 = vmatprep.subr.mxu0 0.0
      %3930 = vmatpush2.msra.mxu0 0.0
      %3931 = vmatprep.subr.mxu0 0.0
      %3932 = vmatpush2.msra.mxu0 0.0
      %3933 = vmatprep.subr.mxu0 0.0
      %3934 = vmatpush2.msra.mxu0 0.0
      %3935 = vmatprep.subr.mxu0 0.0
      %3936 = vmatpush2.msra.mxu0 0.0
      %3937 = vmatprep.subr.mxu0 0.0
      %3938 = vmatpush2.msra.mxu0 0.0
      %3939 = vmatprep.subr.mxu0 0.0
      %3940 = vmatpush2.msra.mxu0 0.0
      %3941 = vmatprep.subr.mxu0 0.0
      %3942 = vmatpush2.msra.mxu0 0.0
      %3943 = vmatprep.subr.mxu0 0.0
      %3944 = vmatpush2.msra.mxu0 0.0
      %3945 = vmatprep.subr.mxu0 0.0
      %3946 = vmatpush2.msra.mxu0 0.0
      %3947 = vmatprep.subr.mxu0 0.0
      %3948 = vmatpush2.msra.mxu0 0.0
      %3949 = vmatprep.mubr.f32.mxu0 0.0
      %3950 = vmatmul.mubr.f32.gmra.mxu0 %v3812
      %v3951 = vpop.f32.mrf.mxu0
      %v3952 = vadd.f32 0.0, %v3951
      %v3953 = vpop.f32.mrf.mxu0
      %3954 = vdwg.mxu0
      %v3955 = vadd.f32 %v3792, %v3881
      %v3956 = vadd.f32 %v3793, %v3883
      %v3957 = vadd.f32 %v3794, %v3952
      %s3958 = scalar_lea.vmem %s7, 12
      %v3959 = vld [vmem:[%s3958] sm:$0xf]
      %3960 = vrot.lane.b32.xlu0 %v3461, 1
      %v3961 = vpop.permute.xlu0 %3960
      %3962 = vrot.lane.b32.xlu0 %v3464, 1
      %v3963 = vpop.permute.xlu0 %3962
      %3964 = vrot.lane.b32.xlu0 %v3467, 1
      %v3965 = vpop.permute.xlu0 %3964
      %3966 = vrot.lane.b32.xlu0 %v3470, 1
      %v3967 = vpop.permute.xlu0 %3966
      %v3968 = vsel %vm953, %v3961, %v3963
      %v3969 = vsel %vm953, %v3963, %v3965
      %v3970 = vsel %vm953, %v3965, %v3967
      %v3975 = vsel %vm467, %v3959, 0
      %3977 = vmatprep.subr.mxu0 0.0
      %3978 = vmatpush1.msra.mxu0 0.0
      %3979 = vmatprep.subr.mxu0 0.0
      %3980 = vmatpush1.msra.mxu0 0.0
      %3981 = vmatprep.subr.mxu0 0.0
      %3982 = vmatpush1.msra.mxu0 0.0
      %3983 = vmatprep.subr.mxu0 0.0
      %3984 = vmatpush1.msra.mxu0 0.0
      %3985 = vmatprep.subr.mxu0 0.0
      %3986 = vmatpush1.msra.mxu0 0.0
      %3987 = vmatprep.subr.mxu0 0.0
      %3988 = vmatpush1.msra.mxu0 0.0
      %3989 = vmatprep.subr.mxu0 0.0
      %3990 = vmatpush1.msra.mxu0 0.0
      %3991 = vmatprep.subr.mxu0 0.0
      %3992 = vmatpush1.msra.mxu0 0.0
      %3993 = vmatprep.subr.mxu0 0.0
      %3994 = vmatpush1.msra.mxu0 0.0
      %3995 = vmatprep.subr.mxu0 0.0
      %3996 = vmatpush1.msra.mxu0 0.0
      %3997 = vmatprep.subr.mxu0 0.0
      %3998 = vmatpush1.msra.mxu0 0.0
      %3999 = vmatprep.subr.mxu0 0.0
      %4000 = vmatpush1.msra.mxu0 0.0
      %4001 = vmatprep.subr.mxu0 0.0
      %4002 = vmatpush1.msra.mxu0 0.0
      %4003 = vmatprep.subr.mxu0 0.0
      %4004 = vmatpush1.msra.mxu0 0.0
      %4005 = vmatprep.subr.mxu0 0.0
      %4006 = vmatpush1.msra.mxu0 0.0
      %4007 = vmatprep.subr.mxu0 %v3969
      %4008 = vmatpush1.msra.mxu0 %v3968
      %4009 = vmatprep.subr.mxu0 0.0
      %4010 = vmatpush2.msra.mxu0 0.0
      %4011 = vmatprep.subr.mxu0 0.0
      %4012 = vmatpush2.msra.mxu0 0.0
      %4013 = vmatprep.subr.mxu0 0.0
      %4014 = vmatpush2.msra.mxu0 0.0
      %4015 = vmatprep.subr.mxu0 0.0
      %4016 = vmatpush2.msra.mxu0 0.0
      %4017 = vmatprep.subr.mxu0 0.0
      %4018 = vmatpush2.msra.mxu0 0.0
      %4019 = vmatprep.subr.mxu0 0.0
      %4020 = vmatpush2.msra.mxu0 0.0
      %4021 = vmatprep.subr.mxu0 0.0
      %4022 = vmatpush2.msra.mxu0 0.0
      %4023 = vmatprep.subr.mxu0 0.0
      %4024 = vmatpush2.msra.mxu0 0.0
      %4025 = vmatprep.subr.mxu0 0.0
      %4026 = vmatpush2.msra.mxu0 0.0
      %4027 = vmatprep.subr.mxu0 0.0
      %4028 = vmatpush2.msra.mxu0 0.0
      %4029 = vmatprep.subr.mxu0 0.0
      %4030 = vmatpush2.msra.mxu0 0.0
      %4031 = vmatprep.subr.mxu0 0.0
      %4032 = vmatpush2.msra.mxu0 0.0
      %4033 = vmatprep.subr.mxu0 0.0
      %4034 = vmatpush2.msra.mxu0 0.0
      %4035 = vmatprep.subr.mxu0 0.0
      %4036 = vmatpush2.msra.mxu0 0.0
      %4037 = vmatprep.subr.mxu0 0.0
      %4038 = vmatpush2.msra.mxu0 0.0
      %4039 = vmatprep.subr.mxu0 0.0
      %4040 = vmatpush2.msra.mxu0 0.0
      %4041 = vmatprep.mubr.f32.mxu0 0.0
      %4042 = vmatmul.mubr.f32.gmra.mxu0 %v3975
      %v4043 = vpop.f32.mrf.mxu0
      %v4044 = vadd.f32 0.0, %v4043
      %v4045 = vpop.f32.mrf.mxu0
      %v4046 = vadd.f32 0.0, %v4045
      %4047 = vdwg.mxu0
      %4048 = vmatprep.subr.mxu0 0.0
      %4049 = vmatpush1.msra.mxu0 0.0
      %4050 = vmatprep.subr.mxu0 0.0
      %4051 = vmatpush1.msra.mxu0 0.0
      %4052 = vmatprep.subr.mxu0 0.0
      %4053 = vmatpush1.msra.mxu0 0.0
      %4054 = vmatprep.subr.mxu0 0.0
      %4055 = vmatpush1.msra.mxu0 0.0
      %4056 = vmatprep.subr.mxu0 0.0
      %4057 = vmatpush1.msra.mxu0 0.0
      %4058 = vmatprep.subr.mxu0 0.0
      %4059 = vmatpush1.msra.mxu0 0.0
      %4060 = vmatprep.subr.mxu0 0.0
      %4061 = vmatpush1.msra.mxu0 0.0
      %4062 = vmatprep.subr.mxu0 0.0
      %4063 = vmatpush1.msra.mxu0 0.0
      %4064 = vmatprep.subr.mxu0 0.0
      %4065 = vmatpush1.msra.mxu0 0.0
      %4066 = vmatprep.subr.mxu0 0.0
      %4067 = vmatpush1.msra.mxu0 0.0
      %4068 = vmatprep.subr.mxu0 0.0
      %4069 = vmatpush1.msra.mxu0 0.0
      %4070 = vmatprep.subr.mxu0 0.0
      %4071 = vmatpush1.msra.mxu0 0.0
      %4072 = vmatprep.subr.mxu0 0.0
      %4073 = vmatpush1.msra.mxu0 0.0
      %4074 = vmatprep.subr.mxu0 0.0
      %4075 = vmatpush1.msra.mxu0 0.0
      %4076 = vmatprep.subr.mxu0 0.0
      %4077 = vmatpush1.msra.mxu0 0.0
      %4078 = vmatprep.subr.mxu0 0.0
      %4079 = vmatpush1.msra.mxu0 %v3970
      %4080 = vmatprep.subr.mxu0 0.0
      %4081 = vmatpush2.msra.mxu0 0.0
      %4082 = vmatprep.subr.mxu0 0.0
      %4083 = vmatpush2.msra.mxu0 0.0
      %4084 = vmatprep.subr.mxu0 0.0
      %4085 = vmatpush2.msra.mxu0 0.0
      %4086 = vmatprep.subr.mxu0 0.0
      %4087 = vmatpush2.msra.mxu0 0.0
      %4088 = vmatprep.subr.mxu0 0.0
      %4089 = vmatpush2.msra.mxu0 0.0
      %4090 = vmatprep.subr.mxu0 0.0
      %4091 = vmatpush2.msra.mxu0 0.0
      %4092 = vmatprep.subr.mxu0 0.0
      %4093 = vmatpush2.msra.mxu0 0.0
      %4094 = vmatprep.subr.mxu0 0.0
      %4095 = vmatpush2.msra.mxu0 0.0
      %4096 = vmatprep.subr.mxu0 0.0
      %4097 = vmatpush2.msra.mxu0 0.0
      %4098 = vmatprep.subr.mxu0 0.0
      %4099 = vmatpush2.msra.mxu0 0.0
      %4100 = vmatprep.subr.mxu0 0.0
      %4101 = vmatpush2.msra.mxu0 0.0
      %4102 = vmatprep.subr.mxu0 0.0
      %4103 = vmatpush2.msra.mxu0 0.0
      %4104 = vmatprep.subr.mxu0 0.0
      %4105 = vmatpush2.msra.mxu0 0.0
      %4106 = vmatprep.subr.mxu0 0.0
      %4107 = vmatpush2.msra.mxu0 0.0
      %4108 = vmatprep.subr.mxu0 0.0
      %4109 = vmatpush2.msra.mxu0 0.0
      %4110 = vmatprep.subr.mxu0 0.0
      %4111 = vmatpush2.msra.mxu0 0.0
      %4112 = vmatprep.mubr.f32.mxu0 0.0
      %4113 = vmatmul.mubr.f32.gmra.mxu0 %v3975
      %v4114 = vpop.f32.mrf.mxu0
      %v4115 = vadd.f32 0.0, %v4114
      %v4116 = vpop.f32.mrf.mxu0
      %4117 = vdwg.mxu0
      %v4118 = vadd.f32 %v3955, %v4044
      %v4119 = vadd.f32 %v3956, %v4046
      %v4120 = vadd.f32 %v3957, %v4115
      %s4121 = scalar_lea.vmem %s7, 16
      %v4122 = vld [vmem:[%s4121] sm:$0xf]
      %v4127 = vsel %vm467, %v4122, 0
      %4129 = vmatprep.subr.mxu0 0.0
      %4130 = vmatpush1.msra.mxu0 0.0
      %4131 = vmatprep.subr.mxu0 0.0
      %4132 = vmatpush1.msra.mxu0 0.0
      %4133 = vmatprep.subr.mxu0 0.0
      %4134 = vmatpush1.msra.mxu0 0.0
      %4135 = vmatprep.subr.mxu0 0.0
      %4136 = vmatpush1.msra.mxu0 0.0
      %4137 = vmatprep.subr.mxu0 0.0
      %4138 = vmatpush1.msra.mxu0 0.0
      %4139 = vmatprep.subr.mxu0 0.0
      %4140 = vmatpush1.msra.mxu0 0.0
      %4141 = vmatprep.subr.mxu0 0.0
      %4142 = vmatpush1.msra.mxu0 0.0
      %4143 = vmatprep.subr.mxu0 0.0
      %4144 = vmatpush1.msra.mxu0 0.0
      %4145 = vmatprep.subr.mxu0 0.0
      %4146 = vmatpush1.msra.mxu0 0.0
      %4147 = vmatprep.subr.mxu0 0.0
      %4148 = vmatpush1.msra.mxu0 0.0
      %4149 = vmatprep.subr.mxu0 0.0
      %4150 = vmatpush1.msra.mxu0 0.0
      %4151 = vmatprep.subr.mxu0 0.0
      %4152 = vmatpush1.msra.mxu0 0.0
      %4153 = vmatprep.subr.mxu0 0.0
      %4154 = vmatpush1.msra.mxu0 0.0
      %4155 = vmatprep.subr.mxu0 0.0
      %4156 = vmatpush1.msra.mxu0 0.0
      %4157 = vmatprep.subr.mxu0 0.0
      %4158 = vmatpush1.msra.mxu0 0.0
      %4159 = vmatprep.subr.mxu0 %v3467
      %4160 = vmatpush1.msra.mxu0 %v3464
      %4161 = vmatprep.subr.mxu0 0.0
      %4162 = vmatpush2.msra.mxu0 0.0
      %4163 = vmatprep.subr.mxu0 0.0
      %4164 = vmatpush2.msra.mxu0 0.0
      %4165 = vmatprep.subr.mxu0 0.0
      %4166 = vmatpush2.msra.mxu0 0.0
      %4167 = vmatprep.subr.mxu0 0.0
      %4168 = vmatpush2.msra.mxu0 0.0
      %4169 = vmatprep.subr.mxu0 0.0
      %4170 = vmatpush2.msra.mxu0 0.0
      %4171 = vmatprep.subr.mxu0 0.0
      %4172 = vmatpush2.msra.mxu0 0.0
      %4173 = vmatprep.subr.mxu0 0.0
      %4174 = vmatpush2.msra.mxu0 0.0
      %4175 = vmatprep.subr.mxu0 0.0
      %4176 = vmatpush2.msra.mxu0 0.0
      %4177 = vmatprep.subr.mxu0 0.0
      %4178 = vmatpush2.msra.mxu0 0.0
      %4179 = vmatprep.subr.mxu0 0.0
      %4180 = vmatpush2.msra.mxu0 0.0
      %4181 = vmatprep.subr.mxu0 0.0
      %4182 = vmatpush2.msra.mxu0 0.0
      %4183 = vmatprep.subr.mxu0 0.0
      %4184 = vmatpush2.msra.mxu0 0.0
      %4185 = vmatprep.subr.mxu0 0.0
      %4186 = vmatpush2.msra.mxu0 0.0
      %4187 = vmatprep.subr.mxu0 0.0
      %4188 = vmatpush2.msra.mxu0 0.0
      %4189 = vmatprep.subr.mxu0 0.0
      %4190 = vmatpush2.msra.mxu0 0.0
      %4191 = vmatprep.subr.mxu0 0.0
      %4192 = vmatpush2.msra.mxu0 0.0
      %4193 = vmatprep.mubr.f32.mxu0 0.0
      %4194 = vmatmul.mubr.f32.gmra.mxu0 %v4127
      %v4195 = vpop.f32.mrf.mxu0
      %v4196 = vadd.f32 0.0, %v4195
      %v4197 = vpop.f32.mrf.mxu0
      %v4198 = vadd.f32 0.0, %v4197
      %4199 = vdwg.mxu0
      %4200 = vmatprep.subr.mxu0 0.0
      %4201 = vmatpush1.msra.mxu0 0.0
      %4202 = vmatprep.subr.mxu0 0.0
      %4203 = vmatpush1.msra.mxu0 0.0
      %4204 = vmatprep.subr.mxu0 0.0
      %4205 = vmatpush1.msra.mxu0 0.0
      %4206 = vmatprep.subr.mxu0 0.0
      %4207 = vmatpush1.msra.mxu0 0.0
      %4208 = vmatprep.subr.mxu0 0.0
      %4209 = vmatpush1.msra.mxu0 0.0
      %4210 = vmatprep.subr.mxu0 0.0
      %4211 = vmatpush1.msra.mxu0 0.0
      %4212 = vmatprep.subr.mxu0 0.0
      %4213 = vmatpush1.msra.mxu0 0.0
      %4214 = vmatprep.subr.mxu0 0.0
      %4215 = vmatpush1.msra.mxu0 0.0
      %4216 = vmatprep.subr.mxu0 0.0
      %4217 = vmatpush1.msra.mxu0 0.0
      %4218 = vmatprep.subr.mxu0 0.0
      %4219 = vmatpush1.msra.mxu0 0.0
      %4220 = vmatprep.subr.mxu0 0.0
      %4221 = vmatpush1.msra.mxu0 0.0
      %4222 = vmatprep.subr.mxu0 0.0
      %4223 = vmatpush1.msra.mxu0 0.0
      %4224 = vmatprep.subr.mxu0 0.0
      %4225 = vmatpush1.msra.mxu0 0.0
      %4226 = vmatprep.subr.mxu0 0.0
      %4227 = vmatpush1.msra.mxu0 0.0
      %4228 = vmatprep.subr.mxu0 0.0
      %4229 = vmatpush1.msra.mxu0 0.0
      %4230 = vmatprep.subr.mxu0 0.0
      %4231 = vmatpush1.msra.mxu0 %v3470
      %4232 = vmatprep.subr.mxu0 0.0
      %4233 = vmatpush2.msra.mxu0 0.0
      %4234 = vmatprep.subr.mxu0 0.0
      %4235 = vmatpush2.msra.mxu0 0.0
      %4236 = vmatprep.subr.mxu0 0.0
      %4237 = vmatpush2.msra.mxu0 0.0
      %4238 = vmatprep.subr.mxu0 0.0
      %4239 = vmatpush2.msra.mxu0 0.0
      %4240 = vmatprep.subr.mxu0 0.0
      %4241 = vmatpush2.msra.mxu0 0.0
      %4242 = vmatprep.subr.mxu0 0.0
      %4243 = vmatpush2.msra.mxu0 0.0
      %4244 = vmatprep.subr.mxu0 0.0
      %4245 = vmatpush2.msra.mxu0 0.0
      %4246 = vmatprep.subr.mxu0 0.0
      %4247 = vmatpush2.msra.mxu0 0.0
      %4248 = vmatprep.subr.mxu0 0.0
      %4249 = vmatpush2.msra.mxu0 0.0
      %4250 = vmatprep.subr.mxu0 0.0
      %4251 = vmatpush2.msra.mxu0 0.0
      %4252 = vmatprep.subr.mxu0 0.0
      %4253 = vmatpush2.msra.mxu0 0.0
      %4254 = vmatprep.subr.mxu0 0.0
      %4255 = vmatpush2.msra.mxu0 0.0
      %4256 = vmatprep.subr.mxu0 0.0
      %4257 = vmatpush2.msra.mxu0 0.0
      %4258 = vmatprep.subr.mxu0 0.0
      %4259 = vmatpush2.msra.mxu0 0.0
      %4260 = vmatprep.subr.mxu0 0.0
      %4261 = vmatpush2.msra.mxu0 0.0
      %4262 = vmatprep.subr.mxu0 0.0
      %4263 = vmatpush2.msra.mxu0 0.0
      %4264 = vmatprep.mubr.f32.mxu0 0.0
      %4265 = vmatmul.mubr.f32.gmra.mxu0 %v4127
      %v4266 = vpop.f32.mrf.mxu0
      %v4267 = vadd.f32 0.0, %v4266
      %v4268 = vpop.f32.mrf.mxu0
      %4269 = vdwg.mxu0
      %v4270 = vadd.f32 %v4118, %v4196
      %v4271 = vadd.f32 %v4119, %v4198
      %v4272 = vadd.f32 %v4120, %v4267
      %s4273 = scalar_lea.vmem %s7, 20
      %v4274 = vld [vmem:[%s4273] sm:$0xf]
      %4275 = vrot.lane.b32.xlu0 %v3464, 127
      %v4276 = vpop.permute.xlu0 %4275
      %4277 = vrot.lane.b32.xlu0 %v3467, 127
      %v4278 = vpop.permute.xlu0 %4277
      %4279 = vrot.lane.b32.xlu0 %v3470, 127
      %v4280 = vpop.permute.xlu0 %4279
      %v4281 = vsel %vm1264, %v4276, %v4278
      %v4282 = vsel %vm1264, %v4278, %v4280
      %v4287 = vsel %vm467, %v4274, 0
      %4289 = vmatprep.subr.mxu0 0.0
      %4290 = vmatpush1.msra.mxu0 0.0
      %4291 = vmatprep.subr.mxu0 0.0
      %4292 = vmatpush1.msra.mxu0 0.0
      %4293 = vmatprep.subr.mxu0 0.0
      %4294 = vmatpush1.msra.mxu0 0.0
      %4295 = vmatprep.subr.mxu0 0.0
      %4296 = vmatpush1.msra.mxu0 0.0
      %4297 = vmatprep.subr.mxu0 0.0
      %4298 = vmatpush1.msra.mxu0 0.0
      %4299 = vmatprep.subr.mxu0 0.0
      %4300 = vmatpush1.msra.mxu0 0.0
      %4301 = vmatprep.subr.mxu0 0.0
      %4302 = vmatpush1.msra.mxu0 0.0
      %4303 = vmatprep.subr.mxu0 0.0
      %4304 = vmatpush1.msra.mxu0 0.0
      %4305 = vmatprep.subr.mxu0 0.0
      %4306 = vmatpush1.msra.mxu0 0.0
      %4307 = vmatprep.subr.mxu0 0.0
      %4308 = vmatpush1.msra.mxu0 0.0
      %4309 = vmatprep.subr.mxu0 0.0
      %4310 = vmatpush1.msra.mxu0 0.0
      %4311 = vmatprep.subr.mxu0 0.0
      %4312 = vmatpush1.msra.mxu0 0.0
      %4313 = vmatprep.subr.mxu0 0.0
      %4314 = vmatpush1.msra.mxu0 0.0
      %4315 = vmatprep.subr.mxu0 0.0
      %4316 = vmatpush1.msra.mxu0 0.0
      %4317 = vmatprep.subr.mxu0 0.0
      %4318 = vmatpush1.msra.mxu0 0.0
      %4319 = vmatprep.subr.mxu0 %v4282
      %4320 = vmatpush1.msra.mxu0 %v4281
      %4321 = vmatprep.subr.mxu0 0.0
      %4322 = vmatpush2.msra.mxu0 0.0
      %4323 = vmatprep.subr.mxu0 0.0
      %4324 = vmatpush2.msra.mxu0 0.0
      %4325 = vmatprep.subr.mxu0 0.0
      %4326 = vmatpush2.msra.mxu0 0.0
      %4327 = vmatprep.subr.mxu0 0.0
      %4328 = vmatpush2.msra.mxu0 0.0
      %4329 = vmatprep.subr.mxu0 0.0
      %4330 = vmatpush2.msra.mxu0 0.0
      %4331 = vmatprep.subr.mxu0 0.0
      %4332 = vmatpush2.msra.mxu0 0.0
      %4333 = vmatprep.subr.mxu0 0.0
      %4334 = vmatpush2.msra.mxu0 0.0
      %4335 = vmatprep.subr.mxu0 0.0
      %4336 = vmatpush2.msra.mxu0 0.0
      %4337 = vmatprep.subr.mxu0 0.0
      %4338 = vmatpush2.msra.mxu0 0.0
      %4339 = vmatprep.subr.mxu0 0.0
      %4340 = vmatpush2.msra.mxu0 0.0
      %4341 = vmatprep.subr.mxu0 0.0
      %4342 = vmatpush2.msra.mxu0 0.0
      %4343 = vmatprep.subr.mxu0 0.0
      %4344 = vmatpush2.msra.mxu0 0.0
      %4345 = vmatprep.subr.mxu0 0.0
      %4346 = vmatpush2.msra.mxu0 0.0
      %4347 = vmatprep.subr.mxu0 0.0
      %4348 = vmatpush2.msra.mxu0 0.0
      %4349 = vmatprep.subr.mxu0 0.0
      %4350 = vmatpush2.msra.mxu0 0.0
      %4351 = vmatprep.subr.mxu0 0.0
      %4352 = vmatpush2.msra.mxu0 0.0
      %4353 = vmatprep.mubr.f32.mxu0 0.0
      %4354 = vmatmul.mubr.f32.gmra.mxu0 %v4287
      %v4355 = vpop.f32.mrf.mxu0
      %v4356 = vadd.f32 0.0, %v4355
      %v4357 = vpop.f32.mrf.mxu0
      %v4358 = vadd.f32 0.0, %v4357
      %4359 = vdwg.mxu0
      %4360 = vmatprep.subr.mxu0 0.0
      %4361 = vmatpush1.msra.mxu0 0.0
      %4362 = vmatprep.subr.mxu0 0.0
      %4363 = vmatpush1.msra.mxu0 0.0
      %4364 = vmatprep.subr.mxu0 0.0
      %4365 = vmatpush1.msra.mxu0 0.0
      %4366 = vmatprep.subr.mxu0 0.0
      %4367 = vmatpush1.msra.mxu0 0.0
      %4368 = vmatprep.subr.mxu0 0.0
      %4369 = vmatpush1.msra.mxu0 0.0
      %4370 = vmatprep.subr.mxu0 0.0
      %4371 = vmatpush1.msra.mxu0 0.0
      %4372 = vmatprep.subr.mxu0 0.0
      %4373 = vmatpush1.msra.mxu0 0.0
      %4374 = vmatprep.subr.mxu0 0.0
      %4375 = vmatpush1.msra.mxu0 0.0
      %4376 = vmatprep.subr.mxu0 0.0
      %4377 = vmatpush1.msra.mxu0 0.0
      %4378 = vmatprep.subr.mxu0 0.0
      %4379 = vmatpush1.msra.mxu0 0.0
      %4380 = vmatprep.subr.mxu0 0.0
      %4381 = vmatpush1.msra.mxu0 0.0
      %4382 = vmatprep.subr.mxu0 0.0
      %4383 = vmatpush1.msra.mxu0 0.0
      %4384 = vmatprep.subr.mxu0 0.0
      %4385 = vmatpush1.msra.mxu0 0.0
      %4386 = vmatprep.subr.mxu0 0.0
      %4387 = vmatpush1.msra.mxu0 0.0
      %4388 = vmatprep.subr.mxu0 0.0
      %4389 = vmatpush1.msra.mxu0 0.0
      %4390 = vmatprep.subr.mxu0 0.0
      %4391 = vmatpush1.msra.mxu0 %v4280
      %4392 = vmatprep.subr.mxu0 0.0
      %4393 = vmatpush2.msra.mxu0 0.0
      %4394 = vmatprep.subr.mxu0 0.0
      %4395 = vmatpush2.msra.mxu0 0.0
      %4396 = vmatprep.subr.mxu0 0.0
      %4397 = vmatpush2.msra.mxu0 0.0
      %4398 = vmatprep.subr.mxu0 0.0
      %4399 = vmatpush2.msra.mxu0 0.0
      %4400 = vmatprep.subr.mxu0 0.0
      %4401 = vmatpush2.msra.mxu0 0.0
      %4402 = vmatprep.subr.mxu0 0.0
      %4403 = vmatpush2.msra.mxu0 0.0
      %4404 = vmatprep.subr.mxu0 0.0
      %4405 = vmatpush2.msra.mxu0 0.0
      %4406 = vmatprep.subr.mxu0 0.0
      %4407 = vmatpush2.msra.mxu0 0.0
      %4408 = vmatprep.subr.mxu0 0.0
      %4409 = vmatpush2.msra.mxu0 0.0
      %4410 = vmatprep.subr.mxu0 0.0
      %4411 = vmatpush2.msra.mxu0 0.0
      %4412 = vmatprep.subr.mxu0 0.0
      %4413 = vmatpush2.msra.mxu0 0.0
      %4414 = vmatprep.subr.mxu0 0.0
      %4415 = vmatpush2.msra.mxu0 0.0
      %4416 = vmatprep.subr.mxu0 0.0
      %4417 = vmatpush2.msra.mxu0 0.0
      %4418 = vmatprep.subr.mxu0 0.0
      %4419 = vmatpush2.msra.mxu0 0.0
      %4420 = vmatprep.subr.mxu0 0.0
      %4421 = vmatpush2.msra.mxu0 0.0
      %4422 = vmatprep.subr.mxu0 0.0
      %4423 = vmatpush2.msra.mxu0 0.0
      %4424 = vmatprep.mubr.f32.mxu0 0.0
      %4425 = vmatmul.mubr.f32.gmra.mxu0 %v4287
      %v4426 = vpop.f32.mrf.mxu0
      %v4427 = vadd.f32 0.0, %v4426
      %v4428 = vpop.f32.mrf.mxu0
      %4429 = vdwg.mxu0
      %v4430 = vadd.f32 %v4270, %v4356
      %v4431 = vadd.f32 %v4271, %v4358
      %v4432 = vadd.f32 %v4272, %v4427
      %s4433 = scalar_lea.vmem %s7, 24
      %v4434 = vld [vmem:[%s4433] sm:$0xf]
      %4435 = vrot.lane.b32.xlu0 %v3464, 111
      %v4436 = vpop.permute.xlu0 %4435
      %4437 = vrot.lane.b32.xlu0 %v3467, 111
      %v4438 = vpop.permute.xlu0 %4437
      %4439 = vrot.lane.b32.xlu0 %v3470, 111
      %v4440 = vpop.permute.xlu0 %4439
      %v4441 = vsel %vm1425, %v4436, %v4438
      %v4442 = vsel %vm1425, %v4438, %v4440
      %v4447 = vsel %vm467, %v4434, 0
      %4449 = vmatprep.subr.mxu0 0.0
      %4450 = vmatpush1.msra.mxu0 0.0
      %4451 = vmatprep.subr.mxu0 0.0
      %4452 = vmatpush1.msra.mxu0 0.0
      %4453 = vmatprep.subr.mxu0 0.0
      %4454 = vmatpush1.msra.mxu0 0.0
      %4455 = vmatprep.subr.mxu0 0.0
      %4456 = vmatpush1.msra.mxu0 0.0
      %4457 = vmatprep.subr.mxu0 0.0
      %4458 = vmatpush1.msra.mxu0 0.0
      %4459 = vmatprep.subr.mxu0 0.0
      %4460 = vmatpush1.msra.mxu0 0.0
      %4461 = vmatprep.subr.mxu0 0.0
      %4462 = vmatpush1.msra.mxu0 0.0
      %4463 = vmatprep.subr.mxu0 0.0
      %4464 = vmatpush1.msra.mxu0 0.0
      %4465 = vmatprep.subr.mxu0 0.0
      %4466 = vmatpush1.msra.mxu0 0.0
      %4467 = vmatprep.subr.mxu0 0.0
      %4468 = vmatpush1.msra.mxu0 0.0
      %4469 = vmatprep.subr.mxu0 0.0
      %4470 = vmatpush1.msra.mxu0 0.0
      %4471 = vmatprep.subr.mxu0 0.0
      %4472 = vmatpush1.msra.mxu0 0.0
      %4473 = vmatprep.subr.mxu0 0.0
      %4474 = vmatpush1.msra.mxu0 0.0
      %4475 = vmatprep.subr.mxu0 0.0
      %4476 = vmatpush1.msra.mxu0 0.0
      %4477 = vmatprep.subr.mxu0 0.0
      %4478 = vmatpush1.msra.mxu0 0.0
      %4479 = vmatprep.subr.mxu0 %v4442
      %4480 = vmatpush1.msra.mxu0 %v4441
      %4481 = vmatprep.subr.mxu0 0.0
      %4482 = vmatpush2.msra.mxu0 0.0
      %4483 = vmatprep.subr.mxu0 0.0
      %4484 = vmatpush2.msra.mxu0 0.0
      %4485 = vmatprep.subr.mxu0 0.0
      %4486 = vmatpush2.msra.mxu0 0.0
      %4487 = vmatprep.subr.mxu0 0.0
      %4488 = vmatpush2.msra.mxu0 0.0
      %4489 = vmatprep.subr.mxu0 0.0
      %4490 = vmatpush2.msra.mxu0 0.0
      %4491 = vmatprep.subr.mxu0 0.0
      %4492 = vmatpush2.msra.mxu0 0.0
      %4493 = vmatprep.subr.mxu0 0.0
      %4494 = vmatpush2.msra.mxu0 0.0
      %4495 = vmatprep.subr.mxu0 0.0
      %4496 = vmatpush2.msra.mxu0 0.0
      %4497 = vmatprep.subr.mxu0 0.0
      %4498 = vmatpush2.msra.mxu0 0.0
      %4499 = vmatprep.subr.mxu0 0.0
      %4500 = vmatpush2.msra.mxu0 0.0
      %4501 = vmatprep.subr.mxu0 0.0
      %4502 = vmatpush2.msra.mxu0 0.0
      %4503 = vmatprep.subr.mxu0 0.0
      %4504 = vmatpush2.msra.mxu0 0.0
      %4505 = vmatprep.subr.mxu0 0.0
      %4506 = vmatpush2.msra.mxu0 0.0
      %4507 = vmatprep.subr.mxu0 0.0
      %4508 = vmatpush2.msra.mxu0 0.0
      %4509 = vmatprep.subr.mxu0 0.0
      %4510 = vmatpush2.msra.mxu0 0.0
      %4511 = vmatprep.subr.mxu0 0.0
      %4512 = vmatpush2.msra.mxu0 0.0
      %4513 = vmatprep.mubr.f32.mxu0 0.0
      %4514 = vmatmul.mubr.f32.gmra.mxu0 %v4447
      %v4515 = vpop.f32.mrf.mxu0
      %v4516 = vadd.f32 0.0, %v4515
      %v4517 = vpop.f32.mrf.mxu0
      %v4518 = vadd.f32 0.0, %v4517
      %4519 = vdwg.mxu0
      %4520 = vmatprep.subr.mxu0 0.0
      %4521 = vmatpush1.msra.mxu0 0.0
      %4522 = vmatprep.subr.mxu0 0.0
      %4523 = vmatpush1.msra.mxu0 0.0
      %4524 = vmatprep.subr.mxu0 0.0
      %4525 = vmatpush1.msra.mxu0 0.0
      %4526 = vmatprep.subr.mxu0 0.0
      %4527 = vmatpush1.msra.mxu0 0.0
      %4528 = vmatprep.subr.mxu0 0.0
      %4529 = vmatpush1.msra.mxu0 0.0
      %4530 = vmatprep.subr.mxu0 0.0
      %4531 = vmatpush1.msra.mxu0 0.0
      %4532 = vmatprep.subr.mxu0 0.0
      %4533 = vmatpush1.msra.mxu0 0.0
      %4534 = vmatprep.subr.mxu0 0.0
      %4535 = vmatpush1.msra.mxu0 0.0
      %4536 = vmatprep.subr.mxu0 0.0
      %4537 = vmatpush1.msra.mxu0 0.0
      %4538 = vmatprep.subr.mxu0 0.0
      %4539 = vmatpush1.msra.mxu0 0.0
      %4540 = vmatprep.subr.mxu0 0.0
      %4541 = vmatpush1.msra.mxu0 0.0
      %4542 = vmatprep.subr.mxu0 0.0
      %4543 = vmatpush1.msra.mxu0 0.0
      %4544 = vmatprep.subr.mxu0 0.0
      %4545 = vmatpush1.msra.mxu0 0.0
      %4546 = vmatprep.subr.mxu0 0.0
      %4547 = vmatpush1.msra.mxu0 0.0
      %4548 = vmatprep.subr.mxu0 0.0
      %4549 = vmatpush1.msra.mxu0 0.0
      %4550 = vmatprep.subr.mxu0 0.0
      %4551 = vmatpush1.msra.mxu0 %v4440
      %4552 = vmatprep.subr.mxu0 0.0
      %4553 = vmatpush2.msra.mxu0 0.0
      %4554 = vmatprep.subr.mxu0 0.0
      %4555 = vmatpush2.msra.mxu0 0.0
      %4556 = vmatprep.subr.mxu0 0.0
      %4557 = vmatpush2.msra.mxu0 0.0
      %4558 = vmatprep.subr.mxu0 0.0
      %4559 = vmatpush2.msra.mxu0 0.0
      %4560 = vmatprep.subr.mxu0 0.0
      %4561 = vmatpush2.msra.mxu0 0.0
      %4562 = vmatprep.subr.mxu0 0.0
      %4563 = vmatpush2.msra.mxu0 0.0
      %4564 = vmatprep.subr.mxu0 0.0
      %4565 = vmatpush2.msra.mxu0 0.0
      %4566 = vmatprep.subr.mxu0 0.0
      %4567 = vmatpush2.msra.mxu0 0.0
      %4568 = vmatprep.subr.mxu0 0.0
      %4569 = vmatpush2.msra.mxu0 0.0
      %4570 = vmatprep.subr.mxu0 0.0
      %4571 = vmatpush2.msra.mxu0 0.0
      %4572 = vmatprep.subr.mxu0 0.0
      %4573 = vmatpush2.msra.mxu0 0.0
      %4574 = vmatprep.subr.mxu0 0.0
      %4575 = vmatpush2.msra.mxu0 0.0
      %4576 = vmatprep.subr.mxu0 0.0
      %4577 = vmatpush2.msra.mxu0 0.0
      %4578 = vmatprep.subr.mxu0 0.0
      %4579 = vmatpush2.msra.mxu0 0.0
      %4580 = vmatprep.subr.mxu0 0.0
      %4581 = vmatpush2.msra.mxu0 0.0
      %4582 = vmatprep.subr.mxu0 0.0
      %4583 = vmatpush2.msra.mxu0 0.0
      %4584 = vmatprep.mubr.f32.mxu0 0.0
      %4585 = vmatmul.mubr.f32.gmra.mxu0 %v4447
      %v4586 = vpop.f32.mrf.mxu0
      %v4587 = vadd.f32 0.0, %v4586
      %v4588 = vpop.f32.mrf.mxu0
      %4589 = vdwg.mxu0
      %v4590 = vadd.f32 %v4430, %v4516
      %v4591 = vadd.f32 %v4431, %v4518
      %v4592 = vadd.f32 %v4432, %v4587
      %s4593 = scalar_lea.vmem %s7, 28
      %v4594 = vld [vmem:[%s4593] sm:$0xf]
      %4595 = vrot.lane.b32.xlu0 %v3464, 110
      %v4596 = vpop.permute.xlu0 %4595
      %4597 = vrot.lane.b32.xlu0 %v3467, 110
      %v4598 = vpop.permute.xlu0 %4597
      %4599 = vrot.lane.b32.xlu0 %v3470, 110
      %v4600 = vpop.permute.xlu0 %4599
      %v4601 = vsel %vm1586, %v4596, %v4598
      %v4602 = vsel %vm1586, %v4598, %v4600
      %v4607 = vsel %vm467, %v4594, 0
      %4609 = vmatprep.subr.mxu0 0.0
      %4610 = vmatpush1.msra.mxu0 0.0
      %4611 = vmatprep.subr.mxu0 0.0
      %4612 = vmatpush1.msra.mxu0 0.0
      %4613 = vmatprep.subr.mxu0 0.0
      %4614 = vmatpush1.msra.mxu0 0.0
      %4615 = vmatprep.subr.mxu0 0.0
      %4616 = vmatpush1.msra.mxu0 0.0
      %4617 = vmatprep.subr.mxu0 0.0
      %4618 = vmatpush1.msra.mxu0 0.0
      %4619 = vmatprep.subr.mxu0 0.0
      %4620 = vmatpush1.msra.mxu0 0.0
      %4621 = vmatprep.subr.mxu0 0.0
      %4622 = vmatpush1.msra.mxu0 0.0
      %4623 = vmatprep.subr.mxu0 0.0
      %4624 = vmatpush1.msra.mxu0 0.0
      %4625 = vmatprep.subr.mxu0 0.0
      %4626 = vmatpush1.msra.mxu0 0.0
      %4627 = vmatprep.subr.mxu0 0.0
      %4628 = vmatpush1.msra.mxu0 0.0
      %4629 = vmatprep.subr.mxu0 0.0
      %4630 = vmatpush1.msra.mxu0 0.0
      %4631 = vmatprep.subr.mxu0 0.0
      %4632 = vmatpush1.msra.mxu0 0.0
      %4633 = vmatprep.subr.mxu0 0.0
      %4634 = vmatpush1.msra.mxu0 0.0
      %4635 = vmatprep.subr.mxu0 0.0
      %4636 = vmatpush1.msra.mxu0 0.0
      %4637 = vmatprep.subr.mxu0 0.0
      %4638 = vmatpush1.msra.mxu0 0.0
      %4639 = vmatprep.subr.mxu0 %v4602
      %4640 = vmatpush1.msra.mxu0 %v4601
      %4641 = vmatprep.subr.mxu0 0.0
      %4642 = vmatpush2.msra.mxu0 0.0
      %4643 = vmatprep.subr.mxu0 0.0
      %4644 = vmatpush2.msra.mxu0 0.0
      %4645 = vmatprep.subr.mxu0 0.0
      %4646 = vmatpush2.msra.mxu0 0.0
      %4647 = vmatprep.subr.mxu0 0.0
      %4648 = vmatpush2.msra.mxu0 0.0
      %4649 = vmatprep.subr.mxu0 0.0
      %4650 = vmatpush2.msra.mxu0 0.0
      %4651 = vmatprep.subr.mxu0 0.0
      %4652 = vmatpush2.msra.mxu0 0.0
      %4653 = vmatprep.subr.mxu0 0.0
      %4654 = vmatpush2.msra.mxu0 0.0
      %4655 = vmatprep.subr.mxu0 0.0
      %4656 = vmatpush2.msra.mxu0 0.0
      %4657 = vmatprep.subr.mxu0 0.0
      %4658 = vmatpush2.msra.mxu0 0.0
      %4659 = vmatprep.subr.mxu0 0.0
      %4660 = vmatpush2.msra.mxu0 0.0
      %4661 = vmatprep.subr.mxu0 0.0
      %4662 = vmatpush2.msra.mxu0 0.0
      %4663 = vmatprep.subr.mxu0 0.0
      %4664 = vmatpush2.msra.mxu0 0.0
      %4665 = vmatprep.subr.mxu0 0.0
      %4666 = vmatpush2.msra.mxu0 0.0
      %4667 = vmatprep.subr.mxu0 0.0
      %4668 = vmatpush2.msra.mxu0 0.0
      %4669 = vmatprep.subr.mxu0 0.0
      %4670 = vmatpush2.msra.mxu0 0.0
      %4671 = vmatprep.subr.mxu0 0.0
      %4672 = vmatpush2.msra.mxu0 0.0
      %4673 = vmatprep.mubr.f32.mxu0 0.0
      %4674 = vmatmul.mubr.f32.gmra.mxu0 %v4607
      %v4675 = vpop.f32.mrf.mxu0
      %v4676 = vadd.f32 0.0, %v4675
      %v4677 = vpop.f32.mrf.mxu0
      %v4678 = vadd.f32 0.0, %v4677
      %4679 = vdwg.mxu0
      %4680 = vmatprep.subr.mxu0 0.0
      %4681 = vmatpush1.msra.mxu0 0.0
      %4682 = vmatprep.subr.mxu0 0.0
      %4683 = vmatpush1.msra.mxu0 0.0
      %4684 = vmatprep.subr.mxu0 0.0
      %4685 = vmatpush1.msra.mxu0 0.0
      %4686 = vmatprep.subr.mxu0 0.0
      %4687 = vmatpush1.msra.mxu0 0.0
      %4688 = vmatprep.subr.mxu0 0.0
      %4689 = vmatpush1.msra.mxu0 0.0
      %4690 = vmatprep.subr.mxu0 0.0
      %4691 = vmatpush1.msra.mxu0 0.0
      %4692 = vmatprep.subr.mxu0 0.0
      %4693 = vmatpush1.msra.mxu0 0.0
      %4694 = vmatprep.subr.mxu0 0.0
      %4695 = vmatpush1.msra.mxu0 0.0
      %4696 = vmatprep.subr.mxu0 0.0
      %4697 = vmatpush1.msra.mxu0 0.0
      %4698 = vmatprep.subr.mxu0 0.0
      %4699 = vmatpush1.msra.mxu0 0.0
      %4700 = vmatprep.subr.mxu0 0.0
      %4701 = vmatpush1.msra.mxu0 0.0
      %4702 = vmatprep.subr.mxu0 0.0
      %4703 = vmatpush1.msra.mxu0 0.0
      %4704 = vmatprep.subr.mxu0 0.0
      %4705 = vmatpush1.msra.mxu0 0.0
      %4706 = vmatprep.subr.mxu0 0.0
      %4707 = vmatpush1.msra.mxu0 0.0
      %4708 = vmatprep.subr.mxu0 0.0
      %4709 = vmatpush1.msra.mxu0 0.0
      %4710 = vmatprep.subr.mxu0 0.0
      %4711 = vmatpush1.msra.mxu0 %v4600
      %4712 = vmatprep.subr.mxu0 0.0
      %4713 = vmatpush2.msra.mxu0 0.0
      %4714 = vmatprep.subr.mxu0 0.0
      %4715 = vmatpush2.msra.mxu0 0.0
      %4716 = vmatprep.subr.mxu0 0.0
      %4717 = vmatpush2.msra.mxu0 0.0
      %4718 = vmatprep.subr.mxu0 0.0
      %4719 = vmatpush2.msra.mxu0 0.0
      %4720 = vmatprep.subr.mxu0 0.0
      %4721 = vmatpush2.msra.mxu0 0.0
      %4722 = vmatprep.subr.mxu0 0.0
      %4723 = vmatpush2.msra.mxu0 0.0
      %4724 = vmatprep.subr.mxu0 0.0
      %4725 = vmatpush2.msra.mxu0 0.0
      %4726 = vmatprep.subr.mxu0 0.0
      %4727 = vmatpush2.msra.mxu0 0.0
      %4728 = vmatprep.subr.mxu0 0.0
      %4729 = vmatpush2.msra.mxu0 0.0
      %4730 = vmatprep.subr.mxu0 0.0
      %4731 = vmatpush2.msra.mxu0 0.0
      %4732 = vmatprep.subr.mxu0 0.0
      %4733 = vmatpush2.msra.mxu0 0.0
      %4734 = vmatprep.subr.mxu0 0.0
      %4735 = vmatpush2.msra.mxu0 0.0
      %4736 = vmatprep.subr.mxu0 0.0
      %4737 = vmatpush2.msra.mxu0 0.0
      %4738 = vmatprep.subr.mxu0 0.0
      %4739 = vmatpush2.msra.mxu0 0.0
      %4740 = vmatprep.subr.mxu0 0.0
      %4741 = vmatpush2.msra.mxu0 0.0
      %4742 = vmatprep.subr.mxu0 0.0
      %4743 = vmatpush2.msra.mxu0 0.0
      %4744 = vmatprep.mubr.f32.mxu0 0.0
      %4745 = vmatmul.mubr.f32.gmra.mxu0 %v4607
      %v4746 = vpop.f32.mrf.mxu0
      %v4747 = vadd.f32 0.0, %v4746
      %v4748 = vpop.f32.mrf.mxu0
      %4749 = vdwg.mxu0
      %v4750 = vadd.f32 %v4590, %v4676
      %v4751 = vadd.f32 %v4591, %v4678
      %v4752 = vadd.f32 %v4592, %v4747
      %s4753 = scalar_lea.vmem %s7, 32
      %v4754 = vld [vmem:[%s4753] sm:$0xf]
      %4755 = vrot.lane.b32.xlu0 %v3464, 109
      %v4756 = vpop.permute.xlu0 %4755
      %4757 = vrot.lane.b32.xlu0 %v3467, 109
      %v4758 = vpop.permute.xlu0 %4757
      %4759 = vrot.lane.b32.xlu0 %v3470, 109
      %v4760 = vpop.permute.xlu0 %4759
      %v4761 = vsel %vm1747, %v4756, %v4758
      %v4762 = vsel %vm1747, %v4758, %v4760
      %v4767 = vsel %vm467, %v4754, 0
      %4769 = vmatprep.subr.mxu0 0.0
      %4770 = vmatpush1.msra.mxu0 0.0
      %4771 = vmatprep.subr.mxu0 0.0
      %4772 = vmatpush1.msra.mxu0 0.0
      %4773 = vmatprep.subr.mxu0 0.0
      %4774 = vmatpush1.msra.mxu0 0.0
      %4775 = vmatprep.subr.mxu0 0.0
      %4776 = vmatpush1.msra.mxu0 0.0
      %4777 = vmatprep.subr.mxu0 0.0
      %4778 = vmatpush1.msra.mxu0 0.0
      %4779 = vmatprep.subr.mxu0 0.0
      %4780 = vmatpush1.msra.mxu0 0.0
      %4781 = vmatprep.subr.mxu0 0.0
      %4782 = vmatpush1.msra.mxu0 0.0
      %4783 = vmatprep.subr.mxu0 0.0
      %4784 = vmatpush1.msra.mxu0 0.0
      %4785 = vmatprep.subr.mxu0 0.0
      %4786 = vmatpush1.msra.mxu0 0.0
      %4787 = vmatprep.subr.mxu0 0.0
      %4788 = vmatpush1.msra.mxu0 0.0
      %4789 = vmatprep.subr.mxu0 0.0
      %4790 = vmatpush1.msra.mxu0 0.0
      %4791 = vmatprep.subr.mxu0 0.0
      %4792 = vmatpush1.msra.mxu0 0.0
      %4793 = vmatprep.subr.mxu0 0.0
      %4794 = vmatpush1.msra.mxu0 0.0
      %4795 = vmatprep.subr.mxu0 0.0
      %4796 = vmatpush1.msra.mxu0 0.0
      %4797 = vmatprep.subr.mxu0 0.0
      %4798 = vmatpush1.msra.mxu0 0.0
      %4799 = vmatprep.subr.mxu0 %v4762
      %4800 = vmatpush1.msra.mxu0 %v4761
      %4801 = vmatprep.subr.mxu0 0.0
      %4802 = vmatpush2.msra.mxu0 0.0
      %4803 = vmatprep.subr.mxu0 0.0
      %4804 = vmatpush2.msra.mxu0 0.0
      %4805 = vmatprep.subr.mxu0 0.0
      %4806 = vmatpush2.msra.mxu0 0.0
      %4807 = vmatprep.subr.mxu0 0.0
      %4808 = vmatpush2.msra.mxu0 0.0
      %4809 = vmatprep.subr.mxu0 0.0
      %4810 = vmatpush2.msra.mxu0 0.0
      %4811 = vmatprep.subr.mxu0 0.0
      %4812 = vmatpush2.msra.mxu0 0.0
      %4813 = vmatprep.subr.mxu0 0.0
      %4814 = vmatpush2.msra.mxu0 0.0
      %4815 = vmatprep.subr.mxu0 0.0
      %4816 = vmatpush2.msra.mxu0 0.0
      %4817 = vmatprep.subr.mxu0 0.0
      %4818 = vmatpush2.msra.mxu0 0.0
      %4819 = vmatprep.subr.mxu0 0.0
      %4820 = vmatpush2.msra.mxu0 0.0
      %4821 = vmatprep.subr.mxu0 0.0
      %4822 = vmatpush2.msra.mxu0 0.0
      %4823 = vmatprep.subr.mxu0 0.0
      %4824 = vmatpush2.msra.mxu0 0.0
      %4825 = vmatprep.subr.mxu0 0.0
      %4826 = vmatpush2.msra.mxu0 0.0
      %4827 = vmatprep.subr.mxu0 0.0
      %4828 = vmatpush2.msra.mxu0 0.0
      %4829 = vmatprep.subr.mxu0 0.0
      %4830 = vmatpush2.msra.mxu0 0.0
      %4831 = vmatprep.subr.mxu0 0.0
      %4832 = vmatpush2.msra.mxu0 0.0
      %4833 = vmatprep.mubr.f32.mxu0 0.0
      %4834 = vmatmul.mubr.f32.gmra.mxu0 %v4767
      %v4835 = vpop.f32.mrf.mxu0
      %v4836 = vadd.f32 0.0, %v4835
      %v4837 = vpop.f32.mrf.mxu0
      %v4838 = vadd.f32 0.0, %v4837
      %4839 = vdwg.mxu0
      %4840 = vmatprep.subr.mxu0 0.0
      %4841 = vmatpush1.msra.mxu0 0.0
      %4842 = vmatprep.subr.mxu0 0.0
      %4843 = vmatpush1.msra.mxu0 0.0
      %4844 = vmatprep.subr.mxu0 0.0
      %4845 = vmatpush1.msra.mxu0 0.0
      %4846 = vmatprep.subr.mxu0 0.0
      %4847 = vmatpush1.msra.mxu0 0.0
      %4848 = vmatprep.subr.mxu0 0.0
      %4849 = vmatpush1.msra.mxu0 0.0
      %4850 = vmatprep.subr.mxu0 0.0
      %4851 = vmatpush1.msra.mxu0 0.0
      %4852 = vmatprep.subr.mxu0 0.0
      %4853 = vmatpush1.msra.mxu0 0.0
      %4854 = vmatprep.subr.mxu0 0.0
      %4855 = vmatpush1.msra.mxu0 0.0
      %4856 = vmatprep.subr.mxu0 0.0
      %4857 = vmatpush1.msra.mxu0 0.0
      %4858 = vmatprep.subr.mxu0 0.0
      %4859 = vmatpush1.msra.mxu0 0.0
      %4860 = vmatprep.subr.mxu0 0.0
      %4861 = vmatpush1.msra.mxu0 0.0
      %4862 = vmatprep.subr.mxu0 0.0
      %4863 = vmatpush1.msra.mxu0 0.0
      %4864 = vmatprep.subr.mxu0 0.0
      %4865 = vmatpush1.msra.mxu0 0.0
      %4866 = vmatprep.subr.mxu0 0.0
      %4867 = vmatpush1.msra.mxu0 0.0
      %4868 = vmatprep.subr.mxu0 0.0
      %4869 = vmatpush1.msra.mxu0 0.0
      %4870 = vmatprep.subr.mxu0 0.0
      %4871 = vmatpush1.msra.mxu0 %v4760
      %4872 = vmatprep.subr.mxu0 0.0
      %4873 = vmatpush2.msra.mxu0 0.0
      %4874 = vmatprep.subr.mxu0 0.0
      %4875 = vmatpush2.msra.mxu0 0.0
      %4876 = vmatprep.subr.mxu0 0.0
      %4877 = vmatpush2.msra.mxu0 0.0
      %4878 = vmatprep.subr.mxu0 0.0
      %4879 = vmatpush2.msra.mxu0 0.0
      %4880 = vmatprep.subr.mxu0 0.0
      %4881 = vmatpush2.msra.mxu0 0.0
      %4882 = vmatprep.subr.mxu0 0.0
      %4883 = vmatpush2.msra.mxu0 0.0
      %4884 = vmatprep.subr.mxu0 0.0
      %4885 = vmatpush2.msra.mxu0 0.0
      %4886 = vmatprep.subr.mxu0 0.0
      %4887 = vmatpush2.msra.mxu0 0.0
      %4888 = vmatprep.subr.mxu0 0.0
      %4889 = vmatpush2.msra.mxu0 0.0
      %4890 = vmatprep.subr.mxu0 0.0
      %4891 = vmatpush2.msra.mxu0 0.0
      %4892 = vmatprep.subr.mxu0 0.0
      %4893 = vmatpush2.msra.mxu0 0.0
      %4894 = vmatprep.subr.mxu0 0.0
      %4895 = vmatpush2.msra.mxu0 0.0
      %4896 = vmatprep.subr.mxu0 0.0
      %4897 = vmatpush2.msra.mxu0 0.0
      %4898 = vmatprep.subr.mxu0 0.0
      %4899 = vmatpush2.msra.mxu0 0.0
      %4900 = vmatprep.subr.mxu0 0.0
      %4901 = vmatpush2.msra.mxu0 0.0
      %4902 = vmatprep.subr.mxu0 0.0
      %4903 = vmatpush2.msra.mxu0 0.0
      %4904 = vmatprep.mubr.f32.mxu0 0.0
      %4905 = vmatmul.mubr.f32.gmra.mxu0 %v4767
      %v4906 = vpop.f32.mrf.mxu0
      %v4907 = vadd.f32 0.0, %v4906
      %v4908 = vpop.f32.mrf.mxu0
      %4909 = vdwg.mxu0
      %v4910 = vadd.f32 %v4750, %v4836
      %v4911 = vadd.f32 %v4751, %v4838
      %v4912 = vadd.f32 %v4752, %v4907
      %v4913 = vmul.f32 %v4910, %v1907
      %v4914 = vmul.f32 %v4911, %v1911
      %v4915 = vmul.f32 %v4912, %v1915
      %v4919 = vrot.slane %v4913, 4
      %v4920 = vrot.slane %v4914, 4
      %v4921 = vrot.slane %v4915, 4
      %4925 = vst [vmem:[#allocation2 + $0x8] sm:$0xf0] %v4919
      %4926 = vst [vmem:[#allocation2 + $0x10] sm:$0xf0] %v4920
      %4927 = vst.msk [vmem:[#allocation2 + $0x18] sm:$0xf0] %vm435, %v4921
      %v4928 = vld [vmem:[%s10] sm:$0xf]
      %4930 = vset.pattern.permute.xlu0 0
      %4931 = vperm.xlu0 %4930, %v4928
      %v4932 = vpop.permute.xlu0 %4931
      %v4934 = vld [vmem:[#allocation2] sm:$0xff]
      %v4935 = vld [vmem:[#allocation2 + $0x8] sm:$0xff]
      %v4936 = vld [vmem:[#allocation2 + $0x10] sm:$0xff]
      %v4937 = vld [vmem:[#allocation2 + $0x18] sm:$0xff]
      %v4938 = vld [vmem:[%s9] sm:$0xf]
      %4943 = vrot.lane.b32.xlu0 %v4934, 19
      %v4944 = vpop.permute.xlu0 %4943
      %4945 = vrot.lane.b32.xlu0 %v4935, 19
      %v4946 = vpop.permute.xlu0 %4945
      %4947 = vrot.lane.b32.xlu0 %v4936, 19
      %v4948 = vpop.permute.xlu0 %4947
      %4949 = vrot.lane.b32.xlu0 %v4937, 19
      %v4950 = vpop.permute.xlu0 %4949
      %v4951 = vsel %vm460, %v4944, %v4946
      %v4952 = vsel %vm460, %v4946, %v4948
      %v4953 = vsel %vm460, %v4948, %v4950
      %v4958 = vsel %vm467, %v4938, 0
      %4960 = vmatprep.subr.mxu0 0.0
      %4961 = vmatpush1.msra.mxu0 0.0
      %4962 = vmatprep.subr.mxu0 0.0
      %4963 = vmatpush1.msra.mxu0 0.0
      %4964 = vmatprep.subr.mxu0 0.0
      %4965 = vmatpush1.msra.mxu0 0.0
      %4966 = vmatprep.subr.mxu0 0.0
      %4967 = vmatpush1.msra.mxu0 0.0
      %4968 = vmatprep.subr.mxu0 0.0
      %4969 = vmatpush1.msra.mxu0 0.0
      %4970 = vmatprep.subr.mxu0 0.0
      %4971 = vmatpush1.msra.mxu0 0.0
      %4972 = vmatprep.subr.mxu0 0.0
      %4973 = vmatpush1.msra.mxu0 0.0
      %4974 = vmatprep.subr.mxu0 0.0
      %4975 = vmatpush1.msra.mxu0 0.0
      %4976 = vmatprep.subr.mxu0 0.0
      %4977 = vmatpush1.msra.mxu0 0.0
      %4978 = vmatprep.subr.mxu0 0.0
      %4979 = vmatpush1.msra.mxu0 0.0
      %4980 = vmatprep.subr.mxu0 0.0
      %4981 = vmatpush1.msra.mxu0 0.0
      %4982 = vmatprep.subr.mxu0 0.0
      %4983 = vmatpush1.msra.mxu0 0.0
      %4984 = vmatprep.subr.mxu0 0.0
      %4985 = vmatpush1.msra.mxu0 0.0
      %4986 = vmatprep.subr.mxu0 0.0
      %4987 = vmatpush1.msra.mxu0 0.0
      %4988 = vmatprep.subr.mxu0 0.0
      %4989 = vmatpush1.msra.mxu0 0.0
      %4990 = vmatprep.subr.mxu0 %v4952
      %4991 = vmatpush1.msra.mxu0 %v4951
      %4992 = vmatprep.subr.mxu0 0.0
      %4993 = vmatpush2.msra.mxu0 0.0
      %4994 = vmatprep.subr.mxu0 0.0
      %4995 = vmatpush2.msra.mxu0 0.0
      %4996 = vmatprep.subr.mxu0 0.0
      %4997 = vmatpush2.msra.mxu0 0.0
      %4998 = vmatprep.subr.mxu0 0.0
      %4999 = vmatpush2.msra.mxu0 0.0
      %5000 = vmatprep.subr.mxu0 0.0
      %5001 = vmatpush2.msra.mxu0 0.0
      %5002 = vmatprep.subr.mxu0 0.0
      %5003 = vmatpush2.msra.mxu0 0.0
      %5004 = vmatprep.subr.mxu0 0.0
      %5005 = vmatpush2.msra.mxu0 0.0
      %5006 = vmatprep.subr.mxu0 0.0
      %5007 = vmatpush2.msra.mxu0 0.0
      %5008 = vmatprep.subr.mxu0 0.0
      %5009 = vmatpush2.msra.mxu0 0.0
      %5010 = vmatprep.subr.mxu0 0.0
      %5011 = vmatpush2.msra.mxu0 0.0
      %5012 = vmatprep.subr.mxu0 0.0
      %5013 = vmatpush2.msra.mxu0 0.0
      %5014 = vmatprep.subr.mxu0 0.0
      %5015 = vmatpush2.msra.mxu0 0.0
      %5016 = vmatprep.subr.mxu0 0.0
      %5017 = vmatpush2.msra.mxu0 0.0
      %5018 = vmatprep.subr.mxu0 0.0
      %5019 = vmatpush2.msra.mxu0 0.0
      %5020 = vmatprep.subr.mxu0 0.0
      %5021 = vmatpush2.msra.mxu0 0.0
      %5022 = vmatprep.subr.mxu0 0.0
      %5023 = vmatpush2.msra.mxu0 0.0
      %5024 = vmatprep.mubr.f32.mxu0 0.0
      %5025 = vmatmul.mubr.f32.gmra.mxu0 %v4958
      %v5026 = vpop.f32.mrf.mxu0
      %v5027 = vadd.f32 0.0, %v5026
      %v5028 = vpop.f32.mrf.mxu0
      %v5029 = vadd.f32 0.0, %v5028
      %5030 = vdwg.mxu0
      %5031 = vmatprep.subr.mxu0 0.0
      %5032 = vmatpush1.msra.mxu0 0.0
      %5033 = vmatprep.subr.mxu0 0.0
      %5034 = vmatpush1.msra.mxu0 0.0
      %5035 = vmatprep.subr.mxu0 0.0
      %5036 = vmatpush1.msra.mxu0 0.0
      %5037 = vmatprep.subr.mxu0 0.0
      %5038 = vmatpush1.msra.mxu0 0.0
      %5039 = vmatprep.subr.mxu0 0.0
      %5040 = vmatpush1.msra.mxu0 0.0
      %5041 = vmatprep.subr.mxu0 0.0
      %5042 = vmatpush1.msra.mxu0 0.0
      %5043 = vmatprep.subr.mxu0 0.0
      %5044 = vmatpush1.msra.mxu0 0.0
      %5045 = vmatprep.subr.mxu0 0.0
      %5046 = vmatpush1.msra.mxu0 0.0
      %5047 = vmatprep.subr.mxu0 0.0
      %5048 = vmatpush1.msra.mxu0 0.0
      %5049 = vmatprep.subr.mxu0 0.0
      %5050 = vmatpush1.msra.mxu0 0.0
      %5051 = vmatprep.subr.mxu0 0.0
      %5052 = vmatpush1.msra.mxu0 0.0
      %5053 = vmatprep.subr.mxu0 0.0
      %5054 = vmatpush1.msra.mxu0 0.0
      %5055 = vmatprep.subr.mxu0 0.0
      %5056 = vmatpush1.msra.mxu0 0.0
      %5057 = vmatprep.subr.mxu0 0.0
      %5058 = vmatpush1.msra.mxu0 0.0
      %5059 = vmatprep.subr.mxu0 0.0
      %5060 = vmatpush1.msra.mxu0 0.0
      %5061 = vmatprep.subr.mxu0 0.0
      %5062 = vmatpush1.msra.mxu0 %v4953
      %5063 = vmatprep.subr.mxu0 0.0
      %5064 = vmatpush2.msra.mxu0 0.0
      %5065 = vmatprep.subr.mxu0 0.0
      %5066 = vmatpush2.msra.mxu0 0.0
      %5067 = vmatprep.subr.mxu0 0.0
      %5068 = vmatpush2.msra.mxu0 0.0
      %5069 = vmatprep.subr.mxu0 0.0
      %5070 = vmatpush2.msra.mxu0 0.0
      %5071 = vmatprep.subr.mxu0 0.0
      %5072 = vmatpush2.msra.mxu0 0.0
      %5073 = vmatprep.subr.mxu0 0.0
      %5074 = vmatpush2.msra.mxu0 0.0
      %5075 = vmatprep.subr.mxu0 0.0
      %5076 = vmatpush2.msra.mxu0 0.0
      %5077 = vmatprep.subr.mxu0 0.0
      %5078 = vmatpush2.msra.mxu0 0.0
      %5079 = vmatprep.subr.mxu0 0.0
      %5080 = vmatpush2.msra.mxu0 0.0
      %5081 = vmatprep.subr.mxu0 0.0
      %5082 = vmatpush2.msra.mxu0 0.0
      %5083 = vmatprep.subr.mxu0 0.0
      %5084 = vmatpush2.msra.mxu0 0.0
      %5085 = vmatprep.subr.mxu0 0.0
      %5086 = vmatpush2.msra.mxu0 0.0
      %5087 = vmatprep.subr.mxu0 0.0
      %5088 = vmatpush2.msra.mxu0 0.0
      %5089 = vmatprep.subr.mxu0 0.0
      %5090 = vmatpush2.msra.mxu0 0.0
      %5091 = vmatprep.subr.mxu0 0.0
      %5092 = vmatpush2.msra.mxu0 0.0
      %5093 = vmatprep.subr.mxu0 0.0
      %5094 = vmatpush2.msra.mxu0 0.0
      %5095 = vmatprep.mubr.f32.mxu0 0.0
      %5096 = vmatmul.mubr.f32.gmra.mxu0 %v4958
      %v5097 = vpop.f32.mrf.mxu0
      %v5098 = vadd.f32 0.0, %v5097
      %v5099 = vpop.f32.mrf.mxu0
      %5100 = vdwg.mxu0
      %v5101 = vadd.f32 %v4932, %v5027
      %v5102 = vadd.f32 %v4932, %v5029
      %v5103 = vadd.f32 %v4932, %v5098
      %s5104 = scalar_lea.vmem %s9, 4
      %v5105 = vld [vmem:[%s5104] sm:$0xf]
      %5106 = vrot.lane.b32.xlu0 %v4934, 18
      %v5107 = vpop.permute.xlu0 %5106
      %5108 = vrot.lane.b32.xlu0 %v4935, 18
      %v5109 = vpop.permute.xlu0 %5108
      %5110 = vrot.lane.b32.xlu0 %v4936, 18
      %v5111 = vpop.permute.xlu0 %5110
      %5112 = vrot.lane.b32.xlu0 %v4937, 18
      %v5113 = vpop.permute.xlu0 %5112
      %v5114 = vsel %vm625, %v5107, %v5109
      %v5115 = vsel %vm625, %v5109, %v5111
      %v5116 = vsel %vm625, %v5111, %v5113
      %v5121 = vsel %vm467, %v5105, 0
      %5123 = vmatprep.subr.mxu0 0.0
      %5124 = vmatpush1.msra.mxu0 0.0
      %5125 = vmatprep.subr.mxu0 0.0
      %5126 = vmatpush1.msra.mxu0 0.0
      %5127 = vmatprep.subr.mxu0 0.0
      %5128 = vmatpush1.msra.mxu0 0.0
      %5129 = vmatprep.subr.mxu0 0.0
      %5130 = vmatpush1.msra.mxu0 0.0
      %5131 = vmatprep.subr.mxu0 0.0
      %5132 = vmatpush1.msra.mxu0 0.0
      %5133 = vmatprep.subr.mxu0 0.0
      %5134 = vmatpush1.msra.mxu0 0.0
      %5135 = vmatprep.subr.mxu0 0.0
      %5136 = vmatpush1.msra.mxu0 0.0
      %5137 = vmatprep.subr.mxu0 0.0
      %5138 = vmatpush1.msra.mxu0 0.0
      %5139 = vmatprep.subr.mxu0 0.0
      %5140 = vmatpush1.msra.mxu0 0.0
      %5141 = vmatprep.subr.mxu0 0.0
      %5142 = vmatpush1.msra.mxu0 0.0
      %5143 = vmatprep.subr.mxu0 0.0
      %5144 = vmatpush1.msra.mxu0 0.0
      %5145 = vmatprep.subr.mxu0 0.0
      %5146 = vmatpush1.msra.mxu0 0.0
      %5147 = vmatprep.subr.mxu0 0.0
      %5148 = vmatpush1.msra.mxu0 0.0
      %5149 = vmatprep.subr.mxu0 0.0
      %5150 = vmatpush1.msra.mxu0 0.0
      %5151 = vmatprep.subr.mxu0 0.0
      %5152 = vmatpush1.msra.mxu0 0.0
      %5153 = vmatprep.subr.mxu0 %v5115
      %5154 = vmatpush1.msra.mxu0 %v5114
      %5155 = vmatprep.subr.mxu0 0.0
      %5156 = vmatpush2.msra.mxu0 0.0
      %5157 = vmatprep.subr.mxu0 0.0
      %5158 = vmatpush2.msra.mxu0 0.0
      %5159 = vmatprep.subr.mxu0 0.0
      %5160 = vmatpush2.msra.mxu0 0.0
      %5161 = vmatprep.subr.mxu0 0.0
      %5162 = vmatpush2.msra.mxu0 0.0
      %5163 = vmatprep.subr.mxu0 0.0
      %5164 = vmatpush2.msra.mxu0 0.0
      %5165 = vmatprep.subr.mxu0 0.0
      %5166 = vmatpush2.msra.mxu0 0.0
      %5167 = vmatprep.subr.mxu0 0.0
      %5168 = vmatpush2.msra.mxu0 0.0
      %5169 = vmatprep.subr.mxu0 0.0
      %5170 = vmatpush2.msra.mxu0 0.0
      %5171 = vmatprep.subr.mxu0 0.0
      %5172 = vmatpush2.msra.mxu0 0.0
      %5173 = vmatprep.subr.mxu0 0.0
      %5174 = vmatpush2.msra.mxu0 0.0
      %5175 = vmatprep.subr.mxu0 0.0
      %5176 = vmatpush2.msra.mxu0 0.0
      %5177 = vmatprep.subr.mxu0 0.0
      %5178 = vmatpush2.msra.mxu0 0.0
      %5179 = vmatprep.subr.mxu0 0.0
      %5180 = vmatpush2.msra.mxu0 0.0
      %5181 = vmatprep.subr.mxu0 0.0
      %5182 = vmatpush2.msra.mxu0 0.0
      %5183 = vmatprep.subr.mxu0 0.0
      %5184 = vmatpush2.msra.mxu0 0.0
      %5185 = vmatprep.subr.mxu0 0.0
      %5186 = vmatpush2.msra.mxu0 0.0
      %5187 = vmatprep.mubr.f32.mxu0 0.0
      %5188 = vmatmul.mubr.f32.gmra.mxu0 %v5121
      %v5189 = vpop.f32.mrf.mxu0
      %v5190 = vadd.f32 0.0, %v5189
      %v5191 = vpop.f32.mrf.mxu0
      %v5192 = vadd.f32 0.0, %v5191
      %5193 = vdwg.mxu0
      %5194 = vmatprep.subr.mxu0 0.0
      %5195 = vmatpush1.msra.mxu0 0.0
      %5196 = vmatprep.subr.mxu0 0.0
      %5197 = vmatpush1.msra.mxu0 0.0
      %5198 = vmatprep.subr.mxu0 0.0
      %5199 = vmatpush1.msra.mxu0 0.0
      %5200 = vmatprep.subr.mxu0 0.0
      %5201 = vmatpush1.msra.mxu0 0.0
      %5202 = vmatprep.subr.mxu0 0.0
      %5203 = vmatpush1.msra.mxu0 0.0
      %5204 = vmatprep.subr.mxu0 0.0
      %5205 = vmatpush1.msra.mxu0 0.0
      %5206 = vmatprep.subr.mxu0 0.0
      %5207 = vmatpush1.msra.mxu0 0.0
      %5208 = vmatprep.subr.mxu0 0.0
      %5209 = vmatpush1.msra.mxu0 0.0
      %5210 = vmatprep.subr.mxu0 0.0
      %5211 = vmatpush1.msra.mxu0 0.0
      %5212 = vmatprep.subr.mxu0 0.0
      %5213 = vmatpush1.msra.mxu0 0.0
      %5214 = vmatprep.subr.mxu0 0.0
      %5215 = vmatpush1.msra.mxu0 0.0
      %5216 = vmatprep.subr.mxu0 0.0
      %5217 = vmatpush1.msra.mxu0 0.0
      %5218 = vmatprep.subr.mxu0 0.0
      %5219 = vmatpush1.msra.mxu0 0.0
      %5220 = vmatprep.subr.mxu0 0.0
      %5221 = vmatpush1.msra.mxu0 0.0
      %5222 = vmatprep.subr.mxu0 0.0
      %5223 = vmatpush1.msra.mxu0 0.0
      %5224 = vmatprep.subr.mxu0 0.0
      %5225 = vmatpush1.msra.mxu0 %v5116
      %5226 = vmatprep.subr.mxu0 0.0
      %5227 = vmatpush2.msra.mxu0 0.0
      %5228 = vmatprep.subr.mxu0 0.0
      %5229 = vmatpush2.msra.mxu0 0.0
      %5230 = vmatprep.subr.mxu0 0.0
      %5231 = vmatpush2.msra.mxu0 0.0
      %5232 = vmatprep.subr.mxu0 0.0
      %5233 = vmatpush2.msra.mxu0 0.0
      %5234 = vmatprep.subr.mxu0 0.0
      %5235 = vmatpush2.msra.mxu0 0.0
      %5236 = vmatprep.subr.mxu0 0.0
      %5237 = vmatpush2.msra.mxu0 0.0
      %5238 = vmatprep.subr.mxu0 0.0
      %5239 = vmatpush2.msra.mxu0 0.0
      %5240 = vmatprep.subr.mxu0 0.0
      %5241 = vmatpush2.msra.mxu0 0.0
      %5242 = vmatprep.subr.mxu0 0.0
      %5243 = vmatpush2.msra.mxu0 0.0
      %5244 = vmatprep.subr.mxu0 0.0
      %5245 = vmatpush2.msra.mxu0 0.0
      %5246 = vmatprep.subr.mxu0 0.0
      %5247 = vmatpush2.msra.mxu0 0.0
      %5248 = vmatprep.subr.mxu0 0.0
      %5249 = vmatpush2.msra.mxu0 0.0
      %5250 = vmatprep.subr.mxu0 0.0
      %5251 = vmatpush2.msra.mxu0 0.0
      %5252 = vmatprep.subr.mxu0 0.0
      %5253 = vmatpush2.msra.mxu0 0.0
      %5254 = vmatprep.subr.mxu0 0.0
      %5255 = vmatpush2.msra.mxu0 0.0
      %5256 = vmatprep.subr.mxu0 0.0
      %5257 = vmatpush2.msra.mxu0 0.0
      %5258 = vmatprep.mubr.f32.mxu0 0.0
      %5259 = vmatmul.mubr.f32.gmra.mxu0 %v5121
      %v5260 = vpop.f32.mrf.mxu0
      %v5261 = vadd.f32 0.0, %v5260
      %v5262 = vpop.f32.mrf.mxu0
      %5263 = vdwg.mxu0
      %v5264 = vadd.f32 %v5101, %v5190
      %v5265 = vadd.f32 %v5102, %v5192
      %v5266 = vadd.f32 %v5103, %v5261
      %s5267 = scalar_lea.vmem %s9, 8
      %v5268 = vld [vmem:[%s5267] sm:$0xf]
      %5269 = vrot.lane.b32.xlu0 %v4934, 17
      %v5270 = vpop.permute.xlu0 %5269
      %5271 = vrot.lane.b32.xlu0 %v4935, 17
      %v5272 = vpop.permute.xlu0 %5271
      %5273 = vrot.lane.b32.xlu0 %v4936, 17
      %v5274 = vpop.permute.xlu0 %5273
      %5275 = vrot.lane.b32.xlu0 %v4937, 17
      %v5276 = vpop.permute.xlu0 %5275
      %v5277 = vsel %vm789, %v5270, %v5272
      %v5278 = vsel %vm789, %v5272, %v5274
      %v5279 = vsel %vm789, %v5274, %v5276
      %v5284 = vsel %vm467, %v5268, 0
      %5286 = vmatprep.subr.mxu0 0.0
      %5287 = vmatpush1.msra.mxu0 0.0
      %5288 = vmatprep.subr.mxu0 0.0
      %5289 = vmatpush1.msra.mxu0 0.0
      %5290 = vmatprep.subr.mxu0 0.0
      %5291 = vmatpush1.msra.mxu0 0.0
      %5292 = vmatprep.subr.mxu0 0.0
      %5293 = vmatpush1.msra.mxu0 0.0
      %5294 = vmatprep.subr.mxu0 0.0
      %5295 = vmatpush1.msra.mxu0 0.0
      %5296 = vmatprep.subr.mxu0 0.0
      %5297 = vmatpush1.msra.mxu0 0.0
      %5298 = vmatprep.subr.mxu0 0.0
      %5299 = vmatpush1.msra.mxu0 0.0
      %5300 = vmatprep.subr.mxu0 0.0
      %5301 = vmatpush1.msra.mxu0 0.0
      %5302 = vmatprep.subr.mxu0 0.0
      %5303 = vmatpush1.msra.mxu0 0.0
      %5304 = vmatprep.subr.mxu0 0.0
      %5305 = vmatpush1.msra.mxu0 0.0
      %5306 = vmatprep.subr.mxu0 0.0
      %5307 = vmatpush1.msra.mxu0 0.0
      %5308 = vmatprep.subr.mxu0 0.0
      %5309 = vmatpush1.msra.mxu0 0.0
      %5310 = vmatprep.subr.mxu0 0.0
      %5311 = vmatpush1.msra.mxu0 0.0
      %5312 = vmatprep.subr.mxu0 0.0
      %5313 = vmatpush1.msra.mxu0 0.0
      %5314 = vmatprep.subr.mxu0 0.0
      %5315 = vmatpush1.msra.mxu0 0.0
      %5316 = vmatprep.subr.mxu0 %v5278
      %5317 = vmatpush1.msra.mxu0 %v5277
      %5318 = vmatprep.subr.mxu0 0.0
      %5319 = vmatpush2.msra.mxu0 0.0
      %5320 = vmatprep.subr.mxu0 0.0
      %5321 = vmatpush2.msra.mxu0 0.0
      %5322 = vmatprep.subr.mxu0 0.0
      %5323 = vmatpush2.msra.mxu0 0.0
      %5324 = vmatprep.subr.mxu0 0.0
      %5325 = vmatpush2.msra.mxu0 0.0
      %5326 = vmatprep.subr.mxu0 0.0
      %5327 = vmatpush2.msra.mxu0 0.0
      %5328 = vmatprep.subr.mxu0 0.0
      %5329 = vmatpush2.msra.mxu0 0.0
      %5330 = vmatprep.subr.mxu0 0.0
      %5331 = vmatpush2.msra.mxu0 0.0
      %5332 = vmatprep.subr.mxu0 0.0
      %5333 = vmatpush2.msra.mxu0 0.0
      %5334 = vmatprep.subr.mxu0 0.0
      %5335 = vmatpush2.msra.mxu0 0.0
      %5336 = vmatprep.subr.mxu0 0.0
      %5337 = vmatpush2.msra.mxu0 0.0
      %5338 = vmatprep.subr.mxu0 0.0
      %5339 = vmatpush2.msra.mxu0 0.0
      %5340 = vmatprep.subr.mxu0 0.0
      %5341 = vmatpush2.msra.mxu0 0.0
      %5342 = vmatprep.subr.mxu0 0.0
      %5343 = vmatpush2.msra.mxu0 0.0
      %5344 = vmatprep.subr.mxu0 0.0
      %5345 = vmatpush2.msra.mxu0 0.0
      %5346 = vmatprep.subr.mxu0 0.0
      %5347 = vmatpush2.msra.mxu0 0.0
      %5348 = vmatprep.subr.mxu0 0.0
      %5349 = vmatpush2.msra.mxu0 0.0
      %5350 = vmatprep.mubr.f32.mxu0 0.0
      %5351 = vmatmul.mubr.f32.gmra.mxu0 %v5284
      %v5352 = vpop.f32.mrf.mxu0
      %v5353 = vadd.f32 0.0, %v5352
      %v5354 = vpop.f32.mrf.mxu0
      %v5355 = vadd.f32 0.0, %v5354
      %5356 = vdwg.mxu0
      %5357 = vmatprep.subr.mxu0 0.0
      %5358 = vmatpush1.msra.mxu0 0.0
      %5359 = vmatprep.subr.mxu0 0.0
      %5360 = vmatpush1.msra.mxu0 0.0
      %5361 = vmatprep.subr.mxu0 0.0
      %5362 = vmatpush1.msra.mxu0 0.0
      %5363 = vmatprep.subr.mxu0 0.0
      %5364 = vmatpush1.msra.mxu0 0.0
      %5365 = vmatprep.subr.mxu0 0.0
      %5366 = vmatpush1.msra.mxu0 0.0
      %5367 = vmatprep.subr.mxu0 0.0
      %5368 = vmatpush1.msra.mxu0 0.0
      %5369 = vmatprep.subr.mxu0 0.0
      %5370 = vmatpush1.msra.mxu0 0.0
      %5371 = vmatprep.subr.mxu0 0.0
      %5372 = vmatpush1.msra.mxu0 0.0
      %5373 = vmatprep.subr.mxu0 0.0
      %5374 = vmatpush1.msra.mxu0 0.0
      %5375 = vmatprep.subr.mxu0 0.0
      %5376 = vmatpush1.msra.mxu0 0.0
      %5377 = vmatprep.subr.mxu0 0.0
      %5378 = vmatpush1.msra.mxu0 0.0
      %5379 = vmatprep.subr.mxu0 0.0
      %5380 = vmatpush1.msra.mxu0 0.0
      %5381 = vmatprep.subr.mxu0 0.0
      %5382 = vmatpush1.msra.mxu0 0.0
      %5383 = vmatprep.subr.mxu0 0.0
      %5384 = vmatpush1.msra.mxu0 0.0
      %5385 = vmatprep.subr.mxu0 0.0
      %5386 = vmatpush1.msra.mxu0 0.0
      %5387 = vmatprep.subr.mxu0 0.0
      %5388 = vmatpush1.msra.mxu0 %v5279
      %5389 = vmatprep.subr.mxu0 0.0
      %5390 = vmatpush2.msra.mxu0 0.0
      %5391 = vmatprep.subr.mxu0 0.0
      %5392 = vmatpush2.msra.mxu0 0.0
      %5393 = vmatprep.subr.mxu0 0.0
      %5394 = vmatpush2.msra.mxu0 0.0
      %5395 = vmatprep.subr.mxu0 0.0
      %5396 = vmatpush2.msra.mxu0 0.0
      %5397 = vmatprep.subr.mxu0 0.0
      %5398 = vmatpush2.msra.mxu0 0.0
      %5399 = vmatprep.subr.mxu0 0.0
      %5400 = vmatpush2.msra.mxu0 0.0
      %5401 = vmatprep.subr.mxu0 0.0
      %5402 = vmatpush2.msra.mxu0 0.0
      %5403 = vmatprep.subr.mxu0 0.0
      %5404 = vmatpush2.msra.mxu0 0.0
      %5405 = vmatprep.subr.mxu0 0.0
      %5406 = vmatpush2.msra.mxu0 0.0
      %5407 = vmatprep.subr.mxu0 0.0
      %5408 = vmatpush2.msra.mxu0 0.0
      %5409 = vmatprep.subr.mxu0 0.0
      %5410 = vmatpush2.msra.mxu0 0.0
      %5411 = vmatprep.subr.mxu0 0.0
      %5412 = vmatpush2.msra.mxu0 0.0
      %5413 = vmatprep.subr.mxu0 0.0
      %5414 = vmatpush2.msra.mxu0 0.0
      %5415 = vmatprep.subr.mxu0 0.0
      %5416 = vmatpush2.msra.mxu0 0.0
      %5417 = vmatprep.subr.mxu0 0.0
      %5418 = vmatpush2.msra.mxu0 0.0
      %5419 = vmatprep.subr.mxu0 0.0
      %5420 = vmatpush2.msra.mxu0 0.0
      %5421 = vmatprep.mubr.f32.mxu0 0.0
      %5422 = vmatmul.mubr.f32.gmra.mxu0 %v5284
      %v5423 = vpop.f32.mrf.mxu0
      %v5424 = vadd.f32 0.0, %v5423
      %v5425 = vpop.f32.mrf.mxu0
      %5426 = vdwg.mxu0
      %v5427 = vadd.f32 %v5264, %v5353
      %v5428 = vadd.f32 %v5265, %v5355
      %v5429 = vadd.f32 %v5266, %v5424
      %s5430 = scalar_lea.vmem %s9, 12
      %v5431 = vld [vmem:[%s5430] sm:$0xf]
      %5432 = vrot.lane.b32.xlu0 %v4934, 1
      %v5433 = vpop.permute.xlu0 %5432
      %5434 = vrot.lane.b32.xlu0 %v4935, 1
      %v5435 = vpop.permute.xlu0 %5434
      %5436 = vrot.lane.b32.xlu0 %v4936, 1
      %v5437 = vpop.permute.xlu0 %5436
      %5438 = vrot.lane.b32.xlu0 %v4937, 1
      %v5439 = vpop.permute.xlu0 %5438
      %v5440 = vsel %vm953, %v5433, %v5435
      %v5441 = vsel %vm953, %v5435, %v5437
      %v5442 = vsel %vm953, %v5437, %v5439
      %v5447 = vsel %vm467, %v5431, 0
      %5449 = vmatprep.subr.mxu0 0.0
      %5450 = vmatpush1.msra.mxu0 0.0
      %5451 = vmatprep.subr.mxu0 0.0
      %5452 = vmatpush1.msra.mxu0 0.0
      %5453 = vmatprep.subr.mxu0 0.0
      %5454 = vmatpush1.msra.mxu0 0.0
      %5455 = vmatprep.subr.mxu0 0.0
      %5456 = vmatpush1.msra.mxu0 0.0
      %5457 = vmatprep.subr.mxu0 0.0
      %5458 = vmatpush1.msra.mxu0 0.0
      %5459 = vmatprep.subr.mxu0 0.0
      %5460 = vmatpush1.msra.mxu0 0.0
      %5461 = vmatprep.subr.mxu0 0.0
      %5462 = vmatpush1.msra.mxu0 0.0
      %5463 = vmatprep.subr.mxu0 0.0
      %5464 = vmatpush1.msra.mxu0 0.0
      %5465 = vmatprep.subr.mxu0 0.0
      %5466 = vmatpush1.msra.mxu0 0.0
      %5467 = vmatprep.subr.mxu0 0.0
      %5468 = vmatpush1.msra.mxu0 0.0
      %5469 = vmatprep.subr.mxu0 0.0
      %5470 = vmatpush1.msra.mxu0 0.0
      %5471 = vmatprep.subr.mxu0 0.0
      %5472 = vmatpush1.msra.mxu0 0.0
      %5473 = vmatprep.subr.mxu0 0.0
      %5474 = vmatpush1.msra.mxu0 0.0
      %5475 = vmatprep.subr.mxu0 0.0
      %5476 = vmatpush1.msra.mxu0 0.0
      %5477 = vmatprep.subr.mxu0 0.0
      %5478 = vmatpush1.msra.mxu0 0.0
      %5479 = vmatprep.subr.mxu0 %v5441
      %5480 = vmatpush1.msra.mxu0 %v5440
      %5481 = vmatprep.subr.mxu0 0.0
      %5482 = vmatpush2.msra.mxu0 0.0
      %5483 = vmatprep.subr.mxu0 0.0
      %5484 = vmatpush2.msra.mxu0 0.0
      %5485 = vmatprep.subr.mxu0 0.0
      %5486 = vmatpush2.msra.mxu0 0.0
      %5487 = vmatprep.subr.mxu0 0.0
      %5488 = vmatpush2.msra.mxu0 0.0
      %5489 = vmatprep.subr.mxu0 0.0
      %5490 = vmatpush2.msra.mxu0 0.0
      %5491 = vmatprep.subr.mxu0 0.0
      %5492 = vmatpush2.msra.mxu0 0.0
      %5493 = vmatprep.subr.mxu0 0.0
      %5494 = vmatpush2.msra.mxu0 0.0
      %5495 = vmatprep.subr.mxu0 0.0
      %5496 = vmatpush2.msra.mxu0 0.0
      %5497 = vmatprep.subr.mxu0 0.0
      %5498 = vmatpush2.msra.mxu0 0.0
      %5499 = vmatprep.subr.mxu0 0.0
      %5500 = vmatpush2.msra.mxu0 0.0
      %5501 = vmatprep.subr.mxu0 0.0
      %5502 = vmatpush2.msra.mxu0 0.0
      %5503 = vmatprep.subr.mxu0 0.0
      %5504 = vmatpush2.msra.mxu0 0.0
      %5505 = vmatprep.subr.mxu0 0.0
      %5506 = vmatpush2.msra.mxu0 0.0
      %5507 = vmatprep.subr.mxu0 0.0
      %5508 = vmatpush2.msra.mxu0 0.0
      %5509 = vmatprep.subr.mxu0 0.0
      %5510 = vmatpush2.msra.mxu0 0.0
      %5511 = vmatprep.subr.mxu0 0.0
      %5512 = vmatpush2.msra.mxu0 0.0
      %5513 = vmatprep.mubr.f32.mxu0 0.0
      %5514 = vmatmul.mubr.f32.gmra.mxu0 %v5447
      %v5515 = vpop.f32.mrf.mxu0
      %v5516 = vadd.f32 0.0, %v5515
      %v5517 = vpop.f32.mrf.mxu0
      %v5518 = vadd.f32 0.0, %v5517
      %5519 = vdwg.mxu0
      %5520 = vmatprep.subr.mxu0 0.0
      %5521 = vmatpush1.msra.mxu0 0.0
      %5522 = vmatprep.subr.mxu0 0.0
      %5523 = vmatpush1.msra.mxu0 0.0
      %5524 = vmatprep.subr.mxu0 0.0
      %5525 = vmatpush1.msra.mxu0 0.0
      %5526 = vmatprep.subr.mxu0 0.0
      %5527 = vmatpush1.msra.mxu0 0.0
      %5528 = vmatprep.subr.mxu0 0.0
      %5529 = vmatpush1.msra.mxu0 0.0
      %5530 = vmatprep.subr.mxu0 0.0
      %5531 = vmatpush1.msra.mxu0 0.0
      %5532 = vmatprep.subr.mxu0 0.0
      %5533 = vmatpush1.msra.mxu0 0.0
      %5534 = vmatprep.subr.mxu0 0.0
      %5535 = vmatpush1.msra.mxu0 0.0
      %5536 = vmatprep.subr.mxu0 0.0
      %5537 = vmatpush1.msra.mxu0 0.0
      %5538 = vmatprep.subr.mxu0 0.0
      %5539 = vmatpush1.msra.mxu0 0.0
      %5540 = vmatprep.subr.mxu0 0.0
      %5541 = vmatpush1.msra.mxu0 0.0
      %5542 = vmatprep.subr.mxu0 0.0
      %5543 = vmatpush1.msra.mxu0 0.0
      %5544 = vmatprep.subr.mxu0 0.0
      %5545 = vmatpush1.msra.mxu0 0.0
      %5546 = vmatprep.subr.mxu0 0.0
      %5547 = vmatpush1.msra.mxu0 0.0
      %5548 = vmatprep.subr.mxu0 0.0
      %5549 = vmatpush1.msra.mxu0 0.0
      %5550 = vmatprep.subr.mxu0 0.0
      %5551 = vmatpush1.msra.mxu0 %v5442
      %5552 = vmatprep.subr.mxu0 0.0
      %5553 = vmatpush2.msra.mxu0 0.0
      %5554 = vmatprep.subr.mxu0 0.0
      %5555 = vmatpush2.msra.mxu0 0.0
      %5556 = vmatprep.subr.mxu0 0.0
      %5557 = vmatpush2.msra.mxu0 0.0
      %5558 = vmatprep.subr.mxu0 0.0
      %5559 = vmatpush2.msra.mxu0 0.0
      %5560 = vmatprep.subr.mxu0 0.0
      %5561 = vmatpush2.msra.mxu0 0.0
      %5562 = vmatprep.subr.mxu0 0.0
      %5563 = vmatpush2.msra.mxu0 0.0
      %5564 = vmatprep.subr.mxu0 0.0
      %5565 = vmatpush2.msra.mxu0 0.0
      %5566 = vmatprep.subr.mxu0 0.0
      %5567 = vmatpush2.msra.mxu0 0.0
      %5568 = vmatprep.subr.mxu0 0.0
      %5569 = vmatpush2.msra.mxu0 0.0
      %5570 = vmatprep.subr.mxu0 0.0
      %5571 = vmatpush2.msra.mxu0 0.0
      %5572 = vmatprep.subr.mxu0 0.0
      %5573 = vmatpush2.msra.mxu0 0.0
      %5574 = vmatprep.subr.mxu0 0.0
      %5575 = vmatpush2.msra.mxu0 0.0
      %5576 = vmatprep.subr.mxu0 0.0
      %5577 = vmatpush2.msra.mxu0 0.0
      %5578 = vmatprep.subr.mxu0 0.0
      %5579 = vmatpush2.msra.mxu0 0.0
      %5580 = vmatprep.subr.mxu0 0.0
      %5581 = vmatpush2.msra.mxu0 0.0
      %5582 = vmatprep.subr.mxu0 0.0
      %5583 = vmatpush2.msra.mxu0 0.0
      %5584 = vmatprep.mubr.f32.mxu0 0.0
      %5585 = vmatmul.mubr.f32.gmra.mxu0 %v5447
      %v5586 = vpop.f32.mrf.mxu0
      %v5587 = vadd.f32 0.0, %v5586
      %v5588 = vpop.f32.mrf.mxu0
      %5589 = vdwg.mxu0
      %v5590 = vadd.f32 %v5427, %v5516
      %v5591 = vadd.f32 %v5428, %v5518
      %v5592 = vadd.f32 %v5429, %v5587
      %s5593 = scalar_lea.vmem %s9, 16
      %v5594 = vld [vmem:[%s5593] sm:$0xf]
      %v5596 = vsel %vm467, %v5594, 0
      %5598 = vmatprep.subr.mxu0 0.0
      %5599 = vmatpush1.msra.mxu0 0.0
      %5600 = vmatprep.subr.mxu0 0.0
      %5601 = vmatpush1.msra.mxu0 0.0
      %5602 = vmatprep.subr.mxu0 0.0
      %5603 = vmatpush1.msra.mxu0 0.0
      %5604 = vmatprep.subr.mxu0 0.0
      %5605 = vmatpush1.msra.mxu0 0.0
      %5606 = vmatprep.subr.mxu0 0.0
      %5607 = vmatpush1.msra.mxu0 0.0
      %5608 = vmatprep.subr.mxu0 0.0
      %5609 = vmatpush1.msra.mxu0 0.0
      %5610 = vmatprep.subr.mxu0 0.0
      %5611 = vmatpush1.msra.mxu0 0.0
      %5612 = vmatprep.subr.mxu0 0.0
      %5613 = vmatpush1.msra.mxu0 0.0
      %5614 = vmatprep.subr.mxu0 0.0
      %5615 = vmatpush1.msra.mxu0 0.0
      %5616 = vmatprep.subr.mxu0 0.0
      %5617 = vmatpush1.msra.mxu0 0.0
      %5618 = vmatprep.subr.mxu0 0.0
      %5619 = vmatpush1.msra.mxu0 0.0
      %5620 = vmatprep.subr.mxu0 0.0
      %5621 = vmatpush1.msra.mxu0 0.0
      %5622 = vmatprep.subr.mxu0 0.0
      %5623 = vmatpush1.msra.mxu0 0.0
      %5624 = vmatprep.subr.mxu0 0.0
      %5625 = vmatpush1.msra.mxu0 0.0
      %5626 = vmatprep.subr.mxu0 0.0
      %5627 = vmatpush1.msra.mxu0 0.0
      %5628 = vmatprep.subr.mxu0 %v4936
      %5629 = vmatpush1.msra.mxu0 %v4935
      %5630 = vmatprep.subr.mxu0 0.0
      %5631 = vmatpush2.msra.mxu0 0.0
      %5632 = vmatprep.subr.mxu0 0.0
      %5633 = vmatpush2.msra.mxu0 0.0
      %5634 = vmatprep.subr.mxu0 0.0
      %5635 = vmatpush2.msra.mxu0 0.0
      %5636 = vmatprep.subr.mxu0 0.0
      %5637 = vmatpush2.msra.mxu0 0.0
      %5638 = vmatprep.subr.mxu0 0.0
      %5639 = vmatpush2.msra.mxu0 0.0
      %5640 = vmatprep.subr.mxu0 0.0
      %5641 = vmatpush2.msra.mxu0 0.0
      %5642 = vmatprep.subr.mxu0 0.0
      %5643 = vmatpush2.msra.mxu0 0.0
      %5644 = vmatprep.subr.mxu0 0.0
      %5645 = vmatpush2.msra.mxu0 0.0
      %5646 = vmatprep.subr.mxu0 0.0
      %5647 = vmatpush2.msra.mxu0 0.0
      %5648 = vmatprep.subr.mxu0 0.0
      %5649 = vmatpush2.msra.mxu0 0.0
      %5650 = vmatprep.subr.mxu0 0.0
      %5651 = vmatpush2.msra.mxu0 0.0
      %5652 = vmatprep.subr.mxu0 0.0
      %5653 = vmatpush2.msra.mxu0 0.0
      %5654 = vmatprep.subr.mxu0 0.0
      %5655 = vmatpush2.msra.mxu0 0.0
      %5656 = vmatprep.subr.mxu0 0.0
      %5657 = vmatpush2.msra.mxu0 0.0
      %5658 = vmatprep.subr.mxu0 0.0
      %5659 = vmatpush2.msra.mxu0 0.0
      %5660 = vmatprep.subr.mxu0 0.0
      %5661 = vmatpush2.msra.mxu0 0.0
      %5662 = vmatprep.mubr.f32.mxu0 0.0
      %5663 = vmatmul.mubr.f32.gmra.mxu0 %v5596
      %v5664 = vpop.f32.mrf.mxu0
      %v5665 = vadd.f32 0.0, %v5664
      %v5666 = vpop.f32.mrf.mxu0
      %v5667 = vadd.f32 0.0, %v5666
      %5668 = vdwg.mxu0
      %5669 = vmatprep.subr.mxu0 0.0
      %5670 = vmatpush1.msra.mxu0 0.0
      %5671 = vmatprep.subr.mxu0 0.0
      %5672 = vmatpush1.msra.mxu0 0.0
      %5673 = vmatprep.subr.mxu0 0.0
      %5674 = vmatpush1.msra.mxu0 0.0
      %5675 = vmatprep.subr.mxu0 0.0
      %5676 = vmatpush1.msra.mxu0 0.0
      %5677 = vmatprep.subr.mxu0 0.0
      %5678 = vmatpush1.msra.mxu0 0.0
      %5679 = vmatprep.subr.mxu0 0.0
      %5680 = vmatpush1.msra.mxu0 0.0
      %5681 = vmatprep.subr.mxu0 0.0
      %5682 = vmatpush1.msra.mxu0 0.0
      %5683 = vmatprep.subr.mxu0 0.0
      %5684 = vmatpush1.msra.mxu0 0.0
      %5685 = vmatprep.subr.mxu0 0.0
      %5686 = vmatpush1.msra.mxu0 0.0
      %5687 = vmatprep.subr.mxu0 0.0
      %5688 = vmatpush1.msra.mxu0 0.0
      %5689 = vmatprep.subr.mxu0 0.0
      %5690 = vmatpush1.msra.mxu0 0.0
      %5691 = vmatprep.subr.mxu0 0.0
      %5692 = vmatpush1.msra.mxu0 0.0
      %5693 = vmatprep.subr.mxu0 0.0
      %5694 = vmatpush1.msra.mxu0 0.0
      %5695 = vmatprep.subr.mxu0 0.0
      %5696 = vmatpush1.msra.mxu0 0.0
      %5697 = vmatprep.subr.mxu0 0.0
      %5698 = vmatpush1.msra.mxu0 0.0
      %5699 = vmatprep.subr.mxu0 0.0
      %5700 = vmatpush1.msra.mxu0 %v4937
      %5701 = vmatprep.subr.mxu0 0.0
      %5702 = vmatpush2.msra.mxu0 0.0
      %5703 = vmatprep.subr.mxu0 0.0
      %5704 = vmatpush2.msra.mxu0 0.0
      %5705 = vmatprep.subr.mxu0 0.0
      %5706 = vmatpush2.msra.mxu0 0.0
      %5707 = vmatprep.subr.mxu0 0.0
      %5708 = vmatpush2.msra.mxu0 0.0
      %5709 = vmatprep.subr.mxu0 0.0
      %5710 = vmatpush2.msra.mxu0 0.0
      %5711 = vmatprep.subr.mxu0 0.0
      %5712 = vmatpush2.msra.mxu0 0.0
      %5713 = vmatprep.subr.mxu0 0.0
      %5714 = vmatpush2.msra.mxu0 0.0
      %5715 = vmatprep.subr.mxu0 0.0
      %5716 = vmatpush2.msra.mxu0 0.0
      %5717 = vmatprep.subr.mxu0 0.0
      %5718 = vmatpush2.msra.mxu0 0.0
      %5719 = vmatprep.subr.mxu0 0.0
      %5720 = vmatpush2.msra.mxu0 0.0
      %5721 = vmatprep.subr.mxu0 0.0
      %5722 = vmatpush2.msra.mxu0 0.0
      %5723 = vmatprep.subr.mxu0 0.0
      %5724 = vmatpush2.msra.mxu0 0.0
      %5725 = vmatprep.subr.mxu0 0.0
      %5726 = vmatpush2.msra.mxu0 0.0
      %5727 = vmatprep.subr.mxu0 0.0
      %5728 = vmatpush2.msra.mxu0 0.0
      %5729 = vmatprep.subr.mxu0 0.0
      %5730 = vmatpush2.msra.mxu0 0.0
      %5731 = vmatprep.subr.mxu0 0.0
      %5732 = vmatpush2.msra.mxu0 0.0
      %5733 = vmatprep.mubr.f32.mxu0 0.0
      %5734 = vmatmul.mubr.f32.gmra.mxu0 %v5596
      %v5735 = vpop.f32.mrf.mxu0
      %v5736 = vadd.f32 0.0, %v5735
      %v5737 = vpop.f32.mrf.mxu0
      %5738 = vdwg.mxu0
      %v5739 = vadd.f32 %v5590, %v5665
      %v5740 = vadd.f32 %v5591, %v5667
      %v5741 = vadd.f32 %v5592, %v5736
      %s5742 = scalar_lea.vmem %s9, 20
      %v5743 = vld [vmem:[%s5742] sm:$0xf]
      %5744 = vrot.lane.b32.xlu0 %v4935, 127
      %v5745 = vpop.permute.xlu0 %5744
      %5746 = vrot.lane.b32.xlu0 %v4936, 127
      %v5747 = vpop.permute.xlu0 %5746
      %5748 = vrot.lane.b32.xlu0 %v4937, 127
      %v5749 = vpop.permute.xlu0 %5748
      %v5750 = vsel %vm1264, %v5745, %v5747
      %v5751 = vsel %vm1264, %v5747, %v5749
      %v5756 = vsel %vm467, %v5743, 0
      %5758 = vmatprep.subr.mxu0 0.0
      %5759 = vmatpush1.msra.mxu0 0.0
      %5760 = vmatprep.subr.mxu0 0.0
      %5761 = vmatpush1.msra.mxu0 0.0
      %5762 = vmatprep.subr.mxu0 0.0
      %5763 = vmatpush1.msra.mxu0 0.0
      %5764 = vmatprep.subr.mxu0 0.0
      %5765 = vmatpush1.msra.mxu0 0.0
      %5766 = vmatprep.subr.mxu0 0.0
      %5767 = vmatpush1.msra.mxu0 0.0
      %5768 = vmatprep.subr.mxu0 0.0
      %5769 = vmatpush1.msra.mxu0 0.0
      %5770 = vmatprep.subr.mxu0 0.0
      %5771 = vmatpush1.msra.mxu0 0.0
      %5772 = vmatprep.subr.mxu0 0.0
      %5773 = vmatpush1.msra.mxu0 0.0
      %5774 = vmatprep.subr.mxu0 0.0
      %5775 = vmatpush1.msra.mxu0 0.0
      %5776 = vmatprep.subr.mxu0 0.0
      %5777 = vmatpush1.msra.mxu0 0.0
      %5778 = vmatprep.subr.mxu0 0.0
      %5779 = vmatpush1.msra.mxu0 0.0
      %5780 = vmatprep.subr.mxu0 0.0
      %5781 = vmatpush1.msra.mxu0 0.0
      %5782 = vmatprep.subr.mxu0 0.0
      %5783 = vmatpush1.msra.mxu0 0.0
      %5784 = vmatprep.subr.mxu0 0.0
      %5785 = vmatpush1.msra.mxu0 0.0
      %5786 = vmatprep.subr.mxu0 0.0
      %5787 = vmatpush1.msra.mxu0 0.0
      %5788 = vmatprep.subr.mxu0 %v5751
      %5789 = vmatpush1.msra.mxu0 %v5750
      %5790 = vmatprep.subr.mxu0 0.0
      %5791 = vmatpush2.msra.mxu0 0.0
      %5792 = vmatprep.subr.mxu0 0.0
      %5793 = vmatpush2.msra.mxu0 0.0
      %5794 = vmatprep.subr.mxu0 0.0
      %5795 = vmatpush2.msra.mxu0 0.0
      %5796 = vmatprep.subr.mxu0 0.0
      %5797 = vmatpush2.msra.mxu0 0.0
      %5798 = vmatprep.subr.mxu0 0.0
      %5799 = vmatpush2.msra.mxu0 0.0
      %5800 = vmatprep.subr.mxu0 0.0
      %5801 = vmatpush2.msra.mxu0 0.0
      %5802 = vmatprep.subr.mxu0 0.0
      %5803 = vmatpush2.msra.mxu0 0.0
      %5804 = vmatprep.subr.mxu0 0.0
      %5805 = vmatpush2.msra.mxu0 0.0
      %5806 = vmatprep.subr.mxu0 0.0
      %5807 = vmatpush2.msra.mxu0 0.0
      %5808 = vmatprep.subr.mxu0 0.0
      %5809 = vmatpush2.msra.mxu0 0.0
      %5810 = vmatprep.subr.mxu0 0.0
      %5811 = vmatpush2.msra.mxu0 0.0
      %5812 = vmatprep.subr.mxu0 0.0
      %5813 = vmatpush2.msra.mxu0 0.0
      %5814 = vmatprep.subr.mxu0 0.0
      %5815 = vmatpush2.msra.mxu0 0.0
      %5816 = vmatprep.subr.mxu0 0.0
      %5817 = vmatpush2.msra.mxu0 0.0
      %5818 = vmatprep.subr.mxu0 0.0
      %5819 = vmatpush2.msra.mxu0 0.0
      %5820 = vmatprep.subr.mxu0 0.0
      %5821 = vmatpush2.msra.mxu0 0.0
      %5822 = vmatprep.mubr.f32.mxu0 0.0
      %5823 = vmatmul.mubr.f32.gmra.mxu0 %v5756
      %v5824 = vpop.f32.mrf.mxu0
      %v5825 = vadd.f32 0.0, %v5824
      %v5826 = vpop.f32.mrf.mxu0
      %v5827 = vadd.f32 0.0, %v5826
      %5828 = vdwg.mxu0
      %5829 = vmatprep.subr.mxu0 0.0
      %5830 = vmatpush1.msra.mxu0 0.0
      %5831 = vmatprep.subr.mxu0 0.0
      %5832 = vmatpush1.msra.mxu0 0.0
      %5833 = vmatprep.subr.mxu0 0.0
      %5834 = vmatpush1.msra.mxu0 0.0
      %5835 = vmatprep.subr.mxu0 0.0
      %5836 = vmatpush1.msra.mxu0 0.0
      %5837 = vmatprep.subr.mxu0 0.0
      %5838 = vmatpush1.msra.mxu0 0.0
      %5839 = vmatprep.subr.mxu0 0.0
      %5840 = vmatpush1.msra.mxu0 0.0
      %5841 = vmatprep.subr.mxu0 0.0
      %5842 = vmatpush1.msra.mxu0 0.0
      %5843 = vmatprep.subr.mxu0 0.0
      %5844 = vmatpush1.msra.mxu0 0.0
      %5845 = vmatprep.subr.mxu0 0.0
      %5846 = vmatpush1.msra.mxu0 0.0
      %5847 = vmatprep.subr.mxu0 0.0
      %5848 = vmatpush1.msra.mxu0 0.0
      %5849 = vmatprep.subr.mxu0 0.0
      %5850 = vmatpush1.msra.mxu0 0.0
      %5851 = vmatprep.subr.mxu0 0.0
      %5852 = vmatpush1.msra.mxu0 0.0
      %5853 = vmatprep.subr.mxu0 0.0
      %5854 = vmatpush1.msra.mxu0 0.0
      %5855 = vmatprep.subr.mxu0 0.0
      %5856 = vmatpush1.msra.mxu0 0.0
      %5857 = vmatprep.subr.mxu0 0.0
      %5858 = vmatpush1.msra.mxu0 0.0
      %5859 = vmatprep.subr.mxu0 0.0
      %5860 = vmatpush1.msra.mxu0 %v5749
      %5861 = vmatprep.subr.mxu0 0.0
      %5862 = vmatpush2.msra.mxu0 0.0
      %5863 = vmatprep.subr.mxu0 0.0
      %5864 = vmatpush2.msra.mxu0 0.0
      %5865 = vmatprep.subr.mxu0 0.0
      %5866 = vmatpush2.msra.mxu0 0.0
      %5867 = vmatprep.subr.mxu0 0.0
      %5868 = vmatpush2.msra.mxu0 0.0
      %5869 = vmatprep.subr.mxu0 0.0
      %5870 = vmatpush2.msra.mxu0 0.0
      %5871 = vmatprep.subr.mxu0 0.0
      %5872 = vmatpush2.msra.mxu0 0.0
      %5873 = vmatprep.subr.mxu0 0.0
      %5874 = vmatpush2.msra.mxu0 0.0
      %5875 = vmatprep.subr.mxu0 0.0
      %5876 = vmatpush2.msra.mxu0 0.0
      %5877 = vmatprep.subr.mxu0 0.0
      %5878 = vmatpush2.msra.mxu0 0.0
      %5879 = vmatprep.subr.mxu0 0.0
      %5880 = vmatpush2.msra.mxu0 0.0
      %5881 = vmatprep.subr.mxu0 0.0
      %5882 = vmatpush2.msra.mxu0 0.0
      %5883 = vmatprep.subr.mxu0 0.0
      %5884 = vmatpush2.msra.mxu0 0.0
      %5885 = vmatprep.subr.mxu0 0.0
      %5886 = vmatpush2.msra.mxu0 0.0
      %5887 = vmatprep.subr.mxu0 0.0
      %5888 = vmatpush2.msra.mxu0 0.0
      %5889 = vmatprep.subr.mxu0 0.0
      %5890 = vmatpush2.msra.mxu0 0.0
      %5891 = vmatprep.subr.mxu0 0.0
      %5892 = vmatpush2.msra.mxu0 0.0
      %5893 = vmatprep.mubr.f32.mxu0 0.0
      %5894 = vmatmul.mubr.f32.gmra.mxu0 %v5756
      %v5895 = vpop.f32.mrf.mxu0
      %v5896 = vadd.f32 0.0, %v5895
      %v5897 = vpop.f32.mrf.mxu0
      %5898 = vdwg.mxu0
      %v5899 = vadd.f32 %v5739, %v5825
      %v5900 = vadd.f32 %v5740, %v5827
      %v5901 = vadd.f32 %v5741, %v5896
      %s5902 = scalar_lea.vmem %s9, 24
      %v5903 = vld [vmem:[%s5902] sm:$0xf]
      %5904 = vrot.lane.b32.xlu0 %v4935, 111
      %v5905 = vpop.permute.xlu0 %5904
      %5906 = vrot.lane.b32.xlu0 %v4936, 111
      %v5907 = vpop.permute.xlu0 %5906
      %5908 = vrot.lane.b32.xlu0 %v4937, 111
      %v5909 = vpop.permute.xlu0 %5908
      %v5910 = vsel %vm1425, %v5905, %v5907
      %v5911 = vsel %vm1425, %v5907, %v5909
      %v5916 = vsel %vm467, %v5903, 0
      %5918 = vmatprep.subr.mxu0 0.0
      %5919 = vmatpush1.msra.mxu0 0.0
      %5920 = vmatprep.subr.mxu0 0.0
      %5921 = vmatpush1.msra.mxu0 0.0
      %5922 = vmatprep.subr.mxu0 0.0
      %5923 = vmatpush1.msra.mxu0 0.0
      %5924 = vmatprep.subr.mxu0 0.0
      %5925 = vmatpush1.msra.mxu0 0.0
      %5926 = vmatprep.subr.mxu0 0.0
      %5927 = vmatpush1.msra.mxu0 0.0
      %5928 = vmatprep.subr.mxu0 0.0
      %5929 = vmatpush1.msra.mxu0 0.0
      %5930 = vmatprep.subr.mxu0 0.0
      %5931 = vmatpush1.msra.mxu0 0.0
      %5932 = vmatprep.subr.mxu0 0.0
      %5933 = vmatpush1.msra.mxu0 0.0
      %5934 = vmatprep.subr.mxu0 0.0
      %5935 = vmatpush1.msra.mxu0 0.0
      %5936 = vmatprep.subr.mxu0 0.0
      %5937 = vmatpush1.msra.mxu0 0.0
      %5938 = vmatprep.subr.mxu0 0.0
      %5939 = vmatpush1.msra.mxu0 0.0
      %5940 = vmatprep.subr.mxu0 0.0
      %5941 = vmatpush1.msra.mxu0 0.0
      %5942 = vmatprep.subr.mxu0 0.0
      %5943 = vmatpush1.msra.mxu0 0.0
      %5944 = vmatprep.subr.mxu0 0.0
      %5945 = vmatpush1.msra.mxu0 0.0
      %5946 = vmatprep.subr.mxu0 0.0
      %5947 = vmatpush1.msra.mxu0 0.0
      %5948 = vmatprep.subr.mxu0 %v5911
      %5949 = vmatpush1.msra.mxu0 %v5910
      %5950 = vmatprep.subr.mxu0 0.0
      %5951 = vmatpush2.msra.mxu0 0.0
      %5952 = vmatprep.subr.mxu0 0.0
      %5953 = vmatpush2.msra.mxu0 0.0
      %5954 = vmatprep.subr.mxu0 0.0
      %5955 = vmatpush2.msra.mxu0 0.0
      %5956 = vmatprep.subr.mxu0 0.0
      %5957 = vmatpush2.msra.mxu0 0.0
      %5958 = vmatprep.subr.mxu0 0.0
      %5959 = vmatpush2.msra.mxu0 0.0
      %5960 = vmatprep.subr.mxu0 0.0
      %5961 = vmatpush2.msra.mxu0 0.0
      %5962 = vmatprep.subr.mxu0 0.0
      %5963 = vmatpush2.msra.mxu0 0.0
      %5964 = vmatprep.subr.mxu0 0.0
      %5965 = vmatpush2.msra.mxu0 0.0
      %5966 = vmatprep.subr.mxu0 0.0
      %5967 = vmatpush2.msra.mxu0 0.0
      %5968 = vmatprep.subr.mxu0 0.0
      %5969 = vmatpush2.msra.mxu0 0.0
      %5970 = vmatprep.subr.mxu0 0.0
      %5971 = vmatpush2.msra.mxu0 0.0
      %5972 = vmatprep.subr.mxu0 0.0
      %5973 = vmatpush2.msra.mxu0 0.0
      %5974 = vmatprep.subr.mxu0 0.0
      %5975 = vmatpush2.msra.mxu0 0.0
      %5976 = vmatprep.subr.mxu0 0.0
      %5977 = vmatpush2.msra.mxu0 0.0
      %5978 = vmatprep.subr.mxu0 0.0
      %5979 = vmatpush2.msra.mxu0 0.0
      %5980 = vmatprep.subr.mxu0 0.0
      %5981 = vmatpush2.msra.mxu0 0.0
      %5982 = vmatprep.mubr.f32.mxu0 0.0
      %5983 = vmatmul.mubr.f32.gmra.mxu0 %v5916
      %v5984 = vpop.f32.mrf.mxu0
      %v5985 = vadd.f32 0.0, %v5984
      %v5986 = vpop.f32.mrf.mxu0
      %v5987 = vadd.f32 0.0, %v5986
      %5988 = vdwg.mxu0
      %5989 = vmatprep.subr.mxu0 0.0
      %5990 = vmatpush1.msra.mxu0 0.0
      %5991 = vmatprep.subr.mxu0 0.0
      %5992 = vmatpush1.msra.mxu0 0.0
      %5993 = vmatprep.subr.mxu0 0.0
      %5994 = vmatpush1.msra.mxu0 0.0
      %5995 = vmatprep.subr.mxu0 0.0
      %5996 = vmatpush1.msra.mxu0 0.0
      %5997 = vmatprep.subr.mxu0 0.0
      %5998 = vmatpush1.msra.mxu0 0.0
      %5999 = vmatprep.subr.mxu0 0.0
      %6000 = vmatpush1.msra.mxu0 0.0
      %6001 = vmatprep.subr.mxu0 0.0
      %6002 = vmatpush1.msra.mxu0 0.0
      %6003 = vmatprep.subr.mxu0 0.0
      %6004 = vmatpush1.msra.mxu0 0.0
      %6005 = vmatprep.subr.mxu0 0.0
      %6006 = vmatpush1.msra.mxu0 0.0
      %6007 = vmatprep.subr.mxu0 0.0
      %6008 = vmatpush1.msra.mxu0 0.0
      %6009 = vmatprep.subr.mxu0 0.0
      %6010 = vmatpush1.msra.mxu0 0.0
      %6011 = vmatprep.subr.mxu0 0.0
      %6012 = vmatpush1.msra.mxu0 0.0
      %6013 = vmatprep.subr.mxu0 0.0
      %6014 = vmatpush1.msra.mxu0 0.0
      %6015 = vmatprep.subr.mxu0 0.0
      %6016 = vmatpush1.msra.mxu0 0.0
      %6017 = vmatprep.subr.mxu0 0.0
      %6018 = vmatpush1.msra.mxu0 0.0
      %6019 = vmatprep.subr.mxu0 0.0
      %6020 = vmatpush1.msra.mxu0 %v5909
      %6021 = vmatprep.subr.mxu0 0.0
      %6022 = vmatpush2.msra.mxu0 0.0
      %6023 = vmatprep.subr.mxu0 0.0
      %6024 = vmatpush2.msra.mxu0 0.0
      %6025 = vmatprep.subr.mxu0 0.0
      %6026 = vmatpush2.msra.mxu0 0.0
      %6027 = vmatprep.subr.mxu0 0.0
      %6028 = vmatpush2.msra.mxu0 0.0
      %6029 = vmatprep.subr.mxu0 0.0
      %6030 = vmatpush2.msra.mxu0 0.0
      %6031 = vmatprep.subr.mxu0 0.0
      %6032 = vmatpush2.msra.mxu0 0.0
      %6033 = vmatprep.subr.mxu0 0.0
      %6034 = vmatpush2.msra.mxu0 0.0
      %6035 = vmatprep.subr.mxu0 0.0
      %6036 = vmatpush2.msra.mxu0 0.0
      %6037 = vmatprep.subr.mxu0 0.0
      %6038 = vmatpush2.msra.mxu0 0.0
      %6039 = vmatprep.subr.mxu0 0.0
      %6040 = vmatpush2.msra.mxu0 0.0
      %6041 = vmatprep.subr.mxu0 0.0
      %6042 = vmatpush2.msra.mxu0 0.0
      %6043 = vmatprep.subr.mxu0 0.0
      %6044 = vmatpush2.msra.mxu0 0.0
      %6045 = vmatprep.subr.mxu0 0.0
      %6046 = vmatpush2.msra.mxu0 0.0
      %6047 = vmatprep.subr.mxu0 0.0
      %6048 = vmatpush2.msra.mxu0 0.0
      %6049 = vmatprep.subr.mxu0 0.0
      %6050 = vmatpush2.msra.mxu0 0.0
      %6051 = vmatprep.subr.mxu0 0.0
      %6052 = vmatpush2.msra.mxu0 0.0
      %6053 = vmatprep.mubr.f32.mxu0 0.0
      %6054 = vmatmul.mubr.f32.gmra.mxu0 %v5916
      %v6055 = vpop.f32.mrf.mxu0
      %v6056 = vadd.f32 0.0, %v6055
      %v6057 = vpop.f32.mrf.mxu0
      %6058 = vdwg.mxu0
      %v6059 = vadd.f32 %v5899, %v5985
      %v6060 = vadd.f32 %v5900, %v5987
      %v6061 = vadd.f32 %v5901, %v6056
      %s6062 = scalar_lea.vmem %s9, 28
      %v6063 = vld [vmem:[%s6062] sm:$0xf]
      %6064 = vrot.lane.b32.xlu0 %v4935, 110
      %v6065 = vpop.permute.xlu0 %6064
      %6066 = vrot.lane.b32.xlu0 %v4936, 110
      %v6067 = vpop.permute.xlu0 %6066
      %6068 = vrot.lane.b32.xlu0 %v4937, 110
      %v6069 = vpop.permute.xlu0 %6068
      %v6070 = vsel %vm1586, %v6065, %v6067
      %v6071 = vsel %vm1586, %v6067, %v6069
      %v6076 = vsel %vm467, %v6063, 0
      %6078 = vmatprep.subr.mxu0 0.0
      %6079 = vmatpush1.msra.mxu0 0.0
      %6080 = vmatprep.subr.mxu0 0.0
      %6081 = vmatpush1.msra.mxu0 0.0
      %6082 = vmatprep.subr.mxu0 0.0
      %6083 = vmatpush1.msra.mxu0 0.0
      %6084 = vmatprep.subr.mxu0 0.0
      %6085 = vmatpush1.msra.mxu0 0.0
      %6086 = vmatprep.subr.mxu0 0.0
      %6087 = vmatpush1.msra.mxu0 0.0
      %6088 = vmatprep.subr.mxu0 0.0
      %6089 = vmatpush1.msra.mxu0 0.0
      %6090 = vmatprep.subr.mxu0 0.0
      %6091 = vmatpush1.msra.mxu0 0.0
      %6092 = vmatprep.subr.mxu0 0.0
      %6093 = vmatpush1.msra.mxu0 0.0
      %6094 = vmatprep.subr.mxu0 0.0
      %6095 = vmatpush1.msra.mxu0 0.0
      %6096 = vmatprep.subr.mxu0 0.0
      %6097 = vmatpush1.msra.mxu0 0.0
      %6098 = vmatprep.subr.mxu0 0.0
      %6099 = vmatpush1.msra.mxu0 0.0
      %6100 = vmatprep.subr.mxu0 0.0
      %6101 = vmatpush1.msra.mxu0 0.0
      %6102 = vmatprep.subr.mxu0 0.0
      %6103 = vmatpush1.msra.mxu0 0.0
      %6104 = vmatprep.subr.mxu0 0.0
      %6105 = vmatpush1.msra.mxu0 0.0
      %6106 = vmatprep.subr.mxu0 0.0
      %6107 = vmatpush1.msra.mxu0 0.0
      %6108 = vmatprep.subr.mxu0 %v6071
      %6109 = vmatpush1.msra.mxu0 %v6070
      %6110 = vmatprep.subr.mxu0 0.0
      %6111 = vmatpush2.msra.mxu0 0.0
      %6112 = vmatprep.subr.mxu0 0.0
      %6113 = vmatpush2.msra.mxu0 0.0
      %6114 = vmatprep.subr.mxu0 0.0
      %6115 = vmatpush2.msra.mxu0 0.0
      %6116 = vmatprep.subr.mxu0 0.0
      %6117 = vmatpush2.msra.mxu0 0.0
      %6118 = vmatprep.subr.mxu0 0.0
      %6119 = vmatpush2.msra.mxu0 0.0
      %6120 = vmatprep.subr.mxu0 0.0
      %6121 = vmatpush2.msra.mxu0 0.0
      %6122 = vmatprep.subr.mxu0 0.0
      %6123 = vmatpush2.msra.mxu0 0.0
      %6124 = vmatprep.subr.mxu0 0.0
      %6125 = vmatpush2.msra.mxu0 0.0
      %6126 = vmatprep.subr.mxu0 0.0
      %6127 = vmatpush2.msra.mxu0 0.0
      %6128 = vmatprep.subr.mxu0 0.0
      %6129 = vmatpush2.msra.mxu0 0.0
      %6130 = vmatprep.subr.mxu0 0.0
      %6131 = vmatpush2.msra.mxu0 0.0
      %6132 = vmatprep.subr.mxu0 0.0
      %6133 = vmatpush2.msra.mxu0 0.0
      %6134 = vmatprep.subr.mxu0 0.0
      %6135 = vmatpush2.msra.mxu0 0.0
      %6136 = vmatprep.subr.mxu0 0.0
      %6137 = vmatpush2.msra.mxu0 0.0
      %6138 = vmatprep.subr.mxu0 0.0
      %6139 = vmatpush2.msra.mxu0 0.0
      %6140 = vmatprep.subr.mxu0 0.0
      %6141 = vmatpush2.msra.mxu0 0.0
      %6142 = vmatprep.mubr.f32.mxu0 0.0
      %6143 = vmatmul.mubr.f32.gmra.mxu0 %v6076
      %v6144 = vpop.f32.mrf.mxu0
      %v6145 = vadd.f32 0.0, %v6144
      %v6146 = vpop.f32.mrf.mxu0
      %v6147 = vadd.f32 0.0, %v6146
      %6148 = vdwg.mxu0
      %6149 = vmatprep.subr.mxu0 0.0
      %6150 = vmatpush1.msra.mxu0 0.0
      %6151 = vmatprep.subr.mxu0 0.0
      %6152 = vmatpush1.msra.mxu0 0.0
      %6153 = vmatprep.subr.mxu0 0.0
      %6154 = vmatpush1.msra.mxu0 0.0
      %6155 = vmatprep.subr.mxu0 0.0
      %6156 = vmatpush1.msra.mxu0 0.0
      %6157 = vmatprep.subr.mxu0 0.0
      %6158 = vmatpush1.msra.mxu0 0.0
      %6159 = vmatprep.subr.mxu0 0.0
      %6160 = vmatpush1.msra.mxu0 0.0
      %6161 = vmatprep.subr.mxu0 0.0
      %6162 = vmatpush1.msra.mxu0 0.0
      %6163 = vmatprep.subr.mxu0 0.0
      %6164 = vmatpush1.msra.mxu0 0.0
      %6165 = vmatprep.subr.mxu0 0.0
      %6166 = vmatpush1.msra.mxu0 0.0
      %6167 = vmatprep.subr.mxu0 0.0
      %6168 = vmatpush1.msra.mxu0 0.0
      %6169 = vmatprep.subr.mxu0 0.0
      %6170 = vmatpush1.msra.mxu0 0.0
      %6171 = vmatprep.subr.mxu0 0.0
      %6172 = vmatpush1.msra.mxu0 0.0
      %6173 = vmatprep.subr.mxu0 0.0
      %6174 = vmatpush1.msra.mxu0 0.0
      %6175 = vmatprep.subr.mxu0 0.0
      %6176 = vmatpush1.msra.mxu0 0.0
      %6177 = vmatprep.subr.mxu0 0.0
      %6178 = vmatpush1.msra.mxu0 0.0
      %6179 = vmatprep.subr.mxu0 0.0
      %6180 = vmatpush1.msra.mxu0 %v6069
      %6181 = vmatprep.subr.mxu0 0.0
      %6182 = vmatpush2.msra.mxu0 0.0
      %6183 = vmatprep.subr.mxu0 0.0
      %6184 = vmatpush2.msra.mxu0 0.0
      %6185 = vmatprep.subr.mxu0 0.0
      %6186 = vmatpush2.msra.mxu0 0.0
      %6187 = vmatprep.subr.mxu0 0.0
      %6188 = vmatpush2.msra.mxu0 0.0
      %6189 = vmatprep.subr.mxu0 0.0
      %6190 = vmatpush2.msra.mxu0 0.0
      %6191 = vmatprep.subr.mxu0 0.0
      %6192 = vmatpush2.msra.mxu0 0.0
      %6193 = vmatprep.subr.mxu0 0.0
      %6194 = vmatpush2.msra.mxu0 0.0
      %6195 = vmatprep.subr.mxu0 0.0
      %6196 = vmatpush2.msra.mxu0 0.0
      %6197 = vmatprep.subr.mxu0 0.0
      %6198 = vmatpush2.msra.mxu0 0.0
      %6199 = vmatprep.subr.mxu0 0.0
      %6200 = vmatpush2.msra.mxu0 0.0
      %6201 = vmatprep.subr.mxu0 0.0
      %6202 = vmatpush2.msra.mxu0 0.0
      %6203 = vmatprep.subr.mxu0 0.0
      %6204 = vmatpush2.msra.mxu0 0.0
      %6205 = vmatprep.subr.mxu0 0.0
      %6206 = vmatpush2.msra.mxu0 0.0
      %6207 = vmatprep.subr.mxu0 0.0
      %6208 = vmatpush2.msra.mxu0 0.0
      %6209 = vmatprep.subr.mxu0 0.0
      %6210 = vmatpush2.msra.mxu0 0.0
      %6211 = vmatprep.subr.mxu0 0.0
      %6212 = vmatpush2.msra.mxu0 0.0
      %6213 = vmatprep.mubr.f32.mxu0 0.0
      %6214 = vmatmul.mubr.f32.gmra.mxu0 %v6076
      %v6215 = vpop.f32.mrf.mxu0
      %v6216 = vadd.f32 0.0, %v6215
      %v6217 = vpop.f32.mrf.mxu0
      %6218 = vdwg.mxu0
      %v6219 = vadd.f32 %v6059, %v6145
      %v6220 = vadd.f32 %v6060, %v6147
      %v6221 = vadd.f32 %v6061, %v6216
      %s6222 = scalar_lea.vmem %s9, 32
      %v6223 = vld [vmem:[%s6222] sm:$0xf]
      %6224 = vrot.lane.b32.xlu0 %v4935, 109
      %v6225 = vpop.permute.xlu0 %6224
      %6226 = vrot.lane.b32.xlu0 %v4936, 109
      %v6227 = vpop.permute.xlu0 %6226
      %6228 = vrot.lane.b32.xlu0 %v4937, 109
      %v6229 = vpop.permute.xlu0 %6228
      %v6230 = vsel %vm1747, %v6225, %v6227
      %v6231 = vsel %vm1747, %v6227, %v6229
      %v6236 = vsel %vm467, %v6223, 0
      %6238 = vmatprep.subr.mxu0 0.0
      %6239 = vmatpush1.msra.mxu0 0.0
      %6240 = vmatprep.subr.mxu0 0.0
      %6241 = vmatpush1.msra.mxu0 0.0
      %6242 = vmatprep.subr.mxu0 0.0
      %6243 = vmatpush1.msra.mxu0 0.0
      %6244 = vmatprep.subr.mxu0 0.0
      %6245 = vmatpush1.msra.mxu0 0.0
      %6246 = vmatprep.subr.mxu0 0.0
      %6247 = vmatpush1.msra.mxu0 0.0
      %6248 = vmatprep.subr.mxu0 0.0
      %6249 = vmatpush1.msra.mxu0 0.0
      %6250 = vmatprep.subr.mxu0 0.0
      %6251 = vmatpush1.msra.mxu0 0.0
      %6252 = vmatprep.subr.mxu0 0.0
      %6253 = vmatpush1.msra.mxu0 0.0
      %6254 = vmatprep.subr.mxu0 0.0
      %6255 = vmatpush1.msra.mxu0 0.0
      %6256 = vmatprep.subr.mxu0 0.0
      %6257 = vmatpush1.msra.mxu0 0.0
      %6258 = vmatprep.subr.mxu0 0.0
      %6259 = vmatpush1.msra.mxu0 0.0
      %6260 = vmatprep.subr.mxu0 0.0
      %6261 = vmatpush1.msra.mxu0 0.0
      %6262 = vmatprep.subr.mxu0 0.0
      %6263 = vmatpush1.msra.mxu0 0.0
      %6264 = vmatprep.subr.mxu0 0.0
      %6265 = vmatpush1.msra.mxu0 0.0
      %6266 = vmatprep.subr.mxu0 0.0
      %6267 = vmatpush1.msra.mxu0 0.0
      %6268 = vmatprep.subr.mxu0 %v6231
      %6269 = vmatpush1.msra.mxu0 %v6230
      %6270 = vmatprep.subr.mxu0 0.0
      %6271 = vmatpush2.msra.mxu0 0.0
      %6272 = vmatprep.subr.mxu0 0.0
      %6273 = vmatpush2.msra.mxu0 0.0
      %6274 = vmatprep.subr.mxu0 0.0
      %6275 = vmatpush2.msra.mxu0 0.0
      %6276 = vmatprep.subr.mxu0 0.0
      %6277 = vmatpush2.msra.mxu0 0.0
      %6278 = vmatprep.subr.mxu0 0.0
      %6279 = vmatpush2.msra.mxu0 0.0
      %6280 = vmatprep.subr.mxu0 0.0
      %6281 = vmatpush2.msra.mxu0 0.0
      %6282 = vmatprep.subr.mxu0 0.0
      %6283 = vmatpush2.msra.mxu0 0.0
      %6284 = vmatprep.subr.mxu0 0.0
      %6285 = vmatpush2.msra.mxu0 0.0
      %6286 = vmatprep.subr.mxu0 0.0
      %6287 = vmatpush2.msra.mxu0 0.0
      %6288 = vmatprep.subr.mxu0 0.0
      %6289 = vmatpush2.msra.mxu0 0.0
      %6290 = vmatprep.subr.mxu0 0.0
      %6291 = vmatpush2.msra.mxu0 0.0
      %6292 = vmatprep.subr.mxu0 0.0
      %6293 = vmatpush2.msra.mxu0 0.0
      %6294 = vmatprep.subr.mxu0 0.0
      %6295 = vmatpush2.msra.mxu0 0.0
      %6296 = vmatprep.subr.mxu0 0.0
      %6297 = vmatpush2.msra.mxu0 0.0
      %6298 = vmatprep.subr.mxu0 0.0
      %6299 = vmatpush2.msra.mxu0 0.0
      %6300 = vmatprep.subr.mxu0 0.0
      %6301 = vmatpush2.msra.mxu0 0.0
      %6302 = vmatprep.mubr.f32.mxu0 0.0
      %6303 = vmatmul.mubr.f32.gmra.mxu0 %v6236
      %v6304 = vpop.f32.mrf.mxu0
      %v6305 = vadd.f32 0.0, %v6304
      %v6306 = vpop.f32.mrf.mxu0
      %v6307 = vadd.f32 0.0, %v6306
      %6308 = vdwg.mxu0
      %6309 = vmatprep.subr.mxu0 0.0
      %6310 = vmatpush1.msra.mxu0 0.0
      %6311 = vmatprep.subr.mxu0 0.0
      %6312 = vmatpush1.msra.mxu0 0.0
      %6313 = vmatprep.subr.mxu0 0.0
      %6314 = vmatpush1.msra.mxu0 0.0
      %6315 = vmatprep.subr.mxu0 0.0
      %6316 = vmatpush1.msra.mxu0 0.0
      %6317 = vmatprep.subr.mxu0 0.0
      %6318 = vmatpush1.msra.mxu0 0.0
      %6319 = vmatprep.subr.mxu0 0.0
      %6320 = vmatpush1.msra.mxu0 0.0
      %6321 = vmatprep.subr.mxu0 0.0
      %6322 = vmatpush1.msra.mxu0 0.0
      %6323 = vmatprep.subr.mxu0 0.0
      %6324 = vmatpush1.msra.mxu0 0.0
      %6325 = vmatprep.subr.mxu0 0.0
      %6326 = vmatpush1.msra.mxu0 0.0
      %6327 = vmatprep.subr.mxu0 0.0
      %6328 = vmatpush1.msra.mxu0 0.0
      %6329 = vmatprep.subr.mxu0 0.0
      %6330 = vmatpush1.msra.mxu0 0.0
      %6331 = vmatprep.subr.mxu0 0.0
      %6332 = vmatpush1.msra.mxu0 0.0
      %6333 = vmatprep.subr.mxu0 0.0
      %6334 = vmatpush1.msra.mxu0 0.0
      %6335 = vmatprep.subr.mxu0 0.0
      %6336 = vmatpush1.msra.mxu0 0.0
      %6337 = vmatprep.subr.mxu0 0.0
      %6338 = vmatpush1.msra.mxu0 0.0
      %6339 = vmatprep.subr.mxu0 0.0
      %6340 = vmatpush1.msra.mxu0 %v6229
      %6341 = vmatprep.subr.mxu0 0.0
      %6342 = vmatpush2.msra.mxu0 0.0
      %6343 = vmatprep.subr.mxu0 0.0
      %6344 = vmatpush2.msra.mxu0 0.0
      %6345 = vmatprep.subr.mxu0 0.0
      %6346 = vmatpush2.msra.mxu0 0.0
      %6347 = vmatprep.subr.mxu0 0.0
      %6348 = vmatpush2.msra.mxu0 0.0
      %6349 = vmatprep.subr.mxu0 0.0
      %6350 = vmatpush2.msra.mxu0 0.0
      %6351 = vmatprep.subr.mxu0 0.0
      %6352 = vmatpush2.msra.mxu0 0.0
      %6353 = vmatprep.subr.mxu0 0.0
      %6354 = vmatpush2.msra.mxu0 0.0
      %6355 = vmatprep.subr.mxu0 0.0
      %6356 = vmatpush2.msra.mxu0 0.0
      %6357 = vmatprep.subr.mxu0 0.0
      %6358 = vmatpush2.msra.mxu0 0.0
      %6359 = vmatprep.subr.mxu0 0.0
      %6360 = vmatpush2.msra.mxu0 0.0
      %6361 = vmatprep.subr.mxu0 0.0
      %6362 = vmatpush2.msra.mxu0 0.0
      %6363 = vmatprep.subr.mxu0 0.0
      %6364 = vmatpush2.msra.mxu0 0.0
      %6365 = vmatprep.subr.mxu0 0.0
      %6366 = vmatpush2.msra.mxu0 0.0
      %6367 = vmatprep.subr.mxu0 0.0
      %6368 = vmatpush2.msra.mxu0 0.0
      %6369 = vmatprep.subr.mxu0 0.0
      %6370 = vmatpush2.msra.mxu0 0.0
      %6371 = vmatprep.subr.mxu0 0.0
      %6372 = vmatpush2.msra.mxu0 0.0
      %6373 = vmatprep.mubr.f32.mxu0 0.0
      %6374 = vmatmul.mubr.f32.gmra.mxu0 %v6236
      %v6375 = vpop.f32.mrf.mxu0
      %v6376 = vadd.f32 0.0, %v6375
      %v6377 = vpop.f32.mrf.mxu0
      %6378 = vdwg.mxu0
      %v6379 = vadd.f32 %v6219, %v6305
      %v6380 = vadd.f32 %v6220, %v6307
      %v6381 = vadd.f32 %v6221, %v6376
      %v6384 = vcombine.low %v6379, %v6380
      %6386 = vst [vmem:[%s406] sm:$0xff] %v6384
      %6387 = vst.msk [vmem:[%s406 + $0x8] sm:$0xf] %vm423, %v6381
      %p6388 = scmp.lt.s32.totalorder %s22, 1
      %s6389 = scalar_select %p6388, %s22, 1
      %s6390 = smul.addr %s6389, 3
      %s6391 = smul.addr %s6390, 4
      %s6392 = scalar_lea.vmem %s11, %s6391
      // Predicated region
      $region65: #{refine_m_forward.1} parent=63 // pred_check
        %p6393 = pneg %p281
      $region66: #{refine_m_forward.1} parent=63 // pred_check_branch
        %6395 = sbr.rel (%p6393) target = $region68
      $region67: #{refine_m_forward.1} parent=63 // pred_region
        _
      $region68: #{refine_m_forward.1} parent=63 // pred_fallthru
        _
    $region64: #{refine_m_forward.1} parent=5 // pred_fallthru
      _
    %p6396 = scmp.le.s32.totalorder 2, %s17
    // Predicated region
    $region69: #{refine_m_forward.1} parent=5 // pred_check
      %p6397 = pneg %p6396
    $region70: #{refine_m_forward.1} parent=5 // pred_check_branch
      %6399 = sbr.rel (%p6397) target = $region72
    $region71: #{refine_m_forward.1} parent=5 // pred_region
      %s6400 = ssub.s32 %s17, 2
      // Predicated region
      $region73: #{refine_m_forward.1} parent=71 // pred_check
        %p6401 = pneg %p287
      $region74: #{refine_m_forward.1} parent=71 // pred_check_branch
        %6403 = sbr.rel (%p6401) target = $region76
      $region75: #{refine_m_forward.1} parent=71 // pred_region
        %p6404 = scmp.lt.s32.totalorder %s23, 1
        %s6405 = scalar_select %p6404, %s23, 1
        %s6406 = smul.addr %s6405, 3
        %s6407 = smul.addr %s6406, 4
        %s6408 = scalar_lea.vmem %s11, %s6407
      $region76: #{refine_m_forward.1} parent=71 // pred_fallthru
        _
    $region72: #{refine_m_forward.1} parent=5 // pred_fallthru
      _
  $region6: #{refine_m_forward.1} parent=0 // loop_footer
    %s21 = sadd.s32 1, %s17
  $region7: #{refine_m_forward.1} parent=0 // loop_footer_branch
    %16 = sbr.rel target = $region3
  $region8: #{refine_m_forward.1} parent=0 // loop_exit
    _

</llo_original>
